<compile_context>
chip_gen: v7x
topology: tpu7x:2x2x1
jax: 0.10.0
libtpu: 0.0.40
codegen_flags: <defaults>
</compile_context>

<pallas_src>
import jax
import jax.numpy as jnp
from jax.experimental import pallas as pl
from jax.experimental.pallas import tpu as pltpu

EPS = 1e-5     # BatchNorm2d eps
PAD = 128      # staging lane margin; multiple of 128 (aligned stores) and >= W + 2
TAIL = 128     # staging lane tail past the largest activation; >= W + 2
CPAD = 16      # every conv input is channel-padded to this many rows (weights zero-padded)
TAPS = tuple((dy, dx) for dy in (-1, 0, 1) for dx in (-1, 0, 1))   # PyTorch 3x3 tap order


def _layer_schedule(n_in, n_out, H, W):
    """(name, cin, cout, H, W, maxpool_before_this_conv) for the 8 conv+BN+ReLU layers."""
    h2, w2 = H // 2, W // 2
    return [
        ("conv1_a", n_in,       n_out // 2, H,  W,  False),  # conv1 = DoubleConv(2, 8)
        ("conv1_b", n_out // 2, n_out // 2, H,  W,  False),
        ("down1_a", n_out // 2, n_out,      h2, w2, True),   # down1 = MaxPool2d(2) -> DoubleConv(8, 16)
        ("down1_b", n_out,      n_out,      h2, w2, False),
        ("conv2_a", n_out,      n_out,      h2, w2, False),  # conv2 = DoubleConv(16, 16)
        ("conv2_b", n_out,      n_out,      h2, w2, False),
        ("outc_a",  n_out,      n_out,      h2, w2, False),  # outc  = DoubleConv(16, 16)
        ("outc_b",  n_out,      n_out,      h2, w2, False),
    ]


def _border_masks(N, H, W):
    """(9, N*H*W) f32 0/1 masks, one per 3x3 tap, realizing the conv's zero padding."""
    M = N * H * W
    m = jnp.arange(M, dtype=jnp.int32)
    xx = m % W
    yy = (m // W) % H
    rows = []
    for dy, dx in TAPS:
        valid = jnp.ones((M,), dtype=bool)
        if dy < 0:
            valid = valid & (yy >= -dy)
        if dy > 0:
            valid = valid & (yy < H - dy)
        if dx < 0:
            valid = valid & (xx >= -dx)
        if dx > 0:
            valid = valid & (xx < W - dx)
        rows.append(valid.astype(jnp.float32))
    return jnp.stack(rows, axis=0)


def _pool_selector(N, H, W):
    """(N*H*W, N*(H//2)*(W//2)) 0/1 bf16 matrix keeping the even-(y, x) columns (MaxPool2d(2) gather)."""
    M = N * H * W
    Ho, Wo = H // 2, W // 2
    Mo = N * Ho * Wo
    col = jnp.arange(Mo, dtype=jnp.int32)
    n_img = col // (Ho * Wo)
    yo = (col // Wo) % Ho
    xo = col % Wo
    tgt = n_img * (H * W) + (2 * yo) * W + 2 * xo
    row = jnp.arange(M, dtype=jnp.int32)[:, None]
    return (row == tgt[None, :]).astype(jnp.bfloat16)


def _make_fused_kernel(schedule, W_full):
    L = len(schedule)

    def kernel(*refs):
        x_ref = refs[0]
        w_refs = refs[1:1 + L]                         # (9, cout, CPAD) bf16 per layer
        gb_refs = refs[1 + L:1 + 2 * L]                # (cout, 2) f32 per layer: [gamma, beta]
        mask_hi = refs[1 + 2 * L]                      # (9, M_hi) f32
        mask_lo = refs[2 + 2 * L]                      # (9, M_lo) f32
        sel_ref = refs[3 + 2 * L]                      # (M_hi, M_lo) bf16
        o_ref = refs[4 + 2 * L]                        # (cout_last, M_lo) f32
        stage = refs[5 + 2 * L]                        # (CPAD, PAD + M_hi + TAIL) bf16

        # One-time clear: the margins (and never-written channel rows) must read as exact zeros.
        stage[...] = jnp.zeros(stage.shape, stage.dtype)

        def conv_bn_relu(act, w_ref, gb_ref, mask_ref, W):
            """Conv3x3(pad=1, no bias) -> training-mode BN -> ReLU on a (cin, M) f32 slab."""
            cin, M = act.shape
            # Stage the input once (bf16, lane-aligned store); the 9 conv taps are statically
            # shifted re-reads that feed the MXU directly.
            stage[0:cin, PAD:PAD + M] = act.astype(jnp.bfloat16)
            z = None
            for t, (dy, dx) in enumerate(TAPS):
                off = dy * W + dx
                tap = stage[0:CPAD, PAD + off:PAD + off + M]                 # (CPAD, M) bf16
                zt = jnp.dot(w_ref[t], tap,
                             preferred_element_type=jnp.float32)             # (cout, M) f32
                if dy != 0 or dx != 0:
                    # zero padding at the image border: hoisted 0/1 mask, one vmul
                    zt = zt * mask_ref[t:t + 1, :]
                z = zt if z is None else z + zt
            # Training-mode BatchNorm folded to one per-channel FMA; stats in one pass over the
            # f32 accumulator.  (Conv bias omitted: the batch-mean subtraction cancels it.)
            inv_m = 1.0 / M
            s1 = jnp.sum(z, axis=1, keepdims=True)
            s2 = jnp.sum(z * z, axis=1, keepdims=True)
            mean = s1 * inv_m
            var = s2 * inv_m - mean * mean
            scale = gb_ref[:, 0:1] * jax.lax.rsqrt(var + EPS)
            shift = gb_ref[:, 1:2] - mean * scale
            return jnp.maximum(z * scale + shift, 0.0)

        def maxpool2x2(act, H, W):
            """nn.MaxPool2d(2) on a (C, N*H*W) f32 slab -> (C, N*(H//2)*(W//2)) f32."""
            C, M = act.shape
            Mo = M // 4
            stage[0:C, PAD:PAD + M] = act.astype(jnp.bfloat16)
            t01 = stage[0:C, PAD + 1:PAD + 1 + M].astype(jnp.float32)
            t10 = stage[0:C, PAD + W:PAD + W + M].astype(jnp.float32)
            t11 = stage[0:C, PAD + W + 1:PAD + W + 1 + M].astype(jnp.float32)
            full = jnp.maximum(jnp.maximum(act, t01), jnp.maximum(t10, t11))
            # Compact the even-(y, x) columns with the precomputed 0/1 selector on the MXU
            # (boundary-crossing windows are discarded by the compaction).
            pooled = jnp.dot(full.astype(jnp.bfloat16), sel_ref[...],
                             preferred_element_type=jnp.float32)              # (C, Mo) f32
            # The following layers stage only Mo columns; clear the now-stale high-res tail so
            # their shifted tap reads past Mo see exact zeros (the border masks already zero
            # those columns' contributions — this is belt-and-braces per the review).
            stage[0:CPAD, PAD + Mo:PAD + Mo + TAIL] = jnp.zeros((CPAD, TAIL), jnp.bfloat16)
            return pooled

        act = x_ref[...]                               # (cin0, N*H*W) f32
        for li, (_, _cin, _cout, H, W, pool_before) in enumerate(schedule):
            if pool_before:
                act = maxpool2x2(act, 2 * H, 2 * W)
            mref = mask_hi if W == W_full else mask_lo
            act = conv_bn_relu(act, w_refs[li], gb_refs[li], mref, W)
        o_ref[...] = act

    return kernel


def edge_feature_extractor(params, x_nchw, n_out=16):
    """Forward pass of EdgeFeatureExtractor. x is NCHW; returns NCHW (training-mode BN)."""
    N, cin0, H, W = x_nchw.shape
    assert H % 2 == 0 and W % 2 == 0, "MaxPool2d(2) fusion assumes even H, W"
    assert PAD % 128 == 0 and PAD >= W + 2, "staging margin must be lane-aligned and cover one row"
    assert TAIL >= W + 2
    schedule = _layer_schedule(cin0, n_out, H, W)
    assert max(cin for _, cin, _, _, _, _ in schedule) <= CPAD
    assert max(cout for _, _, cout, _, _, _ in schedule) <= CPAD
    M1 = N * H * W
    M2 = N * (H // 2) * (W // 2)

    # NCHW -> (C, N*H*W): channels on sublanes, flattened batch*space on lanes (lane-dense).
    x_cm = jnp.transpose(x_nchw.astype(jnp.float32), (1, 0, 2, 3)).reshape(cin0, M1)

    w_list, gb_list = [], []
    for name, cin, cout, _, _, _ in schedule:
        p = params[name]
        # (Cout, Cin, 3, 3) -> (3, 3, Cout, Cin) -> (9, Cout, Cin); tap t = (dy+1)*3 + (dx+1).
        w9 = jnp.transpose(p["w"], (2, 3, 0, 1)).reshape(9, cout, cin)
        w9 = jnp.pad(w9, ((0, 0), (0, 0), (0, CPAD - cin)))       # zero-pad Cin -> CPAD
        w_list.append(w9.astype(jnp.bfloat16))
        gb_list.append(jnp.stack([p["gamma"], p["beta"]], axis=1))  # (Cout, 2) f32

    mask_hi = _border_masks(N, H, W)               # (9, M1) f32
    mask_lo = _border_masks(N, H // 2, W // 2)     # (9, M2) f32
    sel = _pool_selector(N, H, W)                  # (M1, M2) bf16

    inputs = (x_cm, *w_list, *gb_list, mask_hi, mask_lo, sel)

    def full_spec(a):
        return pl.BlockSpec(a.shape, lambda i, _n=a.ndim: (0,) * _n)

    out = pl.pallas_call(
        _make_fused_kernel(schedule, W),
        out_shape=jax.ShapeDtypeStruct((n_out, M2), jnp.float32),
        grid=(1,),
        in_specs=[full_spec(a) for a in inputs],
        out_specs=pl.BlockSpec((n_out, M2), lambda i: (0, 0)),
        scratch_shapes=[
            pltpu.VMEM((CPAD, PAD + M1 + TAIL), jnp.bfloat16),   # tap staging buffer (~24 KB)
        ],
        compiler_params=pltpu.CompilerParams(dimension_semantics=("arbitrary",)),
    )(*inputs)

    # (Cout, N*Ho*Wo) -> NCHW
    return jnp.transpose(out.reshape(n_out, N, H // 2, W // 2), (1, 0, 2, 3))


# ----------------------------------------------------------------------------
# Parameter init (deterministic, synthetic — no checkpoint loading)
# ----------------------------------------------------------------------------
def init_params(key, n_in=2, n_out=16):
    params = {}
    for name, cin, cout, _, _, _ in _layer_schedule(n_in, n_out, 16, 16):
        key, k1, k2, k3, k4 = jax.random.split(key, 5)
        bound = (1.0 / (cin * 9)) ** 0.5
        params[name] = dict(
            w=jax.random.uniform(k1, (cout, cin, 3, 3), jnp.float32, -bound, bound),
            b=jax.random.uniform(k2, (cout,), jnp.float32, -bound, bound),  # cancels under train-mode BN
            gamma=1.0 + 0.1 * jax.random.normal(k3, (cout,), jnp.float32),
            beta=0.1 * jax.random.normal(k4, (cout,), jnp.float32),
        )
    return params


# ----------------------------------------------------------------------------
# Pure-JAX reference of the PyTorch module (training-mode BN, f32, bias kept)
# ----------------------------------------------------------------------------
def reference_forward(params, x_nchw, n_out=16):
    x = jnp.transpose(x_nchw.astype(jnp.float32), (0, 2, 3, 1))     # NHWC
    hp = jax.lax.Precision.HIGHEST

    def conv_bn_relu(x, p):
        w = jnp.transpose(p["w"], (2, 3, 1, 0))                     # OIHW -> HWIO
        z = jax.lax.conv_general_dilated(
            x, w, window_strides=(1, 1), padding="SAME",
            dimension_numbers=("NHWC", "HWIO", "NHWC"), precision=hp)
        z = z + p["b"]
        mean = jnp.mean(z, axis=(0, 1, 2), keepdims=True)
        var = jnp.mean(jnp.square(z - mean), axis=(0, 1, 2), keepdims=True)
        y = (z - mean) * jax.lax.rsqrt(var + EPS) * p["gamma"] + p["beta"]
        return jnp.maximum(y, 0.0)

    def maxpool(x):
        n, h, w, c = x.shape
        return x.reshape(n, h // 2, 2, w // 2, 2, c).max(axis=(2, 4))

    x = conv_bn_relu(x, params["conv1_a"])
    x = conv_bn_relu(x, params["conv1_b"])
    x = maxpool(x)
    for nm in ("down1_a", "down1_b", "conv2_a", "conv2_b", "outc_a", "outc_b"):
        x = conv_bn_relu(x, params[nm])
    return jnp.transpose(x, (0, 3, 1, 2))


if __name__ == "__main__":
    key = jax.random.PRNGKey(0)
    k_param, k_x = jax.random.split(key)
    params = init_params(k_param, n_in=2, n_out=16)
    x = jax.random.normal(k_x, (2, 2, 16, 16), jnp.float32)  # NCHW, like the PyTorch module

    fwd = jax.jit(edge_feature_extractor)
    spatial_features = jax.block_until_ready(fwd(params, x))

    assert spatial_features.shape == (2, 16, 8, 8), spatial_features.shape
    assert bool(jnp.isfinite(spatial_features).all())

    # Sanity-check the fused kernel against the pure-JAX f32 reference of the module.
    # The kernel uses bf16 MXU operands across 8 stacked conv+BN layers (per the perf review),
    # so the expected max deviation from the f32-HIGHEST reference is ~1e-2; BN statistics and
    # all elementwise math are still computed in f32.
    ref = jax.block_until_ready(jax.jit(reference_forward)(params, x))
    max_err = float(jnp.max(jnp.abs(spatial_features - ref)))
    mean_err = float(jnp.mean(jnp.abs(spatial_features - ref)))
    assert max_err < 1e-1, f"kernel deviates from reference (max abs err {max_err})"
    assert mean_err < 1e-2, f"kernel deviates from reference (mean abs err {mean_err})"

    print("KERNEL_OK")
</pallas_src>

<mosaic_0001>
module attributes {stable_mosaic.version = 11 : i64} {
  func.func @kernel(%arg0: i32, %arg1: memref<2x512xf32, #tpu.memory_space<vmem>>, %arg2: memref<9x8x16xbf16, #tpu.memory_space<vmem>>, %arg3: memref<9x8x16xbf16, #tpu.memory_space<vmem>>, %arg4: memref<9x16x16xbf16, #tpu.memory_space<vmem>>, %arg5: memref<9x16x16xbf16, #tpu.memory_space<vmem>>, %arg6: memref<9x16x16xbf16, #tpu.memory_space<vmem>>, %arg7: memref<9x16x16xbf16, #tpu.memory_space<vmem>>, %arg8: memref<9x16x16xbf16, #tpu.memory_space<vmem>>, %arg9: memref<9x16x16xbf16, #tpu.memory_space<vmem>>, %arg10: memref<8x2xf32, #tpu.memory_space<vmem>>, %arg11: memref<8x2xf32, #tpu.memory_space<vmem>>, %arg12: memref<16x2xf32, #tpu.memory_space<vmem>>, %arg13: memref<16x2xf32, #tpu.memory_space<vmem>>, %arg14: memref<16x2xf32, #tpu.memory_space<vmem>>, %arg15: memref<16x2xf32, #tpu.memory_space<vmem>>, %arg16: memref<16x2xf32, #tpu.memory_space<vmem>>, %arg17: memref<16x2xf32, #tpu.memory_space<vmem>>, %arg18: memref<9x512xf32, #tpu.memory_space<vmem>>, %arg19: memref<9x128xf32, #tpu.memory_space<vmem>>, %arg20: memref<512x128xbf16, #tpu.memory_space<vmem>>, %arg21: memref<16x128xf32, #tpu.memory_space<vmem>>, %arg22: memref<16x768xbf16, #tpu.memory_space<vmem>>) attributes {dimension_semantics = [#tpu.dimension_semantics<arbitrary>], iteration_bounds = array<i64: 1>, scalar_prefetch = 0 : i64, scratch_operands = 1 : i64, tpu.core_type = #tpu.core_type<tc>, window_params = [{pipeline_mode = #tpu.pipeline_mode<synchronous>, transform_indices = @transform_0, window_bounds = array<i64: 2, 512>}, {pipeline_mode = #tpu.pipeline_mode<synchronous>, transform_indices = @transform_1, window_bounds = array<i64: 9, 8, 16>}, {pipeline_mode = #tpu.pipeline_mode<synchronous>, transform_indices = @transform_2, window_bounds = array<i64: 9, 8, 16>}, {pipeline_mode = #tpu.pipeline_mode<synchronous>, transform_indices = @transform_3, window_bounds = array<i64: 9, 16, 16>}, {pipeline_mode = #tpu.pipeline_mode<synchronous>, transform_indices = @transform_4, window_bounds = array<i64: 9, 16, 16>}, {pipeline_mode = #tpu.pipeline_mode<synchronous>, transform_indices = @transform_5, window_bounds = array<i64: 9, 16, 16>}, {pipeline_mode = #tpu.pipeline_mode<synchronous>, transform_indices = @transform_6, window_bounds = array<i64: 9, 16, 16>}, {pipeline_mode = #tpu.pipeline_mode<synchronous>, transform_indices = @transform_7, window_bounds = array<i64: 9, 16, 16>}, {pipeline_mode = #tpu.pipeline_mode<synchronous>, transform_indices = @transform_8, window_bounds = array<i64: 9, 16, 16>}, {pipeline_mode = #tpu.pipeline_mode<synchronous>, transform_indices = @transform_9, window_bounds = array<i64: 8, 2>}, {pipeline_mode = #tpu.pipeline_mode<synchronous>, transform_indices = @transform_10, window_bounds = array<i64: 8, 2>}, {pipeline_mode = #tpu.pipeline_mode<synchronous>, transform_indices = @transform_11, window_bounds = array<i64: 16, 2>}, {pipeline_mode = #tpu.pipeline_mode<synchronous>, transform_indices = @transform_12, window_bounds = array<i64: 16, 2>}, {pipeline_mode = #tpu.pipeline_mode<synchronous>, transform_indices = @transform_13, window_bounds = array<i64: 16, 2>}, {pipeline_mode = #tpu.pipeline_mode<synchronous>, transform_indices = @transform_14, window_bounds = array<i64: 16, 2>}, {pipeline_mode = #tpu.pipeline_mode<synchronous>, transform_indices = @transform_15, window_bounds = array<i64: 16, 2>}, {pipeline_mode = #tpu.pipeline_mode<synchronous>, transform_indices = @transform_16, window_bounds = array<i64: 16, 2>}, {pipeline_mode = #tpu.pipeline_mode<synchronous>, transform_indices = @transform_17, window_bounds = array<i64: 9, 512>}, {pipeline_mode = #tpu.pipeline_mode<synchronous>, transform_indices = @transform_18, window_bounds = array<i64: 9, 128>}, {pipeline_mode = #tpu.pipeline_mode<synchronous>, transform_indices = @transform_19, window_bounds = array<i64: 512, 128>}, {pipeline_mode = #tpu.pipeline_mode<synchronous>, transform_indices = @transform_20, window_bounds = array<i64: 16, 128>}]} {
    %cst = arith.constant 0.000000e+00 : bf16
    %0 = vector.broadcast %cst : bf16 to vector<16x768xbf16>
    %c0 = arith.constant 0 : index
    %c0_0 = arith.constant 0 : index
    %1 = vector.load %arg22[%c0, %c0_0] : memref<16x768xbf16, #tpu.memory_space<vmem>>, vector<16x768xbf16>
    tpu.vector_store %arg22[%c0, %c0_0], %0 {strides = array<i32>} : memref<16x768xbf16, #tpu.memory_space<vmem>>, vector<16x768xbf16>,
    %c0_1 = arith.constant 0 : index
    %c0_2 = arith.constant 0 : index
    %2 = vector.load %arg1[%c0_1, %c0_2] : memref<2x512xf32, #tpu.memory_space<vmem>>, vector<2x512xf32>
    %3 = arith.truncf %2 : vector<2x512xf32> to vector<2x512xbf16>
    %c0_3 = arith.constant 0 : index
    %c128 = arith.constant 128 : index
    %4 = vector.load %arg22[%c0_3, %c128] : memref<16x768xbf16, #tpu.memory_space<vmem>>, vector<2x512xbf16>
    tpu.vector_store %arg22[%c0_3, %c128], %3 {strides = array<i32>} : memref<16x768xbf16, #tpu.memory_space<vmem>>, vector<2x512xbf16>,
    %c0_4 = arith.constant 0 : index
    %c111 = arith.constant 111 : index
    %5 = vector.load %arg22[%c0_4, %c111] : memref<16x768xbf16, #tpu.memory_space<vmem>>, vector<16x512xbf16>
    %c0_5 = arith.constant 0 : index
    %c0_6 = arith.constant 0 : index
    %c0_7 = arith.constant 0 : index
    %6 = vector.load %arg2[%c0_5, %c0_6, %c0_7] : memref<9x8x16xbf16, #tpu.memory_space<vmem>>, vector<1x8x16xbf16>
    %7 = vector.shape_cast %6 : vector<1x8x16xbf16> to vector<8x16xbf16>
    %cst_8 = arith.constant dense<0.000000e+00> : vector<8x512xf32>
    %8 = tpu.matmul %7, %5, %cst_8 {dimension_numbers = #tpu.dot_dimension_numbers<[1], [0], [0], [1], [0, 0, 1, 1], [], []>} : vector<8x16xbf16>, vector<16x512xbf16>, vector<8x512xf32> -> vector<8x512xf32>
    %c0_9 = arith.constant 0 : index
    %c0_10 = arith.constant 0 : index
    %9 = vector.load %arg18[%c0_9, %c0_10] : memref<9x512xf32, #tpu.memory_space<vmem>>, vector<1x512xf32>
    %10 = vector.broadcast %9 : vector<1x512xf32> to vector<8x512xf32>
    %11 = arith.mulf %8, %10 : vector<8x512xf32>
    %c0_11 = arith.constant 0 : index
    %c112 = arith.constant 112 : index
    %12 = vector.load %arg22[%c0_11, %c112] : memref<16x768xbf16, #tpu.memory_space<vmem>>, vector<16x512xbf16>
    %c1 = arith.constant 1 : index
    %c0_12 = arith.constant 0 : index
    %c0_13 = arith.constant 0 : index
    %13 = vector.load %arg2[%c1, %c0_12, %c0_13] : memref<9x8x16xbf16, #tpu.memory_space<vmem>>, vector<1x8x16xbf16>
    %14 = vector.shape_cast %13 : vector<1x8x16xbf16> to vector<8x16xbf16>
    %cst_14 = arith.constant dense<0.000000e+00> : vector<8x512xf32>
    %15 = tpu.matmul %14, %12, %cst_14 {dimension_numbers = #tpu.dot_dimension_numbers<[1], [0], [0], [1], [0, 0, 1, 1], [], []>} : vector<8x16xbf16>, vector<16x512xbf16>, vector<8x512xf32> -> vector<8x512xf32>
    %c1_15 = arith.constant 1 : index
    %c0_16 = arith.constant 0 : index
    %16 = vector.load %arg18[%c1_15, %c0_16] : memref<9x512xf32, #tpu.memory_space<vmem>>, vector<1x512xf32>
    %17 = vector.broadcast %16 : vector<1x512xf32> to vector<8x512xf32>
    %18 = arith.mulf %15, %17 : vector<8x512xf32>
    %19 = arith.addf %11, %18 : vector<8x512xf32>
    %c0_17 = arith.constant 0 : index
    %c113 = arith.constant 113 : index
    %20 = vector.load %arg22[%c0_17, %c113] : memref<16x768xbf16, #tpu.memory_space<vmem>>, vector<16x512xbf16>
    %c2 = arith.constant 2 : index
    %c0_18 = arith.constant 0 : index
    %c0_19 = arith.constant 0 : index
    %21 = vector.load %arg2[%c2, %c0_18, %c0_19] : memref<9x8x16xbf16, #tpu.memory_space<vmem>>, vector<1x8x16xbf16>
    %22 = vector.shape_cast %21 : vector<1x8x16xbf16> to vector<8x16xbf16>
    %cst_20 = arith.constant dense<0.000000e+00> : vector<8x512xf32>
    %23 = tpu.matmul %22, %20, %cst_20 {dimension_numbers = #tpu.dot_dimension_numbers<[1], [0], [0], [1], [0, 0, 1, 1], [], []>} : vector<8x16xbf16>, vector<16x512xbf16>, vector<8x512xf32> -> vector<8x512xf32>
    %c2_21 = arith.constant 2 : index
    %c0_22 = arith.constant 0 : index
    %24 = vector.load %arg18[%c2_21, %c0_22] : memref<9x512xf32, #tpu.memory_space<vmem>>, vector<1x512xf32>
    %25 = vector.broadcast %24 : vector<1x512xf32> to vector<8x512xf32>
    %26 = arith.mulf %23, %25 : vector<8x512xf32>
    %27 = arith.addf %19, %26 : vector<8x512xf32>
    %c0_23 = arith.constant 0 : index
    %c127 = arith.constant 127 : index
    %28 = vector.load %arg22[%c0_23, %c127] : memref<16x768xbf16, #tpu.memory_space<vmem>>, vector<16x512xbf16>
    %c3 = arith.constant 3 : index
    %c0_24 = arith.constant 0 : index
    %c0_25 = arith.constant 0 : index
    %29 = vector.load %arg2[%c3, %c0_24, %c0_25] : memref<9x8x16xbf16, #tpu.memory_space<vmem>>, vector<1x8x16xbf16>
    %30 = vector.shape_cast %29 : vector<1x8x16xbf16> to vector<8x16xbf16>
    %cst_26 = arith.constant dense<0.000000e+00> : vector<8x512xf32>
    %31 = tpu.matmul %30, %28, %cst_26 {dimension_numbers = #tpu.dot_dimension_numbers<[1], [0], [0], [1], [0, 0, 1, 1], [], []>} : vector<8x16xbf16>, vector<16x512xbf16>, vector<8x512xf32> -> vector<8x512xf32>
    %c3_27 = arith.constant 3 : index
    %c0_28 = arith.constant 0 : index
    %32 = vector.load %arg18[%c3_27, %c0_28] : memref<9x512xf32, #tpu.memory_space<vmem>>, vector<1x512xf32>
    %33 = vector.broadcast %32 : vector<1x512xf32> to vector<8x512xf32>
    %34 = arith.mulf %31, %33 : vector<8x512xf32>
    %35 = arith.addf %27, %34 : vector<8x512xf32>
    %c0_29 = arith.constant 0 : index
    %c128_30 = arith.constant 128 : index
    %36 = vector.load %arg22[%c0_29, %c128_30] : memref<16x768xbf16, #tpu.memory_space<vmem>>, vector<16x512xbf16>
    %c4 = arith.constant 4 : index
    %c0_31 = arith.constant 0 : index
    %c0_32 = arith.constant 0 : index
    %37 = vector.load %arg2[%c4, %c0_31, %c0_32] : memref<9x8x16xbf16, #tpu.memory_space<vmem>>, vector<1x8x16xbf16>
    %38 = vector.shape_cast %37 : vector<1x8x16xbf16> to vector<8x16xbf16>
    %cst_33 = arith.constant dense<0.000000e+00> : vector<8x512xf32>
    %39 = tpu.matmul %38, %36, %cst_33 {dimension_numbers = #tpu.dot_dimension_numbers<[1], [0], [0], [1], [0, 0, 1, 1], [], []>} : vector<8x16xbf16>, vector<16x512xbf16>, vector<8x512xf32> -> vector<8x512xf32>
    %40 = arith.addf %35, %39 : vector<8x512xf32>
    %c0_34 = arith.constant 0 : index
    %c129 = arith.constant 129 : index
    %41 = vector.load %arg22[%c0_34, %c129] : memref<16x768xbf16, #tpu.memory_space<vmem>>, vector<16x512xbf16>
    %c5 = arith.constant 5 : index
    %c0_35 = arith.constant 0 : index
    %c0_36 = arith.constant 0 : index
    %42 = vector.load %arg2[%c5, %c0_35, %c0_36] : memref<9x8x16xbf16, #tpu.memory_space<vmem>>, vector<1x8x16xbf16>
    %43 = vector.shape_cast %42 : vector<1x8x16xbf16> to vector<8x16xbf16>
    %cst_37 = arith.constant dense<0.000000e+00> : vector<8x512xf32>
    %44 = tpu.matmul %43, %41, %cst_37 {dimension_numbers = #tpu.dot_dimension_numbers<[1], [0], [0], [1], [0, 0, 1, 1], [], []>} : vector<8x16xbf16>, vector<16x512xbf16>, vector<8x512xf32> -> vector<8x512xf32>
    %c5_38 = arith.constant 5 : index
    %c0_39 = arith.constant 0 : index
    %45 = vector.load %arg18[%c5_38, %c0_39] : memref<9x512xf32, #tpu.memory_space<vmem>>, vector<1x512xf32>
    %46 = vector.broadcast %45 : vector<1x512xf32> to vector<8x512xf32>
    %47 = arith.mulf %44, %46 : vector<8x512xf32>
    %48 = arith.addf %40, %47 : vector<8x512xf32>
    %c0_40 = arith.constant 0 : index
    %c143 = arith.constant 143 : index
    %49 = vector.load %arg22[%c0_40, %c143] : memref<16x768xbf16, #tpu.memory_space<vmem>>, vector<16x512xbf16>
    %c6 = arith.constant 6 : index
    %c0_41 = arith.constant 0 : index
    %c0_42 = arith.constant 0 : index
    %50 = vector.load %arg2[%c6, %c0_41, %c0_42] : memref<9x8x16xbf16, #tpu.memory_space<vmem>>, vector<1x8x16xbf16>
    %51 = vector.shape_cast %50 : vector<1x8x16xbf16> to vector<8x16xbf16>
    %cst_43 = arith.constant dense<0.000000e+00> : vector<8x512xf32>
    %52 = tpu.matmul %51, %49, %cst_43 {dimension_numbers = #tpu.dot_dimension_numbers<[1], [0], [0], [1], [0, 0, 1, 1], [], []>} : vector<8x16xbf16>, vector<16x512xbf16>, vector<8x512xf32> -> vector<8x512xf32>
    %c6_44 = arith.constant 6 : index
    %c0_45 = arith.constant 0 : index
    %53 = vector.load %arg18[%c6_44, %c0_45] : memref<9x512xf32, #tpu.memory_space<vmem>>, vector<1x512xf32>
    %54 = vector.broadcast %53 : vector<1x512xf32> to vector<8x512xf32>
    %55 = arith.mulf %52, %54 : vector<8x512xf32>
    %56 = arith.addf %48, %55 : vector<8x512xf32>
    %c0_46 = arith.constant 0 : index
    %c144 = arith.constant 144 : index
    %57 = vector.load %arg22[%c0_46, %c144] : memref<16x768xbf16, #tpu.memory_space<vmem>>, vector<16x512xbf16>
    %c7 = arith.constant 7 : index
    %c0_47 = arith.constant 0 : index
    %c0_48 = arith.constant 0 : index
    %58 = vector.load %arg2[%c7, %c0_47, %c0_48] : memref<9x8x16xbf16, #tpu.memory_space<vmem>>, vector<1x8x16xbf16>
    %59 = vector.shape_cast %58 : vector<1x8x16xbf16> to vector<8x16xbf16>
    %cst_49 = arith.constant dense<0.000000e+00> : vector<8x512xf32>
    %60 = tpu.matmul %59, %57, %cst_49 {dimension_numbers = #tpu.dot_dimension_numbers<[1], [0], [0], [1], [0, 0, 1, 1], [], []>} : vector<8x16xbf16>, vector<16x512xbf16>, vector<8x512xf32> -> vector<8x512xf32>
    %c7_50 = arith.constant 7 : index
    %c0_51 = arith.constant 0 : index
    %61 = vector.load %arg18[%c7_50, %c0_51] : memref<9x512xf32, #tpu.memory_space<vmem>>, vector<1x512xf32>
    %62 = vector.broadcast %61 : vector<1x512xf32> to vector<8x512xf32>
    %63 = arith.mulf %60, %62 : vector<8x512xf32>
    %64 = arith.addf %56, %63 : vector<8x512xf32>
    %c0_52 = arith.constant 0 : index
    %c145 = arith.constant 145 : index
    %65 = vector.load %arg22[%c0_52, %c145] : memref<16x768xbf16, #tpu.memory_space<vmem>>, vector<16x512xbf16>
    %c8 = arith.constant 8 : index
    %c0_53 = arith.constant 0 : index
    %c0_54 = arith.constant 0 : index
    %66 = vector.load %arg2[%c8, %c0_53, %c0_54] : memref<9x8x16xbf16, #tpu.memory_space<vmem>>, vector<1x8x16xbf16>
    %67 = vector.shape_cast %66 : vector<1x8x16xbf16> to vector<8x16xbf16>
    %cst_55 = arith.constant dense<0.000000e+00> : vector<8x512xf32>
    %68 = tpu.matmul %67, %65, %cst_55 {dimension_numbers = #tpu.dot_dimension_numbers<[1], [0], [0], [1], [0, 0, 1, 1], [], []>} : vector<8x16xbf16>, vector<16x512xbf16>, vector<8x512xf32> -> vector<8x512xf32>
    %c8_56 = arith.constant 8 : index
    %c0_57 = arith.constant 0 : index
    %69 = vector.load %arg18[%c8_56, %c0_57] : memref<9x512xf32, #tpu.memory_space<vmem>>, vector<1x512xf32>
    %70 = vector.broadcast %69 : vector<1x512xf32> to vector<8x512xf32>
    %71 = arith.mulf %68, %70 : vector<8x512xf32>
    %72 = arith.addf %64, %71 : vector<8x512xf32>
    %cst_58 = arith.constant dense<0.000000e+00> : vector<8xf32>
    %73 = vector.multi_reduction <add>, %72, %cst_58 [1] : vector<8x512xf32> to vector<8xf32>
    %74 = vector.shape_cast %73 : vector<8xf32> to vector<8x1xf32>
    %75 = arith.mulf %72, %72 : vector<8x512xf32>
    %cst_59 = arith.constant dense<0.000000e+00> : vector<8xf32>
    %76 = vector.multi_reduction <add>, %75, %cst_59 [1] : vector<8x512xf32> to vector<8xf32>
    %77 = vector.shape_cast %76 : vector<8xf32> to vector<8x1xf32>
    %cst_60 = arith.constant 0.001953125 : f32
    %78 = vector.broadcast %cst_60 : f32 to vector<8x1xf32>
    %79 = arith.mulf %74, %78 : vector<8x1xf32>
    %cst_61 = arith.constant 0.001953125 : f32
    %80 = vector.broadcast %cst_61 : f32 to vector<8x1xf32>
    %81 = arith.mulf %77, %80 : vector<8x1xf32>
    %82 = arith.mulf %79, %79 : vector<8x1xf32>
    %83 = arith.subf %81, %82 : vector<8x1xf32>
    %c0_62 = arith.constant 0 : index
    %c0_63 = arith.constant 0 : index
    %84 = vector.load %arg10[%c0_62, %c0_63] : memref<8x2xf32, #tpu.memory_space<vmem>>, vector<8x1xf32>
    %cst_64 = arith.constant 9.99999974E-6 : f32
    %85 = vector.broadcast %cst_64 : f32 to vector<8x1xf32>
    %86 = arith.addf %83, %85 : vector<8x1xf32>
    %87 = math.rsqrt %86 : vector<8x1xf32>
    %88 = arith.mulf %84, %87 : vector<8x1xf32>
    %c0_65 = arith.constant 0 : index
    %c1_66 = arith.constant 1 : index
    %89 = vector.load %arg10[%c0_65, %c1_66] : memref<8x2xf32, #tpu.memory_space<vmem>>, vector<8x1xf32>
    %90 = arith.mulf %79, %88 : vector<8x1xf32>
    %91 = arith.subf %89, %90 : vector<8x1xf32>
    %92 = vector.broadcast %88 : vector<8x1xf32> to vector<8x512xf32>
    %93 = arith.mulf %72, %92 : vector<8x512xf32>
    %94 = vector.broadcast %91 : vector<8x1xf32> to vector<8x512xf32>
    %95 = arith.addf %93, %94 : vector<8x512xf32>
    %cst_67 = arith.constant 0.000000e+00 : f32
    %96 = vector.broadcast %cst_67 : f32 to vector<8x512xf32>
    %97 = arith.maximumf %95, %96 : vector<8x512xf32>
    %98 = arith.truncf %97 : vector<8x512xf32> to vector<8x512xbf16>
    %c0_68 = arith.constant 0 : index
    %c128_69 = arith.constant 128 : index
    %99 = vector.load %arg22[%c0_68, %c128_69] : memref<16x768xbf16, #tpu.memory_space<vmem>>, vector<8x512xbf16>
    tpu.vector_store %arg22[%c0_68, %c128_69], %98 {strides = array<i32>} : memref<16x768xbf16, #tpu.memory_space<vmem>>, vector<8x512xbf16>,
    %c0_70 = arith.constant 0 : index
    %c111_71 = arith.constant 111 : index
    %100 = vector.load %arg22[%c0_70, %c111_71] : memref<16x768xbf16, #tpu.memory_space<vmem>>, vector<16x512xbf16>
    %c0_72 = arith.constant 0 : index
    %c0_73 = arith.constant 0 : index
    %c0_74 = arith.constant 0 : index
    %101 = vector.load %arg3[%c0_72, %c0_73, %c0_74] : memref<9x8x16xbf16, #tpu.memory_space<vmem>>, vector<1x8x16xbf16>
    %102 = vector.shape_cast %101 : vector<1x8x16xbf16> to vector<8x16xbf16>
    %cst_75 = arith.constant dense<0.000000e+00> : vector<8x512xf32>
    %103 = tpu.matmul %102, %100, %cst_75 {dimension_numbers = #tpu.dot_dimension_numbers<[1], [0], [0], [1], [0, 0, 1, 1], [], []>} : vector<8x16xbf16>, vector<16x512xbf16>, vector<8x512xf32> -> vector<8x512xf32>
    %c0_76 = arith.constant 0 : index
    %c0_77 = arith.constant 0 : index
    %104 = vector.load %arg18[%c0_76, %c0_77] : memref<9x512xf32, #tpu.memory_space<vmem>>, vector<1x512xf32>
    %105 = vector.broadcast %104 : vector<1x512xf32> to vector<8x512xf32>
    %106 = arith.mulf %103, %105 : vector<8x512xf32>
    %c0_78 = arith.constant 0 : index
    %c112_79 = arith.constant 112 : index
    %107 = vector.load %arg22[%c0_78, %c112_79] : memref<16x768xbf16, #tpu.memory_space<vmem>>, vector<16x512xbf16>
    %c1_80 = arith.constant 1 : index
    %c0_81 = arith.constant 0 : index
    %c0_82 = arith.constant 0 : index
    %108 = vector.load %arg3[%c1_80, %c0_81, %c0_82] : memref<9x8x16xbf16, #tpu.memory_space<vmem>>, vector<1x8x16xbf16>
    %109 = vector.shape_cast %108 : vector<1x8x16xbf16> to vector<8x16xbf16>
    %cst_83 = arith.constant dense<0.000000e+00> : vector<8x512xf32>
    %110 = tpu.matmul %109, %107, %cst_83 {dimension_numbers = #tpu.dot_dimension_numbers<[1], [0], [0], [1], [0, 0, 1, 1], [], []>} : vector<8x16xbf16>, vector<16x512xbf16>, vector<8x512xf32> -> vector<8x512xf32>
    %c1_84 = arith.constant 1 : index
    %c0_85 = arith.constant 0 : index
    %111 = vector.load %arg18[%c1_84, %c0_85] : memref<9x512xf32, #tpu.memory_space<vmem>>, vector<1x512xf32>
    %112 = vector.broadcast %111 : vector<1x512xf32> to vector<8x512xf32>
    %113 = arith.mulf %110, %112 : vector<8x512xf32>
    %114 = arith.addf %106, %113 : vector<8x512xf32>
    %c0_86 = arith.constant 0 : index
    %c113_87 = arith.constant 113 : index
    %115 = vector.load %arg22[%c0_86, %c113_87] : memref<16x768xbf16, #tpu.memory_space<vmem>>, vector<16x512xbf16>
    %c2_88 = arith.constant 2 : index
    %c0_89 = arith.constant 0 : index
    %c0_90 = arith.constant 0 : index
    %116 = vector.load %arg3[%c2_88, %c0_89, %c0_90] : memref<9x8x16xbf16, #tpu.memory_space<vmem>>, vector<1x8x16xbf16>
    %117 = vector.shape_cast %116 : vector<1x8x16xbf16> to vector<8x16xbf16>
    %cst_91 = arith.constant dense<0.000000e+00> : vector<8x512xf32>
    %118 = tpu.matmul %117, %115, %cst_91 {dimension_numbers = #tpu.dot_dimension_numbers<[1], [0], [0], [1], [0, 0, 1, 1], [], []>} : vector<8x16xbf16>, vector<16x512xbf16>, vector<8x512xf32> -> vector<8x512xf32>
    %c2_92 = arith.constant 2 : index
    %c0_93 = arith.constant 0 : index
    %119 = vector.load %arg18[%c2_92, %c0_93] : memref<9x512xf32, #tpu.memory_space<vmem>>, vector<1x512xf32>
    %120 = vector.broadcast %119 : vector<1x512xf32> to vector<8x512xf32>
    %121 = arith.mulf %118, %120 : vector<8x512xf32>
    %122 = arith.addf %114, %121 : vector<8x512xf32>
    %c0_94 = arith.constant 0 : index
    %c127_95 = arith.constant 127 : index
    %123 = vector.load %arg22[%c0_94, %c127_95] : memref<16x768xbf16, #tpu.memory_space<vmem>>, vector<16x512xbf16>
    %c3_96 = arith.constant 3 : index
    %c0_97 = arith.constant 0 : index
    %c0_98 = arith.constant 0 : index
    %124 = vector.load %arg3[%c3_96, %c0_97, %c0_98] : memref<9x8x16xbf16, #tpu.memory_space<vmem>>, vector<1x8x16xbf16>
    %125 = vector.shape_cast %124 : vector<1x8x16xbf16> to vector<8x16xbf16>
    %cst_99 = arith.constant dense<0.000000e+00> : vector<8x512xf32>
    %126 = tpu.matmul %125, %123, %cst_99 {dimension_numbers = #tpu.dot_dimension_numbers<[1], [0], [0], [1], [0, 0, 1, 1], [], []>} : vector<8x16xbf16>, vector<16x512xbf16>, vector<8x512xf32> -> vector<8x512xf32>
    %c3_100 = arith.constant 3 : index
    %c0_101 = arith.constant 0 : index
    %127 = vector.load %arg18[%c3_100, %c0_101] : memref<9x512xf32, #tpu.memory_space<vmem>>, vector<1x512xf32>
    %128 = vector.broadcast %127 : vector<1x512xf32> to vector<8x512xf32>
    %129 = arith.mulf %126, %128 : vector<8x512xf32>
    %130 = arith.addf %122, %129 : vector<8x512xf32>
    %c0_102 = arith.constant 0 : index
    %c128_103 = arith.constant 128 : index
    %131 = vector.load %arg22[%c0_102, %c128_103] : memref<16x768xbf16, #tpu.memory_space<vmem>>, vector<16x512xbf16>
    %c4_104 = arith.constant 4 : index
    %c0_105 = arith.constant 0 : index
    %c0_106 = arith.constant 0 : index
    %132 = vector.load %arg3[%c4_104, %c0_105, %c0_106] : memref<9x8x16xbf16, #tpu.memory_space<vmem>>, vector<1x8x16xbf16>
    %133 = vector.shape_cast %132 : vector<1x8x16xbf16> to vector<8x16xbf16>
    %cst_107 = arith.constant dense<0.000000e+00> : vector<8x512xf32>
    %134 = tpu.matmul %133, %131, %cst_107 {dimension_numbers = #tpu.dot_dimension_numbers<[1], [0], [0], [1], [0, 0, 1, 1], [], []>} : vector<8x16xbf16>, vector<16x512xbf16>, vector<8x512xf32> -> vector<8x512xf32>
    %135 = arith.addf %130, %134 : vector<8x512xf32>
    %c0_108 = arith.constant 0 : index
    %c129_109 = arith.constant 129 : index
    %136 = vector.load %arg22[%c0_108, %c129_109] : memref<16x768xbf16, #tpu.memory_space<vmem>>, vector<16x512xbf16>
    %c5_110 = arith.constant 5 : index
    %c0_111 = arith.constant 0 : index
    %c0_112 = arith.constant 0 : index
    %137 = vector.load %arg3[%c5_110, %c0_111, %c0_112] : memref<9x8x16xbf16, #tpu.memory_space<vmem>>, vector<1x8x16xbf16>
    %138 = vector.shape_cast %137 : vector<1x8x16xbf16> to vector<8x16xbf16>
    %cst_113 = arith.constant dense<0.000000e+00> : vector<8x512xf32>
    %139 = tpu.matmul %138, %136, %cst_113 {dimension_numbers = #tpu.dot_dimension_numbers<[1], [0], [0], [1], [0, 0, 1, 1], [], []>} : vector<8x16xbf16>, vector<16x512xbf16>, vector<8x512xf32> -> vector<8x512xf32>
    %c5_114 = arith.constant 5 : index
    %c0_115 = arith.constant 0 : index
    %140 = vector.load %arg18[%c5_114, %c0_115] : memref<9x512xf32, #tpu.memory_space<vmem>>, vector<1x512xf32>
    %141 = vector.broadcast %140 : vector<1x512xf32> to vector<8x512xf32>
    %142 = arith.mulf %139, %141 : vector<8x512xf32>
    %143 = arith.addf %135, %142 : vector<8x512xf32>
    %c0_116 = arith.constant 0 : index
    %c143_117 = arith.constant 143 : index
    %144 = vector.load %arg22[%c0_116, %c143_117] : memref<16x768xbf16, #tpu.memory_space<vmem>>, vector<16x512xbf16>
    %c6_118 = arith.constant 6 : index
    %c0_119 = arith.constant 0 : index
    %c0_120 = arith.constant 0 : index
    %145 = vector.load %arg3[%c6_118, %c0_119, %c0_120] : memref<9x8x16xbf16, #tpu.memory_space<vmem>>, vector<1x8x16xbf16>
    %146 = vector.shape_cast %145 : vector<1x8x16xbf16> to vector<8x16xbf16>
    %cst_121 = arith.constant dense<0.000000e+00> : vector<8x512xf32>
    %147 = tpu.matmul %146, %144, %cst_121 {dimension_numbers = #tpu.dot_dimension_numbers<[1], [0], [0], [1], [0, 0, 1, 1], [], []>} : vector<8x16xbf16>, vector<16x512xbf16>, vector<8x512xf32> -> vector<8x512xf32>
    %c6_122 = arith.constant 6 : index
    %c0_123 = arith.constant 0 : index
    %148 = vector.load %arg18[%c6_122, %c0_123] : memref<9x512xf32, #tpu.memory_space<vmem>>, vector<1x512xf32>
    %149 = vector.broadcast %148 : vector<1x512xf32> to vector<8x512xf32>
    %150 = arith.mulf %147, %149 : vector<8x512xf32>
    %151 = arith.addf %143, %150 : vector<8x512xf32>
    %c0_124 = arith.constant 0 : index
    %c144_125 = arith.constant 144 : index
    %152 = vector.load %arg22[%c0_124, %c144_125] : memref<16x768xbf16, #tpu.memory_space<vmem>>, vector<16x512xbf16>
    %c7_126 = arith.constant 7 : index
    %c0_127 = arith.constant 0 : index
    %c0_128 = arith.constant 0 : index
    %153 = vector.load %arg3[%c7_126, %c0_127, %c0_128] : memref<9x8x16xbf16, #tpu.memory_space<vmem>>, vector<1x8x16xbf16>
    %154 = vector.shape_cast %153 : vector<1x8x16xbf16> to vector<8x16xbf16>
    %cst_129 = arith.constant dense<0.000000e+00> : vector<8x512xf32>
    %155 = tpu.matmul %154, %152, %cst_129 {dimension_numbers = #tpu.dot_dimension_numbers<[1], [0], [0], [1], [0, 0, 1, 1], [], []>} : vector<8x16xbf16>, vector<16x512xbf16>, vector<8x512xf32> -> vector<8x512xf32>
    %c7_130 = arith.constant 7 : index
    %c0_131 = arith.constant 0 : index
    %156 = vector.load %arg18[%c7_130, %c0_131] : memref<9x512xf32, #tpu.memory_space<vmem>>, vector<1x512xf32>
    %157 = vector.broadcast %156 : vector<1x512xf32> to vector<8x512xf32>
    %158 = arith.mulf %155, %157 : vector<8x512xf32>
    %159 = arith.addf %151, %158 : vector<8x512xf32>
    %c0_132 = arith.constant 0 : index
    %c145_133 = arith.constant 145 : index
    %160 = vector.load %arg22[%c0_132, %c145_133] : memref<16x768xbf16, #tpu.memory_space<vmem>>, vector<16x512xbf16>
    %c8_134 = arith.constant 8 : index
    %c0_135 = arith.constant 0 : index
    %c0_136 = arith.constant 0 : index
    %161 = vector.load %arg3[%c8_134, %c0_135, %c0_136] : memref<9x8x16xbf16, #tpu.memory_space<vmem>>, vector<1x8x16xbf16>
    %162 = vector.shape_cast %161 : vector<1x8x16xbf16> to vector<8x16xbf16>
    %cst_137 = arith.constant dense<0.000000e+00> : vector<8x512xf32>
    %163 = tpu.matmul %162, %160, %cst_137 {dimension_numbers = #tpu.dot_dimension_numbers<[1], [0], [0], [1], [0, 0, 1, 1], [], []>} : vector<8x16xbf16>, vector<16x512xbf16>, vector<8x512xf32> -> vector<8x512xf32>
    %c8_138 = arith.constant 8 : index
    %c0_139 = arith.constant 0 : index
    %164 = vector.load %arg18[%c8_138, %c0_139] : memref<9x512xf32, #tpu.memory_space<vmem>>, vector<1x512xf32>
    %165 = vector.broadcast %164 : vector<1x512xf32> to vector<8x512xf32>
    %166 = arith.mulf %163, %165 : vector<8x512xf32>
    %167 = arith.addf %159, %166 : vector<8x512xf32>
    %cst_140 = arith.constant dense<0.000000e+00> : vector<8xf32>
    %168 = vector.multi_reduction <add>, %167, %cst_140 [1] : vector<8x512xf32> to vector<8xf32>
    %169 = vector.shape_cast %168 : vector<8xf32> to vector<8x1xf32>
    %170 = arith.mulf %167, %167 : vector<8x512xf32>
    %cst_141 = arith.constant dense<0.000000e+00> : vector<8xf32>
    %171 = vector.multi_reduction <add>, %170, %cst_141 [1] : vector<8x512xf32> to vector<8xf32>
    %172 = vector.shape_cast %171 : vector<8xf32> to vector<8x1xf32>
    %cst_142 = arith.constant 0.001953125 : f32
    %173 = vector.broadcast %cst_142 : f32 to vector<8x1xf32>
    %174 = arith.mulf %169, %173 : vector<8x1xf32>
    %cst_143 = arith.constant 0.001953125 : f32
    %175 = vector.broadcast %cst_143 : f32 to vector<8x1xf32>
    %176 = arith.mulf %172, %175 : vector<8x1xf32>
    %177 = arith.mulf %174, %174 : vector<8x1xf32>
    %178 = arith.subf %176, %177 : vector<8x1xf32>
    %c0_144 = arith.constant 0 : index
    %c0_145 = arith.constant 0 : index
    %179 = vector.load %arg11[%c0_144, %c0_145] : memref<8x2xf32, #tpu.memory_space<vmem>>, vector<8x1xf32>
    %cst_146 = arith.constant 9.99999974E-6 : f32
    %180 = vector.broadcast %cst_146 : f32 to vector<8x1xf32>
    %181 = arith.addf %178, %180 : vector<8x1xf32>
    %182 = math.rsqrt %181 : vector<8x1xf32>
    %183 = arith.mulf %179, %182 : vector<8x1xf32>
    %c0_147 = arith.constant 0 : index
    %c1_148 = arith.constant 1 : index
    %184 = vector.load %arg11[%c0_147, %c1_148] : memref<8x2xf32, #tpu.memory_space<vmem>>, vector<8x1xf32>
    %185 = arith.mulf %174, %183 : vector<8x1xf32>
    %186 = arith.subf %184, %185 : vector<8x1xf32>
    %187 = vector.broadcast %183 : vector<8x1xf32> to vector<8x512xf32>
    %188 = arith.mulf %167, %187 : vector<8x512xf32>
    %189 = vector.broadcast %186 : vector<8x1xf32> to vector<8x512xf32>
    %190 = arith.addf %188, %189 : vector<8x512xf32>
    %cst_149 = arith.constant 0.000000e+00 : f32
    %191 = vector.broadcast %cst_149 : f32 to vector<8x512xf32>
    %192 = arith.maximumf %190, %191 : vector<8x512xf32>
    %193 = arith.truncf %192 : vector<8x512xf32> to vector<8x512xbf16>
    %c0_150 = arith.constant 0 : index
    %c128_151 = arith.constant 128 : index
    %194 = vector.load %arg22[%c0_150, %c128_151] : memref<16x768xbf16, #tpu.memory_space<vmem>>, vector<8x512xbf16>
    tpu.vector_store %arg22[%c0_150, %c128_151], %193 {strides = array<i32>} : memref<16x768xbf16, #tpu.memory_space<vmem>>, vector<8x512xbf16>,
    %c0_152 = arith.constant 0 : index
    %c129_153 = arith.constant 129 : index
    %195 = vector.load %arg22[%c0_152, %c129_153] : memref<16x768xbf16, #tpu.memory_space<vmem>>, vector<8x512xbf16>
    %196 = arith.extf %195 : vector<8x512xbf16> to vector<8x512xf32>
    %c0_154 = arith.constant 0 : index
    %c144_155 = arith.constant 144 : index
    %197 = vector.load %arg22[%c0_154, %c144_155] : memref<16x768xbf16, #tpu.memory_space<vmem>>, vector<8x512xbf16>
    %198 = arith.extf %197 : vector<8x512xbf16> to vector<8x512xf32>
    %c0_156 = arith.constant 0 : index
    %c145_157 = arith.constant 145 : index
    %199 = vector.load %arg22[%c0_156, %c145_157] : memref<16x768xbf16, #tpu.memory_space<vmem>>, vector<8x512xbf16>
    %200 = arith.extf %199 : vector<8x512xbf16> to vector<8x512xf32>
    %201 = arith.maximumf %192, %196 : vector<8x512xf32>
    %202 = arith.maximumf %198, %200 : vector<8x512xf32>
    %203 = arith.maximumf %201, %202 : vector<8x512xf32>
    %204 = arith.truncf %203 : vector<8x512xf32> to vector<8x512xbf16>
    %c0_158 = arith.constant 0 : index
    %c0_159 = arith.constant 0 : index
    %205 = vector.load %arg20[%c0_158, %c0_159] : memref<512x128xbf16, #tpu.memory_space<vmem>>, vector<512x128xbf16>
    %cst_160 = arith.constant dense<0.000000e+00> : vector<8x128xf32>
    %206 = tpu.matmul %204, %205, %cst_160 {dimension_numbers = #tpu.dot_dimension_numbers<[1], [0], [0], [1], [0, 0, 1, 1], [], []>} : vector<8x512xbf16>, vector<512x128xbf16>, vector<8x128xf32> -> vector<8x128xf32>
    %cst_161 = arith.constant 0.000000e+00 : bf16
    %207 = vector.broadcast %cst_161 : bf16 to vector<16x128xbf16>
    %c0_162 = arith.constant 0 : index
    %c256 = arith.constant 256 : index
    %208 = vector.load %arg22[%c0_162, %c256] : memref<16x768xbf16, #tpu.memory_space<vmem>>, vector<16x128xbf16>
    tpu.vector_store %arg22[%c0_162, %c256], %207 {strides = array<i32>} : memref<16x768xbf16, #tpu.memory_space<vmem>>, vector<16x128xbf16>,
    %209 = arith.truncf %206 : vector<8x128xf32> to vector<8x128xbf16>
    %c0_163 = arith.constant 0 : index
    %c128_164 = arith.constant 128 : index
    %210 = vector.load %arg22[%c0_163, %c128_164] : memref<16x768xbf16, #tpu.memory_space<vmem>>, vector<8x128xbf16>
    tpu.vector_store %arg22[%c0_163, %c128_164], %209 {strides = array<i32>} : memref<16x768xbf16, #tpu.memory_space<vmem>>, vector<8x128xbf16>,
    %c0_165 = arith.constant 0 : index
    %c119 = arith.constant 119 : index
    %211 = vector.load %arg22[%c0_165, %c119] : memref<16x768xbf16, #tpu.memory_space<vmem>>, vector<16x128xbf16>
    %c0_166 = arith.constant 0 : index
    %c0_167 = arith.constant 0 : index
    %c0_168 = arith.constant 0 : index
    %212 = vector.load %arg4[%c0_166, %c0_167, %c0_168] : memref<9x16x16xbf16, #tpu.memory_space<vmem>>, vector<1x16x16xbf16>
    %213 = vector.shape_cast %212 : vector<1x16x16xbf16> to vector<16x16xbf16>
    %cst_169 = arith.constant dense<0.000000e+00> : vector<16x128xf32>
    %214 = tpu.matmul %213, %211, %cst_169 {dimension_numbers = #tpu.dot_dimension_numbers<[1], [0], [0], [1], [0, 0, 1, 1], [], []>} : vector<16x16xbf16>, vector<16x128xbf16>, vector<16x128xf32> -> vector<16x128xf32>
    %c0_170 = arith.constant 0 : index
    %c0_171 = arith.constant 0 : index
    %215 = vector.load %arg19[%c0_170, %c0_171] : memref<9x128xf32, #tpu.memory_space<vmem>>, vector<1x128xf32>
    %216 = vector.broadcast %215 : vector<1x128xf32> to vector<16x128xf32>
    %217 = arith.mulf %214, %216 : vector<16x128xf32>
    %c0_172 = arith.constant 0 : index
    %c120 = arith.constant 120 : index
    %218 = vector.load %arg22[%c0_172, %c120] : memref<16x768xbf16, #tpu.memory_space<vmem>>, vector<16x128xbf16>
    %c1_173 = arith.constant 1 : index
    %c0_174 = arith.constant 0 : index
    %c0_175 = arith.constant 0 : index
    %219 = vector.load %arg4[%c1_173, %c0_174, %c0_175] : memref<9x16x16xbf16, #tpu.memory_space<vmem>>, vector<1x16x16xbf16>
    %220 = vector.shape_cast %219 : vector<1x16x16xbf16> to vector<16x16xbf16>
    %cst_176 = arith.constant dense<0.000000e+00> : vector<16x128xf32>
    %221 = tpu.matmul %220, %218, %cst_176 {dimension_numbers = #tpu.dot_dimension_numbers<[1], [0], [0], [1], [0, 0, 1, 1], [], []>} : vector<16x16xbf16>, vector<16x128xbf16>, vector<16x128xf32> -> vector<16x128xf32>
    %c1_177 = arith.constant 1 : index
    %c0_178 = arith.constant 0 : index
    %222 = vector.load %arg19[%c1_177, %c0_178] : memref<9x128xf32, #tpu.memory_space<vmem>>, vector<1x128xf32>
    %223 = vector.broadcast %222 : vector<1x128xf32> to vector<16x128xf32>
    %224 = arith.mulf %221, %223 : vector<16x128xf32>
    %225 = arith.addf %217, %224 : vector<16x128xf32>
    %c0_179 = arith.constant 0 : index
    %c121 = arith.constant 121 : index
    %226 = vector.load %arg22[%c0_179, %c121] : memref<16x768xbf16, #tpu.memory_space<vmem>>, vector<16x128xbf16>
    %c2_180 = arith.constant 2 : index
    %c0_181 = arith.constant 0 : index
    %c0_182 = arith.constant 0 : index
    %227 = vector.load %arg4[%c2_180, %c0_181, %c0_182] : memref<9x16x16xbf16, #tpu.memory_space<vmem>>, vector<1x16x16xbf16>
    %228 = vector.shape_cast %227 : vector<1x16x16xbf16> to vector<16x16xbf16>
    %cst_183 = arith.constant dense<0.000000e+00> : vector<16x128xf32>
    %229 = tpu.matmul %228, %226, %cst_183 {dimension_numbers = #tpu.dot_dimension_numbers<[1], [0], [0], [1], [0, 0, 1, 1], [], []>} : vector<16x16xbf16>, vector<16x128xbf16>, vector<16x128xf32> -> vector<16x128xf32>
    %c2_184 = arith.constant 2 : index
    %c0_185 = arith.constant 0 : index
    %230 = vector.load %arg19[%c2_184, %c0_185] : memref<9x128xf32, #tpu.memory_space<vmem>>, vector<1x128xf32>
    %231 = vector.broadcast %230 : vector<1x128xf32> to vector<16x128xf32>
    %232 = arith.mulf %229, %231 : vector<16x128xf32>
    %233 = arith.addf %225, %232 : vector<16x128xf32>
    %c0_186 = arith.constant 0 : index
    %c127_187 = arith.constant 127 : index
    %234 = vector.load %arg22[%c0_186, %c127_187] : memref<16x768xbf16, #tpu.memory_space<vmem>>, vector<16x128xbf16>
    %c3_188 = arith.constant 3 : index
    %c0_189 = arith.constant 0 : index
    %c0_190 = arith.constant 0 : index
    %235 = vector.load %arg4[%c3_188, %c0_189, %c0_190] : memref<9x16x16xbf16, #tpu.memory_space<vmem>>, vector<1x16x16xbf16>
    %236 = vector.shape_cast %235 : vector<1x16x16xbf16> to vector<16x16xbf16>
    %cst_191 = arith.constant dense<0.000000e+00> : vector<16x128xf32>
    %237 = tpu.matmul %236, %234, %cst_191 {dimension_numbers = #tpu.dot_dimension_numbers<[1], [0], [0], [1], [0, 0, 1, 1], [], []>} : vector<16x16xbf16>, vector<16x128xbf16>, vector<16x128xf32> -> vector<16x128xf32>
    %c3_192 = arith.constant 3 : index
    %c0_193 = arith.constant 0 : index
    %238 = vector.load %arg19[%c3_192, %c0_193] : memref<9x128xf32, #tpu.memory_space<vmem>>, vector<1x128xf32>
    %239 = vector.broadcast %238 : vector<1x128xf32> to vector<16x128xf32>
    %240 = arith.mulf %237, %239 : vector<16x128xf32>
    %241 = arith.addf %233, %240 : vector<16x128xf32>
    %c0_194 = arith.constant 0 : index
    %c128_195 = arith.constant 128 : index
    %242 = vector.load %arg22[%c0_194, %c128_195] : memref<16x768xbf16, #tpu.memory_space<vmem>>, vector<16x128xbf16>
    %c4_196 = arith.constant 4 : index
    %c0_197 = arith.constant 0 : index
    %c0_198 = arith.constant 0 : index
    %243 = vector.load %arg4[%c4_196, %c0_197, %c0_198] : memref<9x16x16xbf16, #tpu.memory_space<vmem>>, vector<1x16x16xbf16>
    %244 = vector.shape_cast %243 : vector<1x16x16xbf16> to vector<16x16xbf16>
    %cst_199 = arith.constant dense<0.000000e+00> : vector<16x128xf32>
    %245 = tpu.matmul %244, %242, %cst_199 {dimension_numbers = #tpu.dot_dimension_numbers<[1], [0], [0], [1], [0, 0, 1, 1], [], []>} : vector<16x16xbf16>, vector<16x128xbf16>, vector<16x128xf32> -> vector<16x128xf32>
    %246 = arith.addf %241, %245 : vector<16x128xf32>
    %c0_200 = arith.constant 0 : index
    %c129_201 = arith.constant 129 : index
    %247 = vector.load %arg22[%c0_200, %c129_201] : memref<16x768xbf16, #tpu.memory_space<vmem>>, vector<16x128xbf16>
    %c5_202 = arith.constant 5 : index
    %c0_203 = arith.constant 0 : index
    %c0_204 = arith.constant 0 : index
    %248 = vector.load %arg4[%c5_202, %c0_203, %c0_204] : memref<9x16x16xbf16, #tpu.memory_space<vmem>>, vector<1x16x16xbf16>
    %249 = vector.shape_cast %248 : vector<1x16x16xbf16> to vector<16x16xbf16>
    %cst_205 = arith.constant dense<0.000000e+00> : vector<16x128xf32>
    %250 = tpu.matmul %249, %247, %cst_205 {dimension_numbers = #tpu.dot_dimension_numbers<[1], [0], [0], [1], [0, 0, 1, 1], [], []>} : vector<16x16xbf16>, vector<16x128xbf16>, vector<16x128xf32> -> vector<16x128xf32>
    %c5_206 = arith.constant 5 : index
    %c0_207 = arith.constant 0 : index
    %251 = vector.load %arg19[%c5_206, %c0_207] : memref<9x128xf32, #tpu.memory_space<vmem>>, vector<1x128xf32>
    %252 = vector.broadcast %251 : vector<1x128xf32> to vector<16x128xf32>
    %253 = arith.mulf %250, %252 : vector<16x128xf32>
    %254 = arith.addf %246, %253 : vector<16x128xf32>
    %c0_208 = arith.constant 0 : index
    %c135 = arith.constant 135 : index
    %255 = vector.load %arg22[%c0_208, %c135] : memref<16x768xbf16, #tpu.memory_space<vmem>>, vector<16x128xbf16>
    %c6_209 = arith.constant 6 : index
    %c0_210 = arith.constant 0 : index
    %c0_211 = arith.constant 0 : index
    %256 = vector.load %arg4[%c6_209, %c0_210, %c0_211] : memref<9x16x16xbf16, #tpu.memory_space<vmem>>, vector<1x16x16xbf16>
    %257 = vector.shape_cast %256 : vector<1x16x16xbf16> to vector<16x16xbf16>
    %cst_212 = arith.constant dense<0.000000e+00> : vector<16x128xf32>
    %258 = tpu.matmul %257, %255, %cst_212 {dimension_numbers = #tpu.dot_dimension_numbers<[1], [0], [0], [1], [0, 0, 1, 1], [], []>} : vector<16x16xbf16>, vector<16x128xbf16>, vector<16x128xf32> -> vector<16x128xf32>
    %c6_213 = arith.constant 6 : index
    %c0_214 = arith.constant 0 : index
    %259 = vector.load %arg19[%c6_213, %c0_214] : memref<9x128xf32, #tpu.memory_space<vmem>>, vector<1x128xf32>
    %260 = vector.broadcast %259 : vector<1x128xf32> to vector<16x128xf32>
    %261 = arith.mulf %258, %260 : vector<16x128xf32>
    %262 = arith.addf %254, %261 : vector<16x128xf32>
    %c0_215 = arith.constant 0 : index
    %c136 = arith.constant 136 : index
    %263 = vector.load %arg22[%c0_215, %c136] : memref<16x768xbf16, #tpu.memory_space<vmem>>, vector<16x128xbf16>
    %c7_216 = arith.constant 7 : index
    %c0_217 = arith.constant 0 : index
    %c0_218 = arith.constant 0 : index
    %264 = vector.load %arg4[%c7_216, %c0_217, %c0_218] : memref<9x16x16xbf16, #tpu.memory_space<vmem>>, vector<1x16x16xbf16>
    %265 = vector.shape_cast %264 : vector<1x16x16xbf16> to vector<16x16xbf16>
    %cst_219 = arith.constant dense<0.000000e+00> : vector<16x128xf32>
    %266 = tpu.matmul %265, %263, %cst_219 {dimension_numbers = #tpu.dot_dimension_numbers<[1], [0], [0], [1], [0, 0, 1, 1], [], []>} : vector<16x16xbf16>, vector<16x128xbf16>, vector<16x128xf32> -> vector<16x128xf32>
    %c7_220 = arith.constant 7 : index
    %c0_221 = arith.constant 0 : index
    %267 = vector.load %arg19[%c7_220, %c0_221] : memref<9x128xf32, #tpu.memory_space<vmem>>, vector<1x128xf32>
    %268 = vector.broadcast %267 : vector<1x128xf32> to vector<16x128xf32>
    %269 = arith.mulf %266, %268 : vector<16x128xf32>
    %270 = arith.addf %262, %269 : vector<16x128xf32>
    %c0_222 = arith.constant 0 : index
    %c137 = arith.constant 137 : index
    %271 = vector.load %arg22[%c0_222, %c137] : memref<16x768xbf16, #tpu.memory_space<vmem>>, vector<16x128xbf16>
    %c8_223 = arith.constant 8 : index
    %c0_224 = arith.constant 0 : index
    %c0_225 = arith.constant 0 : index
    %272 = vector.load %arg4[%c8_223, %c0_224, %c0_225] : memref<9x16x16xbf16, #tpu.memory_space<vmem>>, vector<1x16x16xbf16>
    %273 = vector.shape_cast %272 : vector<1x16x16xbf16> to vector<16x16xbf16>
    %cst_226 = arith.constant dense<0.000000e+00> : vector<16x128xf32>
    %274 = tpu.matmul %273, %271, %cst_226 {dimension_numbers = #tpu.dot_dimension_numbers<[1], [0], [0], [1], [0, 0, 1, 1], [], []>} : vector<16x16xbf16>, vector<16x128xbf16>, vector<16x128xf32> -> vector<16x128xf32>
    %c8_227 = arith.constant 8 : index
    %c0_228 = arith.constant 0 : index
    %275 = vector.load %arg19[%c8_227, %c0_228] : memref<9x128xf32, #tpu.memory_space<vmem>>, vector<1x128xf32>
    %276 = vector.broadcast %275 : vector<1x128xf32> to vector<16x128xf32>
    %277 = arith.mulf %274, %276 : vector<16x128xf32>
    %278 = arith.addf %270, %277 : vector<16x128xf32>
    %cst_229 = arith.constant dense<0.000000e+00> : vector<16xf32>
    %279 = vector.multi_reduction <add>, %278, %cst_229 [1] : vector<16x128xf32> to vector<16xf32>
    %280 = vector.shape_cast %279 : vector<16xf32> to vector<16x1xf32>
    %281 = arith.mulf %278, %278 : vector<16x128xf32>
    %cst_230 = arith.constant dense<0.000000e+00> : vector<16xf32>
    %282 = vector.multi_reduction <add>, %281, %cst_230 [1] : vector<16x128xf32> to vector<16xf32>
    %283 = vector.shape_cast %282 : vector<16xf32> to vector<16x1xf32>
    %cst_231 = arith.constant 7.812500e-03 : f32
    %284 = vector.broadcast %cst_231 : f32 to vector<16x1xf32>
    %285 = arith.mulf %280, %284 : vector<16x1xf32>
    %cst_232 = arith.constant 7.812500e-03 : f32
    %286 = vector.broadcast %cst_232 : f32 to vector<16x1xf32>
    %287 = arith.mulf %283, %286 : vector<16x1xf32>
    %288 = arith.mulf %285, %285 : vector<16x1xf32>
    %289 = arith.subf %287, %288 : vector<16x1xf32>
    %c0_233 = arith.constant 0 : index
    %c0_234 = arith.constant 0 : index
    %290 = vector.load %arg12[%c0_233, %c0_234] : memref<16x2xf32, #tpu.memory_space<vmem>>, vector<16x1xf32>
    %cst_235 = arith.constant 9.99999974E-6 : f32
    %291 = vector.broadcast %cst_235 : f32 to vector<16x1xf32>
    %292 = arith.addf %289, %291 : vector<16x1xf32>
    %293 = math.rsqrt %292 : vector<16x1xf32>
    %294 = arith.mulf %290, %293 : vector<16x1xf32>
    %c0_236 = arith.constant 0 : index
    %c1_237 = arith.constant 1 : index
    %295 = vector.load %arg12[%c0_236, %c1_237] : memref<16x2xf32, #tpu.memory_space<vmem>>, vector<16x1xf32>
    %296 = arith.mulf %285, %294 : vector<16x1xf32>
    %297 = arith.subf %295, %296 : vector<16x1xf32>
    %298 = vector.broadcast %294 : vector<16x1xf32> to vector<16x128xf32>
    %299 = arith.mulf %278, %298 : vector<16x128xf32>
    %300 = vector.broadcast %297 : vector<16x1xf32> to vector<16x128xf32>
    %301 = arith.addf %299, %300 : vector<16x128xf32>
    %cst_238 = arith.constant 0.000000e+00 : f32
    %302 = vector.broadcast %cst_238 : f32 to vector<16x128xf32>
    %303 = arith.maximumf %301, %302 : vector<16x128xf32>
    %304 = arith.truncf %303 : vector<16x128xf32> to vector<16x128xbf16>
    %c0_239 = arith.constant 0 : index
    %c128_240 = arith.constant 128 : index
    %305 = vector.load %arg22[%c0_239, %c128_240] : memref<16x768xbf16, #tpu.memory_space<vmem>>, vector<16x128xbf16>
    tpu.vector_store %arg22[%c0_239, %c128_240], %304 {strides = array<i32>} : memref<16x768xbf16, #tpu.memory_space<vmem>>, vector<16x128xbf16>,
    %c0_241 = arith.constant 0 : index
    %c119_242 = arith.constant 119 : index
    %306 = vector.load %arg22[%c0_241, %c119_242] : memref<16x768xbf16, #tpu.memory_space<vmem>>, vector<16x128xbf16>
    %c0_243 = arith.constant 0 : index
    %c0_244 = arith.constant 0 : index
    %c0_245 = arith.constant 0 : index
    %307 = vector.load %arg5[%c0_243, %c0_244, %c0_245] : memref<9x16x16xbf16, #tpu.memory_space<vmem>>, vector<1x16x16xbf16>
    %308 = vector.shape_cast %307 : vector<1x16x16xbf16> to vector<16x16xbf16>
    %cst_246 = arith.constant dense<0.000000e+00> : vector<16x128xf32>
    %309 = tpu.matmul %308, %306, %cst_246 {dimension_numbers = #tpu.dot_dimension_numbers<[1], [0], [0], [1], [0, 0, 1, 1], [], []>} : vector<16x16xbf16>, vector<16x128xbf16>, vector<16x128xf32> -> vector<16x128xf32>
    %c0_247 = arith.constant 0 : index
    %c0_248 = arith.constant 0 : index
    %310 = vector.load %arg19[%c0_247, %c0_248] : memref<9x128xf32, #tpu.memory_space<vmem>>, vector<1x128xf32>
    %311 = vector.broadcast %310 : vector<1x128xf32> to vector<16x128xf32>
    %312 = arith.mulf %309, %311 : vector<16x128xf32>
    %c0_249 = arith.constant 0 : index
    %c120_250 = arith.constant 120 : index
    %313 = vector.load %arg22[%c0_249, %c120_250] : memref<16x768xbf16, #tpu.memory_space<vmem>>, vector<16x128xbf16>
    %c1_251 = arith.constant 1 : index
    %c0_252 = arith.constant 0 : index
    %c0_253 = arith.constant 0 : index
    %314 = vector.load %arg5[%c1_251, %c0_252, %c0_253] : memref<9x16x16xbf16, #tpu.memory_space<vmem>>, vector<1x16x16xbf16>
    %315 = vector.shape_cast %314 : vector<1x16x16xbf16> to vector<16x16xbf16>
    %cst_254 = arith.constant dense<0.000000e+00> : vector<16x128xf32>
    %316 = tpu.matmul %315, %313, %cst_254 {dimension_numbers = #tpu.dot_dimension_numbers<[1], [0], [0], [1], [0, 0, 1, 1], [], []>} : vector<16x16xbf16>, vector<16x128xbf16>, vector<16x128xf32> -> vector<16x128xf32>
    %c1_255 = arith.constant 1 : index
    %c0_256 = arith.constant 0 : index
    %317 = vector.load %arg19[%c1_255, %c0_256] : memref<9x128xf32, #tpu.memory_space<vmem>>, vector<1x128xf32>
    %318 = vector.broadcast %317 : vector<1x128xf32> to vector<16x128xf32>
    %319 = arith.mulf %316, %318 : vector<16x128xf32>
    %320 = arith.addf %312, %319 : vector<16x128xf32>
    %c0_257 = arith.constant 0 : index
    %c121_258 = arith.constant 121 : index
    %321 = vector.load %arg22[%c0_257, %c121_258] : memref<16x768xbf16, #tpu.memory_space<vmem>>, vector<16x128xbf16>
    %c2_259 = arith.constant 2 : index
    %c0_260 = arith.constant 0 : index
    %c0_261 = arith.constant 0 : index
    %322 = vector.load %arg5[%c2_259, %c0_260, %c0_261] : memref<9x16x16xbf16, #tpu.memory_space<vmem>>, vector<1x16x16xbf16>
    %323 = vector.shape_cast %322 : vector<1x16x16xbf16> to vector<16x16xbf16>
    %cst_262 = arith.constant dense<0.000000e+00> : vector<16x128xf32>
    %324 = tpu.matmul %323, %321, %cst_262 {dimension_numbers = #tpu.dot_dimension_numbers<[1], [0], [0], [1], [0, 0, 1, 1], [], []>} : vector<16x16xbf16>, vector<16x128xbf16>, vector<16x128xf32> -> vector<16x128xf32>
    %c2_263 = arith.constant 2 : index
    %c0_264 = arith.constant 0 : index
    %325 = vector.load %arg19[%c2_263, %c0_264] : memref<9x128xf32, #tpu.memory_space<vmem>>, vector<1x128xf32>
    %326 = vector.broadcast %325 : vector<1x128xf32> to vector<16x128xf32>
    %327 = arith.mulf %324, %326 : vector<16x128xf32>
    %328 = arith.addf %320, %327 : vector<16x128xf32>
    %c0_265 = arith.constant 0 : index
    %c127_266 = arith.constant 127 : index
    %329 = vector.load %arg22[%c0_265, %c127_266] : memref<16x768xbf16, #tpu.memory_space<vmem>>, vector<16x128xbf16>
    %c3_267 = arith.constant 3 : index
    %c0_268 = arith.constant 0 : index
    %c0_269 = arith.constant 0 : index
    %330 = vector.load %arg5[%c3_267, %c0_268, %c0_269] : memref<9x16x16xbf16, #tpu.memory_space<vmem>>, vector<1x16x16xbf16>
    %331 = vector.shape_cast %330 : vector<1x16x16xbf16> to vector<16x16xbf16>
    %cst_270 = arith.constant dense<0.000000e+00> : vector<16x128xf32>
    %332 = tpu.matmul %331, %329, %cst_270 {dimension_numbers = #tpu.dot_dimension_numbers<[1], [0], [0], [1], [0, 0, 1, 1], [], []>} : vector<16x16xbf16>, vector<16x128xbf16>, vector<16x128xf32> -> vector<16x128xf32>
    %c3_271 = arith.constant 3 : index
    %c0_272 = arith.constant 0 : index
    %333 = vector.load %arg19[%c3_271, %c0_272] : memref<9x128xf32, #tpu.memory_space<vmem>>, vector<1x128xf32>
    %334 = vector.broadcast %333 : vector<1x128xf32> to vector<16x128xf32>
    %335 = arith.mulf %332, %334 : vector<16x128xf32>
    %336 = arith.addf %328, %335 : vector<16x128xf32>
    %c0_273 = arith.constant 0 : index
    %c128_274 = arith.constant 128 : index
    %337 = vector.load %arg22[%c0_273, %c128_274] : memref<16x768xbf16, #tpu.memory_space<vmem>>, vector<16x128xbf16>
    %c4_275 = arith.constant 4 : index
    %c0_276 = arith.constant 0 : index
    %c0_277 = arith.constant 0 : index
    %338 = vector.load %arg5[%c4_275, %c0_276, %c0_277] : memref<9x16x16xbf16, #tpu.memory_space<vmem>>, vector<1x16x16xbf16>
    %339 = vector.shape_cast %338 : vector<1x16x16xbf16> to vector<16x16xbf16>
    %cst_278 = arith.constant dense<0.000000e+00> : vector<16x128xf32>
    %340 = tpu.matmul %339, %337, %cst_278 {dimension_numbers = #tpu.dot_dimension_numbers<[1], [0], [0], [1], [0, 0, 1, 1], [], []>} : vector<16x16xbf16>, vector<16x128xbf16>, vector<16x128xf32> -> vector<16x128xf32>
    %341 = arith.addf %336, %340 : vector<16x128xf32>
    %c0_279 = arith.constant 0 : index
    %c129_280 = arith.constant 129 : index
    %342 = vector.load %arg22[%c0_279, %c129_280] : memref<16x768xbf16, #tpu.memory_space<vmem>>, vector<16x128xbf16>
    %c5_281 = arith.constant 5 : index
    %c0_282 = arith.constant 0 : index
    %c0_283 = arith.constant 0 : index
    %343 = vector.load %arg5[%c5_281, %c0_282, %c0_283] : memref<9x16x16xbf16, #tpu.memory_space<vmem>>, vector<1x16x16xbf16>
    %344 = vector.shape_cast %343 : vector<1x16x16xbf16> to vector<16x16xbf16>
    %cst_284 = arith.constant dense<0.000000e+00> : vector<16x128xf32>
    %345 = tpu.matmul %344, %342, %cst_284 {dimension_numbers = #tpu.dot_dimension_numbers<[1], [0], [0], [1], [0, 0, 1, 1], [], []>} : vector<16x16xbf16>, vector<16x128xbf16>, vector<16x128xf32> -> vector<16x128xf32>
    %c5_285 = arith.constant 5 : index
    %c0_286 = arith.constant 0 : index
    %346 = vector.load %arg19[%c5_285, %c0_286] : memref<9x128xf32, #tpu.memory_space<vmem>>, vector<1x128xf32>
    %347 = vector.broadcast %346 : vector<1x128xf32> to vector<16x128xf32>
    %348 = arith.mulf %345, %347 : vector<16x128xf32>
    %349 = arith.addf %341, %348 : vector<16x128xf32>
    %c0_287 = arith.constant 0 : index
    %c135_288 = arith.constant 135 : index
    %350 = vector.load %arg22[%c0_287, %c135_288] : memref<16x768xbf16, #tpu.memory_space<vmem>>, vector<16x128xbf16>
    %c6_289 = arith.constant 6 : index
    %c0_290 = arith.constant 0 : index
    %c0_291 = arith.constant 0 : index
    %351 = vector.load %arg5[%c6_289, %c0_290, %c0_291] : memref<9x16x16xbf16, #tpu.memory_space<vmem>>, vector<1x16x16xbf16>
    %352 = vector.shape_cast %351 : vector<1x16x16xbf16> to vector<16x16xbf16>
    %cst_292 = arith.constant dense<0.000000e+00> : vector<16x128xf32>
    %353 = tpu.matmul %352, %350, %cst_292 {dimension_numbers = #tpu.dot_dimension_numbers<[1], [0], [0], [1], [0, 0, 1, 1], [], []>} : vector<16x16xbf16>, vector<16x128xbf16>, vector<16x128xf32> -> vector<16x128xf32>
    %c6_293 = arith.constant 6 : index
    %c0_294 = arith.constant 0 : index
    %354 = vector.load %arg19[%c6_293, %c0_294] : memref<9x128xf32, #tpu.memory_space<vmem>>, vector<1x128xf32>
    %355 = vector.broadcast %354 : vector<1x128xf32> to vector<16x128xf32>
    %356 = arith.mulf %353, %355 : vector<16x128xf32>
    %357 = arith.addf %349, %356 : vector<16x128xf32>
    %c0_295 = arith.constant 0 : index
    %c136_296 = arith.constant 136 : index
    %358 = vector.load %arg22[%c0_295, %c136_296] : memref<16x768xbf16, #tpu.memory_space<vmem>>, vector<16x128xbf16>
    %c7_297 = arith.constant 7 : index
    %c0_298 = arith.constant 0 : index
    %c0_299 = arith.constant 0 : index
    %359 = vector.load %arg5[%c7_297, %c0_298, %c0_299] : memref<9x16x16xbf16, #tpu.memory_space<vmem>>, vector<1x16x16xbf16>
    %360 = vector.shape_cast %359 : vector<1x16x16xbf16> to vector<16x16xbf16>
    %cst_300 = arith.constant dense<0.000000e+00> : vector<16x128xf32>
    %361 = tpu.matmul %360, %358, %cst_300 {dimension_numbers = #tpu.dot_dimension_numbers<[1], [0], [0], [1], [0, 0, 1, 1], [], []>} : vector<16x16xbf16>, vector<16x128xbf16>, vector<16x128xf32> -> vector<16x128xf32>
    %c7_301 = arith.constant 7 : index
    %c0_302 = arith.constant 0 : index
    %362 = vector.load %arg19[%c7_301, %c0_302] : memref<9x128xf32, #tpu.memory_space<vmem>>, vector<1x128xf32>
    %363 = vector.broadcast %362 : vector<1x128xf32> to vector<16x128xf32>
    %364 = arith.mulf %361, %363 : vector<16x128xf32>
    %365 = arith.addf %357, %364 : vector<16x128xf32>
    %c0_303 = arith.constant 0 : index
    %c137_304 = arith.constant 137 : index
    %366 = vector.load %arg22[%c0_303, %c137_304] : memref<16x768xbf16, #tpu.memory_space<vmem>>, vector<16x128xbf16>
    %c8_305 = arith.constant 8 : index
    %c0_306 = arith.constant 0 : index
    %c0_307 = arith.constant 0 : index
    %367 = vector.load %arg5[%c8_305, %c0_306, %c0_307] : memref<9x16x16xbf16, #tpu.memory_space<vmem>>, vector<1x16x16xbf16>
    %368 = vector.shape_cast %367 : vector<1x16x16xbf16> to vector<16x16xbf16>
    %cst_308 = arith.constant dense<0.000000e+00> : vector<16x128xf32>
    %369 = tpu.matmul %368, %366, %cst_308 {dimension_numbers = #tpu.dot_dimension_numbers<[1], [0], [0], [1], [0, 0, 1, 1], [], []>} : vector<16x16xbf16>, vector<16x128xbf16>, vector<16x128xf32> -> vector<16x128xf32>
    %c8_309 = arith.constant 8 : index
    %c0_310 = arith.constant 0 : index
    %370 = vector.load %arg19[%c8_309, %c0_310] : memref<9x128xf32, #tpu.memory_space<vmem>>, vector<1x128xf32>
    %371 = vector.broadcast %370 : vector<1x128xf32> to vector<16x128xf32>
    %372 = arith.mulf %369, %371 : vector<16x128xf32>
    %373 = arith.addf %365, %372 : vector<16x128xf32>
    %cst_311 = arith.constant dense<0.000000e+00> : vector<16xf32>
    %374 = vector.multi_reduction <add>, %373, %cst_311 [1] : vector<16x128xf32> to vector<16xf32>
    %375 = vector.shape_cast %374 : vector<16xf32> to vector<16x1xf32>
    %376 = arith.mulf %373, %373 : vector<16x128xf32>
    %cst_312 = arith.constant dense<0.000000e+00> : vector<16xf32>
    %377 = vector.multi_reduction <add>, %376, %cst_312 [1] : vector<16x128xf32> to vector<16xf32>
    %378 = vector.shape_cast %377 : vector<16xf32> to vector<16x1xf32>
    %cst_313 = arith.constant 7.812500e-03 : f32
    %379 = vector.broadcast %cst_313 : f32 to vector<16x1xf32>
    %380 = arith.mulf %375, %379 : vector<16x1xf32>
    %cst_314 = arith.constant 7.812500e-03 : f32
    %381 = vector.broadcast %cst_314 : f32 to vector<16x1xf32>
    %382 = arith.mulf %378, %381 : vector<16x1xf32>
    %383 = arith.mulf %380, %380 : vector<16x1xf32>
    %384 = arith.subf %382, %383 : vector<16x1xf32>
    %c0_315 = arith.constant 0 : index
    %c0_316 = arith.constant 0 : index
    %385 = vector.load %arg13[%c0_315, %c0_316] : memref<16x2xf32, #tpu.memory_space<vmem>>, vector<16x1xf32>
    %cst_317 = arith.constant 9.99999974E-6 : f32
    %386 = vector.broadcast %cst_317 : f32 to vector<16x1xf32>
    %387 = arith.addf %384, %386 : vector<16x1xf32>
    %388 = math.rsqrt %387 : vector<16x1xf32>
    %389 = arith.mulf %385, %388 : vector<16x1xf32>
    %c0_318 = arith.constant 0 : index
    %c1_319 = arith.constant 1 : index
    %390 = vector.load %arg13[%c0_318, %c1_319] : memref<16x2xf32, #tpu.memory_space<vmem>>, vector<16x1xf32>
    %391 = arith.mulf %380, %389 : vector<16x1xf32>
    %392 = arith.subf %390, %391 : vector<16x1xf32>
    %393 = vector.broadcast %389 : vector<16x1xf32> to vector<16x128xf32>
    %394 = arith.mulf %373, %393 : vector<16x128xf32>
    %395 = vector.broadcast %392 : vector<16x1xf32> to vector<16x128xf32>
    %396 = arith.addf %394, %395 : vector<16x128xf32>
    %cst_320 = arith.constant 0.000000e+00 : f32
    %397 = vector.broadcast %cst_320 : f32 to vector<16x128xf32>
    %398 = arith.maximumf %396, %397 : vector<16x128xf32>
    %399 = arith.truncf %398 : vector<16x128xf32> to vector<16x128xbf16>
    %c0_321 = arith.constant 0 : index
    %c128_322 = arith.constant 128 : index
    %400 = vector.load %arg22[%c0_321, %c128_322] : memref<16x768xbf16, #tpu.memory_space<vmem>>, vector<16x128xbf16>
    tpu.vector_store %arg22[%c0_321, %c128_322], %399 {strides = array<i32>} : memref<16x768xbf16, #tpu.memory_space<vmem>>, vector<16x128xbf16>,
    %c0_323 = arith.constant 0 : index
    %c119_324 = arith.constant 119 : index
    %401 = vector.load %arg22[%c0_323, %c119_324] : memref<16x768xbf16, #tpu.memory_space<vmem>>, vector<16x128xbf16>
    %c0_325 = arith.constant 0 : index
    %c0_326 = arith.constant 0 : index
    %c0_327 = arith.constant 0 : index
    %402 = vector.load %arg6[%c0_325, %c0_326, %c0_327] : memref<9x16x16xbf16, #tpu.memory_space<vmem>>, vector<1x16x16xbf16>
    %403 = vector.shape_cast %402 : vector<1x16x16xbf16> to vector<16x16xbf16>
    %cst_328 = arith.constant dense<0.000000e+00> : vector<16x128xf32>
    %404 = tpu.matmul %403, %401, %cst_328 {dimension_numbers = #tpu.dot_dimension_numbers<[1], [0], [0], [1], [0, 0, 1, 1], [], []>} : vector<16x16xbf16>, vector<16x128xbf16>, vector<16x128xf32> -> vector<16x128xf32>
    %c0_329 = arith.constant 0 : index
    %c0_330 = arith.constant 0 : index
    %405 = vector.load %arg19[%c0_329, %c0_330] : memref<9x128xf32, #tpu.memory_space<vmem>>, vector<1x128xf32>
    %406 = vector.broadcast %405 : vector<1x128xf32> to vector<16x128xf32>
    %407 = arith.mulf %404, %406 : vector<16x128xf32>
    %c0_331 = arith.constant 0 : index
    %c120_332 = arith.constant 120 : index
    %408 = vector.load %arg22[%c0_331, %c120_332] : memref<16x768xbf16, #tpu.memory_space<vmem>>, vector<16x128xbf16>
    %c1_333 = arith.constant 1 : index
    %c0_334 = arith.constant 0 : index
    %c0_335 = arith.constant 0 : index
    %409 = vector.load %arg6[%c1_333, %c0_334, %c0_335] : memref<9x16x16xbf16, #tpu.memory_space<vmem>>, vector<1x16x16xbf16>
    %410 = vector.shape_cast %409 : vector<1x16x16xbf16> to vector<16x16xbf16>
    %cst_336 = arith.constant dense<0.000000e+00> : vector<16x128xf32>
    %411 = tpu.matmul %410, %408, %cst_336 {dimension_numbers = #tpu.dot_dimension_numbers<[1], [0], [0], [1], [0, 0, 1, 1], [], []>} : vector<16x16xbf16>, vector<16x128xbf16>, vector<16x128xf32> -> vector<16x128xf32>
    %c1_337 = arith.constant 1 : index
    %c0_338 = arith.constant 0 : index
    %412 = vector.load %arg19[%c1_337, %c0_338] : memref<9x128xf32, #tpu.memory_space<vmem>>, vector<1x128xf32>
    %413 = vector.broadcast %412 : vector<1x128xf32> to vector<16x128xf32>
    %414 = arith.mulf %411, %413 : vector<16x128xf32>
    %415 = arith.addf %407, %414 : vector<16x128xf32>
    %c0_339 = arith.constant 0 : index
    %c121_340 = arith.constant 121 : index
    %416 = vector.load %arg22[%c0_339, %c121_340] : memref<16x768xbf16, #tpu.memory_space<vmem>>, vector<16x128xbf16>
    %c2_341 = arith.constant 2 : index
    %c0_342 = arith.constant 0 : index
    %c0_343 = arith.constant 0 : index
    %417 = vector.load %arg6[%c2_341, %c0_342, %c0_343] : memref<9x16x16xbf16, #tpu.memory_space<vmem>>, vector<1x16x16xbf16>
    %418 = vector.shape_cast %417 : vector<1x16x16xbf16> to vector<16x16xbf16>
    %cst_344 = arith.constant dense<0.000000e+00> : vector<16x128xf32>
    %419 = tpu.matmul %418, %416, %cst_344 {dimension_numbers = #tpu.dot_dimension_numbers<[1], [0], [0], [1], [0, 0, 1, 1], [], []>} : vector<16x16xbf16>, vector<16x128xbf16>, vector<16x128xf32> -> vector<16x128xf32>
    %c2_345 = arith.constant 2 : index
    %c0_346 = arith.constant 0 : index
    %420 = vector.load %arg19[%c2_345, %c0_346] : memref<9x128xf32, #tpu.memory_space<vmem>>, vector<1x128xf32>
    %421 = vector.broadcast %420 : vector<1x128xf32> to vector<16x128xf32>
    %422 = arith.mulf %419, %421 : vector<16x128xf32>
    %423 = arith.addf %415, %422 : vector<16x128xf32>
    %c0_347 = arith.constant 0 : index
    %c127_348 = arith.constant 127 : index
    %424 = vector.load %arg22[%c0_347, %c127_348] : memref<16x768xbf16, #tpu.memory_space<vmem>>, vector<16x128xbf16>
    %c3_349 = arith.constant 3 : index
    %c0_350 = arith.constant 0 : index
    %c0_351 = arith.constant 0 : index
    %425 = vector.load %arg6[%c3_349, %c0_350, %c0_351] : memref<9x16x16xbf16, #tpu.memory_space<vmem>>, vector<1x16x16xbf16>
    %426 = vector.shape_cast %425 : vector<1x16x16xbf16> to vector<16x16xbf16>
    %cst_352 = arith.constant dense<0.000000e+00> : vector<16x128xf32>
    %427 = tpu.matmul %426, %424, %cst_352 {dimension_numbers = #tpu.dot_dimension_numbers<[1], [0], [0], [1], [0, 0, 1, 1], [], []>} : vector<16x16xbf16>, vector<16x128xbf16>, vector<16x128xf32> -> vector<16x128xf32>
    %c3_353 = arith.constant 3 : index
    %c0_354 = arith.constant 0 : index
    %428 = vector.load %arg19[%c3_353, %c0_354] : memref<9x128xf32, #tpu.memory_space<vmem>>, vector<1x128xf32>
    %429 = vector.broadcast %428 : vector<1x128xf32> to vector<16x128xf32>
    %430 = arith.mulf %427, %429 : vector<16x128xf32>
    %431 = arith.addf %423, %430 : vector<16x128xf32>
    %c0_355 = arith.constant 0 : index
    %c128_356 = arith.constant 128 : index
    %432 = vector.load %arg22[%c0_355, %c128_356] : memref<16x768xbf16, #tpu.memory_space<vmem>>, vector<16x128xbf16>
    %c4_357 = arith.constant 4 : index
    %c0_358 = arith.constant 0 : index
    %c0_359 = arith.constant 0 : index
    %433 = vector.load %arg6[%c4_357, %c0_358, %c0_359] : memref<9x16x16xbf16, #tpu.memory_space<vmem>>, vector<1x16x16xbf16>
    %434 = vector.shape_cast %433 : vector<1x16x16xbf16> to vector<16x16xbf16>
    %cst_360 = arith.constant dense<0.000000e+00> : vector<16x128xf32>
    %435 = tpu.matmul %434, %432, %cst_360 {dimension_numbers = #tpu.dot_dimension_numbers<[1], [0], [0], [1], [0, 0, 1, 1], [], []>} : vector<16x16xbf16>, vector<16x128xbf16>, vector<16x128xf32> -> vector<16x128xf32>
    %436 = arith.addf %431, %435 : vector<16x128xf32>
    %c0_361 = arith.constant 0 : index
    %c129_362 = arith.constant 129 : index
    %437 = vector.load %arg22[%c0_361, %c129_362] : memref<16x768xbf16, #tpu.memory_space<vmem>>, vector<16x128xbf16>
    %c5_363 = arith.constant 5 : index
    %c0_364 = arith.constant 0 : index
    %c0_365 = arith.constant 0 : index
    %438 = vector.load %arg6[%c5_363, %c0_364, %c0_365] : memref<9x16x16xbf16, #tpu.memory_space<vmem>>, vector<1x16x16xbf16>
    %439 = vector.shape_cast %438 : vector<1x16x16xbf16> to vector<16x16xbf16>
    %cst_366 = arith.constant dense<0.000000e+00> : vector<16x128xf32>
    %440 = tpu.matmul %439, %437, %cst_366 {dimension_numbers = #tpu.dot_dimension_numbers<[1], [0], [0], [1], [0, 0, 1, 1], [], []>} : vector<16x16xbf16>, vector<16x128xbf16>, vector<16x128xf32> -> vector<16x128xf32>
    %c5_367 = arith.constant 5 : index
    %c0_368 = arith.constant 0 : index
    %441 = vector.load %arg19[%c5_367, %c0_368] : memref<9x128xf32, #tpu.memory_space<vmem>>, vector<1x128xf32>
    %442 = vector.broadcast %441 : vector<1x128xf32> to vector<16x128xf32>
    %443 = arith.mulf %440, %442 : vector<16x128xf32>
    %444 = arith.addf %436, %443 : vector<16x128xf32>
    %c0_369 = arith.constant 0 : index
    %c135_370 = arith.constant 135 : index
    %445 = vector.load %arg22[%c0_369, %c135_370] : memref<16x768xbf16, #tpu.memory_space<vmem>>, vector<16x128xbf16>
    %c6_371 = arith.constant 6 : index
    %c0_372 = arith.constant 0 : index
    %c0_373 = arith.constant 0 : index
    %446 = vector.load %arg6[%c6_371, %c0_372, %c0_373] : memref<9x16x16xbf16, #tpu.memory_space<vmem>>, vector<1x16x16xbf16>
    %447 = vector.shape_cast %446 : vector<1x16x16xbf16> to vector<16x16xbf16>
    %cst_374 = arith.constant dense<0.000000e+00> : vector<16x128xf32>
    %448 = tpu.matmul %447, %445, %cst_374 {dimension_numbers = #tpu.dot_dimension_numbers<[1], [0], [0], [1], [0, 0, 1, 1], [], []>} : vector<16x16xbf16>, vector<16x128xbf16>, vector<16x128xf32> -> vector<16x128xf32>
    %c6_375 = arith.constant 6 : index
    %c0_376 = arith.constant 0 : index
    %449 = vector.load %arg19[%c6_375, %c0_376] : memref<9x128xf32, #tpu.memory_space<vmem>>, vector<1x128xf32>
    %450 = vector.broadcast %449 : vector<1x128xf32> to vector<16x128xf32>
    %451 = arith.mulf %448, %450 : vector<16x128xf32>
    %452 = arith.addf %444, %451 : vector<16x128xf32>
    %c0_377 = arith.constant 0 : index
    %c136_378 = arith.constant 136 : index
    %453 = vector.load %arg22[%c0_377, %c136_378] : memref<16x768xbf16, #tpu.memory_space<vmem>>, vector<16x128xbf16>
    %c7_379 = arith.constant 7 : index
    %c0_380 = arith.constant 0 : index
    %c0_381 = arith.constant 0 : index
    %454 = vector.load %arg6[%c7_379, %c0_380, %c0_381] : memref<9x16x16xbf16, #tpu.memory_space<vmem>>, vector<1x16x16xbf16>
    %455 = vector.shape_cast %454 : vector<1x16x16xbf16> to vector<16x16xbf16>
    %cst_382 = arith.constant dense<0.000000e+00> : vector<16x128xf32>
    %456 = tpu.matmul %455, %453, %cst_382 {dimension_numbers = #tpu.dot_dimension_numbers<[1], [0], [0], [1], [0, 0, 1, 1], [], []>} : vector<16x16xbf16>, vector<16x128xbf16>, vector<16x128xf32> -> vector<16x128xf32>
    %c7_383 = arith.constant 7 : index
    %c0_384 = arith.constant 0 : index
    %457 = vector.load %arg19[%c7_383, %c0_384] : memref<9x128xf32, #tpu.memory_space<vmem>>, vector<1x128xf32>
    %458 = vector.broadcast %457 : vector<1x128xf32> to vector<16x128xf32>
    %459 = arith.mulf %456, %458 : vector<16x128xf32>
    %460 = arith.addf %452, %459 : vector<16x128xf32>
    %c0_385 = arith.constant 0 : index
    %c137_386 = arith.constant 137 : index
    %461 = vector.load %arg22[%c0_385, %c137_386] : memref<16x768xbf16, #tpu.memory_space<vmem>>, vector<16x128xbf16>
    %c8_387 = arith.constant 8 : index
    %c0_388 = arith.constant 0 : index
    %c0_389 = arith.constant 0 : index
    %462 = vector.load %arg6[%c8_387, %c0_388, %c0_389] : memref<9x16x16xbf16, #tpu.memory_space<vmem>>, vector<1x16x16xbf16>
    %463 = vector.shape_cast %462 : vector<1x16x16xbf16> to vector<16x16xbf16>
    %cst_390 = arith.constant dense<0.000000e+00> : vector<16x128xf32>
    %464 = tpu.matmul %463, %461, %cst_390 {dimension_numbers = #tpu.dot_dimension_numbers<[1], [0], [0], [1], [0, 0, 1, 1], [], []>} : vector<16x16xbf16>, vector<16x128xbf16>, vector<16x128xf32> -> vector<16x128xf32>
    %c8_391 = arith.constant 8 : index
    %c0_392 = arith.constant 0 : index
    %465 = vector.load %arg19[%c8_391, %c0_392] : memref<9x128xf32, #tpu.memory_space<vmem>>, vector<1x128xf32>
    %466 = vector.broadcast %465 : vector<1x128xf32> to vector<16x128xf32>
    %467 = arith.mulf %464, %466 : vector<16x128xf32>
    %468 = arith.addf %460, %467 : vector<16x128xf32>
    %cst_393 = arith.constant dense<0.000000e+00> : vector<16xf32>
    %469 = vector.multi_reduction <add>, %468, %cst_393 [1] : vector<16x128xf32> to vector<16xf32>
    %470 = vector.shape_cast %469 : vector<16xf32> to vector<16x1xf32>
    %471 = arith.mulf %468, %468 : vector<16x128xf32>
    %cst_394 = arith.constant dense<0.000000e+00> : vector<16xf32>
    %472 = vector.multi_reduction <add>, %471, %cst_394 [1] : vector<16x128xf32> to vector<16xf32>
    %473 = vector.shape_cast %472 : vector<16xf32> to vector<16x1xf32>
    %cst_395 = arith.constant 7.812500e-03 : f32
    %474 = vector.broadcast %cst_395 : f32 to vector<16x1xf32>
    %475 = arith.mulf %470, %474 : vector<16x1xf32>
    %cst_396 = arith.constant 7.812500e-03 : f32
    %476 = vector.broadcast %cst_396 : f32 to vector<16x1xf32>
    %477 = arith.mulf %473, %476 : vector<16x1xf32>
    %478 = arith.mulf %475, %475 : vector<16x1xf32>
    %479 = arith.subf %477, %478 : vector<16x1xf32>
    %c0_397 = arith.constant 0 : index
    %c0_398 = arith.constant 0 : index
    %480 = vector.load %arg14[%c0_397, %c0_398] : memref<16x2xf32, #tpu.memory_space<vmem>>, vector<16x1xf32>
    %cst_399 = arith.constant 9.99999974E-6 : f32
    %481 = vector.broadcast %cst_399 : f32 to vector<16x1xf32>
    %482 = arith.addf %479, %481 : vector<16x1xf32>
    %483 = math.rsqrt %482 : vector<16x1xf32>
    %484 = arith.mulf %480, %483 : vector<16x1xf32>
    %c0_400 = arith.constant 0 : index
    %c1_401 = arith.constant 1 : index
    %485 = vector.load %arg14[%c0_400, %c1_401] : memref<16x2xf32, #tpu.memory_space<vmem>>, vector<16x1xf32>
    %486 = arith.mulf %475, %484 : vector<16x1xf32>
    %487 = arith.subf %485, %486 : vector<16x1xf32>
    %488 = vector.broadcast %484 : vector<16x1xf32> to vector<16x128xf32>
    %489 = arith.mulf %468, %488 : vector<16x128xf32>
    %490 = vector.broadcast %487 : vector<16x1xf32> to vector<16x128xf32>
    %491 = arith.addf %489, %490 : vector<16x128xf32>
    %cst_402 = arith.constant 0.000000e+00 : f32
    %492 = vector.broadcast %cst_402 : f32 to vector<16x128xf32>
    %493 = arith.maximumf %491, %492 : vector<16x128xf32>
    %494 = arith.truncf %493 : vector<16x128xf32> to vector<16x128xbf16>
    %c0_403 = arith.constant 0 : index
    %c128_404 = arith.constant 128 : index
    %495 = vector.load %arg22[%c0_403, %c128_404] : memref<16x768xbf16, #tpu.memory_space<vmem>>, vector<16x128xbf16>
    tpu.vector_store %arg22[%c0_403, %c128_404], %494 {strides = array<i32>} : memref<16x768xbf16, #tpu.memory_space<vmem>>, vector<16x128xbf16>,
    %c0_405 = arith.constant 0 : index
    %c119_406 = arith.constant 119 : index
    %496 = vector.load %arg22[%c0_405, %c119_406] : memref<16x768xbf16, #tpu.memory_space<vmem>>, vector<16x128xbf16>
    %c0_407 = arith.constant 0 : index
    %c0_408 = arith.constant 0 : index
    %c0_409 = arith.constant 0 : index
    %497 = vector.load %arg7[%c0_407, %c0_408, %c0_409] : memref<9x16x16xbf16, #tpu.memory_space<vmem>>, vector<1x16x16xbf16>
    %498 = vector.shape_cast %497 : vector<1x16x16xbf16> to vector<16x16xbf16>
    %cst_410 = arith.constant dense<0.000000e+00> : vector<16x128xf32>
    %499 = tpu.matmul %498, %496, %cst_410 {dimension_numbers = #tpu.dot_dimension_numbers<[1], [0], [0], [1], [0, 0, 1, 1], [], []>} : vector<16x16xbf16>, vector<16x128xbf16>, vector<16x128xf32> -> vector<16x128xf32>
    %c0_411 = arith.constant 0 : index
    %c0_412 = arith.constant 0 : index
    %500 = vector.load %arg19[%c0_411, %c0_412] : memref<9x128xf32, #tpu.memory_space<vmem>>, vector<1x128xf32>
    %501 = vector.broadcast %500 : vector<1x128xf32> to vector<16x128xf32>
    %502 = arith.mulf %499, %501 : vector<16x128xf32>
    %c0_413 = arith.constant 0 : index
    %c120_414 = arith.constant 120 : index
    %503 = vector.load %arg22[%c0_413, %c120_414] : memref<16x768xbf16, #tpu.memory_space<vmem>>, vector<16x128xbf16>
    %c1_415 = arith.constant 1 : index
    %c0_416 = arith.constant 0 : index
    %c0_417 = arith.constant 0 : index
    %504 = vector.load %arg7[%c1_415, %c0_416, %c0_417] : memref<9x16x16xbf16, #tpu.memory_space<vmem>>, vector<1x16x16xbf16>
    %505 = vector.shape_cast %504 : vector<1x16x16xbf16> to vector<16x16xbf16>
    %cst_418 = arith.constant dense<0.000000e+00> : vector<16x128xf32>
    %506 = tpu.matmul %505, %503, %cst_418 {dimension_numbers = #tpu.dot_dimension_numbers<[1], [0], [0], [1], [0, 0, 1, 1], [], []>} : vector<16x16xbf16>, vector<16x128xbf16>, vector<16x128xf32> -> vector<16x128xf32>
    %c1_419 = arith.constant 1 : index
    %c0_420 = arith.constant 0 : index
    %507 = vector.load %arg19[%c1_419, %c0_420] : memref<9x128xf32, #tpu.memory_space<vmem>>, vector<1x128xf32>
    %508 = vector.broadcast %507 : vector<1x128xf32> to vector<16x128xf32>
    %509 = arith.mulf %506, %508 : vector<16x128xf32>
    %510 = arith.addf %502, %509 : vector<16x128xf32>
    %c0_421 = arith.constant 0 : index
    %c121_422 = arith.constant 121 : index
    %511 = vector.load %arg22[%c0_421, %c121_422] : memref<16x768xbf16, #tpu.memory_space<vmem>>, vector<16x128xbf16>
    %c2_423 = arith.constant 2 : index
    %c0_424 = arith.constant 0 : index
    %c0_425 = arith.constant 0 : index
    %512 = vector.load %arg7[%c2_423, %c0_424, %c0_425] : memref<9x16x16xbf16, #tpu.memory_space<vmem>>, vector<1x16x16xbf16>
    %513 = vector.shape_cast %512 : vector<1x16x16xbf16> to vector<16x16xbf16>
    %cst_426 = arith.constant dense<0.000000e+00> : vector<16x128xf32>
    %514 = tpu.matmul %513, %511, %cst_426 {dimension_numbers = #tpu.dot_dimension_numbers<[1], [0], [0], [1], [0, 0, 1, 1], [], []>} : vector<16x16xbf16>, vector<16x128xbf16>, vector<16x128xf32> -> vector<16x128xf32>
    %c2_427 = arith.constant 2 : index
    %c0_428 = arith.constant 0 : index
    %515 = vector.load %arg19[%c2_427, %c0_428] : memref<9x128xf32, #tpu.memory_space<vmem>>, vector<1x128xf32>
    %516 = vector.broadcast %515 : vector<1x128xf32> to vector<16x128xf32>
    %517 = arith.mulf %514, %516 : vector<16x128xf32>
    %518 = arith.addf %510, %517 : vector<16x128xf32>
    %c0_429 = arith.constant 0 : index
    %c127_430 = arith.constant 127 : index
    %519 = vector.load %arg22[%c0_429, %c127_430] : memref<16x768xbf16, #tpu.memory_space<vmem>>, vector<16x128xbf16>
    %c3_431 = arith.constant 3 : index
    %c0_432 = arith.constant 0 : index
    %c0_433 = arith.constant 0 : index
    %520 = vector.load %arg7[%c3_431, %c0_432, %c0_433] : memref<9x16x16xbf16, #tpu.memory_space<vmem>>, vector<1x16x16xbf16>
    %521 = vector.shape_cast %520 : vector<1x16x16xbf16> to vector<16x16xbf16>
    %cst_434 = arith.constant dense<0.000000e+00> : vector<16x128xf32>
    %522 = tpu.matmul %521, %519, %cst_434 {dimension_numbers = #tpu.dot_dimension_numbers<[1], [0], [0], [1], [0, 0, 1, 1], [], []>} : vector<16x16xbf16>, vector<16x128xbf16>, vector<16x128xf32> -> vector<16x128xf32>
    %c3_435 = arith.constant 3 : index
    %c0_436 = arith.constant 0 : index
    %523 = vector.load %arg19[%c3_435, %c0_436] : memref<9x128xf32, #tpu.memory_space<vmem>>, vector<1x128xf32>
    %524 = vector.broadcast %523 : vector<1x128xf32> to vector<16x128xf32>
    %525 = arith.mulf %522, %524 : vector<16x128xf32>
    %526 = arith.addf %518, %525 : vector<16x128xf32>
    %c0_437 = arith.constant 0 : index
    %c128_438 = arith.constant 128 : index
    %527 = vector.load %arg22[%c0_437, %c128_438] : memref<16x768xbf16, #tpu.memory_space<vmem>>, vector<16x128xbf16>
    %c4_439 = arith.constant 4 : index
    %c0_440 = arith.constant 0 : index
    %c0_441 = arith.constant 0 : index
    %528 = vector.load %arg7[%c4_439, %c0_440, %c0_441] : memref<9x16x16xbf16, #tpu.memory_space<vmem>>, vector<1x16x16xbf16>
    %529 = vector.shape_cast %528 : vector<1x16x16xbf16> to vector<16x16xbf16>
    %cst_442 = arith.constant dense<0.000000e+00> : vector<16x128xf32>
    %530 = tpu.matmul %529, %527, %cst_442 {dimension_numbers = #tpu.dot_dimension_numbers<[1], [0], [0], [1], [0, 0, 1, 1], [], []>} : vector<16x16xbf16>, vector<16x128xbf16>, vector<16x128xf32> -> vector<16x128xf32>
    %531 = arith.addf %526, %530 : vector<16x128xf32>
    %c0_443 = arith.constant 0 : index
    %c129_444 = arith.constant 129 : index
    %532 = vector.load %arg22[%c0_443, %c129_444] : memref<16x768xbf16, #tpu.memory_space<vmem>>, vector<16x128xbf16>
    %c5_445 = arith.constant 5 : index
    %c0_446 = arith.constant 0 : index
    %c0_447 = arith.constant 0 : index
    %533 = vector.load %arg7[%c5_445, %c0_446, %c0_447] : memref<9x16x16xbf16, #tpu.memory_space<vmem>>, vector<1x16x16xbf16>
    %534 = vector.shape_cast %533 : vector<1x16x16xbf16> to vector<16x16xbf16>
    %cst_448 = arith.constant dense<0.000000e+00> : vector<16x128xf32>
    %535 = tpu.matmul %534, %532, %cst_448 {dimension_numbers = #tpu.dot_dimension_numbers<[1], [0], [0], [1], [0, 0, 1, 1], [], []>} : vector<16x16xbf16>, vector<16x128xbf16>, vector<16x128xf32> -> vector<16x128xf32>
    %c5_449 = arith.constant 5 : index
    %c0_450 = arith.constant 0 : index
    %536 = vector.load %arg19[%c5_449, %c0_450] : memref<9x128xf32, #tpu.memory_space<vmem>>, vector<1x128xf32>
    %537 = vector.broadcast %536 : vector<1x128xf32> to vector<16x128xf32>
    %538 = arith.mulf %535, %537 : vector<16x128xf32>
    %539 = arith.addf %531, %538 : vector<16x128xf32>
    %c0_451 = arith.constant 0 : index
    %c135_452 = arith.constant 135 : index
    %540 = vector.load %arg22[%c0_451, %c135_452] : memref<16x768xbf16, #tpu.memory_space<vmem>>, vector<16x128xbf16>
    %c6_453 = arith.constant 6 : index
    %c0_454 = arith.constant 0 : index
    %c0_455 = arith.constant 0 : index
    %541 = vector.load %arg7[%c6_453, %c0_454, %c0_455] : memref<9x16x16xbf16, #tpu.memory_space<vmem>>, vector<1x16x16xbf16>
    %542 = vector.shape_cast %541 : vector<1x16x16xbf16> to vector<16x16xbf16>
    %cst_456 = arith.constant dense<0.000000e+00> : vector<16x128xf32>
    %543 = tpu.matmul %542, %540, %cst_456 {dimension_numbers = #tpu.dot_dimension_numbers<[1], [0], [0], [1], [0, 0, 1, 1], [], []>} : vector<16x16xbf16>, vector<16x128xbf16>, vector<16x128xf32> -> vector<16x128xf32>
    %c6_457 = arith.constant 6 : index
    %c0_458 = arith.constant 0 : index
    %544 = vector.load %arg19[%c6_457, %c0_458] : memref<9x128xf32, #tpu.memory_space<vmem>>, vector<1x128xf32>
    %545 = vector.broadcast %544 : vector<1x128xf32> to vector<16x128xf32>
    %546 = arith.mulf %543, %545 : vector<16x128xf32>
    %547 = arith.addf %539, %546 : vector<16x128xf32>
    %c0_459 = arith.constant 0 : index
    %c136_460 = arith.constant 136 : index
    %548 = vector.load %arg22[%c0_459, %c136_460] : memref<16x768xbf16, #tpu.memory_space<vmem>>, vector<16x128xbf16>
    %c7_461 = arith.constant 7 : index
    %c0_462 = arith.constant 0 : index
    %c0_463 = arith.constant 0 : index
    %549 = vector.load %arg7[%c7_461, %c0_462, %c0_463] : memref<9x16x16xbf16, #tpu.memory_space<vmem>>, vector<1x16x16xbf16>
    %550 = vector.shape_cast %549 : vector<1x16x16xbf16> to vector<16x16xbf16>
    %cst_464 = arith.constant dense<0.000000e+00> : vector<16x128xf32>
    %551 = tpu.matmul %550, %548, %cst_464 {dimension_numbers = #tpu.dot_dimension_numbers<[1], [0], [0], [1], [0, 0, 1, 1], [], []>} : vector<16x16xbf16>, vector<16x128xbf16>, vector<16x128xf32> -> vector<16x128xf32>
    %c7_465 = arith.constant 7 : index
    %c0_466 = arith.constant 0 : index
    %552 = vector.load %arg19[%c7_465, %c0_466] : memref<9x128xf32, #tpu.memory_space<vmem>>, vector<1x128xf32>
    %553 = vector.broadcast %552 : vector<1x128xf32> to vector<16x128xf32>
    %554 = arith.mulf %551, %553 : vector<16x128xf32>
    %555 = arith.addf %547, %554 : vector<16x128xf32>
    %c0_467 = arith.constant 0 : index
    %c137_468 = arith.constant 137 : index
    %556 = vector.load %arg22[%c0_467, %c137_468] : memref<16x768xbf16, #tpu.memory_space<vmem>>, vector<16x128xbf16>
    %c8_469 = arith.constant 8 : index
    %c0_470 = arith.constant 0 : index
    %c0_471 = arith.constant 0 : index
    %557 = vector.load %arg7[%c8_469, %c0_470, %c0_471] : memref<9x16x16xbf16, #tpu.memory_space<vmem>>, vector<1x16x16xbf16>
    %558 = vector.shape_cast %557 : vector<1x16x16xbf16> to vector<16x16xbf16>
    %cst_472 = arith.constant dense<0.000000e+00> : vector<16x128xf32>
    %559 = tpu.matmul %558, %556, %cst_472 {dimension_numbers = #tpu.dot_dimension_numbers<[1], [0], [0], [1], [0, 0, 1, 1], [], []>} : vector<16x16xbf16>, vector<16x128xbf16>, vector<16x128xf32> -> vector<16x128xf32>
    %c8_473 = arith.constant 8 : index
    %c0_474 = arith.constant 0 : index
    %560 = vector.load %arg19[%c8_473, %c0_474] : memref<9x128xf32, #tpu.memory_space<vmem>>, vector<1x128xf32>
    %561 = vector.broadcast %560 : vector<1x128xf32> to vector<16x128xf32>
    %562 = arith.mulf %559, %561 : vector<16x128xf32>
    %563 = arith.addf %555, %562 : vector<16x128xf32>
    %cst_475 = arith.constant dense<0.000000e+00> : vector<16xf32>
    %564 = vector.multi_reduction <add>, %563, %cst_475 [1] : vector<16x128xf32> to vector<16xf32>
    %565 = vector.shape_cast %564 : vector<16xf32> to vector<16x1xf32>
    %566 = arith.mulf %563, %563 : vector<16x128xf32>
    %cst_476 = arith.constant dense<0.000000e+00> : vector<16xf32>
    %567 = vector.multi_reduction <add>, %566, %cst_476 [1] : vector<16x128xf32> to vector<16xf32>
    %568 = vector.shape_cast %567 : vector<16xf32> to vector<16x1xf32>
    %cst_477 = arith.constant 7.812500e-03 : f32
    %569 = vector.broadcast %cst_477 : f32 to vector<16x1xf32>
    %570 = arith.mulf %565, %569 : vector<16x1xf32>
    %cst_478 = arith.constant 7.812500e-03 : f32
    %571 = vector.broadcast %cst_478 : f32 to vector<16x1xf32>
    %572 = arith.mulf %568, %571 : vector<16x1xf32>
    %573 = arith.mulf %570, %570 : vector<16x1xf32>
    %574 = arith.subf %572, %573 : vector<16x1xf32>
    %c0_479 = arith.constant 0 : index
    %c0_480 = arith.constant 0 : index
    %575 = vector.load %arg15[%c0_479, %c0_480] : memref<16x2xf32, #tpu.memory_space<vmem>>, vector<16x1xf32>
    %cst_481 = arith.constant 9.99999974E-6 : f32
    %576 = vector.broadcast %cst_481 : f32 to vector<16x1xf32>
    %577 = arith.addf %574, %576 : vector<16x1xf32>
    %578 = math.rsqrt %577 : vector<16x1xf32>
    %579 = arith.mulf %575, %578 : vector<16x1xf32>
    %c0_482 = arith.constant 0 : index
    %c1_483 = arith.constant 1 : index
    %580 = vector.load %arg15[%c0_482, %c1_483] : memref<16x2xf32, #tpu.memory_space<vmem>>, vector<16x1xf32>
    %581 = arith.mulf %570, %579 : vector<16x1xf32>
    %582 = arith.subf %580, %581 : vector<16x1xf32>
    %583 = vector.broadcast %579 : vector<16x1xf32> to vector<16x128xf32>
    %584 = arith.mulf %563, %583 : vector<16x128xf32>
    %585 = vector.broadcast %582 : vector<16x1xf32> to vector<16x128xf32>
    %586 = arith.addf %584, %585 : vector<16x128xf32>
    %cst_484 = arith.constant 0.000000e+00 : f32
    %587 = vector.broadcast %cst_484 : f32 to vector<16x128xf32>
    %588 = arith.maximumf %586, %587 : vector<16x128xf32>
    %589 = arith.truncf %588 : vector<16x128xf32> to vector<16x128xbf16>
    %c0_485 = arith.constant 0 : index
    %c128_486 = arith.constant 128 : index
    %590 = vector.load %arg22[%c0_485, %c128_486] : memref<16x768xbf16, #tpu.memory_space<vmem>>, vector<16x128xbf16>
    tpu.vector_store %arg22[%c0_485, %c128_486], %589 {strides = array<i32>} : memref<16x768xbf16, #tpu.memory_space<vmem>>, vector<16x128xbf16>,
    %c0_487 = arith.constant 0 : index
    %c119_488 = arith.constant 119 : index
    %591 = vector.load %arg22[%c0_487, %c119_488] : memref<16x768xbf16, #tpu.memory_space<vmem>>, vector<16x128xbf16>
    %c0_489 = arith.constant 0 : index
    %c0_490 = arith.constant 0 : index
    %c0_491 = arith.constant 0 : index
    %592 = vector.load %arg8[%c0_489, %c0_490, %c0_491] : memref<9x16x16xbf16, #tpu.memory_space<vmem>>, vector<1x16x16xbf16>
    %593 = vector.shape_cast %592 : vector<1x16x16xbf16> to vector<16x16xbf16>
    %cst_492 = arith.constant dense<0.000000e+00> : vector<16x128xf32>
    %594 = tpu.matmul %593, %591, %cst_492 {dimension_numbers = #tpu.dot_dimension_numbers<[1], [0], [0], [1], [0, 0, 1, 1], [], []>} : vector<16x16xbf16>, vector<16x128xbf16>, vector<16x128xf32> -> vector<16x128xf32>
    %c0_493 = arith.constant 0 : index
    %c0_494 = arith.constant 0 : index
    %595 = vector.load %arg19[%c0_493, %c0_494] : memref<9x128xf32, #tpu.memory_space<vmem>>, vector<1x128xf32>
    %596 = vector.broadcast %595 : vector<1x128xf32> to vector<16x128xf32>
    %597 = arith.mulf %594, %596 : vector<16x128xf32>
    %c0_495 = arith.constant 0 : index
    %c120_496 = arith.constant 120 : index
    %598 = vector.load %arg22[%c0_495, %c120_496] : memref<16x768xbf16, #tpu.memory_space<vmem>>, vector<16x128xbf16>
    %c1_497 = arith.constant 1 : index
    %c0_498 = arith.constant 0 : index
    %c0_499 = arith.constant 0 : index
    %599 = vector.load %arg8[%c1_497, %c0_498, %c0_499] : memref<9x16x16xbf16, #tpu.memory_space<vmem>>, vector<1x16x16xbf16>
    %600 = vector.shape_cast %599 : vector<1x16x16xbf16> to vector<16x16xbf16>
    %cst_500 = arith.constant dense<0.000000e+00> : vector<16x128xf32>
    %601 = tpu.matmul %600, %598, %cst_500 {dimension_numbers = #tpu.dot_dimension_numbers<[1], [0], [0], [1], [0, 0, 1, 1], [], []>} : vector<16x16xbf16>, vector<16x128xbf16>, vector<16x128xf32> -> vector<16x128xf32>
    %c1_501 = arith.constant 1 : index
    %c0_502 = arith.constant 0 : index
    %602 = vector.load %arg19[%c1_501, %c0_502] : memref<9x128xf32, #tpu.memory_space<vmem>>, vector<1x128xf32>
    %603 = vector.broadcast %602 : vector<1x128xf32> to vector<16x128xf32>
    %604 = arith.mulf %601, %603 : vector<16x128xf32>
    %605 = arith.addf %597, %604 : vector<16x128xf32>
    %c0_503 = arith.constant 0 : index
    %c121_504 = arith.constant 121 : index
    %606 = vector.load %arg22[%c0_503, %c121_504] : memref<16x768xbf16, #tpu.memory_space<vmem>>, vector<16x128xbf16>
    %c2_505 = arith.constant 2 : index
    %c0_506 = arith.constant 0 : index
    %c0_507 = arith.constant 0 : index
    %607 = vector.load %arg8[%c2_505, %c0_506, %c0_507] : memref<9x16x16xbf16, #tpu.memory_space<vmem>>, vector<1x16x16xbf16>
    %608 = vector.shape_cast %607 : vector<1x16x16xbf16> to vector<16x16xbf16>
    %cst_508 = arith.constant dense<0.000000e+00> : vector<16x128xf32>
    %609 = tpu.matmul %608, %606, %cst_508 {dimension_numbers = #tpu.dot_dimension_numbers<[1], [0], [0], [1], [0, 0, 1, 1], [], []>} : vector<16x16xbf16>, vector<16x128xbf16>, vector<16x128xf32> -> vector<16x128xf32>
    %c2_509 = arith.constant 2 : index
    %c0_510 = arith.constant 0 : index
    %610 = vector.load %arg19[%c2_509, %c0_510] : memref<9x128xf32, #tpu.memory_space<vmem>>, vector<1x128xf32>
    %611 = vector.broadcast %610 : vector<1x128xf32> to vector<16x128xf32>
    %612 = arith.mulf %609, %611 : vector<16x128xf32>
    %613 = arith.addf %605, %612 : vector<16x128xf32>
    %c0_511 = arith.constant 0 : index
    %c127_512 = arith.constant 127 : index
    %614 = vector.load %arg22[%c0_511, %c127_512] : memref<16x768xbf16, #tpu.memory_space<vmem>>, vector<16x128xbf16>
    %c3_513 = arith.constant 3 : index
    %c0_514 = arith.constant 0 : index
    %c0_515 = arith.constant 0 : index
    %615 = vector.load %arg8[%c3_513, %c0_514, %c0_515] : memref<9x16x16xbf16, #tpu.memory_space<vmem>>, vector<1x16x16xbf16>
    %616 = vector.shape_cast %615 : vector<1x16x16xbf16> to vector<16x16xbf16>
    %cst_516 = arith.constant dense<0.000000e+00> : vector<16x128xf32>
    %617 = tpu.matmul %616, %614, %cst_516 {dimension_numbers = #tpu.dot_dimension_numbers<[1], [0], [0], [1], [0, 0, 1, 1], [], []>} : vector<16x16xbf16>, vector<16x128xbf16>, vector<16x128xf32> -> vector<16x128xf32>
    %c3_517 = arith.constant 3 : index
    %c0_518 = arith.constant 0 : index
    %618 = vector.load %arg19[%c3_517, %c0_518] : memref<9x128xf32, #tpu.memory_space<vmem>>, vector<1x128xf32>
    %619 = vector.broadcast %618 : vector<1x128xf32> to vector<16x128xf32>
    %620 = arith.mulf %617, %619 : vector<16x128xf32>
    %621 = arith.addf %613, %620 : vector<16x128xf32>
    %c0_519 = arith.constant 0 : index
    %c128_520 = arith.constant 128 : index
    %622 = vector.load %arg22[%c0_519, %c128_520] : memref<16x768xbf16, #tpu.memory_space<vmem>>, vector<16x128xbf16>
    %c4_521 = arith.constant 4 : index
    %c0_522 = arith.constant 0 : index
    %c0_523 = arith.constant 0 : index
    %623 = vector.load %arg8[%c4_521, %c0_522, %c0_523] : memref<9x16x16xbf16, #tpu.memory_space<vmem>>, vector<1x16x16xbf16>
    %624 = vector.shape_cast %623 : vector<1x16x16xbf16> to vector<16x16xbf16>
    %cst_524 = arith.constant dense<0.000000e+00> : vector<16x128xf32>
    %625 = tpu.matmul %624, %622, %cst_524 {dimension_numbers = #tpu.dot_dimension_numbers<[1], [0], [0], [1], [0, 0, 1, 1], [], []>} : vector<16x16xbf16>, vector<16x128xbf16>, vector<16x128xf32> -> vector<16x128xf32>
    %626 = arith.addf %621, %625 : vector<16x128xf32>
    %c0_525 = arith.constant 0 : index
    %c129_526 = arith.constant 129 : index
    %627 = vector.load %arg22[%c0_525, %c129_526] : memref<16x768xbf16, #tpu.memory_space<vmem>>, vector<16x128xbf16>
    %c5_527 = arith.constant 5 : index
    %c0_528 = arith.constant 0 : index
    %c0_529 = arith.constant 0 : index
    %628 = vector.load %arg8[%c5_527, %c0_528, %c0_529] : memref<9x16x16xbf16, #tpu.memory_space<vmem>>, vector<1x16x16xbf16>
    %629 = vector.shape_cast %628 : vector<1x16x16xbf16> to vector<16x16xbf16>
    %cst_530 = arith.constant dense<0.000000e+00> : vector<16x128xf32>
    %630 = tpu.matmul %629, %627, %cst_530 {dimension_numbers = #tpu.dot_dimension_numbers<[1], [0], [0], [1], [0, 0, 1, 1], [], []>} : vector<16x16xbf16>, vector<16x128xbf16>, vector<16x128xf32> -> vector<16x128xf32>
    %c5_531 = arith.constant 5 : index
    %c0_532 = arith.constant 0 : index
    %631 = vector.load %arg19[%c5_531, %c0_532] : memref<9x128xf32, #tpu.memory_space<vmem>>, vector<1x128xf32>
    %632 = vector.broadcast %631 : vector<1x128xf32> to vector<16x128xf32>
    %633 = arith.mulf %630, %632 : vector<16x128xf32>
    %634 = arith.addf %626, %633 : vector<16x128xf32>
    %c0_533 = arith.constant 0 : index
    %c135_534 = arith.constant 135 : index
    %635 = vector.load %arg22[%c0_533, %c135_534] : memref<16x768xbf16, #tpu.memory_space<vmem>>, vector<16x128xbf16>
    %c6_535 = arith.constant 6 : index
    %c0_536 = arith.constant 0 : index
    %c0_537 = arith.constant 0 : index
    %636 = vector.load %arg8[%c6_535, %c0_536, %c0_537] : memref<9x16x16xbf16, #tpu.memory_space<vmem>>, vector<1x16x16xbf16>
    %637 = vector.shape_cast %636 : vector<1x16x16xbf16> to vector<16x16xbf16>
    %cst_538 = arith.constant dense<0.000000e+00> : vector<16x128xf32>
    %638 = tpu.matmul %637, %635, %cst_538 {dimension_numbers = #tpu.dot_dimension_numbers<[1], [0], [0], [1], [0, 0, 1, 1], [], []>} : vector<16x16xbf16>, vector<16x128xbf16>, vector<16x128xf32> -> vector<16x128xf32>
    %c6_539 = arith.constant 6 : index
    %c0_540 = arith.constant 0 : index
    %639 = vector.load %arg19[%c6_539, %c0_540] : memref<9x128xf32, #tpu.memory_space<vmem>>, vector<1x128xf32>
    %640 = vector.broadcast %639 : vector<1x128xf32> to vector<16x128xf32>
    %641 = arith.mulf %638, %640 : vector<16x128xf32>
    %642 = arith.addf %634, %641 : vector<16x128xf32>
    %c0_541 = arith.constant 0 : index
    %c136_542 = arith.constant 136 : index
    %643 = vector.load %arg22[%c0_541, %c136_542] : memref<16x768xbf16, #tpu.memory_space<vmem>>, vector<16x128xbf16>
    %c7_543 = arith.constant 7 : index
    %c0_544 = arith.constant 0 : index
    %c0_545 = arith.constant 0 : index
    %644 = vector.load %arg8[%c7_543, %c0_544, %c0_545] : memref<9x16x16xbf16, #tpu.memory_space<vmem>>, vector<1x16x16xbf16>
    %645 = vector.shape_cast %644 : vector<1x16x16xbf16> to vector<16x16xbf16>
    %cst_546 = arith.constant dense<0.000000e+00> : vector<16x128xf32>
    %646 = tpu.matmul %645, %643, %cst_546 {dimension_numbers = #tpu.dot_dimension_numbers<[1], [0], [0], [1], [0, 0, 1, 1], [], []>} : vector<16x16xbf16>, vector<16x128xbf16>, vector<16x128xf32> -> vector<16x128xf32>
    %c7_547 = arith.constant 7 : index
    %c0_548 = arith.constant 0 : index
    %647 = vector.load %arg19[%c7_547, %c0_548] : memref<9x128xf32, #tpu.memory_space<vmem>>, vector<1x128xf32>
    %648 = vector.broadcast %647 : vector<1x128xf32> to vector<16x128xf32>
    %649 = arith.mulf %646, %648 : vector<16x128xf32>
    %650 = arith.addf %642, %649 : vector<16x128xf32>
    %c0_549 = arith.constant 0 : index
    %c137_550 = arith.constant 137 : index
    %651 = vector.load %arg22[%c0_549, %c137_550] : memref<16x768xbf16, #tpu.memory_space<vmem>>, vector<16x128xbf16>
    %c8_551 = arith.constant 8 : index
    %c0_552 = arith.constant 0 : index
    %c0_553 = arith.constant 0 : index
    %652 = vector.load %arg8[%c8_551, %c0_552, %c0_553] : memref<9x16x16xbf16, #tpu.memory_space<vmem>>, vector<1x16x16xbf16>
    %653 = vector.shape_cast %652 : vector<1x16x16xbf16> to vector<16x16xbf16>
    %cst_554 = arith.constant dense<0.000000e+00> : vector<16x128xf32>
    %654 = tpu.matmul %653, %651, %cst_554 {dimension_numbers = #tpu.dot_dimension_numbers<[1], [0], [0], [1], [0, 0, 1, 1], [], []>} : vector<16x16xbf16>, vector<16x128xbf16>, vector<16x128xf32> -> vector<16x128xf32>
    %c8_555 = arith.constant 8 : index
    %c0_556 = arith.constant 0 : index
    %655 = vector.load %arg19[%c8_555, %c0_556] : memref<9x128xf32, #tpu.memory_space<vmem>>, vector<1x128xf32>
    %656 = vector.broadcast %655 : vector<1x128xf32> to vector<16x128xf32>
    %657 = arith.mulf %654, %656 : vector<16x128xf32>
    %658 = arith.addf %650, %657 : vector<16x128xf32>
    %cst_557 = arith.constant dense<0.000000e+00> : vector<16xf32>
    %659 = vector.multi_reduction <add>, %658, %cst_557 [1] : vector<16x128xf32> to vector<16xf32>
    %660 = vector.shape_cast %659 : vector<16xf32> to vector<16x1xf32>
    %661 = arith.mulf %658, %658 : vector<16x128xf32>
    %cst_558 = arith.constant dense<0.000000e+00> : vector<16xf32>
    %662 = vector.multi_reduction <add>, %661, %cst_558 [1] : vector<16x128xf32> to vector<16xf32>
    %663 = vector.shape_cast %662 : vector<16xf32> to vector<16x1xf32>
    %cst_559 = arith.constant 7.812500e-03 : f32
    %664 = vector.broadcast %cst_559 : f32 to vector<16x1xf32>
    %665 = arith.mulf %660, %664 : vector<16x1xf32>
    %cst_560 = arith.constant 7.812500e-03 : f32
    %666 = vector.broadcast %cst_560 : f32 to vector<16x1xf32>
    %667 = arith.mulf %663, %666 : vector<16x1xf32>
    %668 = arith.mulf %665, %665 : vector<16x1xf32>
    %669 = arith.subf %667, %668 : vector<16x1xf32>
    %c0_561 = arith.constant 0 : index
    %c0_562 = arith.constant 0 : index
    %670 = vector.load %arg16[%c0_561, %c0_562] : memref<16x2xf32, #tpu.memory_space<vmem>>, vector<16x1xf32>
    %cst_563 = arith.constant 9.99999974E-6 : f32
    %671 = vector.broadcast %cst_563 : f32 to vector<16x1xf32>
    %672 = arith.addf %669, %671 : vector<16x1xf32>
    %673 = math.rsqrt %672 : vector<16x1xf32>
    %674 = arith.mulf %670, %673 : vector<16x1xf32>
    %c0_564 = arith.constant 0 : index
    %c1_565 = arith.constant 1 : index
    %675 = vector.load %arg16[%c0_564, %c1_565] : memref<16x2xf32, #tpu.memory_space<vmem>>, vector<16x1xf32>
    %676 = arith.mulf %665, %674 : vector<16x1xf32>
    %677 = arith.subf %675, %676 : vector<16x1xf32>
    %678 = vector.broadcast %674 : vector<16x1xf32> to vector<16x128xf32>
    %679 = arith.mulf %658, %678 : vector<16x128xf32>
    %680 = vector.broadcast %677 : vector<16x1xf32> to vector<16x128xf32>
    %681 = arith.addf %679, %680 : vector<16x128xf32>
    %cst_566 = arith.constant 0.000000e+00 : f32
    %682 = vector.broadcast %cst_566 : f32 to vector<16x128xf32>
    %683 = arith.maximumf %681, %682 : vector<16x128xf32>
    %684 = arith.truncf %683 : vector<16x128xf32> to vector<16x128xbf16>
    %c0_567 = arith.constant 0 : index
    %c128_568 = arith.constant 128 : index
    %685 = vector.load %arg22[%c0_567, %c128_568] : memref<16x768xbf16, #tpu.memory_space<vmem>>, vector<16x128xbf16>
    tpu.vector_store %arg22[%c0_567, %c128_568], %684 {strides = array<i32>} : memref<16x768xbf16, #tpu.memory_space<vmem>>, vector<16x128xbf16>,
    %c0_569 = arith.constant 0 : index
    %c119_570 = arith.constant 119 : index
    %686 = vector.load %arg22[%c0_569, %c119_570] : memref<16x768xbf16, #tpu.memory_space<vmem>>, vector<16x128xbf16>
    %c0_571 = arith.constant 0 : index
    %c0_572 = arith.constant 0 : index
    %c0_573 = arith.constant 0 : index
    %687 = vector.load %arg9[%c0_571, %c0_572, %c0_573] : memref<9x16x16xbf16, #tpu.memory_space<vmem>>, vector<1x16x16xbf16>
    %688 = vector.shape_cast %687 : vector<1x16x16xbf16> to vector<16x16xbf16>
    %cst_574 = arith.constant dense<0.000000e+00> : vector<16x128xf32>
    %689 = tpu.matmul %688, %686, %cst_574 {dimension_numbers = #tpu.dot_dimension_numbers<[1], [0], [0], [1], [0, 0, 1, 1], [], []>} : vector<16x16xbf16>, vector<16x128xbf16>, vector<16x128xf32> -> vector<16x128xf32>
    %c0_575 = arith.constant 0 : index
    %c0_576 = arith.constant 0 : index
    %690 = vector.load %arg19[%c0_575, %c0_576] : memref<9x128xf32, #tpu.memory_space<vmem>>, vector<1x128xf32>
    %691 = vector.broadcast %690 : vector<1x128xf32> to vector<16x128xf32>
    %692 = arith.mulf %689, %691 : vector<16x128xf32>
    %c0_577 = arith.constant 0 : index
    %c120_578 = arith.constant 120 : index
    %693 = vector.load %arg22[%c0_577, %c120_578] : memref<16x768xbf16, #tpu.memory_space<vmem>>, vector<16x128xbf16>
    %c1_579 = arith.constant 1 : index
    %c0_580 = arith.constant 0 : index
    %c0_581 = arith.constant 0 : index
    %694 = vector.load %arg9[%c1_579, %c0_580, %c0_581] : memref<9x16x16xbf16, #tpu.memory_space<vmem>>, vector<1x16x16xbf16>
    %695 = vector.shape_cast %694 : vector<1x16x16xbf16> to vector<16x16xbf16>
    %cst_582 = arith.constant dense<0.000000e+00> : vector<16x128xf32>
    %696 = tpu.matmul %695, %693, %cst_582 {dimension_numbers = #tpu.dot_dimension_numbers<[1], [0], [0], [1], [0, 0, 1, 1], [], []>} : vector<16x16xbf16>, vector<16x128xbf16>, vector<16x128xf32> -> vector<16x128xf32>
    %c1_583 = arith.constant 1 : index
    %c0_584 = arith.constant 0 : index
    %697 = vector.load %arg19[%c1_583, %c0_584] : memref<9x128xf32, #tpu.memory_space<vmem>>, vector<1x128xf32>
    %698 = vector.broadcast %697 : vector<1x128xf32> to vector<16x128xf32>
    %699 = arith.mulf %696, %698 : vector<16x128xf32>
    %700 = arith.addf %692, %699 : vector<16x128xf32>
    %c0_585 = arith.constant 0 : index
    %c121_586 = arith.constant 121 : index
    %701 = vector.load %arg22[%c0_585, %c121_586] : memref<16x768xbf16, #tpu.memory_space<vmem>>, vector<16x128xbf16>
    %c2_587 = arith.constant 2 : index
    %c0_588 = arith.constant 0 : index
    %c0_589 = arith.constant 0 : index
    %702 = vector.load %arg9[%c2_587, %c0_588, %c0_589] : memref<9x16x16xbf16, #tpu.memory_space<vmem>>, vector<1x16x16xbf16>
    %703 = vector.shape_cast %702 : vector<1x16x16xbf16> to vector<16x16xbf16>
    %cst_590 = arith.constant dense<0.000000e+00> : vector<16x128xf32>
    %704 = tpu.matmul %703, %701, %cst_590 {dimension_numbers = #tpu.dot_dimension_numbers<[1], [0], [0], [1], [0, 0, 1, 1], [], []>} : vector<16x16xbf16>, vector<16x128xbf16>, vector<16x128xf32> -> vector<16x128xf32>
    %c2_591 = arith.constant 2 : index
    %c0_592 = arith.constant 0 : index
    %705 = vector.load %arg19[%c2_591, %c0_592] : memref<9x128xf32, #tpu.memory_space<vmem>>, vector<1x128xf32>
    %706 = vector.broadcast %705 : vector<1x128xf32> to vector<16x128xf32>
    %707 = arith.mulf %704, %706 : vector<16x128xf32>
    %708 = arith.addf %700, %707 : vector<16x128xf32>
    %c0_593 = arith.constant 0 : index
    %c127_594 = arith.constant 127 : index
    %709 = vector.load %arg22[%c0_593, %c127_594] : memref<16x768xbf16, #tpu.memory_space<vmem>>, vector<16x128xbf16>
    %c3_595 = arith.constant 3 : index
    %c0_596 = arith.constant 0 : index
    %c0_597 = arith.constant 0 : index
    %710 = vector.load %arg9[%c3_595, %c0_596, %c0_597] : memref<9x16x16xbf16, #tpu.memory_space<vmem>>, vector<1x16x16xbf16>
    %711 = vector.shape_cast %710 : vector<1x16x16xbf16> to vector<16x16xbf16>
    %cst_598 = arith.constant dense<0.000000e+00> : vector<16x128xf32>
    %712 = tpu.matmul %711, %709, %cst_598 {dimension_numbers = #tpu.dot_dimension_numbers<[1], [0], [0], [1], [0, 0, 1, 1], [], []>} : vector<16x16xbf16>, vector<16x128xbf16>, vector<16x128xf32> -> vector<16x128xf32>
    %c3_599 = arith.constant 3 : index
    %c0_600 = arith.constant 0 : index
    %713 = vector.load %arg19[%c3_599, %c0_600] : memref<9x128xf32, #tpu.memory_space<vmem>>, vector<1x128xf32>
    %714 = vector.broadcast %713 : vector<1x128xf32> to vector<16x128xf32>
    %715 = arith.mulf %712, %714 : vector<16x128xf32>
    %716 = arith.addf %708, %715 : vector<16x128xf32>
    %c0_601 = arith.constant 0 : index
    %c128_602 = arith.constant 128 : index
    %717 = vector.load %arg22[%c0_601, %c128_602] : memref<16x768xbf16, #tpu.memory_space<vmem>>, vector<16x128xbf16>
    %c4_603 = arith.constant 4 : index
    %c0_604 = arith.constant 0 : index
    %c0_605 = arith.constant 0 : index
    %718 = vector.load %arg9[%c4_603, %c0_604, %c0_605] : memref<9x16x16xbf16, #tpu.memory_space<vmem>>, vector<1x16x16xbf16>
    %719 = vector.shape_cast %718 : vector<1x16x16xbf16> to vector<16x16xbf16>
    %cst_606 = arith.constant dense<0.000000e+00> : vector<16x128xf32>
    %720 = tpu.matmul %719, %717, %cst_606 {dimension_numbers = #tpu.dot_dimension_numbers<[1], [0], [0], [1], [0, 0, 1, 1], [], []>} : vector<16x16xbf16>, vector<16x128xbf16>, vector<16x128xf32> -> vector<16x128xf32>
    %721 = arith.addf %716, %720 : vector<16x128xf32>
    %c0_607 = arith.constant 0 : index
    %c129_608 = arith.constant 129 : index
    %722 = vector.load %arg22[%c0_607, %c129_608] : memref<16x768xbf16, #tpu.memory_space<vmem>>, vector<16x128xbf16>
    %c5_609 = arith.constant 5 : index
    %c0_610 = arith.constant 0 : index
    %c0_611 = arith.constant 0 : index
    %723 = vector.load %arg9[%c5_609, %c0_610, %c0_611] : memref<9x16x16xbf16, #tpu.memory_space<vmem>>, vector<1x16x16xbf16>
    %724 = vector.shape_cast %723 : vector<1x16x16xbf16> to vector<16x16xbf16>
    %cst_612 = arith.constant dense<0.000000e+00> : vector<16x128xf32>
    %725 = tpu.matmul %724, %722, %cst_612 {dimension_numbers = #tpu.dot_dimension_numbers<[1], [0], [0], [1], [0, 0, 1, 1], [], []>} : vector<16x16xbf16>, vector<16x128xbf16>, vector<16x128xf32> -> vector<16x128xf32>
    %c5_613 = arith.constant 5 : index
    %c0_614 = arith.constant 0 : index
    %726 = vector.load %arg19[%c5_613, %c0_614] : memref<9x128xf32, #tpu.memory_space<vmem>>, vector<1x128xf32>
    %727 = vector.broadcast %726 : vector<1x128xf32> to vector<16x128xf32>
    %728 = arith.mulf %725, %727 : vector<16x128xf32>
    %729 = arith.addf %721, %728 : vector<16x128xf32>
    %c0_615 = arith.constant 0 : index
    %c135_616 = arith.constant 135 : index
    %730 = vector.load %arg22[%c0_615, %c135_616] : memref<16x768xbf16, #tpu.memory_space<vmem>>, vector<16x128xbf16>
    %c6_617 = arith.constant 6 : index
    %c0_618 = arith.constant 0 : index
    %c0_619 = arith.constant 0 : index
    %731 = vector.load %arg9[%c6_617, %c0_618, %c0_619] : memref<9x16x16xbf16, #tpu.memory_space<vmem>>, vector<1x16x16xbf16>
    %732 = vector.shape_cast %731 : vector<1x16x16xbf16> to vector<16x16xbf16>
    %cst_620 = arith.constant dense<0.000000e+00> : vector<16x128xf32>
    %733 = tpu.matmul %732, %730, %cst_620 {dimension_numbers = #tpu.dot_dimension_numbers<[1], [0], [0], [1], [0, 0, 1, 1], [], []>} : vector<16x16xbf16>, vector<16x128xbf16>, vector<16x128xf32> -> vector<16x128xf32>
    %c6_621 = arith.constant 6 : index
    %c0_622 = arith.constant 0 : index
    %734 = vector.load %arg19[%c6_621, %c0_622] : memref<9x128xf32, #tpu.memory_space<vmem>>, vector<1x128xf32>
    %735 = vector.broadcast %734 : vector<1x128xf32> to vector<16x128xf32>
    %736 = arith.mulf %733, %735 : vector<16x128xf32>
    %737 = arith.addf %729, %736 : vector<16x128xf32>
    %c0_623 = arith.constant 0 : index
    %c136_624 = arith.constant 136 : index
    %738 = vector.load %arg22[%c0_623, %c136_624] : memref<16x768xbf16, #tpu.memory_space<vmem>>, vector<16x128xbf16>
    %c7_625 = arith.constant 7 : index
    %c0_626 = arith.constant 0 : index
    %c0_627 = arith.constant 0 : index
    %739 = vector.load %arg9[%c7_625, %c0_626, %c0_627] : memref<9x16x16xbf16, #tpu.memory_space<vmem>>, vector<1x16x16xbf16>
    %740 = vector.shape_cast %739 : vector<1x16x16xbf16> to vector<16x16xbf16>
    %cst_628 = arith.constant dense<0.000000e+00> : vector<16x128xf32>
    %741 = tpu.matmul %740, %738, %cst_628 {dimension_numbers = #tpu.dot_dimension_numbers<[1], [0], [0], [1], [0, 0, 1, 1], [], []>} : vector<16x16xbf16>, vector<16x128xbf16>, vector<16x128xf32> -> vector<16x128xf32>
    %c7_629 = arith.constant 7 : index
    %c0_630 = arith.constant 0 : index
    %742 = vector.load %arg19[%c7_629, %c0_630] : memref<9x128xf32, #tpu.memory_space<vmem>>, vector<1x128xf32>
    %743 = vector.broadcast %742 : vector<1x128xf32> to vector<16x128xf32>
    %744 = arith.mulf %741, %743 : vector<16x128xf32>
    %745 = arith.addf %737, %744 : vector<16x128xf32>
    %c0_631 = arith.constant 0 : index
    %c137_632 = arith.constant 137 : index
    %746 = vector.load %arg22[%c0_631, %c137_632] : memref<16x768xbf16, #tpu.memory_space<vmem>>, vector<16x128xbf16>
    %c8_633 = arith.constant 8 : index
    %c0_634 = arith.constant 0 : index
    %c0_635 = arith.constant 0 : index
    %747 = vector.load %arg9[%c8_633, %c0_634, %c0_635] : memref<9x16x16xbf16, #tpu.memory_space<vmem>>, vector<1x16x16xbf16>
    %748 = vector.shape_cast %747 : vector<1x16x16xbf16> to vector<16x16xbf16>
    %cst_636 = arith.constant dense<0.000000e+00> : vector<16x128xf32>
    %749 = tpu.matmul %748, %746, %cst_636 {dimension_numbers = #tpu.dot_dimension_numbers<[1], [0], [0], [1], [0, 0, 1, 1], [], []>} : vector<16x16xbf16>, vector<16x128xbf16>, vector<16x128xf32> -> vector<16x128xf32>
    %c8_637 = arith.constant 8 : index
    %c0_638 = arith.constant 0 : index
    %750 = vector.load %arg19[%c8_637, %c0_638] : memref<9x128xf32, #tpu.memory_space<vmem>>, vector<1x128xf32>
    %751 = vector.broadcast %750 : vector<1x128xf32> to vector<16x128xf32>
    %752 = arith.mulf %749, %751 : vector<16x128xf32>
    %753 = arith.addf %745, %752 : vector<16x128xf32>
    %cst_639 = arith.constant dense<0.000000e+00> : vector<16xf32>
    %754 = vector.multi_reduction <add>, %753, %cst_639 [1] : vector<16x128xf32> to vector<16xf32>
    %755 = vector.shape_cast %754 : vector<16xf32> to vector<16x1xf32>
    %756 = arith.mulf %753, %753 : vector<16x128xf32>
    %cst_640 = arith.constant dense<0.000000e+00> : vector<16xf32>
    %757 = vector.multi_reduction <add>, %756, %cst_640 [1] : vector<16x128xf32> to vector<16xf32>
    %758 = vector.shape_cast %757 : vector<16xf32> to vector<16x1xf32>
    %cst_641 = arith.constant 7.812500e-03 : f32
    %759 = vector.broadcast %cst_641 : f32 to vector<16x1xf32>
    %760 = arith.mulf %755, %759 : vector<16x1xf32>
    %cst_642 = arith.constant 7.812500e-03 : f32
    %761 = vector.broadcast %cst_642 : f32 to vector<16x1xf32>
    %762 = arith.mulf %758, %761 : vector<16x1xf32>
    %763 = arith.mulf %760, %760 : vector<16x1xf32>
    %764 = arith.subf %762, %763 : vector<16x1xf32>
    %c0_643 = arith.constant 0 : index
    %c0_644 = arith.constant 0 : index
    %765 = vector.load %arg17[%c0_643, %c0_644] : memref<16x2xf32, #tpu.memory_space<vmem>>, vector<16x1xf32>
    %cst_645 = arith.constant 9.99999974E-6 : f32
    %766 = vector.broadcast %cst_645 : f32 to vector<16x1xf32>
    %767 = arith.addf %764, %766 : vector<16x1xf32>
    %768 = math.rsqrt %767 : vector<16x1xf32>
    %769 = arith.mulf %765, %768 : vector<16x1xf32>
    %c0_646 = arith.constant 0 : index
    %c1_647 = arith.constant 1 : index
    %770 = vector.load %arg17[%c0_646, %c1_647] : memref<16x2xf32, #tpu.memory_space<vmem>>, vector<16x1xf32>
    %771 = arith.mulf %760, %769 : vector<16x1xf32>
    %772 = arith.subf %770, %771 : vector<16x1xf32>
    %773 = vector.broadcast %769 : vector<16x1xf32> to vector<16x128xf32>
    %774 = arith.mulf %753, %773 : vector<16x128xf32>
    %775 = vector.broadcast %772 : vector<16x1xf32> to vector<16x128xf32>
    %776 = arith.addf %774, %775 : vector<16x128xf32>
    %cst_648 = arith.constant 0.000000e+00 : f32
    %777 = vector.broadcast %cst_648 : f32 to vector<16x128xf32>
    %778 = arith.maximumf %776, %777 : vector<16x128xf32>
    %c0_649 = arith.constant 0 : index
    %c0_650 = arith.constant 0 : index
    %779 = vector.load %arg21[%c0_649, %c0_650] : memref<16x128xf32, #tpu.memory_space<vmem>>, vector<16x128xf32>
    tpu.vector_store %arg21[%c0_649, %c0_650], %778 {strides = array<i32>} : memref<16x128xf32, #tpu.memory_space<vmem>>, vector<16x128xf32>,
    return
  }
  func.func @transform_0(%arg0: i32) -> (i32, i32) {
    %c0_i32 = arith.constant 0 : i32
    %c0_i32_0 = arith.constant 0 : i32
    %c0_i32_1 = arith.constant 0 : i32
    return %c0_i32, %c0_i32_0 : i32, i32
  }
  func.func @transform_1(%arg0: i32) -> (i32, i32, i32) {
    %c0_i32 = arith.constant 0 : i32
    %c0_i32_0 = arith.constant 0 : i32
    %c0_i32_1 = arith.constant 0 : i32
    %c0_i32_2 = arith.constant 0 : i32
    return %c0_i32, %c0_i32_0, %c0_i32_1 : i32, i32, i32
  }
  func.func @transform_2(%arg0: i32) -> (i32, i32, i32) {
    %c0_i32 = arith.constant 0 : i32
    %c0_i32_0 = arith.constant 0 : i32
    %c0_i32_1 = arith.constant 0 : i32
    %c0_i32_2 = arith.constant 0 : i32
    return %c0_i32, %c0_i32_0, %c0_i32_1 : i32, i32, i32
  }
  func.func @transform_3(%arg0: i32) -> (i32, i32, i32) {
    %c0_i32 = arith.constant 0 : i32
    %c0_i32_0 = arith.constant 0 : i32
    %c0_i32_1 = arith.constant 0 : i32
    %c0_i32_2 = arith.constant 0 : i32
    return %c0_i32, %c0_i32_0, %c0_i32_1 : i32, i32, i32
  }
  func.func @transform_4(%arg0: i32) -> (i32, i32, i32) {
    %c0_i32 = arith.constant 0 : i32
    %c0_i32_0 = arith.constant 0 : i32
    %c0_i32_1 = arith.constant 0 : i32
    %c0_i32_2 = arith.constant 0 : i32
    return %c0_i32, %c0_i32_0, %c0_i32_1 : i32, i32, i32
  }
  func.func @transform_5(%arg0: i32) -> (i32, i32, i32) {
    %c0_i32 = arith.constant 0 : i32
    %c0_i32_0 = arith.constant 0 : i32
    %c0_i32_1 = arith.constant 0 : i32
    %c0_i32_2 = arith.constant 0 : i32
    return %c0_i32, %c0_i32_0, %c0_i32_1 : i32, i32, i32
  }
  func.func @transform_6(%arg0: i32) -> (i32, i32, i32) {
    %c0_i32 = arith.constant 0 : i32
    %c0_i32_0 = arith.constant 0 : i32
    %c0_i32_1 = arith.constant 0 : i32
    %c0_i32_2 = arith.constant 0 : i32
    return %c0_i32, %c0_i32_0, %c0_i32_1 : i32, i32, i32
  }
  func.func @transform_7(%arg0: i32) -> (i32, i32, i32) {
    %c0_i32 = arith.constant 0 : i32
    %c0_i32_0 = arith.constant 0 : i32
    %c0_i32_1 = arith.constant 0 : i32
    %c0_i32_2 = arith.constant 0 : i32
    return %c0_i32, %c0_i32_0, %c0_i32_1 : i32, i32, i32
  }
  func.func @transform_8(%arg0: i32) -> (i32, i32, i32) {
    %c0_i32 = arith.constant 0 : i32
    %c0_i32_0 = arith.constant 0 : i32
    %c0_i32_1 = arith.constant 0 : i32
    %c0_i32_2 = arith.constant 0 : i32
    return %c0_i32, %c0_i32_0, %c0_i32_1 : i32, i32, i32
  }
  func.func @transform_9(%arg0: i32) -> (i32, i32) {
    %c0_i32 = arith.constant 0 : i32
    %c0_i32_0 = arith.constant 0 : i32
    %c0_i32_1 = arith.constant 0 : i32
    return %c0_i32, %c0_i32_0 : i32, i32
  }
  func.func @transform_10(%arg0: i32) -> (i32, i32) {
    %c0_i32 = arith.constant 0 : i32
    %c0_i32_0 = arith.constant 0 : i32
    %c0_i32_1 = arith.constant 0 : i32
    return %c0_i32, %c0_i32_0 : i32, i32
  }
  func.func @transform_11(%arg0: i32) -> (i32, i32) {
    %c0_i32 = arith.constant 0 : i32
    %c0_i32_0 = arith.constant 0 : i32
    %c0_i32_1 = arith.constant 0 : i32
    return %c0_i32, %c0_i32_0 : i32, i32
  }
  func.func @transform_12(%arg0: i32) -> (i32, i32) {
    %c0_i32 = arith.constant 0 : i32
    %c0_i32_0 = arith.constant 0 : i32
    %c0_i32_1 = arith.constant 0 : i32
    return %c0_i32, %c0_i32_0 : i32, i32
  }
  func.func @transform_13(%arg0: i32) -> (i32, i32) {
    %c0_i32 = arith.constant 0 : i32
    %c0_i32_0 = arith.constant 0 : i32
    %c0_i32_1 = arith.constant 0 : i32
    return %c0_i32, %c0_i32_0 : i32, i32
  }
  func.func @transform_14(%arg0: i32) -> (i32, i32) {
    %c0_i32 = arith.constant 0 : i32
    %c0_i32_0 = arith.constant 0 : i32
    %c0_i32_1 = arith.constant 0 : i32
    return %c0_i32, %c0_i32_0 : i32, i32
  }
  func.func @transform_15(%arg0: i32) -> (i32, i32) {
    %c0_i32 = arith.constant 0 : i32
    %c0_i32_0 = arith.constant 0 : i32
    %c0_i32_1 = arith.constant 0 : i32
    return %c0_i32, %c0_i32_0 : i32, i32
  }
  func.func @transform_16(%arg0: i32) -> (i32, i32) {
    %c0_i32 = arith.constant 0 : i32
    %c0_i32_0 = arith.constant 0 : i32
    %c0_i32_1 = arith.constant 0 : i32
    return %c0_i32, %c0_i32_0 : i32, i32
  }
  func.func @transform_17(%arg0: i32) -> (i32, i32) {
    %c0_i32 = arith.constant 0 : i32
    %c0_i32_0 = arith.constant 0 : i32
    %c0_i32_1 = arith.constant 0 : i32
    return %c0_i32, %c0_i32_0 : i32, i32
  }
  func.func @transform_18(%arg0: i32) -> (i32, i32) {
    %c0_i32 = arith.constant 0 : i32
    %c0_i32_0 = arith.constant 0 : i32
    %c0_i32_1 = arith.constant 0 : i32
    return %c0_i32, %c0_i32_0 : i32, i32
  }
  func.func @transform_19(%arg0: i32) -> (i32, i32) {
    %c0_i32 = arith.constant 0 : i32
    %c0_i32_0 = arith.constant 0 : i32
    %c0_i32_1 = arith.constant 0 : i32
    return %c0_i32, %c0_i32_0 : i32, i32
  }
  func.func @transform_20(%arg0: i32) -> (i32, i32) {
    %c0_i32 = arith.constant 0 : i32
    %c0_i32_0 = arith.constant 0 : i32
    %c0_i32_1 = arith.constant 0 : i32
    return %c0_i32, %c0_i32_0 : i32, i32
  }
}

</mosaic_0001>

<llo_original>
// kernel: edge_feature_extractor.1
$region0: #{edge_feature_extractor.1}
  #allocation0 [shape = 'u32[]', space=smem, size = 0x4, offset = 0x4, fixed_abs, tag = 'smem constant byte address 0x4 - core index']
  #allocation1 [shape = 'u32[144,128]{1,0:T(1,128)}', space=vmem, size = 0x12000, scoped, tag = 'internal scratch']
  #allocation2 [shape = 'bf16[16,768]{1,0:T(16,128)(2,1)}', space=vmem, size = 0x6000, scoped, tag = 'scratch operand']
  %s0 = inlined_call_operand.vmem [shape: f32[2,512], index: 0, kind: input, shape index: {}]
  %s1 = inlined_call_operand.vmem [shape: bf16[9,8,16], index: 1, kind: input, shape index: {}]
  %s2 = inlined_call_operand.vmem [shape: bf16[9,8,16], index: 2, kind: input, shape index: {}]
  %s3 = inlined_call_operand.vmem [shape: bf16[9,16,16], index: 3, kind: input, shape index: {}]
  %s4 = inlined_call_operand.vmem [shape: bf16[9,16,16], index: 4, kind: input, shape index: {}]
  %s5 = inlined_call_operand.vmem [shape: bf16[9,16,16], index: 5, kind: input, shape index: {}]
  %s6 = inlined_call_operand.vmem [shape: bf16[9,16,16], index: 6, kind: input, shape index: {}]
  %s7 = inlined_call_operand.vmem [shape: bf16[9,16,16], index: 7, kind: input, shape index: {}]
  %s8 = inlined_call_operand.vmem [shape: bf16[9,16,16], index: 8, kind: input, shape index: {}]
  %s9 = inlined_call_operand.vmem [shape: f32[8,2], index: 9, kind: input, shape index: {}]
  %s10 = inlined_call_operand.vmem [shape: f32[8,2], index: 10, kind: input, shape index: {}]
  %s11 = inlined_call_operand.vmem [shape: f32[16,2], index: 11, kind: input, shape index: {}]
  %s12 = inlined_call_operand.vmem [shape: f32[16,2], index: 12, kind: input, shape index: {}]
  %s13 = inlined_call_operand.vmem [shape: f32[16,2], index: 13, kind: input, shape index: {}]
  %s14 = inlined_call_operand.vmem [shape: f32[16,2], index: 14, kind: input, shape index: {}]
  %s15 = inlined_call_operand.vmem [shape: f32[16,2], index: 15, kind: input, shape index: {}]
  %s16 = inlined_call_operand.vmem [shape: f32[16,2], index: 16, kind: input, shape index: {}]
  %s17 = inlined_call_operand.vmem [shape: f32[9,512], index: 17, kind: input, shape index: {}]
  %s18 = inlined_call_operand.vmem [shape: f32[9,128], index: 18, kind: input, shape index: {}]
  %s19 = inlined_call_operand.vmem [shape: bf16[512,128], index: 19, kind: input, shape index: {}]
  %s20 = inlined_call_operand.vmem [shape: f32[16,128], index: 20, kind: output, shape index: {}]
  %s21 = sld [smem:[#allocation0]]
  $region90: #{edge_feature_extractor.1} parent=0
    _
  %s23 = ssub.s32 1, %s21
  %s24 = scalar_select 0, %s23, %s21
  // Predicated region
  $region2: #{edge_feature_extractor.1} parent=0 // pred_check
    _
  $region3: #{edge_feature_extractor.1} parent=0 // pred_check_branch
    %26 = sbr.rel (0) target = $region5
  $region4: #{edge_feature_extractor.1} parent=0 // pred_region
    _
  $region5: #{edge_feature_extractor.1} parent=0 // pred_fallthru
    _
  // Predicated region
  $region6: #{edge_feature_extractor.1} parent=0 // pred_check
    _
  $region7: #{edge_feature_extractor.1} parent=0 // pred_check_branch
    %28 = sbr.rel (0) target = $region9
  $region8: #{edge_feature_extractor.1} parent=0 // pred_region
    _
  $region9: #{edge_feature_extractor.1} parent=0 // pred_fallthru
    _
  // Predicated region
  $region10: #{edge_feature_extractor.1} parent=0 // pred_check
    _
  $region11: #{edge_feature_extractor.1} parent=0 // pred_check_branch
    %30 = sbr.rel (0) target = $region13
  $region12: #{edge_feature_extractor.1} parent=0 // pred_region
    _
  $region13: #{edge_feature_extractor.1} parent=0 // pred_fallthru
    _
  // Predicated region
  $region14: #{edge_feature_extractor.1} parent=0 // pred_check
    _
  $region15: #{edge_feature_extractor.1} parent=0 // pred_check_branch
    %32 = sbr.rel (0) target = $region17
  $region16: #{edge_feature_extractor.1} parent=0 // pred_region
    _
  $region17: #{edge_feature_extractor.1} parent=0 // pred_fallthru
    _
  // Predicated region
  $region18: #{edge_feature_extractor.1} parent=0 // pred_check
    _
  $region19: #{edge_feature_extractor.1} parent=0 // pred_check_branch
    %34 = sbr.rel (0) target = $region21
  $region20: #{edge_feature_extractor.1} parent=0 // pred_region
    _
  $region21: #{edge_feature_extractor.1} parent=0 // pred_fallthru
    _
  // Predicated region
  $region22: #{edge_feature_extractor.1} parent=0 // pred_check
    _
  $region23: #{edge_feature_extractor.1} parent=0 // pred_check_branch
    %36 = sbr.rel (0) target = $region25
  $region24: #{edge_feature_extractor.1} parent=0 // pred_region
    _
  $region25: #{edge_feature_extractor.1} parent=0 // pred_fallthru
    _
  // Predicated region
  $region26: #{edge_feature_extractor.1} parent=0 // pred_check
    _
  $region27: #{edge_feature_extractor.1} parent=0 // pred_check_branch
    %38 = sbr.rel (0) target = $region29
  $region28: #{edge_feature_extractor.1} parent=0 // pred_region
    _
  $region29: #{edge_feature_extractor.1} parent=0 // pred_fallthru
    _
  // Predicated region
  $region30: #{edge_feature_extractor.1} parent=0 // pred_check
    _
  $region31: #{edge_feature_extractor.1} parent=0 // pred_check_branch
    %40 = sbr.rel (0) target = $region33
  $region32: #{edge_feature_extractor.1} parent=0 // pred_region
    _
  $region33: #{edge_feature_extractor.1} parent=0 // pred_fallthru
    _
  // Predicated region
  $region34: #{edge_feature_extractor.1} parent=0 // pred_check
    _
  $region35: #{edge_feature_extractor.1} parent=0 // pred_check_branch
    %42 = sbr.rel (0) target = $region37
  $region36: #{edge_feature_extractor.1} parent=0 // pred_region
    _
  $region37: #{edge_feature_extractor.1} parent=0 // pred_fallthru
    _
  // Predicated region
  $region38: #{edge_feature_extractor.1} parent=0 // pred_check
    _
  $region39: #{edge_feature_extractor.1} parent=0 // pred_check_branch
    %44 = sbr.rel (0) target = $region41
  $region40: #{edge_feature_extractor.1} parent=0 // pred_region
    _
  $region41: #{edge_feature_extractor.1} parent=0 // pred_fallthru
    _
  // Predicated region
  $region42: #{edge_feature_extractor.1} parent=0 // pred_check
    _
  $region43: #{edge_feature_extractor.1} parent=0 // pred_check_branch
    %46 = sbr.rel (0) target = $region45
  $region44: #{edge_feature_extractor.1} parent=0 // pred_region
    _
  $region45: #{edge_feature_extractor.1} parent=0 // pred_fallthru
    _
  // Predicated region
  $region46: #{edge_feature_extractor.1} parent=0 // pred_check
    _
  $region47: #{edge_feature_extractor.1} parent=0 // pred_check_branch
    %48 = sbr.rel (0) target = $region49
  $region48: #{edge_feature_extractor.1} parent=0 // pred_region
    _
  $region49: #{edge_feature_extractor.1} parent=0 // pred_fallthru
    _
  // Predicated region
  $region50: #{edge_feature_extractor.1} parent=0 // pred_check
    _
  $region51: #{edge_feature_extractor.1} parent=0 // pred_check_branch
    %50 = sbr.rel (0) target = $region53
  $region52: #{edge_feature_extractor.1} parent=0 // pred_region
    _
  $region53: #{edge_feature_extractor.1} parent=0 // pred_fallthru
    _
  // Predicated region
  $region54: #{edge_feature_extractor.1} parent=0 // pred_check
    _
  $region55: #{edge_feature_extractor.1} parent=0 // pred_check_branch
    %52 = sbr.rel (0) target = $region57
  $region56: #{edge_feature_extractor.1} parent=0 // pred_region
    _
  $region57: #{edge_feature_extractor.1} parent=0 // pred_fallthru
    _
  // Predicated region
  $region58: #{edge_feature_extractor.1} parent=0 // pred_check
    _
  $region59: #{edge_feature_extractor.1} parent=0 // pred_check_branch
    %54 = sbr.rel (0) target = $region61
  $region60: #{edge_feature_extractor.1} parent=0 // pred_region
    _
  $region61: #{edge_feature_extractor.1} parent=0 // pred_fallthru
    _
  // Predicated region
  $region62: #{edge_feature_extractor.1} parent=0 // pred_check
    _
  $region63: #{edge_feature_extractor.1} parent=0 // pred_check_branch
    %56 = sbr.rel (0) target = $region65
  $region64: #{edge_feature_extractor.1} parent=0 // pred_region
    _
  $region65: #{edge_feature_extractor.1} parent=0 // pred_fallthru
    _
  // Predicated region
  $region66: #{edge_feature_extractor.1} parent=0 // pred_check
    _
  $region67: #{edge_feature_extractor.1} parent=0 // pred_check_branch
    %58 = sbr.rel (0) target = $region69
  $region68: #{edge_feature_extractor.1} parent=0 // pred_region
    _
  $region69: #{edge_feature_extractor.1} parent=0 // pred_fallthru
    _
  // Predicated region
  $region70: #{edge_feature_extractor.1} parent=0 // pred_check
    _
  $region71: #{edge_feature_extractor.1} parent=0 // pred_check_branch
    %60 = sbr.rel (0) target = $region73
  $region72: #{edge_feature_extractor.1} parent=0 // pred_region
    _
  $region73: #{edge_feature_extractor.1} parent=0 // pred_fallthru
    _
  // Predicated region
  $region74: #{edge_feature_extractor.1} parent=0 // pred_check
    _
  $region75: #{edge_feature_extractor.1} parent=0 // pred_check_branch
    %62 = sbr.rel (0) target = $region77
  $region76: #{edge_feature_extractor.1} parent=0 // pred_region
    _
  $region77: #{edge_feature_extractor.1} parent=0 // pred_fallthru
    _
  // Predicated region
  $region78: #{edge_feature_extractor.1} parent=0 // pred_check
    _
  $region79: #{edge_feature_extractor.1} parent=0 // pred_check_branch
    %64 = sbr.rel (0) target = $region81
  $region80: #{edge_feature_extractor.1} parent=0 // pred_region
    _
  $region81: #{edge_feature_extractor.1} parent=0 // pred_fallthru
    _
  %66 = vst [vmem:[#allocation2] sm:$0xff] 0
  %67 = vst [vmem:[#allocation2 + $0x8] sm:$0xff] 0
  %68 = vst [vmem:[#allocation2 + $0x10] sm:$0xff] 0
  %69 = vst [vmem:[#allocation2 + $0x18] sm:$0xff] 0
  %70 = vst [vmem:[#allocation2 + $0x20] sm:$0xff] 0
  %71 = vst [vmem:[#allocation2 + $0x28] sm:$0xff] 0
  %v72 = vld [vmem:[%s0] sm:$0xff]
  %v74 = vcombine.high %v72, %v72
  %v76 = vunpack.c.l.s4 1983009808
  %v77 = vunpack.c.0.s8 %v76
  %v78 = vlaneseq
  %v79 = vshrl.u32 %v78, 7
  %v80 = vsub.s32 %v77, %v79
  %v81 = vrot.slane %v72, %v80
  %v83 = vunpack.c.l.s4 1983009808
  %v84 = vunpack.c.0.s8 %v83
  %v85 = vlaneseq
  %v86 = vshrl.u32 %v85, 7
  %v87 = vsub.s32 %v84, %v86
  %v88 = vrot.slane %v74, %v87
  %v89 = vcombine.high %v81, %v81
  %v90 = vcombine.high %v88, %v88
  %v95 = vpack.c.bf16 %v81, %v81
  %v96 = vpack.c.bf16 %v89, %v89
  %v97 = vpack.c.bf16 %v88, %v88
  %v98 = vpack.c.bf16 %v90, %v90
  %99 = vst [vmem:[#allocation2 + $0x8] sm:$0x1] %v95
  %100 = vst [vmem:[#allocation2 + $0x10] sm:$0x1] %v96
  %101 = vst [vmem:[#allocation2 + $0x18] sm:$0x1] %v97
  %102 = vst [vmem:[#allocation2 + $0x20] sm:$0x1] %v98
  %v103 = vld [vmem:[#allocation2] sm:$0xff]
  %v104 = vld [vmem:[#allocation2 + $0x8] sm:$0xff]
  %v105 = vld [vmem:[#allocation2 + $0x10] sm:$0xff]
  %v106 = vld [vmem:[#allocation2 + $0x18] sm:$0xff]
  %v107 = vld [vmem:[#allocation2 + $0x20] sm:$0xff]
  %v108 = vld [vmem:[%s1] sm:$0xf]
  %114 = vrot.lane.b32.xlu0 %v103, 17
  %v115 = vpop.permute.xlu0 %114
  %116 = vrot.lane.b32.xlu0 %v104, 17
  %v117 = vpop.permute.xlu0 %116
  %118 = vrot.lane.b32.xlu0 %v105, 17
  %v119 = vpop.permute.xlu0 %118
  %120 = vrot.lane.b32.xlu0 %v106, 17
  %v121 = vpop.permute.xlu0 %120
  %122 = vrot.lane.b32.xlu0 %v107, 17
  %v123 = vpop.permute.xlu0 %122
  %vm124 = vcmask 138240
  %v125 = vsel %vm124, %v115, %v117
  %v126 = vsel %vm124, %v117, %v119
  %v127 = vsel %vm124, %v119, %v121
  %v128 = vsel %vm124, %v121, %v123
  %vm133 = vcmask 130048
  %v135 = vsel %vm133, %v108, 0
  %137 = vmatprep.subr.bf16.mxu0 %v126
  %138 = vmatpush1.bf16.msra.mxu0 %v125
  %139 = vmatprep.subr.bf16.mxu0 0
  %140 = vmatpush1.bf16.msra.mxu0 0
  %141 = vmatprep.subr.bf16.mxu0 0
  %142 = vmatpush1.bf16.msra.mxu0 0
  %143 = vmatprep.subr.bf16.mxu0 0
  %144 = vmatpush1.bf16.msra.mxu0 0
  %145 = vmatprep.subr.bf16.mxu0 0
  %146 = vmatpush1.bf16.msra.mxu0 0
  %147 = vmatprep.subr.bf16.mxu0 0
  %148 = vmatpush1.bf16.msra.mxu0 0
  %149 = vmatprep.subr.bf16.mxu0 0
  %150 = vmatpush1.bf16.msra.mxu0 0
  %151 = vmatprep.subr.bf16.mxu0 0
  %152 = vmatpush1.bf16.msra.mxu0 0
  %153 = vmatprep.subr.bf16.mxu0 0
  %154 = vmatpush1.bf16.msra.mxu0 0
  %155 = vmatprep.subr.bf16.mxu0 0
  %156 = vmatpush1.bf16.msra.mxu0 0
  %157 = vmatprep.subr.bf16.mxu0 0
  %158 = vmatpush1.bf16.msra.mxu0 0
  %159 = vmatprep.subr.bf16.mxu0 0
  %160 = vmatpush1.bf16.msra.mxu0 0
  %161 = vmatprep.subr.bf16.mxu0 0
  %162 = vmatpush1.bf16.msra.mxu0 0
  %163 = vmatprep.subr.bf16.mxu0 0
  %164 = vmatpush1.bf16.msra.mxu0 0
  %165 = vmatprep.subr.bf16.mxu0 0
  %166 = vmatpush1.bf16.msra.mxu0 0
  %167 = vmatprep.subr.bf16.mxu0 0
  %168 = vmatpush1.bf16.msra.mxu0 0
  %169 = vmatprep.mubr.bf16.mxu0 0
  %170 = vmatmul.mubr.bf16.gmra.mrb[0].mxu0 %v135
  %v171 = vpop.f32.mrb[0].mxu0
  %v172 = vadd.f32 0.0, %v171
  %v173 = vpop.f32.mrb[0].mxu0
  %v174 = vadd.f32 0.0, %v173
  %v175 = vpop.f32.mrb[0].mxu0
  %v176 = vpop.f32.mrb[0].mxu0
  %177 = vdwg.mxu0
  %178 = vmatprep.subr.bf16.mxu0 %v128
  %179 = vmatpush1.bf16.msra.mxu0 %v127
  %180 = vmatprep.subr.bf16.mxu0 0
  %181 = vmatpush1.bf16.msra.mxu0 0
  %182 = vmatprep.subr.bf16.mxu0 0
  %183 = vmatpush1.bf16.msra.mxu0 0
  %184 = vmatprep.subr.bf16.mxu0 0
  %185 = vmatpush1.bf16.msra.mxu0 0
  %186 = vmatprep.subr.bf16.mxu0 0
  %187 = vmatpush1.bf16.msra.mxu0 0
  %188 = vmatprep.subr.bf16.mxu0 0
  %189 = vmatpush1.bf16.msra.mxu0 0
  %190 = vmatprep.subr.bf16.mxu0 0
  %191 = vmatpush1.bf16.msra.mxu0 0
  %192 = vmatprep.subr.bf16.mxu0 0
  %193 = vmatpush1.bf16.msra.mxu0 0
  %194 = vmatprep.subr.bf16.mxu0 0
  %195 = vmatpush1.bf16.msra.mxu0 0
  %196 = vmatprep.subr.bf16.mxu0 0
  %197 = vmatpush1.bf16.msra.mxu0 0
  %198 = vmatprep.subr.bf16.mxu0 0
  %199 = vmatpush1.bf16.msra.mxu0 0
  %200 = vmatprep.subr.bf16.mxu0 0
  %201 = vmatpush1.bf16.msra.mxu0 0
  %202 = vmatprep.subr.bf16.mxu0 0
  %203 = vmatpush1.bf16.msra.mxu0 0
  %204 = vmatprep.subr.bf16.mxu0 0
  %205 = vmatpush1.bf16.msra.mxu0 0
  %206 = vmatprep.subr.bf16.mxu0 0
  %207 = vmatpush1.bf16.msra.mxu0 0
  %208 = vmatprep.subr.bf16.mxu0 0
  %209 = vmatpush1.bf16.msra.mxu0 0
  %210 = vmatprep.mubr.bf16.mxu0 0
  %211 = vmatmul.mubr.bf16.gmra.mrb[0].mxu0 %v135
  %v212 = vpop.f32.mrb[0].mxu0
  %v213 = vadd.f32 0.0, %v212
  %v214 = vpop.f32.mrb[0].mxu0
  %v215 = vadd.f32 0.0, %v214
  %v216 = vpop.f32.mrb[0].mxu0
  %v217 = vpop.f32.mrb[0].mxu0
  %218 = vdwg.mxu0
  %v219 = vld [vmem:[%s17] ss:$8 sm:$0xf]
  %v221 = vlaneseq
  %v222 = vshrl.u32 %v221, 7
  %v223 = vsub.s32 0, %v222
  %v224 = vrot.slane %v219, %v223
  %v225 = vlaneseq
  %v226 = vshrl.u32 %v225, 7
  %v227 = vsub.s32 1, %v226
  %v228 = vrot.slane %v219, %v227
  %v229 = vlaneseq
  %v230 = vshrl.u32 %v229, 7
  %v231 = vsub.s32 2, %v230
  %v232 = vrot.slane %v219, %v231
  %v233 = vlaneseq
  %v234 = vshrl.u32 %v233, 7
  %v235 = vsub.s32 3, %v234
  %v236 = vrot.slane %v219, %v235
  %v241 = vmul.f32 %v172, %v224
  %v242 = vmul.f32 %v174, %v228
  %v243 = vmul.f32 %v213, %v232
  %v244 = vmul.f32 %v215, %v236
  %s245 = scalar_lea.vmem %s1, 4
  %v246 = vld [vmem:[%s245] sm:$0xf]
  %247 = vrot.lane.b32.xlu0 %v103, 16
  %v248 = vpop.permute.xlu0 %247
  %249 = vrot.lane.b32.xlu0 %v104, 16
  %v250 = vpop.permute.xlu0 %249
  %251 = vrot.lane.b32.xlu0 %v105, 16
  %v252 = vpop.permute.xlu0 %251
  %253 = vrot.lane.b32.xlu0 %v106, 16
  %v254 = vpop.permute.xlu0 %253
  %255 = vrot.lane.b32.xlu0 %v107, 16
  %v256 = vpop.permute.xlu0 %255
  %vm257 = vcmask 130048
  %v258 = vsel %vm257, %v248, %v250
  %v259 = vsel %vm257, %v250, %v252
  %v260 = vsel %vm257, %v252, %v254
  %v261 = vsel %vm257, %v254, %v256
  %v267 = vsel %vm133, %v246, 0
  %269 = vmatprep.subr.bf16.mxu0 %v259
  %270 = vmatpush1.bf16.msra.mxu0 %v258
  %271 = vmatprep.subr.bf16.mxu0 0
  %272 = vmatpush1.bf16.msra.mxu0 0
  %273 = vmatprep.subr.bf16.mxu0 0
  %274 = vmatpush1.bf16.msra.mxu0 0
  %275 = vmatprep.subr.bf16.mxu0 0
  %276 = vmatpush1.bf16.msra.mxu0 0
  %277 = vmatprep.subr.bf16.mxu0 0
  %278 = vmatpush1.bf16.msra.mxu0 0
  %279 = vmatprep.subr.bf16.mxu0 0
  %280 = vmatpush1.bf16.msra.mxu0 0
  %281 = vmatprep.subr.bf16.mxu0 0
  %282 = vmatpush1.bf16.msra.mxu0 0
  %283 = vmatprep.subr.bf16.mxu0 0
  %284 = vmatpush1.bf16.msra.mxu0 0
  %285 = vmatprep.subr.bf16.mxu0 0
  %286 = vmatpush1.bf16.msra.mxu0 0
  %287 = vmatprep.subr.bf16.mxu0 0
  %288 = vmatpush1.bf16.msra.mxu0 0
  %289 = vmatprep.subr.bf16.mxu0 0
  %290 = vmatpush1.bf16.msra.mxu0 0
  %291 = vmatprep.subr.bf16.mxu0 0
  %292 = vmatpush1.bf16.msra.mxu0 0
  %293 = vmatprep.subr.bf16.mxu0 0
  %294 = vmatpush1.bf16.msra.mxu0 0
  %295 = vmatprep.subr.bf16.mxu0 0
  %296 = vmatpush1.bf16.msra.mxu0 0
  %297 = vmatprep.subr.bf16.mxu0 0
  %298 = vmatpush1.bf16.msra.mxu0 0
  %299 = vmatprep.subr.bf16.mxu0 0
  %300 = vmatpush1.bf16.msra.mxu0 0
  %301 = vmatprep.mubr.bf16.mxu0 0
  %302 = vmatmul.mubr.bf16.gmra.mrb[0].mxu0 %v267
  %v303 = vpop.f32.mrb[0].mxu0
  %v304 = vadd.f32 0.0, %v303
  %v305 = vpop.f32.mrb[0].mxu0
  %v306 = vadd.f32 0.0, %v305
  %v307 = vpop.f32.mrb[0].mxu0
  %v308 = vpop.f32.mrb[0].mxu0
  %309 = vdwg.mxu0
  %310 = vmatprep.subr.bf16.mxu0 %v261
  %311 = vmatpush1.bf16.msra.mxu0 %v260
  %312 = vmatprep.subr.bf16.mxu0 0
  %313 = vmatpush1.bf16.msra.mxu0 0
  %314 = vmatprep.subr.bf16.mxu0 0
  %315 = vmatpush1.bf16.msra.mxu0 0
  %316 = vmatprep.subr.bf16.mxu0 0
  %317 = vmatpush1.bf16.msra.mxu0 0
  %318 = vmatprep.subr.bf16.mxu0 0
  %319 = vmatpush1.bf16.msra.mxu0 0
  %320 = vmatprep.subr.bf16.mxu0 0
  %321 = vmatpush1.bf16.msra.mxu0 0
  %322 = vmatprep.subr.bf16.mxu0 0
  %323 = vmatpush1.bf16.msra.mxu0 0
  %324 = vmatprep.subr.bf16.mxu0 0
  %325 = vmatpush1.bf16.msra.mxu0 0
  %326 = vmatprep.subr.bf16.mxu0 0
  %327 = vmatpush1.bf16.msra.mxu0 0
  %328 = vmatprep.subr.bf16.mxu0 0
  %329 = vmatpush1.bf16.msra.mxu0 0
  %330 = vmatprep.subr.bf16.mxu0 0
  %331 = vmatpush1.bf16.msra.mxu0 0
  %332 = vmatprep.subr.bf16.mxu0 0
  %333 = vmatpush1.bf16.msra.mxu0 0
  %334 = vmatprep.subr.bf16.mxu0 0
  %335 = vmatpush1.bf16.msra.mxu0 0
  %336 = vmatprep.subr.bf16.mxu0 0
  %337 = vmatpush1.bf16.msra.mxu0 0
  %338 = vmatprep.subr.bf16.mxu0 0
  %339 = vmatpush1.bf16.msra.mxu0 0
  %340 = vmatprep.subr.bf16.mxu0 0
  %341 = vmatpush1.bf16.msra.mxu0 0
  %342 = vmatprep.mubr.bf16.mxu0 0
  %343 = vmatmul.mubr.bf16.gmra.mrb[0].mxu0 %v267
  %v344 = vpop.f32.mrb[0].mxu0
  %v345 = vadd.f32 0.0, %v344
  %v346 = vpop.f32.mrb[0].mxu0
  %v347 = vadd.f32 0.0, %v346
  %v348 = vpop.f32.mrb[0].mxu0
  %v349 = vpop.f32.mrb[0].mxu0
  %350 = vdwg.mxu0
  %s351 = scalar_lea.vmem %s17, 1
  %v352 = vld [vmem:[%s351] ss:$8 sm:$0xf]
  %v354 = vlaneseq
  %v355 = vshrl.u32 %v354, 7
  %v356 = vsub.s32 0, %v355
  %v357 = vrot.slane %v352, %v356
  %v358 = vlaneseq
  %v359 = vshrl.u32 %v358, 7
  %v360 = vsub.s32 1, %v359
  %v361 = vrot.slane %v352, %v360
  %v362 = vlaneseq
  %v363 = vshrl.u32 %v362, 7
  %v364 = vsub.s32 2, %v363
  %v365 = vrot.slane %v352, %v364
  %v366 = vlaneseq
  %v367 = vshrl.u32 %v366, 7
  %v368 = vsub.s32 3, %v367
  %v369 = vrot.slane %v352, %v368
  %v374 = vmul.f32 %v304, %v357
  %v375 = vmul.f32 %v306, %v361
  %v376 = vmul.f32 %v345, %v365
  %v377 = vmul.f32 %v347, %v369
  %v378 = vadd.f32 %v241, %v374
  %v379 = vadd.f32 %v242, %v375
  %v380 = vadd.f32 %v243, %v376
  %v381 = vadd.f32 %v244, %v377
  %s382 = scalar_lea.vmem %s1, 8
  %v383 = vld [vmem:[%s382] sm:$0xf]
  %384 = vrot.lane.b32.xlu0 %v103, 15
  %v385 = vpop.permute.xlu0 %384
  %386 = vrot.lane.b32.xlu0 %v104, 15
  %v387 = vpop.permute.xlu0 %386
  %388 = vrot.lane.b32.xlu0 %v105, 15
  %v389 = vpop.permute.xlu0 %388
  %390 = vrot.lane.b32.xlu0 %v106, 15
  %v391 = vpop.permute.xlu0 %390
  %392 = vrot.lane.b32.xlu0 %v107, 15
  %v393 = vpop.permute.xlu0 %392
  %vm394 = vcmask 121856
  %v395 = vsel %vm394, %v385, %v387
  %v396 = vsel %vm394, %v387, %v389
  %v397 = vsel %vm394, %v389, %v391
  %v398 = vsel %vm394, %v391, %v393
  %v404 = vsel %vm133, %v383, 0
  %406 = vmatprep.subr.bf16.mxu0 %v396
  %407 = vmatpush1.bf16.msra.mxu0 %v395
  %408 = vmatprep.subr.bf16.mxu0 0
  %409 = vmatpush1.bf16.msra.mxu0 0
  %410 = vmatprep.subr.bf16.mxu0 0
  %411 = vmatpush1.bf16.msra.mxu0 0
  %412 = vmatprep.subr.bf16.mxu0 0
  %413 = vmatpush1.bf16.msra.mxu0 0
  %414 = vmatprep.subr.bf16.mxu0 0
  %415 = vmatpush1.bf16.msra.mxu0 0
  %416 = vmatprep.subr.bf16.mxu0 0
  %417 = vmatpush1.bf16.msra.mxu0 0
  %418 = vmatprep.subr.bf16.mxu0 0
  %419 = vmatpush1.bf16.msra.mxu0 0
  %420 = vmatprep.subr.bf16.mxu0 0
  %421 = vmatpush1.bf16.msra.mxu0 0
  %422 = vmatprep.subr.bf16.mxu0 0
  %423 = vmatpush1.bf16.msra.mxu0 0
  %424 = vmatprep.subr.bf16.mxu0 0
  %425 = vmatpush1.bf16.msra.mxu0 0
  %426 = vmatprep.subr.bf16.mxu0 0
  %427 = vmatpush1.bf16.msra.mxu0 0
  %428 = vmatprep.subr.bf16.mxu0 0
  %429 = vmatpush1.bf16.msra.mxu0 0
  %430 = vmatprep.subr.bf16.mxu0 0
  %431 = vmatpush1.bf16.msra.mxu0 0
  %432 = vmatprep.subr.bf16.mxu0 0
  %433 = vmatpush1.bf16.msra.mxu0 0
  %434 = vmatprep.subr.bf16.mxu0 0
  %435 = vmatpush1.bf16.msra.mxu0 0
  %436 = vmatprep.subr.bf16.mxu0 0
  %437 = vmatpush1.bf16.msra.mxu0 0
  %438 = vmatprep.mubr.bf16.mxu0 0
  %439 = vmatmul.mubr.bf16.gmra.mrb[0].mxu0 %v404
  %v440 = vpop.f32.mrb[0].mxu0
  %v441 = vadd.f32 0.0, %v440
  %v442 = vpop.f32.mrb[0].mxu0
  %v443 = vadd.f32 0.0, %v442
  %v444 = vpop.f32.mrb[0].mxu0
  %v445 = vpop.f32.mrb[0].mxu0
  %446 = vdwg.mxu0
  %447 = vmatprep.subr.bf16.mxu0 %v398
  %448 = vmatpush1.bf16.msra.mxu0 %v397
  %449 = vmatprep.subr.bf16.mxu0 0
  %450 = vmatpush1.bf16.msra.mxu0 0
  %451 = vmatprep.subr.bf16.mxu0 0
  %452 = vmatpush1.bf16.msra.mxu0 0
  %453 = vmatprep.subr.bf16.mxu0 0
  %454 = vmatpush1.bf16.msra.mxu0 0
  %455 = vmatprep.subr.bf16.mxu0 0
  %456 = vmatpush1.bf16.msra.mxu0 0
  %457 = vmatprep.subr.bf16.mxu0 0
  %458 = vmatpush1.bf16.msra.mxu0 0
  %459 = vmatprep.subr.bf16.mxu0 0
  %460 = vmatpush1.bf16.msra.mxu0 0
  %461 = vmatprep.subr.bf16.mxu0 0
  %462 = vmatpush1.bf16.msra.mxu0 0
  %463 = vmatprep.subr.bf16.mxu0 0
  %464 = vmatpush1.bf16.msra.mxu0 0
  %465 = vmatprep.subr.bf16.mxu0 0
  %466 = vmatpush1.bf16.msra.mxu0 0
  %467 = vmatprep.subr.bf16.mxu0 0
  %468 = vmatpush1.bf16.msra.mxu0 0
  %469 = vmatprep.subr.bf16.mxu0 0
  %470 = vmatpush1.bf16.msra.mxu0 0
  %471 = vmatprep.subr.bf16.mxu0 0
  %472 = vmatpush1.bf16.msra.mxu0 0
  %473 = vmatprep.subr.bf16.mxu0 0
  %474 = vmatpush1.bf16.msra.mxu0 0
  %475 = vmatprep.subr.bf16.mxu0 0
  %476 = vmatpush1.bf16.msra.mxu0 0
  %477 = vmatprep.subr.bf16.mxu0 0
  %478 = vmatpush1.bf16.msra.mxu0 0
  %479 = vmatprep.mubr.bf16.mxu0 0
  %480 = vmatmul.mubr.bf16.gmra.mrb[0].mxu0 %v404
  %v481 = vpop.f32.mrb[0].mxu0
  %v482 = vadd.f32 0.0, %v481
  %v483 = vpop.f32.mrb[0].mxu0
  %v484 = vadd.f32 0.0, %v483
  %v485 = vpop.f32.mrb[0].mxu0
  %v486 = vpop.f32.mrb[0].mxu0
  %487 = vdwg.mxu0
  %s488 = scalar_lea.vmem %s17, 2
  %v489 = vld [vmem:[%s488] ss:$8 sm:$0xf]
  %v491 = vlaneseq
  %v492 = vshrl.u32 %v491, 7
  %v493 = vsub.s32 0, %v492
  %v494 = vrot.slane %v489, %v493
  %v495 = vlaneseq
  %v496 = vshrl.u32 %v495, 7
  %v497 = vsub.s32 1, %v496
  %v498 = vrot.slane %v489, %v497
  %v499 = vlaneseq
  %v500 = vshrl.u32 %v499, 7
  %v501 = vsub.s32 2, %v500
  %v502 = vrot.slane %v489, %v501
  %v503 = vlaneseq
  %v504 = vshrl.u32 %v503, 7
  %v505 = vsub.s32 3, %v504
  %v506 = vrot.slane %v489, %v505
  %v511 = vmul.f32 %v441, %v494
  %v512 = vmul.f32 %v443, %v498
  %v513 = vmul.f32 %v482, %v502
  %v514 = vmul.f32 %v484, %v506
  %v515 = vadd.f32 %v378, %v511
  %v516 = vadd.f32 %v379, %v512
  %v517 = vadd.f32 %v380, %v513
  %v518 = vadd.f32 %v381, %v514
  %s519 = scalar_lea.vmem %s1, 12
  %v520 = vld [vmem:[%s519] sm:$0xf]
  %521 = vrot.lane.b32.xlu0 %v103, 1
  %v522 = vpop.permute.xlu0 %521
  %523 = vrot.lane.b32.xlu0 %v104, 1
  %v524 = vpop.permute.xlu0 %523
  %525 = vrot.lane.b32.xlu0 %v105, 1
  %v526 = vpop.permute.xlu0 %525
  %527 = vrot.lane.b32.xlu0 %v106, 1
  %v528 = vpop.permute.xlu0 %527
  %529 = vrot.lane.b32.xlu0 %v107, 1
  %v530 = vpop.permute.xlu0 %529
  %vm531 = vcmask 7168
  %v532 = vsel %vm531, %v522, %v524
  %v533 = vsel %vm531, %v524, %v526
  %v534 = vsel %vm531, %v526, %v528
  %v535 = vsel %vm531, %v528, %v530
  %v541 = vsel %vm133, %v520, 0
  %543 = vmatprep.subr.bf16.mxu0 %v533
  %544 = vmatpush1.bf16.msra.mxu0 %v532
  %545 = vmatprep.subr.bf16.mxu0 0
  %546 = vmatpush1.bf16.msra.mxu0 0
  %547 = vmatprep.subr.bf16.mxu0 0
  %548 = vmatpush1.bf16.msra.mxu0 0
  %549 = vmatprep.subr.bf16.mxu0 0
  %550 = vmatpush1.bf16.msra.mxu0 0
  %551 = vmatprep.subr.bf16.mxu0 0
  %552 = vmatpush1.bf16.msra.mxu0 0
  %553 = vmatprep.subr.bf16.mxu0 0
  %554 = vmatpush1.bf16.msra.mxu0 0
  %555 = vmatprep.subr.bf16.mxu0 0
  %556 = vmatpush1.bf16.msra.mxu0 0
  %557 = vmatprep.subr.bf16.mxu0 0
  %558 = vmatpush1.bf16.msra.mxu0 0
  %559 = vmatprep.subr.bf16.mxu0 0
  %560 = vmatpush1.bf16.msra.mxu0 0
  %561 = vmatprep.subr.bf16.mxu0 0
  %562 = vmatpush1.bf16.msra.mxu0 0
  %563 = vmatprep.subr.bf16.mxu0 0
  %564 = vmatpush1.bf16.msra.mxu0 0
  %565 = vmatprep.subr.bf16.mxu0 0
  %566 = vmatpush1.bf16.msra.mxu0 0
  %567 = vmatprep.subr.bf16.mxu0 0
  %568 = vmatpush1.bf16.msra.mxu0 0
  %569 = vmatprep.subr.bf16.mxu0 0
  %570 = vmatpush1.bf16.msra.mxu0 0
  %571 = vmatprep.subr.bf16.mxu0 0
  %572 = vmatpush1.bf16.msra.mxu0 0
  %573 = vmatprep.subr.bf16.mxu0 0
  %574 = vmatpush1.bf16.msra.mxu0 0
  %575 = vmatprep.mubr.bf16.mxu0 0
  %576 = vmatmul.mubr.bf16.gmra.mrb[0].mxu0 %v541
  %v577 = vpop.f32.mrb[0].mxu0
  %v578 = vadd.f32 0.0, %v577
  %v579 = vpop.f32.mrb[0].mxu0
  %v580 = vadd.f32 0.0, %v579
  %v581 = vpop.f32.mrb[0].mxu0
  %v582 = vpop.f32.mrb[0].mxu0
  %583 = vdwg.mxu0
  %584 = vmatprep.subr.bf16.mxu0 %v535
  %585 = vmatpush1.bf16.msra.mxu0 %v534
  %586 = vmatprep.subr.bf16.mxu0 0
  %587 = vmatpush1.bf16.msra.mxu0 0
  %588 = vmatprep.subr.bf16.mxu0 0
  %589 = vmatpush1.bf16.msra.mxu0 0
  %590 = vmatprep.subr.bf16.mxu0 0
  %591 = vmatpush1.bf16.msra.mxu0 0
  %592 = vmatprep.subr.bf16.mxu0 0
  %593 = vmatpush1.bf16.msra.mxu0 0
  %594 = vmatprep.subr.bf16.mxu0 0
  %595 = vmatpush1.bf16.msra.mxu0 0
  %596 = vmatprep.subr.bf16.mxu0 0
  %597 = vmatpush1.bf16.msra.mxu0 0
  %598 = vmatprep.subr.bf16.mxu0 0
  %599 = vmatpush1.bf16.msra.mxu0 0
  %600 = vmatprep.subr.bf16.mxu0 0
  %601 = vmatpush1.bf16.msra.mxu0 0
  %602 = vmatprep.subr.bf16.mxu0 0
  %603 = vmatpush1.bf16.msra.mxu0 0
  %604 = vmatprep.subr.bf16.mxu0 0
  %605 = vmatpush1.bf16.msra.mxu0 0
  %606 = vmatprep.subr.bf16.mxu0 0
  %607 = vmatpush1.bf16.msra.mxu0 0
  %608 = vmatprep.subr.bf16.mxu0 0
  %609 = vmatpush1.bf16.msra.mxu0 0
  %610 = vmatprep.subr.bf16.mxu0 0
  %611 = vmatpush1.bf16.msra.mxu0 0
  %612 = vmatprep.subr.bf16.mxu0 0
  %613 = vmatpush1.bf16.msra.mxu0 0
  %614 = vmatprep.subr.bf16.mxu0 0
  %615 = vmatpush1.bf16.msra.mxu0 0
  %616 = vmatprep.mubr.bf16.mxu0 0
  %617 = vmatmul.mubr.bf16.gmra.mrb[0].mxu0 %v541
  %v618 = vpop.f32.mrb[0].mxu0
  %v619 = vadd.f32 0.0, %v618
  %v620 = vpop.f32.mrb[0].mxu0
  %v621 = vadd.f32 0.0, %v620
  %v622 = vpop.f32.mrb[0].mxu0
  %v623 = vpop.f32.mrb[0].mxu0
  %624 = vdwg.mxu0
  %s625 = scalar_lea.vmem %s17, 3
  %v626 = vld [vmem:[%s625] ss:$8 sm:$0xf]
  %v628 = vlaneseq
  %v629 = vshrl.u32 %v628, 7
  %v630 = vsub.s32 0, %v629
  %v631 = vrot.slane %v626, %v630
  %v632 = vlaneseq
  %v633 = vshrl.u32 %v632, 7
  %v634 = vsub.s32 1, %v633
  %v635 = vrot.slane %v626, %v634
  %v636 = vlaneseq
  %v637 = vshrl.u32 %v636, 7
  %v638 = vsub.s32 2, %v637
  %v639 = vrot.slane %v626, %v638
  %v640 = vlaneseq
  %v641 = vshrl.u32 %v640, 7
  %v642 = vsub.s32 3, %v641
  %v643 = vrot.slane %v626, %v642
  %v648 = vmul.f32 %v578, %v631
  %v649 = vmul.f32 %v580, %v635
  %v650 = vmul.f32 %v619, %v639
  %v651 = vmul.f32 %v621, %v643
  %v652 = vadd.f32 %v515, %v648
  %v653 = vadd.f32 %v516, %v649
  %v654 = vadd.f32 %v517, %v650
  %v655 = vadd.f32 %v518, %v651
  %s656 = scalar_lea.vmem %s1, 16
  %v657 = vld [vmem:[%s656] sm:$0xf]
  %v659 = vsel %vm133, %v657, 0
  %661 = vmatprep.subr.bf16.mxu0 %v105
  %662 = vmatpush1.bf16.msra.mxu0 %v104
  %663 = vmatprep.subr.bf16.mxu0 0
  %664 = vmatpush1.bf16.msra.mxu0 0
  %665 = vmatprep.subr.bf16.mxu0 0
  %666 = vmatpush1.bf16.msra.mxu0 0
  %667 = vmatprep.subr.bf16.mxu0 0
  %668 = vmatpush1.bf16.msra.mxu0 0
  %669 = vmatprep.subr.bf16.mxu0 0
  %670 = vmatpush1.bf16.msra.mxu0 0
  %671 = vmatprep.subr.bf16.mxu0 0
  %672 = vmatpush1.bf16.msra.mxu0 0
  %673 = vmatprep.subr.bf16.mxu0 0
  %674 = vmatpush1.bf16.msra.mxu0 0
  %675 = vmatprep.subr.bf16.mxu0 0
  %676 = vmatpush1.bf16.msra.mxu0 0
  %677 = vmatprep.subr.bf16.mxu0 0
  %678 = vmatpush1.bf16.msra.mxu0 0
  %679 = vmatprep.subr.bf16.mxu0 0
  %680 = vmatpush1.bf16.msra.mxu0 0
  %681 = vmatprep.subr.bf16.mxu0 0
  %682 = vmatpush1.bf16.msra.mxu0 0
  %683 = vmatprep.subr.bf16.mxu0 0
  %684 = vmatpush1.bf16.msra.mxu0 0
  %685 = vmatprep.subr.bf16.mxu0 0
  %686 = vmatpush1.bf16.msra.mxu0 0
  %687 = vmatprep.subr.bf16.mxu0 0
  %688 = vmatpush1.bf16.msra.mxu0 0
  %689 = vmatprep.subr.bf16.mxu0 0
  %690 = vmatpush1.bf16.msra.mxu0 0
  %691 = vmatprep.subr.bf16.mxu0 0
  %692 = vmatpush1.bf16.msra.mxu0 0
  %693 = vmatprep.mubr.bf16.mxu0 0
  %694 = vmatmul.mubr.bf16.gmra.mrb[0].mxu0 %v659
  %v695 = vpop.f32.mrb[0].mxu0
  %v696 = vadd.f32 0.0, %v695
  %v697 = vpop.f32.mrb[0].mxu0
  %v698 = vadd.f32 0.0, %v697
  %v699 = vpop.f32.mrb[0].mxu0
  %v700 = vpop.f32.mrb[0].mxu0
  %701 = vdwg.mxu0
  %702 = vmatprep.subr.bf16.mxu0 %v107
  %703 = vmatpush1.bf16.msra.mxu0 %v106
  %704 = vmatprep.subr.bf16.mxu0 0
  %705 = vmatpush1.bf16.msra.mxu0 0
  %706 = vmatprep.subr.bf16.mxu0 0
  %707 = vmatpush1.bf16.msra.mxu0 0
  %708 = vmatprep.subr.bf16.mxu0 0
  %709 = vmatpush1.bf16.msra.mxu0 0
  %710 = vmatprep.subr.bf16.mxu0 0
  %711 = vmatpush1.bf16.msra.mxu0 0
  %712 = vmatprep.subr.bf16.mxu0 0
  %713 = vmatpush1.bf16.msra.mxu0 0
  %714 = vmatprep.subr.bf16.mxu0 0
  %715 = vmatpush1.bf16.msra.mxu0 0
  %716 = vmatprep.subr.bf16.mxu0 0
  %717 = vmatpush1.bf16.msra.mxu0 0
  %718 = vmatprep.subr.bf16.mxu0 0
  %719 = vmatpush1.bf16.msra.mxu0 0
  %720 = vmatprep.subr.bf16.mxu0 0
  %721 = vmatpush1.bf16.msra.mxu0 0
  %722 = vmatprep.subr.bf16.mxu0 0
  %723 = vmatpush1.bf16.msra.mxu0 0
  %724 = vmatprep.subr.bf16.mxu0 0
  %725 = vmatpush1.bf16.msra.mxu0 0
  %726 = vmatprep.subr.bf16.mxu0 0
  %727 = vmatpush1.bf16.msra.mxu0 0
  %728 = vmatprep.subr.bf16.mxu0 0
  %729 = vmatpush1.bf16.msra.mxu0 0
  %730 = vmatprep.subr.bf16.mxu0 0
  %731 = vmatpush1.bf16.msra.mxu0 0
  %732 = vmatprep.subr.bf16.mxu0 0
  %733 = vmatpush1.bf16.msra.mxu0 0
  %734 = vmatprep.mubr.bf16.mxu0 0
  %735 = vmatmul.mubr.bf16.gmra.mrb[0].mxu0 %v659
  %v736 = vpop.f32.mrb[0].mxu0
  %v737 = vadd.f32 0.0, %v736
  %v738 = vpop.f32.mrb[0].mxu0
  %v739 = vadd.f32 0.0, %v738
  %v740 = vpop.f32.mrb[0].mxu0
  %v741 = vpop.f32.mrb[0].mxu0
  %742 = vdwg.mxu0
  %v743 = vadd.f32 %v652, %v696
  %v744 = vadd.f32 %v653, %v698
  %v745 = vadd.f32 %v654, %v737
  %v746 = vadd.f32 %v655, %v739
  %v747 = vld [vmem:[#allocation2 + $0x8] sm:$0xff]
  %v748 = vld [vmem:[#allocation2 + $0x10] sm:$0xff]
  %v749 = vld [vmem:[#allocation2 + $0x18] sm:$0xff]
  %v750 = vld [vmem:[#allocation2 + $0x20] sm:$0xff]
  %v751 = vld [vmem:[#allocation2 + $0x28] sm:$0xff]
  %s752 = scalar_lea.vmem %s1, 20
  %v753 = vld [vmem:[%s752] sm:$0xf]
  %759 = vrot.lane.b32.xlu0 %v747, 127
  %v760 = vpop.permute.xlu0 %759
  %761 = vrot.lane.b32.xlu0 %v748, 127
  %v762 = vpop.permute.xlu0 %761
  %763 = vrot.lane.b32.xlu0 %v749, 127
  %v764 = vpop.permute.xlu0 %763
  %765 = vrot.lane.b32.xlu0 %v750, 127
  %v766 = vpop.permute.xlu0 %765
  %767 = vrot.lane.b32.xlu0 %v751, 127
  %v768 = vpop.permute.xlu0 %767
  %vm769 = vcmask 1039360
  %v770 = vsel %vm769, %v760, %v762
  %v771 = vsel %vm769, %v762, %v764
  %v772 = vsel %vm769, %v764, %v766
  %v773 = vsel %vm769, %v766, %v768
  %v779 = vsel %vm133, %v753, 0
  %781 = vmatprep.subr.bf16.mxu0 %v771
  %782 = vmatpush1.bf16.msra.mxu0 %v770
  %783 = vmatprep.subr.bf16.mxu0 0
  %784 = vmatpush1.bf16.msra.mxu0 0
  %785 = vmatprep.subr.bf16.mxu0 0
  %786 = vmatpush1.bf16.msra.mxu0 0
  %787 = vmatprep.subr.bf16.mxu0 0
  %788 = vmatpush1.bf16.msra.mxu0 0
  %789 = vmatprep.subr.bf16.mxu0 0
  %790 = vmatpush1.bf16.msra.mxu0 0
  %791 = vmatprep.subr.bf16.mxu0 0
  %792 = vmatpush1.bf16.msra.mxu0 0
  %793 = vmatprep.subr.bf16.mxu0 0
  %794 = vmatpush1.bf16.msra.mxu0 0
  %795 = vmatprep.subr.bf16.mxu0 0
  %796 = vmatpush1.bf16.msra.mxu0 0
  %797 = vmatprep.subr.bf16.mxu0 0
  %798 = vmatpush1.bf16.msra.mxu0 0
  %799 = vmatprep.subr.bf16.mxu0 0
  %800 = vmatpush1.bf16.msra.mxu0 0
  %801 = vmatprep.subr.bf16.mxu0 0
  %802 = vmatpush1.bf16.msra.mxu0 0
  %803 = vmatprep.subr.bf16.mxu0 0
  %804 = vmatpush1.bf16.msra.mxu0 0
  %805 = vmatprep.subr.bf16.mxu0 0
  %806 = vmatpush1.bf16.msra.mxu0 0
  %807 = vmatprep.subr.bf16.mxu0 0
  %808 = vmatpush1.bf16.msra.mxu0 0
  %809 = vmatprep.subr.bf16.mxu0 0
  %810 = vmatpush1.bf16.msra.mxu0 0
  %811 = vmatprep.subr.bf16.mxu0 0
  %812 = vmatpush1.bf16.msra.mxu0 0
  %813 = vmatprep.mubr.bf16.mxu0 0
  %814 = vmatmul.mubr.bf16.gmra.mrb[0].mxu0 %v779
  %v815 = vpop.f32.mrb[0].mxu0
  %v816 = vadd.f32 0.0, %v815
  %v817 = vpop.f32.mrb[0].mxu0
  %v818 = vadd.f32 0.0, %v817
  %v819 = vpop.f32.mrb[0].mxu0
  %v820 = vpop.f32.mrb[0].mxu0
  %821 = vdwg.mxu0
  %822 = vmatprep.subr.bf16.mxu0 %v773
  %823 = vmatpush1.bf16.msra.mxu0 %v772
  %824 = vmatprep.subr.bf16.mxu0 0
  %825 = vmatpush1.bf16.msra.mxu0 0
  %826 = vmatprep.subr.bf16.mxu0 0
  %827 = vmatpush1.bf16.msra.mxu0 0
  %828 = vmatprep.subr.bf16.mxu0 0
  %829 = vmatpush1.bf16.msra.mxu0 0
  %830 = vmatprep.subr.bf16.mxu0 0
  %831 = vmatpush1.bf16.msra.mxu0 0
  %832 = vmatprep.subr.bf16.mxu0 0
  %833 = vmatpush1.bf16.msra.mxu0 0
  %834 = vmatprep.subr.bf16.mxu0 0
  %835 = vmatpush1.bf16.msra.mxu0 0
  %836 = vmatprep.subr.bf16.mxu0 0
  %837 = vmatpush1.bf16.msra.mxu0 0
  %838 = vmatprep.subr.bf16.mxu0 0
  %839 = vmatpush1.bf16.msra.mxu0 0
  %840 = vmatprep.subr.bf16.mxu0 0
  %841 = vmatpush1.bf16.msra.mxu0 0
  %842 = vmatprep.subr.bf16.mxu0 0
  %843 = vmatpush1.bf16.msra.mxu0 0
  %844 = vmatprep.subr.bf16.mxu0 0
  %845 = vmatpush1.bf16.msra.mxu0 0
  %846 = vmatprep.subr.bf16.mxu0 0
  %847 = vmatpush1.bf16.msra.mxu0 0
  %848 = vmatprep.subr.bf16.mxu0 0
  %849 = vmatpush1.bf16.msra.mxu0 0
  %850 = vmatprep.subr.bf16.mxu0 0
  %851 = vmatpush1.bf16.msra.mxu0 0
  %852 = vmatprep.subr.bf16.mxu0 0
  %853 = vmatpush1.bf16.msra.mxu0 0
  %854 = vmatprep.mubr.bf16.mxu0 0
  %855 = vmatmul.mubr.bf16.gmra.mrb[0].mxu0 %v779
  %v856 = vpop.f32.mrb[0].mxu0
  %v857 = vadd.f32 0.0, %v856
  %v858 = vpop.f32.mrb[0].mxu0
  %v859 = vadd.f32 0.0, %v858
  %v860 = vpop.f32.mrb[0].mxu0
  %v861 = vpop.f32.mrb[0].mxu0
  %862 = vdwg.mxu0
  %s863 = scalar_lea.vmem %s17, 5
  %v864 = vld [vmem:[%s863] ss:$8 sm:$0xf]
  %v866 = vlaneseq
  %v867 = vshrl.u32 %v866, 7
  %v868 = vsub.s32 0, %v867
  %v869 = vrot.slane %v864, %v868
  %v870 = vlaneseq
  %v871 = vshrl.u32 %v870, 7
  %v872 = vsub.s32 1, %v871
  %v873 = vrot.slane %v864, %v872
  %v874 = vlaneseq
  %v875 = vshrl.u32 %v874, 7
  %v876 = vsub.s32 2, %v875
  %v877 = vrot.slane %v864, %v876
  %v878 = vlaneseq
  %v879 = vshrl.u32 %v878, 7
  %v880 = vsub.s32 3, %v879
  %v881 = vrot.slane %v864, %v880
  %v886 = vmul.f32 %v816, %v869
  %v887 = vmul.f32 %v818, %v873
  %v888 = vmul.f32 %v857, %v877
  %v889 = vmul.f32 %v859, %v881
  %v890 = vadd.f32 %v743, %v886
  %v891 = vadd.f32 %v744, %v887
  %v892 = vadd.f32 %v745, %v888
  %v893 = vadd.f32 %v746, %v889
  %s894 = scalar_lea.vmem %s1, 24
  %v895 = vld [vmem:[%s894] sm:$0xf]
  %896 = vrot.lane.b32.xlu0 %v747, 113
  %v897 = vpop.permute.xlu0 %896
  %898 = vrot.lane.b32.xlu0 %v748, 113
  %v899 = vpop.permute.xlu0 %898
  %900 = vrot.lane.b32.xlu0 %v749, 113
  %v901 = vpop.permute.xlu0 %900
  %902 = vrot.lane.b32.xlu0 %v750, 113
  %v903 = vpop.permute.xlu0 %902
  %904 = vrot.lane.b32.xlu0 %v751, 113
  %v905 = vpop.permute.xlu0 %904
  %vm906 = vcmask 924672
  %v907 = vsel %vm906, %v897, %v899
  %v908 = vsel %vm906, %v899, %v901
  %v909 = vsel %vm906, %v901, %v903
  %v910 = vsel %vm906, %v903, %v905
  %v916 = vsel %vm133, %v895, 0
  %918 = vmatprep.subr.bf16.mxu0 %v908
  %919 = vmatpush1.bf16.msra.mxu0 %v907
  %920 = vmatprep.subr.bf16.mxu0 0
  %921 = vmatpush1.bf16.msra.mxu0 0
  %922 = vmatprep.subr.bf16.mxu0 0
  %923 = vmatpush1.bf16.msra.mxu0 0
  %924 = vmatprep.subr.bf16.mxu0 0
  %925 = vmatpush1.bf16.msra.mxu0 0
  %926 = vmatprep.subr.bf16.mxu0 0
  %927 = vmatpush1.bf16.msra.mxu0 0
  %928 = vmatprep.subr.bf16.mxu0 0
  %929 = vmatpush1.bf16.msra.mxu0 0
  %930 = vmatprep.subr.bf16.mxu0 0
  %931 = vmatpush1.bf16.msra.mxu0 0
  %932 = vmatprep.subr.bf16.mxu0 0
  %933 = vmatpush1.bf16.msra.mxu0 0
  %934 = vmatprep.subr.bf16.mxu0 0
  %935 = vmatpush1.bf16.msra.mxu0 0
  %936 = vmatprep.subr.bf16.mxu0 0
  %937 = vmatpush1.bf16.msra.mxu0 0
  %938 = vmatprep.subr.bf16.mxu0 0
  %939 = vmatpush1.bf16.msra.mxu0 0
  %940 = vmatprep.subr.bf16.mxu0 0
  %941 = vmatpush1.bf16.msra.mxu0 0
  %942 = vmatprep.subr.bf16.mxu0 0
  %943 = vmatpush1.bf16.msra.mxu0 0
  %944 = vmatprep.subr.bf16.mxu0 0
  %945 = vmatpush1.bf16.msra.mxu0 0
  %946 = vmatprep.subr.bf16.mxu0 0
  %947 = vmatpush1.bf16.msra.mxu0 0
  %948 = vmatprep.subr.bf16.mxu0 0
  %949 = vmatpush1.bf16.msra.mxu0 0
  %950 = vmatprep.mubr.bf16.mxu0 0
  %951 = vmatmul.mubr.bf16.gmra.mrb[0].mxu0 %v916
  %v952 = vpop.f32.mrb[0].mxu0
  %v953 = vadd.f32 0.0, %v952
  %v954 = vpop.f32.mrb[0].mxu0
  %v955 = vadd.f32 0.0, %v954
  %v956 = vpop.f32.mrb[0].mxu0
  %v957 = vpop.f32.mrb[0].mxu0
  %958 = vdwg.mxu0
  %959 = vmatprep.subr.bf16.mxu0 %v910
  %960 = vmatpush1.bf16.msra.mxu0 %v909
  %961 = vmatprep.subr.bf16.mxu0 0
  %962 = vmatpush1.bf16.msra.mxu0 0
  %963 = vmatprep.subr.bf16.mxu0 0
  %964 = vmatpush1.bf16.msra.mxu0 0
  %965 = vmatprep.subr.bf16.mxu0 0
  %966 = vmatpush1.bf16.msra.mxu0 0
  %967 = vmatprep.subr.bf16.mxu0 0
  %968 = vmatpush1.bf16.msra.mxu0 0
  %969 = vmatprep.subr.bf16.mxu0 0
  %970 = vmatpush1.bf16.msra.mxu0 0
  %971 = vmatprep.subr.bf16.mxu0 0
  %972 = vmatpush1.bf16.msra.mxu0 0
  %973 = vmatprep.subr.bf16.mxu0 0
  %974 = vmatpush1.bf16.msra.mxu0 0
  %975 = vmatprep.subr.bf16.mxu0 0
  %976 = vmatpush1.bf16.msra.mxu0 0
  %977 = vmatprep.subr.bf16.mxu0 0
  %978 = vmatpush1.bf16.msra.mxu0 0
  %979 = vmatprep.subr.bf16.mxu0 0
  %980 = vmatpush1.bf16.msra.mxu0 0
  %981 = vmatprep.subr.bf16.mxu0 0
  %982 = vmatpush1.bf16.msra.mxu0 0
  %983 = vmatprep.subr.bf16.mxu0 0
  %984 = vmatpush1.bf16.msra.mxu0 0
  %985 = vmatprep.subr.bf16.mxu0 0
  %986 = vmatpush1.bf16.msra.mxu0 0
  %987 = vmatprep.subr.bf16.mxu0 0
  %988 = vmatpush1.bf16.msra.mxu0 0
  %989 = vmatprep.subr.bf16.mxu0 0
  %990 = vmatpush1.bf16.msra.mxu0 0
  %991 = vmatprep.mubr.bf16.mxu0 0
  %992 = vmatmul.mubr.bf16.gmra.mrb[0].mxu0 %v916
  %v993 = vpop.f32.mrb[0].mxu0
  %v994 = vadd.f32 0.0, %v993
  %v995 = vpop.f32.mrb[0].mxu0
  %v996 = vadd.f32 0.0, %v995
  %v997 = vpop.f32.mrb[0].mxu0
  %v998 = vpop.f32.mrb[0].mxu0
  %999 = vdwg.mxu0
  %s1000 = scalar_lea.vmem %s17, 6
  %v1001 = vld [vmem:[%s1000] ss:$8 sm:$0xf]
  %v1003 = vlaneseq
  %v1004 = vshrl.u32 %v1003, 7
  %v1005 = vsub.s32 0, %v1004
  %v1006 = vrot.slane %v1001, %v1005
  %v1007 = vlaneseq
  %v1008 = vshrl.u32 %v1007, 7
  %v1009 = vsub.s32 1, %v1008
  %v1010 = vrot.slane %v1001, %v1009
  %v1011 = vlaneseq
  %v1012 = vshrl.u32 %v1011, 7
  %v1013 = vsub.s32 2, %v1012
  %v1014 = vrot.slane %v1001, %v1013
  %v1015 = vlaneseq
  %v1016 = vshrl.u32 %v1015, 7
  %v1017 = vsub.s32 3, %v1016
  %v1018 = vrot.slane %v1001, %v1017
  %v1023 = vmul.f32 %v953, %v1006
  %v1024 = vmul.f32 %v955, %v1010
  %v1025 = vmul.f32 %v994, %v1014
  %v1026 = vmul.f32 %v996, %v1018
  %v1027 = vadd.f32 %v890, %v1023
  %v1028 = vadd.f32 %v891, %v1024
  %v1029 = vadd.f32 %v892, %v1025
  %v1030 = vadd.f32 %v893, %v1026
  %s1031 = scalar_lea.vmem %s1, 28
  %v1032 = vld [vmem:[%s1031] sm:$0xf]
  %1033 = vrot.lane.b32.xlu0 %v747, 112
  %v1034 = vpop.permute.xlu0 %1033
  %1035 = vrot.lane.b32.xlu0 %v748, 112
  %v1036 = vpop.permute.xlu0 %1035
  %1037 = vrot.lane.b32.xlu0 %v749, 112
  %v1038 = vpop.permute.xlu0 %1037
  %1039 = vrot.lane.b32.xlu0 %v750, 112
  %v1040 = vpop.permute.xlu0 %1039
  %1041 = vrot.lane.b32.xlu0 %v751, 112
  %v1042 = vpop.permute.xlu0 %1041
  %vm1043 = vcmask 916480
  %v1044 = vsel %vm1043, %v1034, %v1036
  %v1045 = vsel %vm1043, %v1036, %v1038
  %v1046 = vsel %vm1043, %v1038, %v1040
  %v1047 = vsel %vm1043, %v1040, %v1042
  %v1053 = vsel %vm133, %v1032, 0
  %1055 = vmatprep.subr.bf16.mxu0 %v1045
  %1056 = vmatpush1.bf16.msra.mxu0 %v1044
  %1057 = vmatprep.subr.bf16.mxu0 0
  %1058 = vmatpush1.bf16.msra.mxu0 0
  %1059 = vmatprep.subr.bf16.mxu0 0
  %1060 = vmatpush1.bf16.msra.mxu0 0
  %1061 = vmatprep.subr.bf16.mxu0 0
  %1062 = vmatpush1.bf16.msra.mxu0 0
  %1063 = vmatprep.subr.bf16.mxu0 0
  %1064 = vmatpush1.bf16.msra.mxu0 0
  %1065 = vmatprep.subr.bf16.mxu0 0
  %1066 = vmatpush1.bf16.msra.mxu0 0
  %1067 = vmatprep.subr.bf16.mxu0 0
  %1068 = vmatpush1.bf16.msra.mxu0 0
  %1069 = vmatprep.subr.bf16.mxu0 0
  %1070 = vmatpush1.bf16.msra.mxu0 0
  %1071 = vmatprep.subr.bf16.mxu0 0
  %1072 = vmatpush1.bf16.msra.mxu0 0
  %1073 = vmatprep.subr.bf16.mxu0 0
  %1074 = vmatpush1.bf16.msra.mxu0 0
  %1075 = vmatprep.subr.bf16.mxu0 0
  %1076 = vmatpush1.bf16.msra.mxu0 0
  %1077 = vmatprep.subr.bf16.mxu0 0
  %1078 = vmatpush1.bf16.msra.mxu0 0
  %1079 = vmatprep.subr.bf16.mxu0 0
  %1080 = vmatpush1.bf16.msra.mxu0 0
  %1081 = vmatprep.subr.bf16.mxu0 0
  %1082 = vmatpush1.bf16.msra.mxu0 0
  %1083 = vmatprep.subr.bf16.mxu0 0
  %1084 = vmatpush1.bf16.msra.mxu0 0
  %1085 = vmatprep.subr.bf16.mxu0 0
  %1086 = vmatpush1.bf16.msra.mxu0 0
  %1087 = vmatprep.mubr.bf16.mxu0 0
  %1088 = vmatmul.mubr.bf16.gmra.mrb[0].mxu0 %v1053
  %v1089 = vpop.f32.mrb[0].mxu0
  %v1090 = vadd.f32 0.0, %v1089
  %v1091 = vpop.f32.mrb[0].mxu0
  %v1092 = vadd.f32 0.0, %v1091
  %v1093 = vpop.f32.mrb[0].mxu0
  %v1094 = vpop.f32.mrb[0].mxu0
  %1095 = vdwg.mxu0
  %1096 = vmatprep.subr.bf16.mxu0 %v1047
  %1097 = vmatpush1.bf16.msra.mxu0 %v1046
  %1098 = vmatprep.subr.bf16.mxu0 0
  %1099 = vmatpush1.bf16.msra.mxu0 0
  %1100 = vmatprep.subr.bf16.mxu0 0
  %1101 = vmatpush1.bf16.msra.mxu0 0
  %1102 = vmatprep.subr.bf16.mxu0 0
  %1103 = vmatpush1.bf16.msra.mxu0 0
  %1104 = vmatprep.subr.bf16.mxu0 0
  %1105 = vmatpush1.bf16.msra.mxu0 0
  %1106 = vmatprep.subr.bf16.mxu0 0
  %1107 = vmatpush1.bf16.msra.mxu0 0
  %1108 = vmatprep.subr.bf16.mxu0 0
  %1109 = vmatpush1.bf16.msra.mxu0 0
  %1110 = vmatprep.subr.bf16.mxu0 0
  %1111 = vmatpush1.bf16.msra.mxu0 0
  %1112 = vmatprep.subr.bf16.mxu0 0
  %1113 = vmatpush1.bf16.msra.mxu0 0
  %1114 = vmatprep.subr.bf16.mxu0 0
  %1115 = vmatpush1.bf16.msra.mxu0 0
  %1116 = vmatprep.subr.bf16.mxu0 0
  %1117 = vmatpush1.bf16.msra.mxu0 0
  %1118 = vmatprep.subr.bf16.mxu0 0
  %1119 = vmatpush1.bf16.msra.mxu0 0
  %1120 = vmatprep.subr.bf16.mxu0 0
  %1121 = vmatpush1.bf16.msra.mxu0 0
  %1122 = vmatprep.subr.bf16.mxu0 0
  %1123 = vmatpush1.bf16.msra.mxu0 0
  %1124 = vmatprep.subr.bf16.mxu0 0
  %1125 = vmatpush1.bf16.msra.mxu0 0
  %1126 = vmatprep.subr.bf16.mxu0 0
  %1127 = vmatpush1.bf16.msra.mxu0 0
  %1128 = vmatprep.mubr.bf16.mxu0 0
  %1129 = vmatmul.mubr.bf16.gmra.mrb[0].mxu0 %v1053
  %v1130 = vpop.f32.mrb[0].mxu0
  %v1131 = vadd.f32 0.0, %v1130
  %v1132 = vpop.f32.mrb[0].mxu0
  %v1133 = vadd.f32 0.0, %v1132
  %v1134 = vpop.f32.mrb[0].mxu0
  %v1135 = vpop.f32.mrb[0].mxu0
  %1136 = vdwg.mxu0
  %s1137 = scalar_lea.vmem %s17, 7
  %v1138 = vld [vmem:[%s1137] ss:$8 sm:$0xf]
  %v1140 = vlaneseq
  %v1141 = vshrl.u32 %v1140, 7
  %v1142 = vsub.s32 0, %v1141
  %v1143 = vrot.slane %v1138, %v1142
  %v1144 = vlaneseq
  %v1145 = vshrl.u32 %v1144, 7
  %v1146 = vsub.s32 1, %v1145
  %v1147 = vrot.slane %v1138, %v1146
  %v1148 = vlaneseq
  %v1149 = vshrl.u32 %v1148, 7
  %v1150 = vsub.s32 2, %v1149
  %v1151 = vrot.slane %v1138, %v1150
  %v1152 = vlaneseq
  %v1153 = vshrl.u32 %v1152, 7
  %v1154 = vsub.s32 3, %v1153
  %v1155 = vrot.slane %v1138, %v1154
  %v1160 = vmul.f32 %v1090, %v1143
  %v1161 = vmul.f32 %v1092, %v1147
  %v1162 = vmul.f32 %v1131, %v1151
  %v1163 = vmul.f32 %v1133, %v1155
  %v1164 = vadd.f32 %v1027, %v1160
  %v1165 = vadd.f32 %v1028, %v1161
  %v1166 = vadd.f32 %v1029, %v1162
  %v1167 = vadd.f32 %v1030, %v1163
  %s1168 = scalar_lea.vmem %s1, 32
  %v1169 = vld [vmem:[%s1168] sm:$0xf]
  %1170 = vrot.lane.b32.xlu0 %v747, 111
  %v1171 = vpop.permute.xlu0 %1170
  %1172 = vrot.lane.b32.xlu0 %v748, 111
  %v1173 = vpop.permute.xlu0 %1172
  %1174 = vrot.lane.b32.xlu0 %v749, 111
  %v1175 = vpop.permute.xlu0 %1174
  %1176 = vrot.lane.b32.xlu0 %v750, 111
  %v1177 = vpop.permute.xlu0 %1176
  %1178 = vrot.lane.b32.xlu0 %v751, 111
  %v1179 = vpop.permute.xlu0 %1178
  %vm1180 = vcmask 908288
  %v1181 = vsel %vm1180, %v1171, %v1173
  %v1182 = vsel %vm1180, %v1173, %v1175
  %v1183 = vsel %vm1180, %v1175, %v1177
  %v1184 = vsel %vm1180, %v1177, %v1179
  %v1190 = vsel %vm133, %v1169, 0
  %1192 = vmatprep.subr.bf16.mxu0 %v1182
  %1193 = vmatpush1.bf16.msra.mxu0 %v1181
  %1194 = vmatprep.subr.bf16.mxu0 0
  %1195 = vmatpush1.bf16.msra.mxu0 0
  %1196 = vmatprep.subr.bf16.mxu0 0
  %1197 = vmatpush1.bf16.msra.mxu0 0
  %1198 = vmatprep.subr.bf16.mxu0 0
  %1199 = vmatpush1.bf16.msra.mxu0 0
  %1200 = vmatprep.subr.bf16.mxu0 0
  %1201 = vmatpush1.bf16.msra.mxu0 0
  %1202 = vmatprep.subr.bf16.mxu0 0
  %1203 = vmatpush1.bf16.msra.mxu0 0
  %1204 = vmatprep.subr.bf16.mxu0 0
  %1205 = vmatpush1.bf16.msra.mxu0 0
  %1206 = vmatprep.subr.bf16.mxu0 0
  %1207 = vmatpush1.bf16.msra.mxu0 0
  %1208 = vmatprep.subr.bf16.mxu0 0
  %1209 = vmatpush1.bf16.msra.mxu0 0
  %1210 = vmatprep.subr.bf16.mxu0 0
  %1211 = vmatpush1.bf16.msra.mxu0 0
  %1212 = vmatprep.subr.bf16.mxu0 0
  %1213 = vmatpush1.bf16.msra.mxu0 0
  %1214 = vmatprep.subr.bf16.mxu0 0
  %1215 = vmatpush1.bf16.msra.mxu0 0
  %1216 = vmatprep.subr.bf16.mxu0 0
  %1217 = vmatpush1.bf16.msra.mxu0 0
  %1218 = vmatprep.subr.bf16.mxu0 0
  %1219 = vmatpush1.bf16.msra.mxu0 0
  %1220 = vmatprep.subr.bf16.mxu0 0
  %1221 = vmatpush1.bf16.msra.mxu0 0
  %1222 = vmatprep.subr.bf16.mxu0 0
  %1223 = vmatpush1.bf16.msra.mxu0 0
  %1224 = vmatprep.mubr.bf16.mxu0 0
  %1225 = vmatmul.mubr.bf16.gmra.mrb[0].mxu0 %v1190
  %v1226 = vpop.f32.mrb[0].mxu0
  %v1227 = vadd.f32 0.0, %v1226
  %v1228 = vpop.f32.mrb[0].mxu0
  %v1229 = vadd.f32 0.0, %v1228
  %v1230 = vpop.f32.mrb[0].mxu0
  %v1231 = vpop.f32.mrb[0].mxu0
  %1232 = vdwg.mxu0
  %1233 = vmatprep.subr.bf16.mxu0 %v1184
  %1234 = vmatpush1.bf16.msra.mxu0 %v1183
  %1235 = vmatprep.subr.bf16.mxu0 0
  %1236 = vmatpush1.bf16.msra.mxu0 0
  %1237 = vmatprep.subr.bf16.mxu0 0
  %1238 = vmatpush1.bf16.msra.mxu0 0
  %1239 = vmatprep.subr.bf16.mxu0 0
  %1240 = vmatpush1.bf16.msra.mxu0 0
  %1241 = vmatprep.subr.bf16.mxu0 0
  %1242 = vmatpush1.bf16.msra.mxu0 0
  %1243 = vmatprep.subr.bf16.mxu0 0
  %1244 = vmatpush1.bf16.msra.mxu0 0
  %1245 = vmatprep.subr.bf16.mxu0 0
  %1246 = vmatpush1.bf16.msra.mxu0 0
  %1247 = vmatprep.subr.bf16.mxu0 0
  %1248 = vmatpush1.bf16.msra.mxu0 0
  %1249 = vmatprep.subr.bf16.mxu0 0
  %1250 = vmatpush1.bf16.msra.mxu0 0
  %1251 = vmatprep.subr.bf16.mxu0 0
  %1252 = vmatpush1.bf16.msra.mxu0 0
  %1253 = vmatprep.subr.bf16.mxu0 0
  %1254 = vmatpush1.bf16.msra.mxu0 0
  %1255 = vmatprep.subr.bf16.mxu0 0
  %1256 = vmatpush1.bf16.msra.mxu0 0
  %1257 = vmatprep.subr.bf16.mxu0 0
  %1258 = vmatpush1.bf16.msra.mxu0 0
  %1259 = vmatprep.subr.bf16.mxu0 0
  %1260 = vmatpush1.bf16.msra.mxu0 0
  %1261 = vmatprep.subr.bf16.mxu0 0
  %1262 = vmatpush1.bf16.msra.mxu0 0
  %1263 = vmatprep.subr.bf16.mxu0 0
  %1264 = vmatpush1.bf16.msra.mxu0 0
  %1265 = vmatprep.mubr.bf16.mxu0 0
  %1266 = vmatmul.mubr.bf16.gmra.mrb[0].mxu0 %v1190
  %v1267 = vpop.f32.mrb[0].mxu0
  %v1268 = vadd.f32 0.0, %v1267
  %v1269 = vpop.f32.mrb[0].mxu0
  %v1270 = vadd.f32 0.0, %v1269
  %v1271 = vpop.f32.mrb[0].mxu0
  %v1272 = vpop.f32.mrb[0].mxu0
  %1273 = vdwg.mxu0
  %s1274 = scalar_lea.vmem %s17, 32
  %v1275 = vld [vmem:[%s1274] ss:$8 sm:$0xf]
  %v1277 = vlaneseq
  %v1278 = vshrl.u32 %v1277, 7
  %v1279 = vsub.s32 0, %v1278
  %v1280 = vrot.slane %v1275, %v1279
  %v1281 = vlaneseq
  %v1282 = vshrl.u32 %v1281, 7
  %v1283 = vsub.s32 1, %v1282
  %v1284 = vrot.slane %v1275, %v1283
  %v1285 = vlaneseq
  %v1286 = vshrl.u32 %v1285, 7
  %v1287 = vsub.s32 2, %v1286
  %v1288 = vrot.slane %v1275, %v1287
  %v1289 = vlaneseq
  %v1290 = vshrl.u32 %v1289, 7
  %v1291 = vsub.s32 3, %v1290
  %v1292 = vrot.slane %v1275, %v1291
  %v1297 = vmul.f32 %v1227, %v1280
  %v1298 = vmul.f32 %v1229, %v1284
  %v1299 = vmul.f32 %v1268, %v1288
  %v1300 = vmul.f32 %v1270, %v1292
  %v1301 = vadd.f32 %v1164, %v1297
  %v1302 = vadd.f32 %v1165, %v1298
  %v1303 = vadd.f32 %v1166, %v1299
  %v1304 = vadd.f32 %v1167, %v1300
  %v1305 = vadd.f32 %v1301, %v1302
  %v1306 = vadd.f32 %v1305, %v1303
  %v1307 = vadd.f32 %v1306, %v1304
  %1308 = vadd.xlane.f32.xlu0 %v1307
  %v1309 = vpop.xlane.xlu0 %1308
  %v1310 = vmul.f32 %v1301, %v1301
  %v1311 = vmul.f32 %v1302, %v1302
  %v1312 = vmul.f32 %v1303, %v1303
  %v1313 = vmul.f32 %v1304, %v1304
  %v1314 = vadd.f32 %v1310, %v1311
  %v1315 = vadd.f32 %v1314, %v1312
  %v1316 = vadd.f32 %v1315, %v1313
  %1317 = vadd.xlane.f32.xlu0 %v1316
  %v1318 = vpop.xlane.xlu0 %1317
  %v1319 = vmul.f32 %v1309, 0.001953125
  %v1320 = vmul.f32 %v1318, 0.001953125
  %v1321 = vmul.f32 %v1319, %v1319
  %v1322 = vsub.f32 %v1320, %v1321
  %v1323 = vld [vmem:[%s9] sm:$0xff]
  %v1324 = vadd.f32 %v1322, 1e-05
  %v1325 = vrsqrt.pop %v1324
  %v1326 = vmul.f32 %v1323, %v1325
  %v1327 = vmul.f32 %v1319, %v1326
  %1329 = vrot.lane.b32.xlu0 %v1327, 1
  %v1330 = vpop.permute.xlu0 %1329
  %v1332 = vsub.f32 %v1323, %v1330
  %1334 = vset.pattern.permute.xlu0 0
  %1335 = vperm.xlu0 %1334, %v1326
  %v1336 = vpop.permute.xlu0 %1335
  %v1338 = vmul.f32 %v1301, %v1336
  %v1339 = vmul.f32 %v1302, %v1336
  %v1340 = vmul.f32 %v1303, %v1336
  %v1341 = vmul.f32 %v1304, %v1336
  %1343 = vset.pattern.permute.xlu0 1
  %1344 = vperm.xlu0 %1343, %v1332
  %v1345 = vpop.permute.xlu0 %1344
  %v1347 = vadd.f32 %v1338, %v1345
  %v1348 = vadd.f32 %v1339, %v1345
  %v1349 = vadd.f32 %v1340, %v1345
  %v1350 = vadd.f32 %v1341, %v1345
  %v1351 = vmax.f32 %v1347, 0.0
  %v1352 = vmax.f32 %v1348, 0.0
  %v1353 = vmax.f32 %v1349, 0.0
  %v1354 = vmax.f32 %v1350, 0.0
  %v1355 = vpack.c.bf16 %v1351, %v1351
  %v1356 = vpack.c.bf16 %v1352, %v1352
  %v1357 = vpack.c.bf16 %v1353, %v1353
  %v1358 = vpack.c.bf16 %v1354, %v1354
  %1359 = vst [vmem:[#allocation2 + $0x8] sm:$0xf] %v1355
  %1360 = vst [vmem:[#allocation2 + $0x10] sm:$0xf] %v1356
  %1361 = vst [vmem:[#allocation2 + $0x18] sm:$0xf] %v1357
  %1362 = vst [vmem:[#allocation2 + $0x20] sm:$0xf] %v1358
  %v1363 = vld [vmem:[#allocation2] sm:$0xff]
  %v1364 = vld [vmem:[#allocation2 + $0x8] sm:$0xff]
  %v1365 = vld [vmem:[#allocation2 + $0x10] sm:$0xff]
  %v1366 = vld [vmem:[#allocation2 + $0x18] sm:$0xff]
  %v1367 = vld [vmem:[#allocation2 + $0x20] sm:$0xff]
  %v1368 = vld [vmem:[%s2] sm:$0xf]
  %1374 = vrot.lane.b32.xlu0 %v1363, 17
  %v1375 = vpop.permute.xlu0 %1374
  %1376 = vrot.lane.b32.xlu0 %v1364, 17
  %v1377 = vpop.permute.xlu0 %1376
  %1378 = vrot.lane.b32.xlu0 %v1365, 17
  %v1379 = vpop.permute.xlu0 %1378
  %1380 = vrot.lane.b32.xlu0 %v1366, 17
  %v1381 = vpop.permute.xlu0 %1380
  %1382 = vrot.lane.b32.xlu0 %v1367, 17
  %v1383 = vpop.permute.xlu0 %1382
  %v1384 = vsel %vm124, %v1375, %v1377
  %v1385 = vsel %vm124, %v1377, %v1379
  %v1386 = vsel %vm124, %v1379, %v1381
  %v1387 = vsel %vm124, %v1381, %v1383
  %v1393 = vsel %vm133, %v1368, 0
  %1395 = vmatprep.subr.bf16.mxu0 %v1385
  %1396 = vmatpush1.bf16.msra.mxu0 %v1384
  %1397 = vmatprep.subr.bf16.mxu0 0
  %1398 = vmatpush1.bf16.msra.mxu0 0
  %1399 = vmatprep.subr.bf16.mxu0 0
  %1400 = vmatpush1.bf16.msra.mxu0 0
  %1401 = vmatprep.subr.bf16.mxu0 0
  %1402 = vmatpush1.bf16.msra.mxu0 0
  %1403 = vmatprep.subr.bf16.mxu0 0
  %1404 = vmatpush1.bf16.msra.mxu0 0
  %1405 = vmatprep.subr.bf16.mxu0 0
  %1406 = vmatpush1.bf16.msra.mxu0 0
  %1407 = vmatprep.subr.bf16.mxu0 0
  %1408 = vmatpush1.bf16.msra.mxu0 0
  %1409 = vmatprep.subr.bf16.mxu0 0
  %1410 = vmatpush1.bf16.msra.mxu0 0
  %1411 = vmatprep.subr.bf16.mxu0 0
  %1412 = vmatpush1.bf16.msra.mxu0 0
  %1413 = vmatprep.subr.bf16.mxu0 0
  %1414 = vmatpush1.bf16.msra.mxu0 0
  %1415 = vmatprep.subr.bf16.mxu0 0
  %1416 = vmatpush1.bf16.msra.mxu0 0
  %1417 = vmatprep.subr.bf16.mxu0 0
  %1418 = vmatpush1.bf16.msra.mxu0 0
  %1419 = vmatprep.subr.bf16.mxu0 0
  %1420 = vmatpush1.bf16.msra.mxu0 0
  %1421 = vmatprep.subr.bf16.mxu0 0
  %1422 = vmatpush1.bf16.msra.mxu0 0
  %1423 = vmatprep.subr.bf16.mxu0 0
  %1424 = vmatpush1.bf16.msra.mxu0 0
  %1425 = vmatprep.subr.bf16.mxu0 0
  %1426 = vmatpush1.bf16.msra.mxu0 0
  %1427 = vmatprep.mubr.bf16.mxu0 0
  %1428 = vmatmul.mubr.bf16.gmra.mrb[0].mxu0 %v1393
  %v1429 = vpop.f32.mrb[0].mxu0
  %v1430 = vadd.f32 0.0, %v1429
  %v1431 = vpop.f32.mrb[0].mxu0
  %v1432 = vadd.f32 0.0, %v1431
  %v1433 = vpop.f32.mrb[0].mxu0
  %v1434 = vpop.f32.mrb[0].mxu0
  %1435 = vdwg.mxu0
  %1436 = vmatprep.subr.bf16.mxu0 %v1387
  %1437 = vmatpush1.bf16.msra.mxu0 %v1386
  %1438 = vmatprep.subr.bf16.mxu0 0
  %1439 = vmatpush1.bf16.msra.mxu0 0
  %1440 = vmatprep.subr.bf16.mxu0 0
  %1441 = vmatpush1.bf16.msra.mxu0 0
  %1442 = vmatprep.subr.bf16.mxu0 0
  %1443 = vmatpush1.bf16.msra.mxu0 0
  %1444 = vmatprep.subr.bf16.mxu0 0
  %1445 = vmatpush1.bf16.msra.mxu0 0
  %1446 = vmatprep.subr.bf16.mxu0 0
  %1447 = vmatpush1.bf16.msra.mxu0 0
  %1448 = vmatprep.subr.bf16.mxu0 0
  %1449 = vmatpush1.bf16.msra.mxu0 0
  %1450 = vmatprep.subr.bf16.mxu0 0
  %1451 = vmatpush1.bf16.msra.mxu0 0
  %1452 = vmatprep.subr.bf16.mxu0 0
  %1453 = vmatpush1.bf16.msra.mxu0 0
  %1454 = vmatprep.subr.bf16.mxu0 0
  %1455 = vmatpush1.bf16.msra.mxu0 0
  %1456 = vmatprep.subr.bf16.mxu0 0
  %1457 = vmatpush1.bf16.msra.mxu0 0
  %1458 = vmatprep.subr.bf16.mxu0 0
  %1459 = vmatpush1.bf16.msra.mxu0 0
  %1460 = vmatprep.subr.bf16.mxu0 0
  %1461 = vmatpush1.bf16.msra.mxu0 0
  %1462 = vmatprep.subr.bf16.mxu0 0
  %1463 = vmatpush1.bf16.msra.mxu0 0
  %1464 = vmatprep.subr.bf16.mxu0 0
  %1465 = vmatpush1.bf16.msra.mxu0 0
  %1466 = vmatprep.subr.bf16.mxu0 0
  %1467 = vmatpush1.bf16.msra.mxu0 0
  %1468 = vmatprep.mubr.bf16.mxu0 0
  %1469 = vmatmul.mubr.bf16.gmra.mrb[0].mxu0 %v1393
  %v1470 = vpop.f32.mrb[0].mxu0
  %v1471 = vadd.f32 0.0, %v1470
  %v1472 = vpop.f32.mrb[0].mxu0
  %v1473 = vadd.f32 0.0, %v1472
  %v1474 = vpop.f32.mrb[0].mxu0
  %v1475 = vpop.f32.mrb[0].mxu0
  %1476 = vdwg.mxu0
  %v1477 = vld [vmem:[%s17] ss:$8 sm:$0xf]
  %v1479 = vlaneseq
  %v1480 = vshrl.u32 %v1479, 7
  %v1481 = vsub.s32 0, %v1480
  %v1482 = vrot.slane %v1477, %v1481
  %v1483 = vlaneseq
  %v1484 = vshrl.u32 %v1483, 7
  %v1485 = vsub.s32 1, %v1484
  %v1486 = vrot.slane %v1477, %v1485
  %v1487 = vlaneseq
  %v1488 = vshrl.u32 %v1487, 7
  %v1489 = vsub.s32 2, %v1488
  %v1490 = vrot.slane %v1477, %v1489
  %v1491 = vlaneseq
  %v1492 = vshrl.u32 %v1491, 7
  %v1493 = vsub.s32 3, %v1492
  %v1494 = vrot.slane %v1477, %v1493
  %v1499 = vmul.f32 %v1430, %v1482
  %v1500 = vmul.f32 %v1432, %v1486
  %v1501 = vmul.f32 %v1471, %v1490
  %v1502 = vmul.f32 %v1473, %v1494
  %s1503 = scalar_lea.vmem %s2, 4
  %v1504 = vld [vmem:[%s1503] sm:$0xf]
  %1505 = vrot.lane.b32.xlu0 %v1363, 16
  %v1506 = vpop.permute.xlu0 %1505
  %1507 = vrot.lane.b32.xlu0 %v1364, 16
  %v1508 = vpop.permute.xlu0 %1507
  %1509 = vrot.lane.b32.xlu0 %v1365, 16
  %v1510 = vpop.permute.xlu0 %1509
  %1511 = vrot.lane.b32.xlu0 %v1366, 16
  %v1512 = vpop.permute.xlu0 %1511
  %1513 = vrot.lane.b32.xlu0 %v1367, 16
  %v1514 = vpop.permute.xlu0 %1513
  %v1515 = vsel %vm257, %v1506, %v1508
  %v1516 = vsel %vm257, %v1508, %v1510
  %v1517 = vsel %vm257, %v1510, %v1512
  %v1518 = vsel %vm257, %v1512, %v1514
  %v1524 = vsel %vm133, %v1504, 0
  %1526 = vmatprep.subr.bf16.mxu0 %v1516
  %1527 = vmatpush1.bf16.msra.mxu0 %v1515
  %1528 = vmatprep.subr.bf16.mxu0 0
  %1529 = vmatpush1.bf16.msra.mxu0 0
  %1530 = vmatprep.subr.bf16.mxu0 0
  %1531 = vmatpush1.bf16.msra.mxu0 0
  %1532 = vmatprep.subr.bf16.mxu0 0
  %1533 = vmatpush1.bf16.msra.mxu0 0
  %1534 = vmatprep.subr.bf16.mxu0 0
  %1535 = vmatpush1.bf16.msra.mxu0 0
  %1536 = vmatprep.subr.bf16.mxu0 0
  %1537 = vmatpush1.bf16.msra.mxu0 0
  %1538 = vmatprep.subr.bf16.mxu0 0
  %1539 = vmatpush1.bf16.msra.mxu0 0
  %1540 = vmatprep.subr.bf16.mxu0 0
  %1541 = vmatpush1.bf16.msra.mxu0 0
  %1542 = vmatprep.subr.bf16.mxu0 0
  %1543 = vmatpush1.bf16.msra.mxu0 0
  %1544 = vmatprep.subr.bf16.mxu0 0
  %1545 = vmatpush1.bf16.msra.mxu0 0
  %1546 = vmatprep.subr.bf16.mxu0 0
  %1547 = vmatpush1.bf16.msra.mxu0 0
  %1548 = vmatprep.subr.bf16.mxu0 0
  %1549 = vmatpush1.bf16.msra.mxu0 0
  %1550 = vmatprep.subr.bf16.mxu0 0
  %1551 = vmatpush1.bf16.msra.mxu0 0
  %1552 = vmatprep.subr.bf16.mxu0 0
  %1553 = vmatpush1.bf16.msra.mxu0 0
  %1554 = vmatprep.subr.bf16.mxu0 0
  %1555 = vmatpush1.bf16.msra.mxu0 0
  %1556 = vmatprep.subr.bf16.mxu0 0
  %1557 = vmatpush1.bf16.msra.mxu0 0
  %1558 = vmatprep.mubr.bf16.mxu0 0
  %1559 = vmatmul.mubr.bf16.gmra.mrb[0].mxu0 %v1524
  %v1560 = vpop.f32.mrb[0].mxu0
  %v1561 = vadd.f32 0.0, %v1560
  %v1562 = vpop.f32.mrb[0].mxu0
  %v1563 = vadd.f32 0.0, %v1562
  %v1564 = vpop.f32.mrb[0].mxu0
  %v1565 = vpop.f32.mrb[0].mxu0
  %1566 = vdwg.mxu0
  %1567 = vmatprep.subr.bf16.mxu0 %v1518
  %1568 = vmatpush1.bf16.msra.mxu0 %v1517
  %1569 = vmatprep.subr.bf16.mxu0 0
  %1570 = vmatpush1.bf16.msra.mxu0 0
  %1571 = vmatprep.subr.bf16.mxu0 0
  %1572 = vmatpush1.bf16.msra.mxu0 0
  %1573 = vmatprep.subr.bf16.mxu0 0
  %1574 = vmatpush1.bf16.msra.mxu0 0
  %1575 = vmatprep.subr.bf16.mxu0 0
  %1576 = vmatpush1.bf16.msra.mxu0 0
  %1577 = vmatprep.subr.bf16.mxu0 0
  %1578 = vmatpush1.bf16.msra.mxu0 0
  %1579 = vmatprep.subr.bf16.mxu0 0
  %1580 = vmatpush1.bf16.msra.mxu0 0
  %1581 = vmatprep.subr.bf16.mxu0 0
  %1582 = vmatpush1.bf16.msra.mxu0 0
  %1583 = vmatprep.subr.bf16.mxu0 0
  %1584 = vmatpush1.bf16.msra.mxu0 0
  %1585 = vmatprep.subr.bf16.mxu0 0
  %1586 = vmatpush1.bf16.msra.mxu0 0
  %1587 = vmatprep.subr.bf16.mxu0 0
  %1588 = vmatpush1.bf16.msra.mxu0 0
  %1589 = vmatprep.subr.bf16.mxu0 0
  %1590 = vmatpush1.bf16.msra.mxu0 0
  %1591 = vmatprep.subr.bf16.mxu0 0
  %1592 = vmatpush1.bf16.msra.mxu0 0
  %1593 = vmatprep.subr.bf16.mxu0 0
  %1594 = vmatpush1.bf16.msra.mxu0 0
  %1595 = vmatprep.subr.bf16.mxu0 0
  %1596 = vmatpush1.bf16.msra.mxu0 0
  %1597 = vmatprep.subr.bf16.mxu0 0
  %1598 = vmatpush1.bf16.msra.mxu0 0
  %1599 = vmatprep.mubr.bf16.mxu0 0
  %1600 = vmatmul.mubr.bf16.gmra.mrb[0].mxu0 %v1524
  %v1601 = vpop.f32.mrb[0].mxu0
  %v1602 = vadd.f32 0.0, %v1601
  %v1603 = vpop.f32.mrb[0].mxu0
  %v1604 = vadd.f32 0.0, %v1603
  %v1605 = vpop.f32.mrb[0].mxu0
  %v1606 = vpop.f32.mrb[0].mxu0
  %1607 = vdwg.mxu0
  %v1608 = vld [vmem:[%s351] ss:$8 sm:$0xf]
  %v1610 = vlaneseq
  %v1611 = vshrl.u32 %v1610, 7
  %v1612 = vsub.s32 0, %v1611
  %v1613 = vrot.slane %v1608, %v1612
  %v1614 = vlaneseq
  %v1615 = vshrl.u32 %v1614, 7
  %v1616 = vsub.s32 1, %v1615
  %v1617 = vrot.slane %v1608, %v1616
  %v1618 = vlaneseq
  %v1619 = vshrl.u32 %v1618, 7
  %v1620 = vsub.s32 2, %v1619
  %v1621 = vrot.slane %v1608, %v1620
  %v1622 = vlaneseq
  %v1623 = vshrl.u32 %v1622, 7
  %v1624 = vsub.s32 3, %v1623
  %v1625 = vrot.slane %v1608, %v1624
  %v1630 = vmul.f32 %v1561, %v1613
  %v1631 = vmul.f32 %v1563, %v1617
  %v1632 = vmul.f32 %v1602, %v1621
  %v1633 = vmul.f32 %v1604, %v1625
  %v1634 = vadd.f32 %v1499, %v1630
  %v1635 = vadd.f32 %v1500, %v1631
  %v1636 = vadd.f32 %v1501, %v1632
  %v1637 = vadd.f32 %v1502, %v1633
  %s1638 = scalar_lea.vmem %s2, 8
  %v1639 = vld [vmem:[%s1638] sm:$0xf]
  %1640 = vrot.lane.b32.xlu0 %v1363, 15
  %v1641 = vpop.permute.xlu0 %1640
  %1642 = vrot.lane.b32.xlu0 %v1364, 15
  %v1643 = vpop.permute.xlu0 %1642
  %1644 = vrot.lane.b32.xlu0 %v1365, 15
  %v1645 = vpop.permute.xlu0 %1644
  %1646 = vrot.lane.b32.xlu0 %v1366, 15
  %v1647 = vpop.permute.xlu0 %1646
  %1648 = vrot.lane.b32.xlu0 %v1367, 15
  %v1649 = vpop.permute.xlu0 %1648
  %v1650 = vsel %vm394, %v1641, %v1643
  %v1651 = vsel %vm394, %v1643, %v1645
  %v1652 = vsel %vm394, %v1645, %v1647
  %v1653 = vsel %vm394, %v1647, %v1649
  %v1659 = vsel %vm133, %v1639, 0
  %1661 = vmatprep.subr.bf16.mxu0 %v1651
  %1662 = vmatpush1.bf16.msra.mxu0 %v1650
  %1663 = vmatprep.subr.bf16.mxu0 0
  %1664 = vmatpush1.bf16.msra.mxu0 0
  %1665 = vmatprep.subr.bf16.mxu0 0
  %1666 = vmatpush1.bf16.msra.mxu0 0
  %1667 = vmatprep.subr.bf16.mxu0 0
  %1668 = vmatpush1.bf16.msra.mxu0 0
  %1669 = vmatprep.subr.bf16.mxu0 0
  %1670 = vmatpush1.bf16.msra.mxu0 0
  %1671 = vmatprep.subr.bf16.mxu0 0
  %1672 = vmatpush1.bf16.msra.mxu0 0
  %1673 = vmatprep.subr.bf16.mxu0 0
  %1674 = vmatpush1.bf16.msra.mxu0 0
  %1675 = vmatprep.subr.bf16.mxu0 0
  %1676 = vmatpush1.bf16.msra.mxu0 0
  %1677 = vmatprep.subr.bf16.mxu0 0
  %1678 = vmatpush1.bf16.msra.mxu0 0
  %1679 = vmatprep.subr.bf16.mxu0 0
  %1680 = vmatpush1.bf16.msra.mxu0 0
  %1681 = vmatprep.subr.bf16.mxu0 0
  %1682 = vmatpush1.bf16.msra.mxu0 0
  %1683 = vmatprep.subr.bf16.mxu0 0
  %1684 = vmatpush1.bf16.msra.mxu0 0
  %1685 = vmatprep.subr.bf16.mxu0 0
  %1686 = vmatpush1.bf16.msra.mxu0 0
  %1687 = vmatprep.subr.bf16.mxu0 0
  %1688 = vmatpush1.bf16.msra.mxu0 0
  %1689 = vmatprep.subr.bf16.mxu0 0
  %1690 = vmatpush1.bf16.msra.mxu0 0
  %1691 = vmatprep.subr.bf16.mxu0 0
  %1692 = vmatpush1.bf16.msra.mxu0 0
  %1693 = vmatprep.mubr.bf16.mxu0 0
  %1694 = vmatmul.mubr.bf16.gmra.mrb[0].mxu0 %v1659
  %v1695 = vpop.f32.mrb[0].mxu0
  %v1696 = vadd.f32 0.0, %v1695
  %v1697 = vpop.f32.mrb[0].mxu0
  %v1698 = vadd.f32 0.0, %v1697
  %v1699 = vpop.f32.mrb[0].mxu0
  %v1700 = vpop.f32.mrb[0].mxu0
  %1701 = vdwg.mxu0
  %1702 = vmatprep.subr.bf16.mxu0 %v1653
  %1703 = vmatpush1.bf16.msra.mxu0 %v1652
  %1704 = vmatprep.subr.bf16.mxu0 0
  %1705 = vmatpush1.bf16.msra.mxu0 0
  %1706 = vmatprep.subr.bf16.mxu0 0
  %1707 = vmatpush1.bf16.msra.mxu0 0
  %1708 = vmatprep.subr.bf16.mxu0 0
  %1709 = vmatpush1.bf16.msra.mxu0 0
  %1710 = vmatprep.subr.bf16.mxu0 0
  %1711 = vmatpush1.bf16.msra.mxu0 0
  %1712 = vmatprep.subr.bf16.mxu0 0
  %1713 = vmatpush1.bf16.msra.mxu0 0
  %1714 = vmatprep.subr.bf16.mxu0 0
  %1715 = vmatpush1.bf16.msra.mxu0 0
  %1716 = vmatprep.subr.bf16.mxu0 0
  %1717 = vmatpush1.bf16.msra.mxu0 0
  %1718 = vmatprep.subr.bf16.mxu0 0
  %1719 = vmatpush1.bf16.msra.mxu0 0
  %1720 = vmatprep.subr.bf16.mxu0 0
  %1721 = vmatpush1.bf16.msra.mxu0 0
  %1722 = vmatprep.subr.bf16.mxu0 0
  %1723 = vmatpush1.bf16.msra.mxu0 0
  %1724 = vmatprep.subr.bf16.mxu0 0
  %1725 = vmatpush1.bf16.msra.mxu0 0
  %1726 = vmatprep.subr.bf16.mxu0 0
  %1727 = vmatpush1.bf16.msra.mxu0 0
  %1728 = vmatprep.subr.bf16.mxu0 0
  %1729 = vmatpush1.bf16.msra.mxu0 0
  %1730 = vmatprep.subr.bf16.mxu0 0
  %1731 = vmatpush1.bf16.msra.mxu0 0
  %1732 = vmatprep.subr.bf16.mxu0 0
  %1733 = vmatpush1.bf16.msra.mxu0 0
  %1734 = vmatprep.mubr.bf16.mxu0 0
  %1735 = vmatmul.mubr.bf16.gmra.mrb[0].mxu0 %v1659
  %v1736 = vpop.f32.mrb[0].mxu0
  %v1737 = vadd.f32 0.0, %v1736
  %v1738 = vpop.f32.mrb[0].mxu0
  %v1739 = vadd.f32 0.0, %v1738
  %v1740 = vpop.f32.mrb[0].mxu0
  %v1741 = vpop.f32.mrb[0].mxu0
  %1742 = vdwg.mxu0
  %v1743 = vld [vmem:[%s488] ss:$8 sm:$0xf]
  %v1745 = vlaneseq
  %v1746 = vshrl.u32 %v1745, 7
  %v1747 = vsub.s32 0, %v1746
  %v1748 = vrot.slane %v1743, %v1747
  %v1749 = vlaneseq
  %v1750 = vshrl.u32 %v1749, 7
  %v1751 = vsub.s32 1, %v1750
  %v1752 = vrot.slane %v1743, %v1751
  %v1753 = vlaneseq
  %v1754 = vshrl.u32 %v1753, 7
  %v1755 = vsub.s32 2, %v1754
  %v1756 = vrot.slane %v1743, %v1755
  %v1757 = vlaneseq
  %v1758 = vshrl.u32 %v1757, 7
  %v1759 = vsub.s32 3, %v1758
  %v1760 = vrot.slane %v1743, %v1759
  %v1765 = vmul.f32 %v1696, %v1748
  %v1766 = vmul.f32 %v1698, %v1752
  %v1767 = vmul.f32 %v1737, %v1756
  %v1768 = vmul.f32 %v1739, %v1760
  %v1769 = vadd.f32 %v1634, %v1765
  %v1770 = vadd.f32 %v1635, %v1766
  %v1771 = vadd.f32 %v1636, %v1767
  %v1772 = vadd.f32 %v1637, %v1768
  %s1773 = scalar_lea.vmem %s2, 12
  %v1774 = vld [vmem:[%s1773] sm:$0xf]
  %1775 = vrot.lane.b32.xlu0 %v1363, 1
  %v1776 = vpop.permute.xlu0 %1775
  %1777 = vrot.lane.b32.xlu0 %v1364, 1
  %v1778 = vpop.permute.xlu0 %1777
  %1779 = vrot.lane.b32.xlu0 %v1365, 1
  %v1780 = vpop.permute.xlu0 %1779
  %1781 = vrot.lane.b32.xlu0 %v1366, 1
  %v1782 = vpop.permute.xlu0 %1781
  %1783 = vrot.lane.b32.xlu0 %v1367, 1
  %v1784 = vpop.permute.xlu0 %1783
  %v1785 = vsel %vm531, %v1776, %v1778
  %v1786 = vsel %vm531, %v1778, %v1780
  %v1787 = vsel %vm531, %v1780, %v1782
  %v1788 = vsel %vm531, %v1782, %v1784
  %v1794 = vsel %vm133, %v1774, 0
  %1796 = vmatprep.subr.bf16.mxu0 %v1786
  %1797 = vmatpush1.bf16.msra.mxu0 %v1785
  %1798 = vmatprep.subr.bf16.mxu0 0
  %1799 = vmatpush1.bf16.msra.mxu0 0
  %1800 = vmatprep.subr.bf16.mxu0 0
  %1801 = vmatpush1.bf16.msra.mxu0 0
  %1802 = vmatprep.subr.bf16.mxu0 0
  %1803 = vmatpush1.bf16.msra.mxu0 0
  %1804 = vmatprep.subr.bf16.mxu0 0
  %1805 = vmatpush1.bf16.msra.mxu0 0
  %1806 = vmatprep.subr.bf16.mxu0 0
  %1807 = vmatpush1.bf16.msra.mxu0 0
  %1808 = vmatprep.subr.bf16.mxu0 0
  %1809 = vmatpush1.bf16.msra.mxu0 0
  %1810 = vmatprep.subr.bf16.mxu0 0
  %1811 = vmatpush1.bf16.msra.mxu0 0
  %1812 = vmatprep.subr.bf16.mxu0 0
  %1813 = vmatpush1.bf16.msra.mxu0 0
  %1814 = vmatprep.subr.bf16.mxu0 0
  %1815 = vmatpush1.bf16.msra.mxu0 0
  %1816 = vmatprep.subr.bf16.mxu0 0
  %1817 = vmatpush1.bf16.msra.mxu0 0
  %1818 = vmatprep.subr.bf16.mxu0 0
  %1819 = vmatpush1.bf16.msra.mxu0 0
  %1820 = vmatprep.subr.bf16.mxu0 0
  %1821 = vmatpush1.bf16.msra.mxu0 0
  %1822 = vmatprep.subr.bf16.mxu0 0
  %1823 = vmatpush1.bf16.msra.mxu0 0
  %1824 = vmatprep.subr.bf16.mxu0 0
  %1825 = vmatpush1.bf16.msra.mxu0 0
  %1826 = vmatprep.subr.bf16.mxu0 0
  %1827 = vmatpush1.bf16.msra.mxu0 0
  %1828 = vmatprep.mubr.bf16.mxu0 0
  %1829 = vmatmul.mubr.bf16.gmra.mrb[0].mxu0 %v1794
  %v1830 = vpop.f32.mrb[0].mxu0
  %v1831 = vadd.f32 0.0, %v1830
  %v1832 = vpop.f32.mrb[0].mxu0
  %v1833 = vadd.f32 0.0, %v1832
  %v1834 = vpop.f32.mrb[0].mxu0
  %v1835 = vpop.f32.mrb[0].mxu0
  %1836 = vdwg.mxu0
  %1837 = vmatprep.subr.bf16.mxu0 %v1788
  %1838 = vmatpush1.bf16.msra.mxu0 %v1787
  %1839 = vmatprep.subr.bf16.mxu0 0
  %1840 = vmatpush1.bf16.msra.mxu0 0
  %1841 = vmatprep.subr.bf16.mxu0 0
  %1842 = vmatpush1.bf16.msra.mxu0 0
  %1843 = vmatprep.subr.bf16.mxu0 0
  %1844 = vmatpush1.bf16.msra.mxu0 0
  %1845 = vmatprep.subr.bf16.mxu0 0
  %1846 = vmatpush1.bf16.msra.mxu0 0
  %1847 = vmatprep.subr.bf16.mxu0 0
  %1848 = vmatpush1.bf16.msra.mxu0 0
  %1849 = vmatprep.subr.bf16.mxu0 0
  %1850 = vmatpush1.bf16.msra.mxu0 0
  %1851 = vmatprep.subr.bf16.mxu0 0
  %1852 = vmatpush1.bf16.msra.mxu0 0
  %1853 = vmatprep.subr.bf16.mxu0 0
  %1854 = vmatpush1.bf16.msra.mxu0 0
  %1855 = vmatprep.subr.bf16.mxu0 0
  %1856 = vmatpush1.bf16.msra.mxu0 0
  %1857 = vmatprep.subr.bf16.mxu0 0
  %1858 = vmatpush1.bf16.msra.mxu0 0
  %1859 = vmatprep.subr.bf16.mxu0 0
  %1860 = vmatpush1.bf16.msra.mxu0 0
  %1861 = vmatprep.subr.bf16.mxu0 0
  %1862 = vmatpush1.bf16.msra.mxu0 0
  %1863 = vmatprep.subr.bf16.mxu0 0
  %1864 = vmatpush1.bf16.msra.mxu0 0
  %1865 = vmatprep.subr.bf16.mxu0 0
  %1866 = vmatpush1.bf16.msra.mxu0 0
  %1867 = vmatprep.subr.bf16.mxu0 0
  %1868 = vmatpush1.bf16.msra.mxu0 0
  %1869 = vmatprep.mubr.bf16.mxu0 0
  %1870 = vmatmul.mubr.bf16.gmra.mrb[0].mxu0 %v1794
  %v1871 = vpop.f32.mrb[0].mxu0
  %v1872 = vadd.f32 0.0, %v1871
  %v1873 = vpop.f32.mrb[0].mxu0
  %v1874 = vadd.f32 0.0, %v1873
  %v1875 = vpop.f32.mrb[0].mxu0
  %v1876 = vpop.f32.mrb[0].mxu0
  %1877 = vdwg.mxu0
  %v1878 = vld [vmem:[%s625] ss:$8 sm:$0xf]
  %v1880 = vlaneseq
  %v1881 = vshrl.u32 %v1880, 7
  %v1882 = vsub.s32 0, %v1881
  %v1883 = vrot.slane %v1878, %v1882
  %v1884 = vlaneseq
  %v1885 = vshrl.u32 %v1884, 7
  %v1886 = vsub.s32 1, %v1885
  %v1887 = vrot.slane %v1878, %v1886
  %v1888 = vlaneseq
  %v1889 = vshrl.u32 %v1888, 7
  %v1890 = vsub.s32 2, %v1889
  %v1891 = vrot.slane %v1878, %v1890
  %v1892 = vlaneseq
  %v1893 = vshrl.u32 %v1892, 7
  %v1894 = vsub.s32 3, %v1893
  %v1895 = vrot.slane %v1878, %v1894
  %v1900 = vmul.f32 %v1831, %v1883
  %v1901 = vmul.f32 %v1833, %v1887
  %v1902 = vmul.f32 %v1872, %v1891
  %v1903 = vmul.f32 %v1874, %v1895
  %v1904 = vadd.f32 %v1769, %v1900
  %v1905 = vadd.f32 %v1770, %v1901
  %v1906 = vadd.f32 %v1771, %v1902
  %v1907 = vadd.f32 %v1772, %v1903
  %s1908 = scalar_lea.vmem %s2, 16
  %v1909 = vld [vmem:[%s1908] sm:$0xf]
  %v1911 = vsel %vm133, %v1909, 0
  %1913 = vmatprep.subr.bf16.mxu0 %v1365
  %1914 = vmatpush1.bf16.msra.mxu0 %v1364
  %1915 = vmatprep.subr.bf16.mxu0 0
  %1916 = vmatpush1.bf16.msra.mxu0 0
  %1917 = vmatprep.subr.bf16.mxu0 0
  %1918 = vmatpush1.bf16.msra.mxu0 0
  %1919 = vmatprep.subr.bf16.mxu0 0
  %1920 = vmatpush1.bf16.msra.mxu0 0
  %1921 = vmatprep.subr.bf16.mxu0 0
  %1922 = vmatpush1.bf16.msra.mxu0 0
  %1923 = vmatprep.subr.bf16.mxu0 0
  %1924 = vmatpush1.bf16.msra.mxu0 0
  %1925 = vmatprep.subr.bf16.mxu0 0
  %1926 = vmatpush1.bf16.msra.mxu0 0
  %1927 = vmatprep.subr.bf16.mxu0 0
  %1928 = vmatpush1.bf16.msra.mxu0 0
  %1929 = vmatprep.subr.bf16.mxu0 0
  %1930 = vmatpush1.bf16.msra.mxu0 0
  %1931 = vmatprep.subr.bf16.mxu0 0
  %1932 = vmatpush1.bf16.msra.mxu0 0
  %1933 = vmatprep.subr.bf16.mxu0 0
  %1934 = vmatpush1.bf16.msra.mxu0 0
  %1935 = vmatprep.subr.bf16.mxu0 0
  %1936 = vmatpush1.bf16.msra.mxu0 0
  %1937 = vmatprep.subr.bf16.mxu0 0
  %1938 = vmatpush1.bf16.msra.mxu0 0
  %1939 = vmatprep.subr.bf16.mxu0 0
  %1940 = vmatpush1.bf16.msra.mxu0 0
  %1941 = vmatprep.subr.bf16.mxu0 0
  %1942 = vmatpush1.bf16.msra.mxu0 0
  %1943 = vmatprep.subr.bf16.mxu0 0
  %1944 = vmatpush1.bf16.msra.mxu0 0
  %1945 = vmatprep.mubr.bf16.mxu0 0
  %1946 = vmatmul.mubr.bf16.gmra.mrb[0].mxu0 %v1911
  %v1947 = vpop.f32.mrb[0].mxu0
  %v1948 = vadd.f32 0.0, %v1947
  %v1949 = vpop.f32.mrb[0].mxu0
  %v1950 = vadd.f32 0.0, %v1949
  %v1951 = vpop.f32.mrb[0].mxu0
  %v1952 = vpop.f32.mrb[0].mxu0
  %1953 = vdwg.mxu0
  %1954 = vmatprep.subr.bf16.mxu0 %v1367
  %1955 = vmatpush1.bf16.msra.mxu0 %v1366
  %1956 = vmatprep.subr.bf16.mxu0 0
  %1957 = vmatpush1.bf16.msra.mxu0 0
  %1958 = vmatprep.subr.bf16.mxu0 0
  %1959 = vmatpush1.bf16.msra.mxu0 0
  %1960 = vmatprep.subr.bf16.mxu0 0
  %1961 = vmatpush1.bf16.msra.mxu0 0
  %1962 = vmatprep.subr.bf16.mxu0 0
  %1963 = vmatpush1.bf16.msra.mxu0 0
  %1964 = vmatprep.subr.bf16.mxu0 0
  %1965 = vmatpush1.bf16.msra.mxu0 0
  %1966 = vmatprep.subr.bf16.mxu0 0
  %1967 = vmatpush1.bf16.msra.mxu0 0
  %1968 = vmatprep.subr.bf16.mxu0 0
  %1969 = vmatpush1.bf16.msra.mxu0 0
  %1970 = vmatprep.subr.bf16.mxu0 0
  %1971 = vmatpush1.bf16.msra.mxu0 0
  %1972 = vmatprep.subr.bf16.mxu0 0
  %1973 = vmatpush1.bf16.msra.mxu0 0
  %1974 = vmatprep.subr.bf16.mxu0 0
  %1975 = vmatpush1.bf16.msra.mxu0 0
  %1976 = vmatprep.subr.bf16.mxu0 0
  %1977 = vmatpush1.bf16.msra.mxu0 0
  %1978 = vmatprep.subr.bf16.mxu0 0
  %1979 = vmatpush1.bf16.msra.mxu0 0
  %1980 = vmatprep.subr.bf16.mxu0 0
  %1981 = vmatpush1.bf16.msra.mxu0 0
  %1982 = vmatprep.subr.bf16.mxu0 0
  %1983 = vmatpush1.bf16.msra.mxu0 0
  %1984 = vmatprep.subr.bf16.mxu0 0
  %1985 = vmatpush1.bf16.msra.mxu0 0
  %1986 = vmatprep.mubr.bf16.mxu0 0
  %1987 = vmatmul.mubr.bf16.gmra.mrb[0].mxu0 %v1911
  %v1988 = vpop.f32.mrb[0].mxu0
  %v1989 = vadd.f32 0.0, %v1988
  %v1990 = vpop.f32.mrb[0].mxu0
  %v1991 = vadd.f32 0.0, %v1990
  %v1992 = vpop.f32.mrb[0].mxu0
  %v1993 = vpop.f32.mrb[0].mxu0
  %1994 = vdwg.mxu0
  %v1995 = vadd.f32 %v1904, %v1948
  %v1996 = vadd.f32 %v1905, %v1950
  %v1997 = vadd.f32 %v1906, %v1989
  %v1998 = vadd.f32 %v1907, %v1991
  %v1999 = vld [vmem:[#allocation2 + $0x8] sm:$0xff]
  %v2000 = vld [vmem:[#allocation2 + $0x10] sm:$0xff]
  %v2001 = vld [vmem:[#allocation2 + $0x18] sm:$0xff]
  %v2002 = vld [vmem:[#allocation2 + $0x20] sm:$0xff]
  %v2003 = vld [vmem:[#allocation2 + $0x28] sm:$0xff]
  %s2004 = scalar_lea.vmem %s2, 20
  %v2005 = vld [vmem:[%s2004] sm:$0xf]
  %2011 = vrot.lane.b32.xlu0 %v1999, 127
  %v2012 = vpop.permute.xlu0 %2011
  %2013 = vrot.lane.b32.xlu0 %v2000, 127
  %v2014 = vpop.permute.xlu0 %2013
  %2015 = vrot.lane.b32.xlu0 %v2001, 127
  %v2016 = vpop.permute.xlu0 %2015
  %2017 = vrot.lane.b32.xlu0 %v2002, 127
  %v2018 = vpop.permute.xlu0 %2017
  %2019 = vrot.lane.b32.xlu0 %v2003, 127
  %v2020 = vpop.permute.xlu0 %2019
  %v2021 = vsel %vm769, %v2012, %v2014
  %v2022 = vsel %vm769, %v2014, %v2016
  %v2023 = vsel %vm769, %v2016, %v2018
  %v2024 = vsel %vm769, %v2018, %v2020
  %v2030 = vsel %vm133, %v2005, 0
  %2032 = vmatprep.subr.bf16.mxu0 %v2022
  %2033 = vmatpush1.bf16.msra.mxu0 %v2021
  %2034 = vmatprep.subr.bf16.mxu0 0
  %2035 = vmatpush1.bf16.msra.mxu0 0
  %2036 = vmatprep.subr.bf16.mxu0 0
  %2037 = vmatpush1.bf16.msra.mxu0 0
  %2038 = vmatprep.subr.bf16.mxu0 0
  %2039 = vmatpush1.bf16.msra.mxu0 0
  %2040 = vmatprep.subr.bf16.mxu0 0
  %2041 = vmatpush1.bf16.msra.mxu0 0
  %2042 = vmatprep.subr.bf16.mxu0 0
  %2043 = vmatpush1.bf16.msra.mxu0 0
  %2044 = vmatprep.subr.bf16.mxu0 0
  %2045 = vmatpush1.bf16.msra.mxu0 0
  %2046 = vmatprep.subr.bf16.mxu0 0
  %2047 = vmatpush1.bf16.msra.mxu0 0
  %2048 = vmatprep.subr.bf16.mxu0 0
  %2049 = vmatpush1.bf16.msra.mxu0 0
  %2050 = vmatprep.subr.bf16.mxu0 0
  %2051 = vmatpush1.bf16.msra.mxu0 0
  %2052 = vmatprep.subr.bf16.mxu0 0
  %2053 = vmatpush1.bf16.msra.mxu0 0
  %2054 = vmatprep.subr.bf16.mxu0 0
  %2055 = vmatpush1.bf16.msra.mxu0 0
  %2056 = vmatprep.subr.bf16.mxu0 0
  %2057 = vmatpush1.bf16.msra.mxu0 0
  %2058 = vmatprep.subr.bf16.mxu0 0
  %2059 = vmatpush1.bf16.msra.mxu0 0
  %2060 = vmatprep.subr.bf16.mxu0 0
  %2061 = vmatpush1.bf16.msra.mxu0 0
  %2062 = vmatprep.subr.bf16.mxu0 0
  %2063 = vmatpush1.bf16.msra.mxu0 0
  %2064 = vmatprep.mubr.bf16.mxu0 0
  %2065 = vmatmul.mubr.bf16.gmra.mrb[0].mxu0 %v2030
  %v2066 = vpop.f32.mrb[0].mxu0
  %v2067 = vadd.f32 0.0, %v2066
  %v2068 = vpop.f32.mrb[0].mxu0
  %v2069 = vadd.f32 0.0, %v2068
  %v2070 = vpop.f32.mrb[0].mxu0
  %v2071 = vpop.f32.mrb[0].mxu0
  %2072 = vdwg.mxu0
  %2073 = vmatprep.subr.bf16.mxu0 %v2024
  %2074 = vmatpush1.bf16.msra.mxu0 %v2023
  %2075 = vmatprep.subr.bf16.mxu0 0
  %2076 = vmatpush1.bf16.msra.mxu0 0
  %2077 = vmatprep.subr.bf16.mxu0 0
  %2078 = vmatpush1.bf16.msra.mxu0 0
  %2079 = vmatprep.subr.bf16.mxu0 0
  %2080 = vmatpush1.bf16.msra.mxu0 0
  %2081 = vmatprep.subr.bf16.mxu0 0
  %2082 = vmatpush1.bf16.msra.mxu0 0
  %2083 = vmatprep.subr.bf16.mxu0 0
  %2084 = vmatpush1.bf16.msra.mxu0 0
  %2085 = vmatprep.subr.bf16.mxu0 0
  %2086 = vmatpush1.bf16.msra.mxu0 0
  %2087 = vmatprep.subr.bf16.mxu0 0
  %2088 = vmatpush1.bf16.msra.mxu0 0
  %2089 = vmatprep.subr.bf16.mxu0 0
  %2090 = vmatpush1.bf16.msra.mxu0 0
  %2091 = vmatprep.subr.bf16.mxu0 0
  %2092 = vmatpush1.bf16.msra.mxu0 0
  %2093 = vmatprep.subr.bf16.mxu0 0
  %2094 = vmatpush1.bf16.msra.mxu0 0
  %2095 = vmatprep.subr.bf16.mxu0 0
  %2096 = vmatpush1.bf16.msra.mxu0 0
  %2097 = vmatprep.subr.bf16.mxu0 0
  %2098 = vmatpush1.bf16.msra.mxu0 0
  %2099 = vmatprep.subr.bf16.mxu0 0
  %2100 = vmatpush1.bf16.msra.mxu0 0
  %2101 = vmatprep.subr.bf16.mxu0 0
  %2102 = vmatpush1.bf16.msra.mxu0 0
  %2103 = vmatprep.subr.bf16.mxu0 0
  %2104 = vmatpush1.bf16.msra.mxu0 0
  %2105 = vmatprep.mubr.bf16.mxu0 0
  %2106 = vmatmul.mubr.bf16.gmra.mrb[0].mxu0 %v2030
  %v2107 = vpop.f32.mrb[0].mxu0
  %v2108 = vadd.f32 0.0, %v2107
  %v2109 = vpop.f32.mrb[0].mxu0
  %v2110 = vadd.f32 0.0, %v2109
  %v2111 = vpop.f32.mrb[0].mxu0
  %v2112 = vpop.f32.mrb[0].mxu0
  %2113 = vdwg.mxu0
  %v2114 = vld [vmem:[%s863] ss:$8 sm:$0xf]
  %v2116 = vlaneseq
  %v2117 = vshrl.u32 %v2116, 7
  %v2118 = vsub.s32 0, %v2117
  %v2119 = vrot.slane %v2114, %v2118
  %v2120 = vlaneseq
  %v2121 = vshrl.u32 %v2120, 7
  %v2122 = vsub.s32 1, %v2121
  %v2123 = vrot.slane %v2114, %v2122
  %v2124 = vlaneseq
  %v2125 = vshrl.u32 %v2124, 7
  %v2126 = vsub.s32 2, %v2125
  %v2127 = vrot.slane %v2114, %v2126
  %v2128 = vlaneseq
  %v2129 = vshrl.u32 %v2128, 7
  %v2130 = vsub.s32 3, %v2129
  %v2131 = vrot.slane %v2114, %v2130
  %v2136 = vmul.f32 %v2067, %v2119
  %v2137 = vmul.f32 %v2069, %v2123
  %v2138 = vmul.f32 %v2108, %v2127
  %v2139 = vmul.f32 %v2110, %v2131
  %v2140 = vadd.f32 %v1995, %v2136
  %v2141 = vadd.f32 %v1996, %v2137
  %v2142 = vadd.f32 %v1997, %v2138
  %v2143 = vadd.f32 %v1998, %v2139
  %s2144 = scalar_lea.vmem %s2, 24
  %v2145 = vld [vmem:[%s2144] sm:$0xf]
  %2146 = vrot.lane.b32.xlu0 %v1999, 113
  %v2147 = vpop.permute.xlu0 %2146
  %2148 = vrot.lane.b32.xlu0 %v2000, 113
  %v2149 = vpop.permute.xlu0 %2148
  %2150 = vrot.lane.b32.xlu0 %v2001, 113
  %v2151 = vpop.permute.xlu0 %2150
  %2152 = vrot.lane.b32.xlu0 %v2002, 113
  %v2153 = vpop.permute.xlu0 %2152
  %2154 = vrot.lane.b32.xlu0 %v2003, 113
  %v2155 = vpop.permute.xlu0 %2154
  %v2156 = vsel %vm906, %v2147, %v2149
  %v2157 = vsel %vm906, %v2149, %v2151
  %v2158 = vsel %vm906, %v2151, %v2153
  %v2159 = vsel %vm906, %v2153, %v2155
  %v2165 = vsel %vm133, %v2145, 0
  %2167 = vmatprep.subr.bf16.mxu0 %v2157
  %2168 = vmatpush1.bf16.msra.mxu0 %v2156
  %2169 = vmatprep.subr.bf16.mxu0 0
  %2170 = vmatpush1.bf16.msra.mxu0 0
  %2171 = vmatprep.subr.bf16.mxu0 0
  %2172 = vmatpush1.bf16.msra.mxu0 0
  %2173 = vmatprep.subr.bf16.mxu0 0
  %2174 = vmatpush1.bf16.msra.mxu0 0
  %2175 = vmatprep.subr.bf16.mxu0 0
  %2176 = vmatpush1.bf16.msra.mxu0 0
  %2177 = vmatprep.subr.bf16.mxu0 0
  %2178 = vmatpush1.bf16.msra.mxu0 0
  %2179 = vmatprep.subr.bf16.mxu0 0
  %2180 = vmatpush1.bf16.msra.mxu0 0
  %2181 = vmatprep.subr.bf16.mxu0 0
  %2182 = vmatpush1.bf16.msra.mxu0 0
  %2183 = vmatprep.subr.bf16.mxu0 0
  %2184 = vmatpush1.bf16.msra.mxu0 0
  %2185 = vmatprep.subr.bf16.mxu0 0
  %2186 = vmatpush1.bf16.msra.mxu0 0
  %2187 = vmatprep.subr.bf16.mxu0 0
  %2188 = vmatpush1.bf16.msra.mxu0 0
  %2189 = vmatprep.subr.bf16.mxu0 0
  %2190 = vmatpush1.bf16.msra.mxu0 0
  %2191 = vmatprep.subr.bf16.mxu0 0
  %2192 = vmatpush1.bf16.msra.mxu0 0
  %2193 = vmatprep.subr.bf16.mxu0 0
  %2194 = vmatpush1.bf16.msra.mxu0 0
  %2195 = vmatprep.subr.bf16.mxu0 0
  %2196 = vmatpush1.bf16.msra.mxu0 0
  %2197 = vmatprep.subr.bf16.mxu0 0
  %2198 = vmatpush1.bf16.msra.mxu0 0
  %2199 = vmatprep.mubr.bf16.mxu0 0
  %2200 = vmatmul.mubr.bf16.gmra.mrb[0].mxu0 %v2165
  %v2201 = vpop.f32.mrb[0].mxu0
  %v2202 = vadd.f32 0.0, %v2201
  %v2203 = vpop.f32.mrb[0].mxu0
  %v2204 = vadd.f32 0.0, %v2203
  %v2205 = vpop.f32.mrb[0].mxu0
  %v2206 = vpop.f32.mrb[0].mxu0
  %2207 = vdwg.mxu0
  %2208 = vmatprep.subr.bf16.mxu0 %v2159
  %2209 = vmatpush1.bf16.msra.mxu0 %v2158
  %2210 = vmatprep.subr.bf16.mxu0 0
  %2211 = vmatpush1.bf16.msra.mxu0 0
  %2212 = vmatprep.subr.bf16.mxu0 0
  %2213 = vmatpush1.bf16.msra.mxu0 0
  %2214 = vmatprep.subr.bf16.mxu0 0
  %2215 = vmatpush1.bf16.msra.mxu0 0
  %2216 = vmatprep.subr.bf16.mxu0 0
  %2217 = vmatpush1.bf16.msra.mxu0 0
  %2218 = vmatprep.subr.bf16.mxu0 0
  %2219 = vmatpush1.bf16.msra.mxu0 0
  %2220 = vmatprep.subr.bf16.mxu0 0
  %2221 = vmatpush1.bf16.msra.mxu0 0
  %2222 = vmatprep.subr.bf16.mxu0 0
  %2223 = vmatpush1.bf16.msra.mxu0 0
  %2224 = vmatprep.subr.bf16.mxu0 0
  %2225 = vmatpush1.bf16.msra.mxu0 0
  %2226 = vmatprep.subr.bf16.mxu0 0
  %2227 = vmatpush1.bf16.msra.mxu0 0
  %2228 = vmatprep.subr.bf16.mxu0 0
  %2229 = vmatpush1.bf16.msra.mxu0 0
  %2230 = vmatprep.subr.bf16.mxu0 0
  %2231 = vmatpush1.bf16.msra.mxu0 0
  %2232 = vmatprep.subr.bf16.mxu0 0
  %2233 = vmatpush1.bf16.msra.mxu0 0
  %2234 = vmatprep.subr.bf16.mxu0 0
  %2235 = vmatpush1.bf16.msra.mxu0 0
  %2236 = vmatprep.subr.bf16.mxu0 0
  %2237 = vmatpush1.bf16.msra.mxu0 0
  %2238 = vmatprep.subr.bf16.mxu0 0
  %2239 = vmatpush1.bf16.msra.mxu0 0
  %2240 = vmatprep.mubr.bf16.mxu0 0
  %2241 = vmatmul.mubr.bf16.gmra.mrb[0].mxu0 %v2165
  %v2242 = vpop.f32.mrb[0].mxu0
  %v2243 = vadd.f32 0.0, %v2242
  %v2244 = vpop.f32.mrb[0].mxu0
  %v2245 = vadd.f32 0.0, %v2244
  %v2246 = vpop.f32.mrb[0].mxu0
  %v2247 = vpop.f32.mrb[0].mxu0
  %2248 = vdwg.mxu0
  %v2249 = vld [vmem:[%s1000] ss:$8 sm:$0xf]
  %v2251 = vlaneseq
  %v2252 = vshrl.u32 %v2251, 7
  %v2253 = vsub.s32 0, %v2252
  %v2254 = vrot.slane %v2249, %v2253
  %v2255 = vlaneseq
  %v2256 = vshrl.u32 %v2255, 7
  %v2257 = vsub.s32 1, %v2256
  %v2258 = vrot.slane %v2249, %v2257
  %v2259 = vlaneseq
  %v2260 = vshrl.u32 %v2259, 7
  %v2261 = vsub.s32 2, %v2260
  %v2262 = vrot.slane %v2249, %v2261
  %v2263 = vlaneseq
  %v2264 = vshrl.u32 %v2263, 7
  %v2265 = vsub.s32 3, %v2264
  %v2266 = vrot.slane %v2249, %v2265
  %v2271 = vmul.f32 %v2202, %v2254
  %v2272 = vmul.f32 %v2204, %v2258
  %v2273 = vmul.f32 %v2243, %v2262
  %v2274 = vmul.f32 %v2245, %v2266
  %v2275 = vadd.f32 %v2140, %v2271
  %v2276 = vadd.f32 %v2141, %v2272
  %v2277 = vadd.f32 %v2142, %v2273
  %v2278 = vadd.f32 %v2143, %v2274
  %s2279 = scalar_lea.vmem %s2, 28
  %v2280 = vld [vmem:[%s2279] sm:$0xf]
  %2281 = vrot.lane.b32.xlu0 %v1999, 112
  %v2282 = vpop.permute.xlu0 %2281
  %2283 = vrot.lane.b32.xlu0 %v2000, 112
  %v2284 = vpop.permute.xlu0 %2283
  %2285 = vrot.lane.b32.xlu0 %v2001, 112
  %v2286 = vpop.permute.xlu0 %2285
  %2287 = vrot.lane.b32.xlu0 %v2002, 112
  %v2288 = vpop.permute.xlu0 %2287
  %2289 = vrot.lane.b32.xlu0 %v2003, 112
  %v2290 = vpop.permute.xlu0 %2289
  %v2291 = vsel %vm1043, %v2282, %v2284
  %v2292 = vsel %vm1043, %v2284, %v2286
  %v2293 = vsel %vm1043, %v2286, %v2288
  %v2294 = vsel %vm1043, %v2288, %v2290
  %v2300 = vsel %vm133, %v2280, 0
  %2302 = vmatprep.subr.bf16.mxu0 %v2292
  %2303 = vmatpush1.bf16.msra.mxu0 %v2291
  %2304 = vmatprep.subr.bf16.mxu0 0
  %2305 = vmatpush1.bf16.msra.mxu0 0
  %2306 = vmatprep.subr.bf16.mxu0 0
  %2307 = vmatpush1.bf16.msra.mxu0 0
  %2308 = vmatprep.subr.bf16.mxu0 0
  %2309 = vmatpush1.bf16.msra.mxu0 0
  %2310 = vmatprep.subr.bf16.mxu0 0
  %2311 = vmatpush1.bf16.msra.mxu0 0
  %2312 = vmatprep.subr.bf16.mxu0 0
  %2313 = vmatpush1.bf16.msra.mxu0 0
  %2314 = vmatprep.subr.bf16.mxu0 0
  %2315 = vmatpush1.bf16.msra.mxu0 0
  %2316 = vmatprep.subr.bf16.mxu0 0
  %2317 = vmatpush1.bf16.msra.mxu0 0
  %2318 = vmatprep.subr.bf16.mxu0 0
  %2319 = vmatpush1.bf16.msra.mxu0 0
  %2320 = vmatprep.subr.bf16.mxu0 0
  %2321 = vmatpush1.bf16.msra.mxu0 0
  %2322 = vmatprep.subr.bf16.mxu0 0
  %2323 = vmatpush1.bf16.msra.mxu0 0
  %2324 = vmatprep.subr.bf16.mxu0 0
  %2325 = vmatpush1.bf16.msra.mxu0 0
  %2326 = vmatprep.subr.bf16.mxu0 0
  %2327 = vmatpush1.bf16.msra.mxu0 0
  %2328 = vmatprep.subr.bf16.mxu0 0
  %2329 = vmatpush1.bf16.msra.mxu0 0
  %2330 = vmatprep.subr.bf16.mxu0 0
  %2331 = vmatpush1.bf16.msra.mxu0 0
  %2332 = vmatprep.subr.bf16.mxu0 0
  %2333 = vmatpush1.bf16.msra.mxu0 0
  %2334 = vmatprep.mubr.bf16.mxu0 0
  %2335 = vmatmul.mubr.bf16.gmra.mrb[0].mxu0 %v2300
  %v2336 = vpop.f32.mrb[0].mxu0
  %v2337 = vadd.f32 0.0, %v2336
  %v2338 = vpop.f32.mrb[0].mxu0
  %v2339 = vadd.f32 0.0, %v2338
  %v2340 = vpop.f32.mrb[0].mxu0
  %v2341 = vpop.f32.mrb[0].mxu0
  %2342 = vdwg.mxu0
  %2343 = vmatprep.subr.bf16.mxu0 %v2294
  %2344 = vmatpush1.bf16.msra.mxu0 %v2293
  %2345 = vmatprep.subr.bf16.mxu0 0
  %2346 = vmatpush1.bf16.msra.mxu0 0
  %2347 = vmatprep.subr.bf16.mxu0 0
  %2348 = vmatpush1.bf16.msra.mxu0 0
  %2349 = vmatprep.subr.bf16.mxu0 0
  %2350 = vmatpush1.bf16.msra.mxu0 0
  %2351 = vmatprep.subr.bf16.mxu0 0
  %2352 = vmatpush1.bf16.msra.mxu0 0
  %2353 = vmatprep.subr.bf16.mxu0 0
  %2354 = vmatpush1.bf16.msra.mxu0 0
  %2355 = vmatprep.subr.bf16.mxu0 0
  %2356 = vmatpush1.bf16.msra.mxu0 0
  %2357 = vmatprep.subr.bf16.mxu0 0
  %2358 = vmatpush1.bf16.msra.mxu0 0
  %2359 = vmatprep.subr.bf16.mxu0 0
  %2360 = vmatpush1.bf16.msra.mxu0 0
  %2361 = vmatprep.subr.bf16.mxu0 0
  %2362 = vmatpush1.bf16.msra.mxu0 0
  %2363 = vmatprep.subr.bf16.mxu0 0
  %2364 = vmatpush1.bf16.msra.mxu0 0
  %2365 = vmatprep.subr.bf16.mxu0 0
  %2366 = vmatpush1.bf16.msra.mxu0 0
  %2367 = vmatprep.subr.bf16.mxu0 0
  %2368 = vmatpush1.bf16.msra.mxu0 0
  %2369 = vmatprep.subr.bf16.mxu0 0
  %2370 = vmatpush1.bf16.msra.mxu0 0
  %2371 = vmatprep.subr.bf16.mxu0 0
  %2372 = vmatpush1.bf16.msra.mxu0 0
  %2373 = vmatprep.subr.bf16.mxu0 0
  %2374 = vmatpush1.bf16.msra.mxu0 0
  %2375 = vmatprep.mubr.bf16.mxu0 0
  %2376 = vmatmul.mubr.bf16.gmra.mrb[0].mxu0 %v2300
  %v2377 = vpop.f32.mrb[0].mxu0
  %v2378 = vadd.f32 0.0, %v2377
  %v2379 = vpop.f32.mrb[0].mxu0
  %v2380 = vadd.f32 0.0, %v2379
  %v2381 = vpop.f32.mrb[0].mxu0
  %v2382 = vpop.f32.mrb[0].mxu0
  %2383 = vdwg.mxu0
  %v2384 = vld [vmem:[%s1137] ss:$8 sm:$0xf]
  %v2386 = vlaneseq
  %v2387 = vshrl.u32 %v2386, 7
  %v2388 = vsub.s32 0, %v2387
  %v2389 = vrot.slane %v2384, %v2388
  %v2390 = vlaneseq
  %v2391 = vshrl.u32 %v2390, 7
  %v2392 = vsub.s32 1, %v2391
  %v2393 = vrot.slane %v2384, %v2392
  %v2394 = vlaneseq
  %v2395 = vshrl.u32 %v2394, 7
  %v2396 = vsub.s32 2, %v2395
  %v2397 = vrot.slane %v2384, %v2396
  %v2398 = vlaneseq
  %v2399 = vshrl.u32 %v2398, 7
  %v2400 = vsub.s32 3, %v2399
  %v2401 = vrot.slane %v2384, %v2400
  %v2406 = vmul.f32 %v2337, %v2389
  %v2407 = vmul.f32 %v2339, %v2393
  %v2408 = vmul.f32 %v2378, %v2397
  %v2409 = vmul.f32 %v2380, %v2401
  %v2410 = vadd.f32 %v2275, %v2406
  %v2411 = vadd.f32 %v2276, %v2407
  %v2412 = vadd.f32 %v2277, %v2408
  %v2413 = vadd.f32 %v2278, %v2409
  %s2414 = scalar_lea.vmem %s2, 32
  %v2415 = vld [vmem:[%s2414] sm:$0xf]
  %2416 = vrot.lane.b32.xlu0 %v1999, 111
  %v2417 = vpop.permute.xlu0 %2416
  %2418 = vrot.lane.b32.xlu0 %v2000, 111
  %v2419 = vpop.permute.xlu0 %2418
  %2420 = vrot.lane.b32.xlu0 %v2001, 111
  %v2421 = vpop.permute.xlu0 %2420
  %2422 = vrot.lane.b32.xlu0 %v2002, 111
  %v2423 = vpop.permute.xlu0 %2422
  %2424 = vrot.lane.b32.xlu0 %v2003, 111
  %v2425 = vpop.permute.xlu0 %2424
  %v2426 = vsel %vm1180, %v2417, %v2419
  %v2427 = vsel %vm1180, %v2419, %v2421
  %v2428 = vsel %vm1180, %v2421, %v2423
  %v2429 = vsel %vm1180, %v2423, %v2425
  %v2435 = vsel %vm133, %v2415, 0
  %2437 = vmatprep.subr.bf16.mxu0 %v2427
  %2438 = vmatpush1.bf16.msra.mxu0 %v2426
  %2439 = vmatprep.subr.bf16.mxu0 0
  %2440 = vmatpush1.bf16.msra.mxu0 0
  %2441 = vmatprep.subr.bf16.mxu0 0
  %2442 = vmatpush1.bf16.msra.mxu0 0
  %2443 = vmatprep.subr.bf16.mxu0 0
  %2444 = vmatpush1.bf16.msra.mxu0 0
  %2445 = vmatprep.subr.bf16.mxu0 0
  %2446 = vmatpush1.bf16.msra.mxu0 0
  %2447 = vmatprep.subr.bf16.mxu0 0
  %2448 = vmatpush1.bf16.msra.mxu0 0
  %2449 = vmatprep.subr.bf16.mxu0 0
  %2450 = vmatpush1.bf16.msra.mxu0 0
  %2451 = vmatprep.subr.bf16.mxu0 0
  %2452 = vmatpush1.bf16.msra.mxu0 0
  %2453 = vmatprep.subr.bf16.mxu0 0
  %2454 = vmatpush1.bf16.msra.mxu0 0
  %2455 = vmatprep.subr.bf16.mxu0 0
  %2456 = vmatpush1.bf16.msra.mxu0 0
  %2457 = vmatprep.subr.bf16.mxu0 0
  %2458 = vmatpush1.bf16.msra.mxu0 0
  %2459 = vmatprep.subr.bf16.mxu0 0
  %2460 = vmatpush1.bf16.msra.mxu0 0
  %2461 = vmatprep.subr.bf16.mxu0 0
  %2462 = vmatpush1.bf16.msra.mxu0 0
  %2463 = vmatprep.subr.bf16.mxu0 0
  %2464 = vmatpush1.bf16.msra.mxu0 0
  %2465 = vmatprep.subr.bf16.mxu0 0
  %2466 = vmatpush1.bf16.msra.mxu0 0
  %2467 = vmatprep.subr.bf16.mxu0 0
  %2468 = vmatpush1.bf16.msra.mxu0 0
  %2469 = vmatprep.mubr.bf16.mxu0 0
  %2470 = vmatmul.mubr.bf16.gmra.mrb[0].mxu0 %v2435
  %v2471 = vpop.f32.mrb[0].mxu0
  %v2472 = vadd.f32 0.0, %v2471
  %v2473 = vpop.f32.mrb[0].mxu0
  %v2474 = vadd.f32 0.0, %v2473
  %v2475 = vpop.f32.mrb[0].mxu0
  %v2476 = vpop.f32.mrb[0].mxu0
  %2477 = vdwg.mxu0
  %2478 = vmatprep.subr.bf16.mxu0 %v2429
  %2479 = vmatpush1.bf16.msra.mxu0 %v2428
  %2480 = vmatprep.subr.bf16.mxu0 0
  %2481 = vmatpush1.bf16.msra.mxu0 0
  %2482 = vmatprep.subr.bf16.mxu0 0
  %2483 = vmatpush1.bf16.msra.mxu0 0
  %2484 = vmatprep.subr.bf16.mxu0 0
  %2485 = vmatpush1.bf16.msra.mxu0 0
  %2486 = vmatprep.subr.bf16.mxu0 0
  %2487 = vmatpush1.bf16.msra.mxu0 0
  %2488 = vmatprep.subr.bf16.mxu0 0
  %2489 = vmatpush1.bf16.msra.mxu0 0
  %2490 = vmatprep.subr.bf16.mxu0 0
  %2491 = vmatpush1.bf16.msra.mxu0 0
  %2492 = vmatprep.subr.bf16.mxu0 0
  %2493 = vmatpush1.bf16.msra.mxu0 0
  %2494 = vmatprep.subr.bf16.mxu0 0
  %2495 = vmatpush1.bf16.msra.mxu0 0
  %2496 = vmatprep.subr.bf16.mxu0 0
  %2497 = vmatpush1.bf16.msra.mxu0 0
  %2498 = vmatprep.subr.bf16.mxu0 0
  %2499 = vmatpush1.bf16.msra.mxu0 0
  %2500 = vmatprep.subr.bf16.mxu0 0
  %2501 = vmatpush1.bf16.msra.mxu0 0
  %2502 = vmatprep.subr.bf16.mxu0 0
  %2503 = vmatpush1.bf16.msra.mxu0 0
  %2504 = vmatprep.subr.bf16.mxu0 0
  %2505 = vmatpush1.bf16.msra.mxu0 0
  %2506 = vmatprep.subr.bf16.mxu0 0
  %2507 = vmatpush1.bf16.msra.mxu0 0
  %2508 = vmatprep.subr.bf16.mxu0 0
  %2509 = vmatpush1.bf16.msra.mxu0 0
  %2510 = vmatprep.mubr.bf16.mxu0 0
  %2511 = vmatmul.mubr.bf16.gmra.mrb[0].mxu0 %v2435
  %v2512 = vpop.f32.mrb[0].mxu0
  %v2513 = vadd.f32 0.0, %v2512
  %v2514 = vpop.f32.mrb[0].mxu0
  %v2515 = vadd.f32 0.0, %v2514
  %v2516 = vpop.f32.mrb[0].mxu0
  %v2517 = vpop.f32.mrb[0].mxu0
  %2518 = vdwg.mxu0
  %v2519 = vld [vmem:[%s1274] ss:$8 sm:$0xf]
  %v2521 = vlaneseq
  %v2522 = vshrl.u32 %v2521, 7
  %v2523 = vsub.s32 0, %v2522
  %v2524 = vrot.slane %v2519, %v2523
  %v2525 = vlaneseq
  %v2526 = vshrl.u32 %v2525, 7
  %v2527 = vsub.s32 1, %v2526
  %v2528 = vrot.slane %v2519, %v2527
  %v2529 = vlaneseq
  %v2530 = vshrl.u32 %v2529, 7
  %v2531 = vsub.s32 2, %v2530
  %v2532 = vrot.slane %v2519, %v2531
  %v2533 = vlaneseq
  %v2534 = vshrl.u32 %v2533, 7
  %v2535 = vsub.s32 3, %v2534
  %v2536 = vrot.slane %v2519, %v2535
  %v2541 = vmul.f32 %v2472, %v2524
  %v2542 = vmul.f32 %v2474, %v2528
  %v2543 = vmul.f32 %v2513, %v2532
  %v2544 = vmul.f32 %v2515, %v2536
  %v2545 = vadd.f32 %v2410, %v2541
  %v2546 = vadd.f32 %v2411, %v2542
  %v2547 = vadd.f32 %v2412, %v2543
  %v2548 = vadd.f32 %v2413, %v2544
  %v2549 = vadd.f32 %v2545, %v2546
  %v2550 = vadd.f32 %v2549, %v2547
  %v2551 = vadd.f32 %v2550, %v2548
  %2552 = vadd.xlane.f32.xlu0 %v2551
  %v2553 = vpop.xlane.xlu0 %2552
  %v2554 = vmul.f32 %v2545, %v2545
  %v2555 = vmul.f32 %v2546, %v2546
  %v2556 = vmul.f32 %v2547, %v2547
  %v2557 = vmul.f32 %v2548, %v2548
  %v2558 = vadd.f32 %v2554, %v2555
  %v2559 = vadd.f32 %v2558, %v2556
  %v2560 = vadd.f32 %v2559, %v2557
  %2561 = vadd.xlane.f32.xlu0 %v2560
  %v2562 = vpop.xlane.xlu0 %2561
  %v2563 = vmul.f32 %v2553, 0.001953125
  %v2564 = vmul.f32 %v2562, 0.001953125
  %v2565 = vmul.f32 %v2563, %v2563
  %v2566 = vsub.f32 %v2564, %v2565
  %v2567 = vld [vmem:[%s10] sm:$0xff]
  %v2568 = vadd.f32 %v2566, 1e-05
  %v2569 = vrsqrt.pop %v2568
  %v2570 = vmul.f32 %v2567, %v2569
  %v2571 = vmul.f32 %v2563, %v2570
  %2573 = vrot.lane.b32.xlu0 %v2571, 1
  %v2574 = vpop.permute.xlu0 %2573
  %v2576 = vsub.f32 %v2567, %v2574
  %2578 = vset.pattern.permute.xlu0 0
  %2579 = vperm.xlu0 %2578, %v2570
  %v2580 = vpop.permute.xlu0 %2579
  %v2582 = vmul.f32 %v2545, %v2580
  %v2583 = vmul.f32 %v2546, %v2580
  %v2584 = vmul.f32 %v2547, %v2580
  %v2585 = vmul.f32 %v2548, %v2580
  %2587 = vset.pattern.permute.xlu0 1
  %2588 = vperm.xlu0 %2587, %v2576
  %v2589 = vpop.permute.xlu0 %2588
  %v2591 = vadd.f32 %v2582, %v2589
  %v2592 = vadd.f32 %v2583, %v2589
  %v2593 = vadd.f32 %v2584, %v2589
  %v2594 = vadd.f32 %v2585, %v2589
  %v2595 = vmax.f32 %v2591, 0.0
  %v2596 = vmax.f32 %v2592, 0.0
  %v2597 = vmax.f32 %v2593, 0.0
  %v2598 = vmax.f32 %v2594, 0.0
  %v2599 = vpack.c.bf16 %v2595, %v2595
  %v2600 = vpack.c.bf16 %v2596, %v2596
  %v2601 = vpack.c.bf16 %v2597, %v2597
  %v2602 = vpack.c.bf16 %v2598, %v2598
  %2603 = vst [vmem:[#allocation2 + $0x8] sm:$0xf] %v2599
  %2604 = vst [vmem:[#allocation2 + $0x10] sm:$0xf] %v2600
  %2605 = vst [vmem:[#allocation2 + $0x18] sm:$0xf] %v2601
  %2606 = vst [vmem:[#allocation2 + $0x20] sm:$0xf] %v2602
  %v2607 = vld [vmem:[#allocation2 + $0x8] sm:$0xf]
  %v2608 = vld [vmem:[#allocation2 + $0x10] sm:$0xf]
  %v2609 = vld [vmem:[#allocation2 + $0x18] sm:$0xf]
  %v2610 = vld [vmem:[#allocation2 + $0x20] sm:$0xf]
  %v2611 = vld [vmem:[#allocation2 + $0x28] sm:$0xf]
  %v2612 = vunpack.c.l.bf16 %v2607
  %v2613 = vunpack.c.l.bf16 %v2608
  %v2614 = vunpack.c.l.bf16 %v2609
  %v2615 = vunpack.c.l.bf16 %v2610
  %v2616 = vunpack.c.l.bf16 %v2611
  %2622 = vrot.lane.b32.xlu0 %v2612, 127
  %v2623 = vpop.permute.xlu0 %2622
  %2624 = vrot.lane.b32.xlu0 %v2613, 127
  %v2625 = vpop.permute.xlu0 %2624
  %2626 = vrot.lane.b32.xlu0 %v2614, 127
  %v2627 = vpop.permute.xlu0 %2626
  %2628 = vrot.lane.b32.xlu0 %v2615, 127
  %v2629 = vpop.permute.xlu0 %2628
  %2630 = vrot.lane.b32.xlu0 %v2616, 127
  %v2631 = vpop.permute.xlu0 %2630
  %vm2632 = vcmask 1039360
  %v2633 = vsel %vm2632, %v2623, %v2625
  %v2634 = vsel %vm2632, %v2625, %v2627
  %v2635 = vsel %vm2632, %v2627, %v2629
  %v2636 = vsel %vm2632, %v2629, %v2631
  %v2641 = vmax.f32 %v2595, %v2633
  %v2642 = vmax.f32 %v2596, %v2634
  %v2643 = vmax.f32 %v2597, %v2635
  %v2644 = vmax.f32 %v2598, %v2636
  %v2646 = vmax.f32 %v2612, %v2633
  %v2647 = vmax.f32 %v2613, %v2634
  %v2648 = vmax.f32 %v2614, %v2635
  %v2649 = vmax.f32 %v2615, %v2636
  %v2650 = vmax.f32 %v2616, %v2631
  %2656 = vrot.lane.b32.xlu0 %v2646, 112
  %v2657 = vpop.permute.xlu0 %2656
  %2658 = vrot.lane.b32.xlu0 %v2647, 112
  %v2659 = vpop.permute.xlu0 %2658
  %2660 = vrot.lane.b32.xlu0 %v2648, 112
  %v2661 = vpop.permute.xlu0 %2660
  %2662 = vrot.lane.b32.xlu0 %v2649, 112
  %v2663 = vpop.permute.xlu0 %2662
  %2664 = vrot.lane.b32.xlu0 %v2650, 112
  %v2665 = vpop.permute.xlu0 %2664
  %vm2666 = vcmask 916480
  %v2667 = vsel %vm2666, %v2657, %v2659
  %v2668 = vsel %vm2666, %v2659, %v2661
  %v2669 = vsel %vm2666, %v2661, %v2663
  %v2670 = vsel %vm2666, %v2663, %v2665
  %v2675 = vmax.f32 %v2641, %v2667
  %v2676 = vmax.f32 %v2642, %v2668
  %v2677 = vmax.f32 %v2643, %v2669
  %v2678 = vmax.f32 %v2644, %v2670
  %v2679 = vpack.c.bf16 %v2675, %v2675
  %v2680 = vpack.c.bf16 %v2676, %v2676
  %v2681 = vpack.c.bf16 %v2677, %v2677
  %v2682 = vpack.c.bf16 %v2678, %v2678
  %v2683 = vld [vmem:[%s19] sm:$0xf]
  %v2684 = vld [vmem:[%s19 + $0x4] sm:$0xf]
  %v2685 = vld [vmem:[%s19 + $0x8] sm:$0xf]
  %v2686 = vld [vmem:[%s19 + $0xc] sm:$0xf]
  %v2687 = vld [vmem:[%s19 + $0x10] sm:$0xf]
  %v2688 = vld [vmem:[%s19 + $0x14] sm:$0xf]
  %v2689 = vld [vmem:[%s19 + $0x18] sm:$0xf]
  %v2690 = vld [vmem:[%s19 + $0x1c] sm:$0xf]
  %v2691 = vld [vmem:[%s19 + $0x20] sm:$0xf]
  %v2692 = vld [vmem:[%s19 + $0x24] sm:$0xf]
  %v2693 = vld [vmem:[%s19 + $0x28] sm:$0xf]
  %v2694 = vld [vmem:[%s19 + $0x2c] sm:$0xf]
  %v2695 = vld [vmem:[%s19 + $0x30] sm:$0xf]
  %v2696 = vld [vmem:[%s19 + $0x34] sm:$0xf]
  %v2697 = vld [vmem:[%s19 + $0x38] sm:$0xf]
  %v2698 = vld [vmem:[%s19 + $0x3c] sm:$0xf]
  %v2699 = vld [vmem:[%s19 + $0x40] sm:$0xf]
  %v2700 = vld [vmem:[%s19 + $0x44] sm:$0xf]
  %v2701 = vld [vmem:[%s19 + $0x48] sm:$0xf]
  %v2702 = vld [vmem:[%s19 + $0x4c] sm:$0xf]
  %v2703 = vld [vmem:[%s19 + $0x50] sm:$0xf]
  %v2704 = vld [vmem:[%s19 + $0x54] sm:$0xf]
  %v2705 = vld [vmem:[%s19 + $0x58] sm:$0xf]
  %v2706 = vld [vmem:[%s19 + $0x5c] sm:$0xf]
  %v2707 = vld [vmem:[%s19 + $0x60] sm:$0xf]
  %v2708 = vld [vmem:[%s19 + $0x64] sm:$0xf]
  %v2709 = vld [vmem:[%s19 + $0x68] sm:$0xf]
  %v2710 = vld [vmem:[%s19 + $0x6c] sm:$0xf]
  %v2711 = vld [vmem:[%s19 + $0x70] sm:$0xf]
  %v2712 = vld [vmem:[%s19 + $0x74] sm:$0xf]
  %v2713 = vld [vmem:[%s19 + $0x78] sm:$0xf]
  %v2714 = vld [vmem:[%s19 + $0x7c] sm:$0xf]
  %v2715 = vld [vmem:[%s19 + $0x80] sm:$0xf]
  %v2716 = vld [vmem:[%s19 + $0x84] sm:$0xf]
  %v2717 = vld [vmem:[%s19 + $0x88] sm:$0xf]
  %v2718 = vld [vmem:[%s19 + $0x8c] sm:$0xf]
  %v2719 = vld [vmem:[%s19 + $0x90] sm:$0xf]
  %v2720 = vld [vmem:[%s19 + $0x94] sm:$0xf]
  %v2721 = vld [vmem:[%s19 + $0x98] sm:$0xf]
  %v2722 = vld [vmem:[%s19 + $0x9c] sm:$0xf]
  %v2723 = vld [vmem:[%s19 + $0xa0] sm:$0xf]
  %v2724 = vld [vmem:[%s19 + $0xa4] sm:$0xf]
  %v2725 = vld [vmem:[%s19 + $0xa8] sm:$0xf]
  %v2726 = vld [vmem:[%s19 + $0xac] sm:$0xf]
  %v2727 = vld [vmem:[%s19 + $0xb0] sm:$0xf]
  %v2728 = vld [vmem:[%s19 + $0xb4] sm:$0xf]
  %v2729 = vld [vmem:[%s19 + $0xb8] sm:$0xf]
  %v2730 = vld [vmem:[%s19 + $0xbc] sm:$0xf]
  %v2731 = vld [vmem:[%s19 + $0xc0] sm:$0xf]
  %v2732 = vld [vmem:[%s19 + $0xc4] sm:$0xf]
  %v2733 = vld [vmem:[%s19 + $0xc8] sm:$0xf]
  %v2734 = vld [vmem:[%s19 + $0xcc] sm:$0xf]
  %v2735 = vld [vmem:[%s19 + $0xd0] sm:$0xf]
  %v2736 = vld [vmem:[%s19 + $0xd4] sm:$0xf]
  %v2737 = vld [vmem:[%s19 + $0xd8] sm:$0xf]
  %v2738 = vld [vmem:[%s19 + $0xdc] sm:$0xf]
  %v2739 = vld [vmem:[%s19 + $0xe0] sm:$0xf]
  %v2740 = vld [vmem:[%s19 + $0xe4] sm:$0xf]
  %v2741 = vld [vmem:[%s19 + $0xe8] sm:$0xf]
  %v2742 = vld [vmem:[%s19 + $0xec] sm:$0xf]
  %v2743 = vld [vmem:[%s19 + $0xf0] sm:$0xf]
  %v2744 = vld [vmem:[%s19 + $0xf4] sm:$0xf]
  %v2745 = vld [vmem:[%s19 + $0xf8] sm:$0xf]
  %v2746 = vld [vmem:[%s19 + $0xfc] sm:$0xf]
  %v2811 = vunpack.c.l.b16 %v2683
  %v2812 = vunpack.c.l.b16 %v2684
  %v2813 = vunpack.c.l.b16 %v2685
  %v2814 = vunpack.c.l.b16 %v2686
  %v2815 = vunpack.c.l.b16 %v2687
  %v2816 = vunpack.c.l.b16 %v2688
  %v2817 = vunpack.c.l.b16 %v2689
  %v2818 = vunpack.c.l.b16 %v2690
  %v2819 = vunpack.c.l.b16 %v2691
  %v2820 = vunpack.c.l.b16 %v2692
  %v2821 = vunpack.c.l.b16 %v2693
  %v2822 = vunpack.c.l.b16 %v2694
  %v2823 = vunpack.c.l.b16 %v2695
  %v2824 = vunpack.c.l.b16 %v2696
  %v2825 = vunpack.c.l.b16 %v2697
  %v2826 = vunpack.c.l.b16 %v2698
  %v2827 = vunpack.c.l.b16 %v2699
  %v2828 = vunpack.c.l.b16 %v2700
  %v2829 = vunpack.c.l.b16 %v2701
  %v2830 = vunpack.c.l.b16 %v2702
  %v2831 = vunpack.c.l.b16 %v2703
  %v2832 = vunpack.c.l.b16 %v2704
  %v2833 = vunpack.c.l.b16 %v2705
  %v2834 = vunpack.c.l.b16 %v2706
  %v2835 = vunpack.c.l.b16 %v2707
  %v2836 = vunpack.c.l.b16 %v2708
  %v2837 = vunpack.c.l.b16 %v2709
  %v2838 = vunpack.c.l.b16 %v2710
  %v2839 = vunpack.c.l.b16 %v2711
  %v2840 = vunpack.c.l.b16 %v2712
  %v2841 = vunpack.c.l.b16 %v2713
  %v2842 = vunpack.c.l.b16 %v2714
  %v2843 = vunpack.c.l.b16 %v2715
  %v2844 = vunpack.c.l.b16 %v2716
  %v2845 = vunpack.c.l.b16 %v2717
  %v2846 = vunpack.c.l.b16 %v2718
  %v2847 = vunpack.c.l.b16 %v2719
  %v2848 = vunpack.c.l.b16 %v2720
  %v2849 = vunpack.c.l.b16 %v2721
  %v2850 = vunpack.c.l.b16 %v2722
  %v2851 = vunpack.c.l.b16 %v2723
  %v2852 = vunpack.c.l.b16 %v2724
  %v2853 = vunpack.c.l.b16 %v2725
  %v2854 = vunpack.c.l.b16 %v2726
  %v2855 = vunpack.c.l.b16 %v2727
  %v2856 = vunpack.c.l.b16 %v2728
  %v2857 = vunpack.c.l.b16 %v2729
  %v2858 = vunpack.c.l.b16 %v2730
  %v2859 = vunpack.c.l.b16 %v2731
  %v2860 = vunpack.c.l.b16 %v2732
  %v2861 = vunpack.c.l.b16 %v2733
  %v2862 = vunpack.c.l.b16 %v2734
  %v2863 = vunpack.c.l.b16 %v2735
  %v2864 = vunpack.c.l.b16 %v2736
  %v2865 = vunpack.c.l.b16 %v2737
  %v2866 = vunpack.c.l.b16 %v2738
  %v2867 = vunpack.c.l.b16 %v2739
  %v2868 = vunpack.c.l.b16 %v2740
  %v2869 = vunpack.c.l.b16 %v2741
  %v2870 = vunpack.c.l.b16 %v2742
  %v2871 = vunpack.c.l.b16 %v2743
  %v2872 = vunpack.c.l.b16 %v2744
  %v2873 = vunpack.c.l.b16 %v2745
  %v2874 = vunpack.c.l.b16 %v2746
  %v2875 = vpack.c.b16 %v2812, %v2811
  %v2876 = vpack.c.b16 %v2814, %v2813
  %v2877 = vpack.c.b16 %v2816, %v2815
  %v2878 = vpack.c.b16 %v2818, %v2817
  %v2879 = vpack.c.b16 %v2820, %v2819
  %v2880 = vpack.c.b16 %v2822, %v2821
  %v2881 = vpack.c.b16 %v2824, %v2823
  %v2882 = vpack.c.b16 %v2826, %v2825
  %v2883 = vpack.c.b16 %v2828, %v2827
  %v2884 = vpack.c.b16 %v2830, %v2829
  %v2885 = vpack.c.b16 %v2832, %v2831
  %v2886 = vpack.c.b16 %v2834, %v2833
  %v2887 = vpack.c.b16 %v2836, %v2835
  %v2888 = vpack.c.b16 %v2838, %v2837
  %v2889 = vpack.c.b16 %v2840, %v2839
  %v2890 = vpack.c.b16 %v2842, %v2841
  %v2891 = vpack.c.b16 %v2844, %v2843
  %v2892 = vpack.c.b16 %v2846, %v2845
  %v2893 = vpack.c.b16 %v2848, %v2847
  %v2894 = vpack.c.b16 %v2850, %v2849
  %v2895 = vpack.c.b16 %v2852, %v2851
  %v2896 = vpack.c.b16 %v2854, %v2853
  %v2897 = vpack.c.b16 %v2856, %v2855
  %v2898 = vpack.c.b16 %v2858, %v2857
  %v2899 = vpack.c.b16 %v2860, %v2859
  %v2900 = vpack.c.b16 %v2862, %v2861
  %v2901 = vpack.c.b16 %v2864, %v2863
  %v2902 = vpack.c.b16 %v2866, %v2865
  %v2903 = vpack.c.b16 %v2868, %v2867
  %v2904 = vpack.c.b16 %v2870, %v2869
  %v2905 = vpack.c.b16 %v2872, %v2871
  %v2906 = vpack.c.b16 %v2874, %v2873
  %2939 = vmatprep.subr.bf16.mxu0 0
  %2940 = vmatpush1.bf16.msra.mxu0 %v2875
  %2941 = vmatprep.subr.bf16.mxu0 0
  %2942 = vmatpush1.bf16.msra.mxu0 %v2876
  %2943 = vmatprep.subr.bf16.mxu0 0
  %2944 = vmatpush1.bf16.msra.mxu0 %v2877
  %2945 = vmatprep.subr.bf16.mxu0 0
  %2946 = vmatpush1.bf16.msra.mxu0 %v2878
  %2947 = vmatprep.subr.bf16.mxu0 0
  %2948 = vmatpush1.bf16.msra.mxu0 %v2879
  %2949 = vmatprep.subr.bf16.mxu0 0
  %2950 = vmatpush1.bf16.msra.mxu0 %v2880
  %2951 = vmatprep.subr.bf16.mxu0 0
  %2952 = vmatpush1.bf16.msra.mxu0 %v2881
  %2953 = vmatprep.subr.bf16.mxu0 0
  %2954 = vmatpush1.bf16.msra.mxu0 %v2882
  %2955 = vmatprep.subr.bf16.mxu0 0
  %2956 = vmatpush1.bf16.msra.mxu0 %v2883
  %2957 = vmatprep.subr.bf16.mxu0 0
  %2958 = vmatpush1.bf16.msra.mxu0 %v2884
  %2959 = vmatprep.subr.bf16.mxu0 0
  %2960 = vmatpush1.bf16.msra.mxu0 %v2885
  %2961 = vmatprep.subr.bf16.mxu0 0
  %2962 = vmatpush1.bf16.msra.mxu0 %v2886
  %2963 = vmatprep.subr.bf16.mxu0 0
  %2964 = vmatpush1.bf16.msra.mxu0 %v2887
  %2965 = vmatprep.subr.bf16.mxu0 0
  %2966 = vmatpush1.bf16.msra.mxu0 %v2888
  %2967 = vmatprep.subr.bf16.mxu0 0
  %2968 = vmatpush1.bf16.msra.mxu0 %v2889
  %2969 = vmatprep.subr.bf16.mxu0 0
  %2970 = vmatpush1.bf16.msra.mxu0 %v2890
  %2971 = vmatprep.mubr.bf16.mxu0 %v2680
  %2972 = vmatmul.mubr.bf16.gmra.mrb[0].mxu0 %v2679
  %v2973 = vpop.f32.mrb[0].mxu0
  %v2974 = vadd.f32 0.0, %v2973
  %v2975 = vpop.f32.mrb[0].mxu0
  %v2976 = vpop.f32.mrb[0].mxu0
  %v2977 = vpop.f32.mrb[0].mxu0
  %2978 = vdwg.mxu0
  %2979 = vmatprep.subr.bf16.mxu0 0
  %2980 = vmatpush1.bf16.msra.mxu0 %v2891
  %2981 = vmatprep.subr.bf16.mxu0 0
  %2982 = vmatpush1.bf16.msra.mxu0 %v2892
  %2983 = vmatprep.subr.bf16.mxu0 0
  %2984 = vmatpush1.bf16.msra.mxu0 %v2893
  %2985 = vmatprep.subr.bf16.mxu0 0
  %2986 = vmatpush1.bf16.msra.mxu0 %v2894
  %2987 = vmatprep.subr.bf16.mxu0 0
  %2988 = vmatpush1.bf16.msra.mxu0 %v2895
  %2989 = vmatprep.subr.bf16.mxu0 0
  %2990 = vmatpush1.bf16.msra.mxu0 %v2896
  %2991 = vmatprep.subr.bf16.mxu0 0
  %2992 = vmatpush1.bf16.msra.mxu0 %v2897
  %2993 = vmatprep.subr.bf16.mxu0 0
  %2994 = vmatpush1.bf16.msra.mxu0 %v2898
  %2995 = vmatprep.subr.bf16.mxu0 0
  %2996 = vmatpush1.bf16.msra.mxu0 %v2899
  %2997 = vmatprep.subr.bf16.mxu0 0
  %2998 = vmatpush1.bf16.msra.mxu0 %v2900
  %2999 = vmatprep.subr.bf16.mxu0 0
  %3000 = vmatpush1.bf16.msra.mxu0 %v2901
  %3001 = vmatprep.subr.bf16.mxu0 0
  %3002 = vmatpush1.bf16.msra.mxu0 %v2902
  %3003 = vmatprep.subr.bf16.mxu0 0
  %3004 = vmatpush1.bf16.msra.mxu0 %v2903
  %3005 = vmatprep.subr.bf16.mxu0 0
  %3006 = vmatpush1.bf16.msra.mxu0 %v2904
  %3007 = vmatprep.subr.bf16.mxu0 0
  %3008 = vmatpush1.bf16.msra.mxu0 %v2905
  %3009 = vmatprep.subr.bf16.mxu0 0
  %3010 = vmatpush1.bf16.msra.mxu0 %v2906
  %3011 = vmatprep.mubr.bf16.mxu0 %v2682
  %3012 = vmatmul.mubr.bf16.gmra.mrb[0].mxu0 %v2681
  %v3013 = vpop.f32.mrb[0].mxu0
  %v3014 = vadd.f32 %v2974, %v3013
  %v3015 = vpop.f32.mrb[0].mxu0
  %v3016 = vpop.f32.mrb[0].mxu0
  %v3017 = vpop.f32.mrb[0].mxu0
  %3018 = vdwg.mxu0
  %3019 = vst [vmem:[#allocation2 + $0x10] sm:$0xff] 0
  %v3020 = vpack.c.bf16 %v3014, %v3014
  %3021 = vst [vmem:[#allocation2 + $0x8] sm:$0xf] %v3020
  %v3022 = vld [vmem:[#allocation2] sm:$0xff]
  %v3023 = vld [vmem:[#allocation2 + $0x8] sm:$0xff]
  %v3024 = vld [vmem:[%s3] sm:$0xf]
  %v3025 = vld [vmem:[%s3 + $0x4] sm:$0xf]
  %v3028 = vunpack.c.l.b16 %v3024
  %v3029 = vunpack.c.l.b16 %v3025
  %v3030 = vpack.c.b16 %v3029, %v3028
  %3033 = vrot.lane.b32.xlu0 %v3022, 9
  %v3034 = vpop.permute.xlu0 %3033
  %3035 = vrot.lane.b32.xlu0 %v3023, 9
  %v3036 = vpop.permute.xlu0 %3035
  %vm3037 = vcmask 72704
  %v3038 = vsel %vm3037, %v3034, %v3036
  %v3041 = vsel %vm133, %v3030, 0
  %3043 = vmatprep.subr.bf16.mxu0 0
  %3044 = vmatpush1.bf16.msra.mxu0 %v3038
  %3045 = vmatprep.subr.bf16.mxu0 0
  %3046 = vmatpush1.bf16.msra.mxu0 0
  %3047 = vmatprep.subr.bf16.mxu0 0
  %3048 = vmatpush1.bf16.msra.mxu0 0
  %3049 = vmatprep.subr.bf16.mxu0 0
  %3050 = vmatpush1.bf16.msra.mxu0 0
  %3051 = vmatprep.subr.bf16.mxu0 0
  %3052 = vmatpush1.bf16.msra.mxu0 0
  %3053 = vmatprep.subr.bf16.mxu0 0
  %3054 = vmatpush1.bf16.msra.mxu0 0
  %3055 = vmatprep.subr.bf16.mxu0 0
  %3056 = vmatpush1.bf16.msra.mxu0 0
  %3057 = vmatprep.subr.bf16.mxu0 0
  %3058 = vmatpush1.bf16.msra.mxu0 0
  %3059 = vmatprep.subr.bf16.mxu0 0
  %3060 = vmatpush1.bf16.msra.mxu0 0
  %3061 = vmatprep.subr.bf16.mxu0 0
  %3062 = vmatpush1.bf16.msra.mxu0 0
  %3063 = vmatprep.subr.bf16.mxu0 0
  %3064 = vmatpush1.bf16.msra.mxu0 0
  %3065 = vmatprep.subr.bf16.mxu0 0
  %3066 = vmatpush1.bf16.msra.mxu0 0
  %3067 = vmatprep.subr.bf16.mxu0 0
  %3068 = vmatpush1.bf16.msra.mxu0 0
  %3069 = vmatprep.subr.bf16.mxu0 0
  %3070 = vmatpush1.bf16.msra.mxu0 0
  %3071 = vmatprep.subr.bf16.mxu0 0
  %3072 = vmatpush1.bf16.msra.mxu0 0
  %3073 = vmatprep.subr.bf16.mxu0 0
  %3074 = vmatpush1.bf16.msra.mxu0 0
  %3075 = vmatprep.mubr.bf16.mxu0 0
  %3076 = vmatmul.mubr.bf16.gmra.mrb[0].mxu0 %v3041
  %v3077 = vpop.f32.mrb[0].mxu0
  %v3078 = vadd.f32 0.0, %v3077
  %v3079 = vpop.f32.mrb[0].mxu0
  %v3080 = vpop.f32.mrb[0].mxu0
  %v3081 = vadd.f32 0.0, %v3080
  %v3082 = vpop.f32.mrb[0].mxu0
  %3083 = vdwg.mxu0
  %v3084 = vld [vmem:[%s18] sm:$0x1]
  %v3085 = vlaneseq
  %v3086 = vshrl.u32 %v3085, 7
  %v3087 = vsub.s32 0, %v3086
  %v3088 = vrot.slane %v3084, %v3087
  %v3089 = vmul.f32 %v3078, %v3088
  %v3090 = vmul.f32 %v3081, %v3088
  %s3091 = scalar_lea.vmem %s3, 8
  %v3092 = vld [vmem:[%s3091] sm:$0xf]
  %v3093 = vld [vmem:[%s3091 + $0x4] sm:$0xf]
  %v3096 = vunpack.c.l.b16 %v3092
  %v3097 = vunpack.c.l.b16 %v3093
  %v3098 = vpack.c.b16 %v3097, %v3096
  %3099 = vrot.lane.b32.xlu0 %v3022, 8
  %v3100 = vpop.permute.xlu0 %3099
  %3101 = vrot.lane.b32.xlu0 %v3023, 8
  %v3102 = vpop.permute.xlu0 %3101
  %vm3103 = vcmask 64512
  %v3104 = vsel %vm3103, %v3100, %v3102
  %v3107 = vsel %vm133, %v3098, 0
  %3109 = vmatprep.subr.bf16.mxu0 0
  %3110 = vmatpush1.bf16.msra.mxu0 %v3104
  %3111 = vmatprep.subr.bf16.mxu0 0
  %3112 = vmatpush1.bf16.msra.mxu0 0
  %3113 = vmatprep.subr.bf16.mxu0 0
  %3114 = vmatpush1.bf16.msra.mxu0 0
  %3115 = vmatprep.subr.bf16.mxu0 0
  %3116 = vmatpush1.bf16.msra.mxu0 0
  %3117 = vmatprep.subr.bf16.mxu0 0
  %3118 = vmatpush1.bf16.msra.mxu0 0
  %3119 = vmatprep.subr.bf16.mxu0 0
  %3120 = vmatpush1.bf16.msra.mxu0 0
  %3121 = vmatprep.subr.bf16.mxu0 0
  %3122 = vmatpush1.bf16.msra.mxu0 0
  %3123 = vmatprep.subr.bf16.mxu0 0
  %3124 = vmatpush1.bf16.msra.mxu0 0
  %3125 = vmatprep.subr.bf16.mxu0 0
  %3126 = vmatpush1.bf16.msra.mxu0 0
  %3127 = vmatprep.subr.bf16.mxu0 0
  %3128 = vmatpush1.bf16.msra.mxu0 0
  %3129 = vmatprep.subr.bf16.mxu0 0
  %3130 = vmatpush1.bf16.msra.mxu0 0
  %3131 = vmatprep.subr.bf16.mxu0 0
  %3132 = vmatpush1.bf16.msra.mxu0 0
  %3133 = vmatprep.subr.bf16.mxu0 0
  %3134 = vmatpush1.bf16.msra.mxu0 0
  %3135 = vmatprep.subr.bf16.mxu0 0
  %3136 = vmatpush1.bf16.msra.mxu0 0
  %3137 = vmatprep.subr.bf16.mxu0 0
  %3138 = vmatpush1.bf16.msra.mxu0 0
  %3139 = vmatprep.subr.bf16.mxu0 0
  %3140 = vmatpush1.bf16.msra.mxu0 0
  %3141 = vmatprep.mubr.bf16.mxu0 0
  %3142 = vmatmul.mubr.bf16.gmra.mrb[0].mxu0 %v3107
  %v3143 = vpop.f32.mrb[0].mxu0
  %v3144 = vadd.f32 0.0, %v3143
  %v3145 = vpop.f32.mrb[0].mxu0
  %v3146 = vpop.f32.mrb[0].mxu0
  %v3147 = vadd.f32 0.0, %v3146
  %v3148 = vpop.f32.mrb[0].mxu0
  %3149 = vdwg.mxu0
  %v3150 = vld [vmem:[%s18 + $0x1] sm:$0x1]
  %v3151 = vlaneseq
  %v3152 = vshrl.u32 %v3151, 7
  %v3153 = vsub.s32 0, %v3152
  %v3154 = vrot.slane %v3150, %v3153
  %v3155 = vmul.f32 %v3144, %v3154
  %v3156 = vmul.f32 %v3147, %v3154
  %v3157 = vadd.f32 %v3089, %v3155
  %v3158 = vadd.f32 %v3090, %v3156
  %s3159 = scalar_lea.vmem %s3, 16
  %v3160 = vld [vmem:[%s3159] sm:$0xf]
  %v3161 = vld [vmem:[%s3159 + $0x4] sm:$0xf]
  %v3164 = vunpack.c.l.b16 %v3160
  %v3165 = vunpack.c.l.b16 %v3161
  %v3166 = vpack.c.b16 %v3165, %v3164
  %3167 = vrot.lane.b32.xlu0 %v3022, 7
  %v3168 = vpop.permute.xlu0 %3167
  %3169 = vrot.lane.b32.xlu0 %v3023, 7
  %v3170 = vpop.permute.xlu0 %3169
  %vm3171 = vcmask 56320
  %v3172 = vsel %vm3171, %v3168, %v3170
  %v3175 = vsel %vm133, %v3166, 0
  %3177 = vmatprep.subr.bf16.mxu0 0
  %3178 = vmatpush1.bf16.msra.mxu0 %v3172
  %3179 = vmatprep.subr.bf16.mxu0 0
  %3180 = vmatpush1.bf16.msra.mxu0 0
  %3181 = vmatprep.subr.bf16.mxu0 0
  %3182 = vmatpush1.bf16.msra.mxu0 0
  %3183 = vmatprep.subr.bf16.mxu0 0
  %3184 = vmatpush1.bf16.msra.mxu0 0
  %3185 = vmatprep.subr.bf16.mxu0 0
  %3186 = vmatpush1.bf16.msra.mxu0 0
  %3187 = vmatprep.subr.bf16.mxu0 0
  %3188 = vmatpush1.bf16.msra.mxu0 0
  %3189 = vmatprep.subr.bf16.mxu0 0
  %3190 = vmatpush1.bf16.msra.mxu0 0
  %3191 = vmatprep.subr.bf16.mxu0 0
  %3192 = vmatpush1.bf16.msra.mxu0 0
  %3193 = vmatprep.subr.bf16.mxu0 0
  %3194 = vmatpush1.bf16.msra.mxu0 0
  %3195 = vmatprep.subr.bf16.mxu0 0
  %3196 = vmatpush1.bf16.msra.mxu0 0
  %3197 = vmatprep.subr.bf16.mxu0 0
  %3198 = vmatpush1.bf16.msra.mxu0 0
  %3199 = vmatprep.subr.bf16.mxu0 0
  %3200 = vmatpush1.bf16.msra.mxu0 0
  %3201 = vmatprep.subr.bf16.mxu0 0
  %3202 = vmatpush1.bf16.msra.mxu0 0
  %3203 = vmatprep.subr.bf16.mxu0 0
  %3204 = vmatpush1.bf16.msra.mxu0 0
  %3205 = vmatprep.subr.bf16.mxu0 0
  %3206 = vmatpush1.bf16.msra.mxu0 0
  %3207 = vmatprep.subr.bf16.mxu0 0
  %3208 = vmatpush1.bf16.msra.mxu0 0
  %3209 = vmatprep.mubr.bf16.mxu0 0
  %3210 = vmatmul.mubr.bf16.gmra.mrb[0].mxu0 %v3175
  %v3211 = vpop.f32.mrb[0].mxu0
  %v3212 = vadd.f32 0.0, %v3211
  %v3213 = vpop.f32.mrb[0].mxu0
  %v3214 = vpop.f32.mrb[0].mxu0
  %v3215 = vadd.f32 0.0, %v3214
  %v3216 = vpop.f32.mrb[0].mxu0
  %3217 = vdwg.mxu0
  %v3218 = vld [vmem:[%s18 + $0x2] sm:$0x1]
  %v3219 = vlaneseq
  %v3220 = vshrl.u32 %v3219, 7
  %v3221 = vsub.s32 0, %v3220
  %v3222 = vrot.slane %v3218, %v3221
  %v3223 = vmul.f32 %v3212, %v3222
  %v3224 = vmul.f32 %v3215, %v3222
  %v3225 = vadd.f32 %v3157, %v3223
  %v3226 = vadd.f32 %v3158, %v3224
  %s3227 = scalar_lea.vmem %s3, 24
  %v3228 = vld [vmem:[%s3227] sm:$0xf]
  %v3229 = vld [vmem:[%s3227 + $0x4] sm:$0xf]
  %v3232 = vunpack.c.l.b16 %v3228
  %v3233 = vunpack.c.l.b16 %v3229
  %v3234 = vpack.c.b16 %v3233, %v3232
  %3235 = vrot.lane.b32.xlu0 %v3022, 1
  %v3236 = vpop.permute.xlu0 %3235
  %3237 = vrot.lane.b32.xlu0 %v3023, 1
  %v3238 = vpop.permute.xlu0 %3237
  %v3239 = vsel %vm531, %v3236, %v3238
  %v3242 = vsel %vm133, %v3234, 0
  %3244 = vmatprep.subr.bf16.mxu0 0
  %3245 = vmatpush1.bf16.msra.mxu0 %v3239
  %3246 = vmatprep.subr.bf16.mxu0 0
  %3247 = vmatpush1.bf16.msra.mxu0 0
  %3248 = vmatprep.subr.bf16.mxu0 0
  %3249 = vmatpush1.bf16.msra.mxu0 0
  %3250 = vmatprep.subr.bf16.mxu0 0
  %3251 = vmatpush1.bf16.msra.mxu0 0
  %3252 = vmatprep.subr.bf16.mxu0 0
  %3253 = vmatpush1.bf16.msra.mxu0 0
  %3254 = vmatprep.subr.bf16.mxu0 0
  %3255 = vmatpush1.bf16.msra.mxu0 0
  %3256 = vmatprep.subr.bf16.mxu0 0
  %3257 = vmatpush1.bf16.msra.mxu0 0
  %3258 = vmatprep.subr.bf16.mxu0 0
  %3259 = vmatpush1.bf16.msra.mxu0 0
  %3260 = vmatprep.subr.bf16.mxu0 0
  %3261 = vmatpush1.bf16.msra.mxu0 0
  %3262 = vmatprep.subr.bf16.mxu0 0
  %3263 = vmatpush1.bf16.msra.mxu0 0
  %3264 = vmatprep.subr.bf16.mxu0 0
  %3265 = vmatpush1.bf16.msra.mxu0 0
  %3266 = vmatprep.subr.bf16.mxu0 0
  %3267 = vmatpush1.bf16.msra.mxu0 0
  %3268 = vmatprep.subr.bf16.mxu0 0
  %3269 = vmatpush1.bf16.msra.mxu0 0
  %3270 = vmatprep.subr.bf16.mxu0 0
  %3271 = vmatpush1.bf16.msra.mxu0 0
  %3272 = vmatprep.subr.bf16.mxu0 0
  %3273 = vmatpush1.bf16.msra.mxu0 0
  %3274 = vmatprep.subr.bf16.mxu0 0
  %3275 = vmatpush1.bf16.msra.mxu0 0
  %3276 = vmatprep.mubr.bf16.mxu0 0
  %3277 = vmatmul.mubr.bf16.gmra.mrb[0].mxu0 %v3242
  %v3278 = vpop.f32.mrb[0].mxu0
  %v3279 = vadd.f32 0.0, %v3278
  %v3280 = vpop.f32.mrb[0].mxu0
  %v3281 = vpop.f32.mrb[0].mxu0
  %v3282 = vadd.f32 0.0, %v3281
  %v3283 = vpop.f32.mrb[0].mxu0
  %3284 = vdwg.mxu0
  %v3285 = vld [vmem:[%s18 + $0x3] sm:$0x1]
  %v3286 = vlaneseq
  %v3287 = vshrl.u32 %v3286, 7
  %v3288 = vsub.s32 0, %v3287
  %v3289 = vrot.slane %v3285, %v3288
  %v3290 = vmul.f32 %v3279, %v3289
  %v3291 = vmul.f32 %v3282, %v3289
  %v3292 = vadd.f32 %v3225, %v3290
  %v3293 = vadd.f32 %v3226, %v3291
  %s3294 = scalar_lea.vmem %s3, 32
  %v3295 = vld [vmem:[%s3294] sm:$0xf]
  %v3296 = vld [vmem:[%s3294 + $0x4] sm:$0xf]
  %v3299 = vunpack.c.l.b16 %v3295
  %v3300 = vunpack.c.l.b16 %v3296
  %v3301 = vpack.c.b16 %v3300, %v3299
  %v3303 = vsel %vm133, %v3301, 0
  %3305 = vmatprep.subr.bf16.mxu0 0
  %3306 = vmatpush1.bf16.msra.mxu0 %v3023
  %3307 = vmatprep.subr.bf16.mxu0 0
  %3308 = vmatpush1.bf16.msra.mxu0 0
  %3309 = vmatprep.subr.bf16.mxu0 0
  %3310 = vmatpush1.bf16.msra.mxu0 0
  %3311 = vmatprep.subr.bf16.mxu0 0
  %3312 = vmatpush1.bf16.msra.mxu0 0
  %3313 = vmatprep.subr.bf16.mxu0 0
  %3314 = vmatpush1.bf16.msra.mxu0 0
  %3315 = vmatprep.subr.bf16.mxu0 0
  %3316 = vmatpush1.bf16.msra.mxu0 0
  %3317 = vmatprep.subr.bf16.mxu0 0
  %3318 = vmatpush1.bf16.msra.mxu0 0
  %3319 = vmatprep.subr.bf16.mxu0 0
  %3320 = vmatpush1.bf16.msra.mxu0 0
  %3321 = vmatprep.subr.bf16.mxu0 0
  %3322 = vmatpush1.bf16.msra.mxu0 0
  %3323 = vmatprep.subr.bf16.mxu0 0
  %3324 = vmatpush1.bf16.msra.mxu0 0
  %3325 = vmatprep.subr.bf16.mxu0 0
  %3326 = vmatpush1.bf16.msra.mxu0 0
  %3327 = vmatprep.subr.bf16.mxu0 0
  %3328 = vmatpush1.bf16.msra.mxu0 0
  %3329 = vmatprep.subr.bf16.mxu0 0
  %3330 = vmatpush1.bf16.msra.mxu0 0
  %3331 = vmatprep.subr.bf16.mxu0 0
  %3332 = vmatpush1.bf16.msra.mxu0 0
  %3333 = vmatprep.subr.bf16.mxu0 0
  %3334 = vmatpush1.bf16.msra.mxu0 0
  %3335 = vmatprep.subr.bf16.mxu0 0
  %3336 = vmatpush1.bf16.msra.mxu0 0
  %3337 = vmatprep.mubr.bf16.mxu0 0
  %3338 = vmatmul.mubr.bf16.gmra.mrb[0].mxu0 %v3303
  %v3339 = vpop.f32.mrb[0].mxu0
  %v3340 = vadd.f32 0.0, %v3339
  %v3341 = vpop.f32.mrb[0].mxu0
  %v3342 = vpop.f32.mrb[0].mxu0
  %v3343 = vadd.f32 0.0, %v3342
  %v3344 = vpop.f32.mrb[0].mxu0
  %3345 = vdwg.mxu0
  %v3346 = vadd.f32 %v3292, %v3340
  %v3347 = vadd.f32 %v3293, %v3343
  %v3348 = vld [vmem:[#allocation2 + $0x8] sm:$0xff]
  %v3349 = vld [vmem:[#allocation2 + $0x10] sm:$0xff]
  %s3350 = scalar_lea.vmem %s3, 40
  %v3351 = vld [vmem:[%s3350] sm:$0xf]
  %v3352 = vld [vmem:[%s3350 + $0x4] sm:$0xf]
  %v3355 = vunpack.c.l.b16 %v3351
  %v3356 = vunpack.c.l.b16 %v3352
  %v3357 = vpack.c.b16 %v3356, %v3355
  %3360 = vrot.lane.b32.xlu0 %v3348, 127
  %v3361 = vpop.permute.xlu0 %3360
  %3362 = vrot.lane.b32.xlu0 %v3349, 127
  %v3363 = vpop.permute.xlu0 %3362
  %v3364 = vsel %vm769, %v3361, %v3363
  %v3367 = vsel %vm133, %v3357, 0
  %3369 = vmatprep.subr.bf16.mxu0 0
  %3370 = vmatpush1.bf16.msra.mxu0 %v3364
  %3371 = vmatprep.subr.bf16.mxu0 0
  %3372 = vmatpush1.bf16.msra.mxu0 0
  %3373 = vmatprep.subr.bf16.mxu0 0
  %3374 = vmatpush1.bf16.msra.mxu0 0
  %3375 = vmatprep.subr.bf16.mxu0 0
  %3376 = vmatpush1.bf16.msra.mxu0 0
  %3377 = vmatprep.subr.bf16.mxu0 0
  %3378 = vmatpush1.bf16.msra.mxu0 0
  %3379 = vmatprep.subr.bf16.mxu0 0
  %3380 = vmatpush1.bf16.msra.mxu0 0
  %3381 = vmatprep.subr.bf16.mxu0 0
  %3382 = vmatpush1.bf16.msra.mxu0 0
  %3383 = vmatprep.subr.bf16.mxu0 0
  %3384 = vmatpush1.bf16.msra.mxu0 0
  %3385 = vmatprep.subr.bf16.mxu0 0
  %3386 = vmatpush1.bf16.msra.mxu0 0
  %3387 = vmatprep.subr.bf16.mxu0 0
  %3388 = vmatpush1.bf16.msra.mxu0 0
  %3389 = vmatprep.subr.bf16.mxu0 0
  %3390 = vmatpush1.bf16.msra.mxu0 0
  %3391 = vmatprep.subr.bf16.mxu0 0
  %3392 = vmatpush1.bf16.msra.mxu0 0
  %3393 = vmatprep.subr.bf16.mxu0 0
  %3394 = vmatpush1.bf16.msra.mxu0 0
  %3395 = vmatprep.subr.bf16.mxu0 0
  %3396 = vmatpush1.bf16.msra.mxu0 0
  %3397 = vmatprep.subr.bf16.mxu0 0
  %3398 = vmatpush1.bf16.msra.mxu0 0
  %3399 = vmatprep.subr.bf16.mxu0 0
  %3400 = vmatpush1.bf16.msra.mxu0 0
  %3401 = vmatprep.mubr.bf16.mxu0 0
  %3402 = vmatmul.mubr.bf16.gmra.mrb[0].mxu0 %v3367
  %v3403 = vpop.f32.mrb[0].mxu0
  %v3404 = vadd.f32 0.0, %v3403
  %v3405 = vpop.f32.mrb[0].mxu0
  %v3406 = vpop.f32.mrb[0].mxu0
  %v3407 = vadd.f32 0.0, %v3406
  %v3408 = vpop.f32.mrb[0].mxu0
  %3409 = vdwg.mxu0
  %v3410 = vld [vmem:[%s18 + $0x5] sm:$0x1]
  %v3411 = vlaneseq
  %v3412 = vshrl.u32 %v3411, 7
  %v3413 = vsub.s32 0, %v3412
  %v3414 = vrot.slane %v3410, %v3413
  %v3415 = vmul.f32 %v3404, %v3414
  %v3416 = vmul.f32 %v3407, %v3414
  %v3417 = vadd.f32 %v3346, %v3415
  %v3418 = vadd.f32 %v3347, %v3416
  %s3419 = scalar_lea.vmem %s3, 48
  %v3420 = vld [vmem:[%s3419] sm:$0xf]
  %v3421 = vld [vmem:[%s3419 + $0x4] sm:$0xf]
  %v3424 = vunpack.c.l.b16 %v3420
  %v3425 = vunpack.c.l.b16 %v3421
  %v3426 = vpack.c.b16 %v3425, %v3424
  %3427 = vrot.lane.b32.xlu0 %v3348, 121
  %v3428 = vpop.permute.xlu0 %3427
  %3429 = vrot.lane.b32.xlu0 %v3349, 121
  %v3430 = vpop.permute.xlu0 %3429
  %vm3431 = vcmask 990208
  %v3432 = vsel %vm3431, %v3428, %v3430
  %v3435 = vsel %vm133, %v3426, 0
  %3437 = vmatprep.subr.bf16.mxu0 0
  %3438 = vmatpush1.bf16.msra.mxu0 %v3432
  %3439 = vmatprep.subr.bf16.mxu0 0
  %3440 = vmatpush1.bf16.msra.mxu0 0
  %3441 = vmatprep.subr.bf16.mxu0 0
  %3442 = vmatpush1.bf16.msra.mxu0 0
  %3443 = vmatprep.subr.bf16.mxu0 0
  %3444 = vmatpush1.bf16.msra.mxu0 0
  %3445 = vmatprep.subr.bf16.mxu0 0
  %3446 = vmatpush1.bf16.msra.mxu0 0
  %3447 = vmatprep.subr.bf16.mxu0 0
  %3448 = vmatpush1.bf16.msra.mxu0 0
  %3449 = vmatprep.subr.bf16.mxu0 0
  %3450 = vmatpush1.bf16.msra.mxu0 0
  %3451 = vmatprep.subr.bf16.mxu0 0
  %3452 = vmatpush1.bf16.msra.mxu0 0
  %3453 = vmatprep.subr.bf16.mxu0 0
  %3454 = vmatpush1.bf16.msra.mxu0 0
  %3455 = vmatprep.subr.bf16.mxu0 0
  %3456 = vmatpush1.bf16.msra.mxu0 0
  %3457 = vmatprep.subr.bf16.mxu0 0
  %3458 = vmatpush1.bf16.msra.mxu0 0
  %3459 = vmatprep.subr.bf16.mxu0 0
  %3460 = vmatpush1.bf16.msra.mxu0 0
  %3461 = vmatprep.subr.bf16.mxu0 0
  %3462 = vmatpush1.bf16.msra.mxu0 0
  %3463 = vmatprep.subr.bf16.mxu0 0
  %3464 = vmatpush1.bf16.msra.mxu0 0
  %3465 = vmatprep.subr.bf16.mxu0 0
  %3466 = vmatpush1.bf16.msra.mxu0 0
  %3467 = vmatprep.subr.bf16.mxu0 0
  %3468 = vmatpush1.bf16.msra.mxu0 0
  %3469 = vmatprep.mubr.bf16.mxu0 0
  %3470 = vmatmul.mubr.bf16.gmra.mrb[0].mxu0 %v3435
  %v3471 = vpop.f32.mrb[0].mxu0
  %v3472 = vadd.f32 0.0, %v3471
  %v3473 = vpop.f32.mrb[0].mxu0
  %v3474 = vpop.f32.mrb[0].mxu0
  %v3475 = vadd.f32 0.0, %v3474
  %v3476 = vpop.f32.mrb[0].mxu0
  %3477 = vdwg.mxu0
  %v3478 = vld [vmem:[%s18 + $0x6] sm:$0x1]
  %v3479 = vlaneseq
  %v3480 = vshrl.u32 %v3479, 7
  %v3481 = vsub.s32 0, %v3480
  %v3482 = vrot.slane %v3478, %v3481
  %v3483 = vmul.f32 %v3472, %v3482
  %v3484 = vmul.f32 %v3475, %v3482
  %v3485 = vadd.f32 %v3417, %v3483
  %v3486 = vadd.f32 %v3418, %v3484
  %s3487 = scalar_lea.vmem %s3, 56
  %v3488 = vld [vmem:[%s3487] sm:$0xf]
  %v3489 = vld [vmem:[%s3487 + $0x4] sm:$0xf]
  %v3492 = vunpack.c.l.b16 %v3488
  %v3493 = vunpack.c.l.b16 %v3489
  %v3494 = vpack.c.b16 %v3493, %v3492
  %3495 = vrot.lane.b32.xlu0 %v3348, 120
  %v3496 = vpop.permute.xlu0 %3495
  %3497 = vrot.lane.b32.xlu0 %v3349, 120
  %v3498 = vpop.permute.xlu0 %3497
  %vm3499 = vcmask 982016
  %v3500 = vsel %vm3499, %v3496, %v3498
  %v3503 = vsel %vm133, %v3494, 0
  %3505 = vmatprep.subr.bf16.mxu0 0
  %3506 = vmatpush1.bf16.msra.mxu0 %v3500
  %3507 = vmatprep.subr.bf16.mxu0 0
  %3508 = vmatpush1.bf16.msra.mxu0 0
  %3509 = vmatprep.subr.bf16.mxu0 0
  %3510 = vmatpush1.bf16.msra.mxu0 0
  %3511 = vmatprep.subr.bf16.mxu0 0
  %3512 = vmatpush1.bf16.msra.mxu0 0
  %3513 = vmatprep.subr.bf16.mxu0 0
  %3514 = vmatpush1.bf16.msra.mxu0 0
  %3515 = vmatprep.subr.bf16.mxu0 0
  %3516 = vmatpush1.bf16.msra.mxu0 0
  %3517 = vmatprep.subr.bf16.mxu0 0
  %3518 = vmatpush1.bf16.msra.mxu0 0
  %3519 = vmatprep.subr.bf16.mxu0 0
  %3520 = vmatpush1.bf16.msra.mxu0 0
  %3521 = vmatprep.subr.bf16.mxu0 0
  %3522 = vmatpush1.bf16.msra.mxu0 0
  %3523 = vmatprep.subr.bf16.mxu0 0
  %3524 = vmatpush1.bf16.msra.mxu0 0
  %3525 = vmatprep.subr.bf16.mxu0 0
  %3526 = vmatpush1.bf16.msra.mxu0 0
  %3527 = vmatprep.subr.bf16.mxu0 0
  %3528 = vmatpush1.bf16.msra.mxu0 0
  %3529 = vmatprep.subr.bf16.mxu0 0
  %3530 = vmatpush1.bf16.msra.mxu0 0
  %3531 = vmatprep.subr.bf16.mxu0 0
  %3532 = vmatpush1.bf16.msra.mxu0 0
  %3533 = vmatprep.subr.bf16.mxu0 0
  %3534 = vmatpush1.bf16.msra.mxu0 0
  %3535 = vmatprep.subr.bf16.mxu0 0
  %3536 = vmatpush1.bf16.msra.mxu0 0
  %3537 = vmatprep.mubr.bf16.mxu0 0
  %3538 = vmatmul.mubr.bf16.gmra.mrb[0].mxu0 %v3503
  %v3539 = vpop.f32.mrb[0].mxu0
  %v3540 = vadd.f32 0.0, %v3539
  %v3541 = vpop.f32.mrb[0].mxu0
  %v3542 = vpop.f32.mrb[0].mxu0
  %v3543 = vadd.f32 0.0, %v3542
  %v3544 = vpop.f32.mrb[0].mxu0
  %3545 = vdwg.mxu0
  %v3546 = vld [vmem:[%s18 + $0x7] sm:$0x1]
  %v3547 = vlaneseq
  %v3548 = vshrl.u32 %v3547, 7
  %v3549 = vsub.s32 0, %v3548
  %v3550 = vrot.slane %v3546, %v3549
  %v3551 = vmul.f32 %v3540, %v3550
  %v3552 = vmul.f32 %v3543, %v3550
  %v3553 = vadd.f32 %v3485, %v3551
  %v3554 = vadd.f32 %v3486, %v3552
  %s3555 = scalar_lea.vmem %s3, 64
  %v3556 = vld [vmem:[%s3555] sm:$0xf]
  %v3557 = vld [vmem:[%s3555 + $0x4] sm:$0xf]
  %v3560 = vunpack.c.l.b16 %v3556
  %v3561 = vunpack.c.l.b16 %v3557
  %v3562 = vpack.c.b16 %v3561, %v3560
  %3563 = vrot.lane.b32.xlu0 %v3348, 119
  %v3564 = vpop.permute.xlu0 %3563
  %3565 = vrot.lane.b32.xlu0 %v3349, 119
  %v3566 = vpop.permute.xlu0 %3565
  %vm3567 = vcmask 973824
  %v3568 = vsel %vm3567, %v3564, %v3566
  %v3571 = vsel %vm133, %v3562, 0
  %3573 = vmatprep.subr.bf16.mxu0 0
  %3574 = vmatpush1.bf16.msra.mxu0 %v3568
  %3575 = vmatprep.subr.bf16.mxu0 0
  %3576 = vmatpush1.bf16.msra.mxu0 0
  %3577 = vmatprep.subr.bf16.mxu0 0
  %3578 = vmatpush1.bf16.msra.mxu0 0
  %3579 = vmatprep.subr.bf16.mxu0 0
  %3580 = vmatpush1.bf16.msra.mxu0 0
  %3581 = vmatprep.subr.bf16.mxu0 0
  %3582 = vmatpush1.bf16.msra.mxu0 0
  %3583 = vmatprep.subr.bf16.mxu0 0
  %3584 = vmatpush1.bf16.msra.mxu0 0
  %3585 = vmatprep.subr.bf16.mxu0 0
  %3586 = vmatpush1.bf16.msra.mxu0 0
  %3587 = vmatprep.subr.bf16.mxu0 0
  %3588 = vmatpush1.bf16.msra.mxu0 0
  %3589 = vmatprep.subr.bf16.mxu0 0
  %3590 = vmatpush1.bf16.msra.mxu0 0
  %3591 = vmatprep.subr.bf16.mxu0 0
  %3592 = vmatpush1.bf16.msra.mxu0 0
  %3593 = vmatprep.subr.bf16.mxu0 0
  %3594 = vmatpush1.bf16.msra.mxu0 0
  %3595 = vmatprep.subr.bf16.mxu0 0
  %3596 = vmatpush1.bf16.msra.mxu0 0
  %3597 = vmatprep.subr.bf16.mxu0 0
  %3598 = vmatpush1.bf16.msra.mxu0 0
  %3599 = vmatprep.subr.bf16.mxu0 0
  %3600 = vmatpush1.bf16.msra.mxu0 0
  %3601 = vmatprep.subr.bf16.mxu0 0
  %3602 = vmatpush1.bf16.msra.mxu0 0
  %3603 = vmatprep.subr.bf16.mxu0 0
  %3604 = vmatpush1.bf16.msra.mxu0 0
  %3605 = vmatprep.mubr.bf16.mxu0 0
  %3606 = vmatmul.mubr.bf16.gmra.mrb[0].mxu0 %v3571
  %v3607 = vpop.f32.mrb[0].mxu0
  %v3608 = vadd.f32 0.0, %v3607
  %v3609 = vpop.f32.mrb[0].mxu0
  %v3610 = vpop.f32.mrb[0].mxu0
  %v3611 = vadd.f32 0.0, %v3610
  %v3612 = vpop.f32.mrb[0].mxu0
  %3613 = vdwg.mxu0
  %v3614 = vld [vmem:[%s18 + $0x8] sm:$0x1]
  %v3615 = vlaneseq
  %v3616 = vshrl.u32 %v3615, 7
  %v3617 = vsub.s32 0, %v3616
  %v3618 = vrot.slane %v3614, %v3617
  %v3619 = vmul.f32 %v3608, %v3618
  %v3620 = vmul.f32 %v3611, %v3618
  %v3621 = vadd.f32 %v3553, %v3619
  %v3622 = vadd.f32 %v3554, %v3620
  %3623 = vadd.xlane.f32.xlu0 %v3621
  %v3624 = vpop.xlane.xlu0 %3623
  %3625 = vadd.xlane.f32.xlu0 %v3622
  %v3626 = vpop.xlane.xlu0 %3625
  %v3627 = vmul.f32 %v3621, %v3621
  %v3628 = vmul.f32 %v3622, %v3622
  %3629 = vadd.xlane.f32.xlu0 %v3627
  %v3630 = vpop.xlane.xlu0 %3629
  %3631 = vadd.xlane.f32.xlu0 %v3628
  %v3632 = vpop.xlane.xlu0 %3631
  %v3633 = vmul.f32 %v3624, 0.0078125
  %v3634 = vmul.f32 %v3626, 0.0078125
  %v3635 = vmul.f32 %v3630, 0.0078125
  %v3636 = vmul.f32 %v3632, 0.0078125
  %v3637 = vmul.f32 %v3633, %v3633
  %v3638 = vmul.f32 %v3634, %v3634
  %v3639 = vsub.f32 %v3635, %v3637
  %v3640 = vsub.f32 %v3636, %v3638
  %v3641 = vld [vmem:[%s11] sm:$0xff]
  %v3642 = vld [vmem:[%s11 + $0x8] sm:$0xff]
  %v3643 = vadd.f32 %v3639, 1e-05
  %v3644 = vadd.f32 %v3640, 1e-05
  %v3645 = vrsqrt.pop %v3643
  %v3646 = vrsqrt.pop %v3644
  %v3647 = vmul.f32 %v3641, %v3645
  %v3648 = vmul.f32 %v3642, %v3646
  %v3649 = vmul.f32 %v3633, %v3647
  %v3650 = vmul.f32 %v3634, %v3648
  %3653 = vrot.lane.b32.xlu0 %v3649, 1
  %v3654 = vpop.permute.xlu0 %3653
  %3655 = vrot.lane.b32.xlu0 %v3650, 1
  %v3656 = vpop.permute.xlu0 %3655
  %v3659 = vsub.f32 %v3641, %v3654
  %v3660 = vsub.f32 %v3642, %v3656
  %3662 = vset.pattern.permute.xlu0 0
  %3663 = vperm.xlu0 %3662, %v3647
  %v3664 = vpop.permute.xlu0 %3663
  %3667 = vset.pattern.permute.xlu0 0
  %3668 = vperm.xlu0 %3667, %v3648
  %v3669 = vpop.permute.xlu0 %3668
  %v3671 = vmul.f32 %v3621, %v3664
  %v3672 = vmul.f32 %v3622, %v3669
  %3674 = vset.pattern.permute.xlu0 1
  %3675 = vperm.xlu0 %3674, %v3659
  %v3676 = vpop.permute.xlu0 %3675
  %3679 = vset.pattern.permute.xlu0 1
  %3680 = vperm.xlu0 %3679, %v3660
  %v3681 = vpop.permute.xlu0 %3680
  %v3683 = vadd.f32 %v3671, %v3676
  %v3684 = vadd.f32 %v3672, %v3681
  %v3685 = vmax.f32 %v3683, 0.0
  %v3686 = vmax.f32 %v3684, 0.0
  %v3687 = vpack.c.bf16 %v3686, %v3685
  %3688 = vst [vmem:[#allocation2 + $0x8] sm:$0xff] %v3687
  %v3689 = vld [vmem:[#allocation2] sm:$0xff]
  %v3690 = vld [vmem:[#allocation2 + $0x8] sm:$0xff]
  %v3691 = vld [vmem:[%s4] sm:$0xf]
  %v3692 = vld [vmem:[%s4 + $0x4] sm:$0xf]
  %v3695 = vunpack.c.l.b16 %v3691
  %v3696 = vunpack.c.l.b16 %v3692
  %v3697 = vpack.c.b16 %v3696, %v3695
  %3700 = vrot.lane.b32.xlu0 %v3689, 9
  %v3701 = vpop.permute.xlu0 %3700
  %3702 = vrot.lane.b32.xlu0 %v3690, 9
  %v3703 = vpop.permute.xlu0 %3702
  %v3704 = vsel %vm3037, %v3701, %v3703
  %v3707 = vsel %vm133, %v3697, 0
  %3709 = vmatprep.subr.bf16.mxu0 0
  %3710 = vmatpush1.bf16.msra.mxu0 %v3704
  %3711 = vmatprep.subr.bf16.mxu0 0
  %3712 = vmatpush1.bf16.msra.mxu0 0
  %3713 = vmatprep.subr.bf16.mxu0 0
  %3714 = vmatpush1.bf16.msra.mxu0 0
  %3715 = vmatprep.subr.bf16.mxu0 0
  %3716 = vmatpush1.bf16.msra.mxu0 0
  %3717 = vmatprep.subr.bf16.mxu0 0
  %3718 = vmatpush1.bf16.msra.mxu0 0
  %3719 = vmatprep.subr.bf16.mxu0 0
  %3720 = vmatpush1.bf16.msra.mxu0 0
  %3721 = vmatprep.subr.bf16.mxu0 0
  %3722 = vmatpush1.bf16.msra.mxu0 0
  %3723 = vmatprep.subr.bf16.mxu0 0
  %3724 = vmatpush1.bf16.msra.mxu0 0
  %3725 = vmatprep.subr.bf16.mxu0 0
  %3726 = vmatpush1.bf16.msra.mxu0 0
  %3727 = vmatprep.subr.bf16.mxu0 0
  %3728 = vmatpush1.bf16.msra.mxu0 0
  %3729 = vmatprep.subr.bf16.mxu0 0
  %3730 = vmatpush1.bf16.msra.mxu0 0
  %3731 = vmatprep.subr.bf16.mxu0 0
  %3732 = vmatpush1.bf16.msra.mxu0 0
  %3733 = vmatprep.subr.bf16.mxu0 0
  %3734 = vmatpush1.bf16.msra.mxu0 0
  %3735 = vmatprep.subr.bf16.mxu0 0
  %3736 = vmatpush1.bf16.msra.mxu0 0
  %3737 = vmatprep.subr.bf16.mxu0 0
  %3738 = vmatpush1.bf16.msra.mxu0 0
  %3739 = vmatprep.subr.bf16.mxu0 0
  %3740 = vmatpush1.bf16.msra.mxu0 0
  %3741 = vmatprep.mubr.bf16.mxu0 0
  %3742 = vmatmul.mubr.bf16.gmra.mrb[0].mxu0 %v3707
  %v3743 = vpop.f32.mrb[0].mxu0
  %v3744 = vadd.f32 0.0, %v3743
  %v3745 = vpop.f32.mrb[0].mxu0
  %v3746 = vpop.f32.mrb[0].mxu0
  %v3747 = vadd.f32 0.0, %v3746
  %v3748 = vpop.f32.mrb[0].mxu0
  %3749 = vdwg.mxu0
  %v3750 = vld [vmem:[%s18] sm:$0x1]
  %v3751 = vlaneseq
  %v3752 = vshrl.u32 %v3751, 7
  %v3753 = vsub.s32 0, %v3752
  %v3754 = vrot.slane %v3750, %v3753
  %v3755 = vmul.f32 %v3744, %v3754
  %v3756 = vmul.f32 %v3747, %v3754
  %s3757 = scalar_lea.vmem %s4, 8
  %v3758 = vld [vmem:[%s3757] sm:$0xf]
  %v3759 = vld [vmem:[%s3757 + $0x4] sm:$0xf]
  %v3762 = vunpack.c.l.b16 %v3758
  %v3763 = vunpack.c.l.b16 %v3759
  %v3764 = vpack.c.b16 %v3763, %v3762
  %3765 = vrot.lane.b32.xlu0 %v3689, 8
  %v3766 = vpop.permute.xlu0 %3765
  %3767 = vrot.lane.b32.xlu0 %v3690, 8
  %v3768 = vpop.permute.xlu0 %3767
  %v3769 = vsel %vm3103, %v3766, %v3768
  %v3772 = vsel %vm133, %v3764, 0
  %3774 = vmatprep.subr.bf16.mxu0 0
  %3775 = vmatpush1.bf16.msra.mxu0 %v3769
  %3776 = vmatprep.subr.bf16.mxu0 0
  %3777 = vmatpush1.bf16.msra.mxu0 0
  %3778 = vmatprep.subr.bf16.mxu0 0
  %3779 = vmatpush1.bf16.msra.mxu0 0
  %3780 = vmatprep.subr.bf16.mxu0 0
  %3781 = vmatpush1.bf16.msra.mxu0 0
  %3782 = vmatprep.subr.bf16.mxu0 0
  %3783 = vmatpush1.bf16.msra.mxu0 0
  %3784 = vmatprep.subr.bf16.mxu0 0
  %3785 = vmatpush1.bf16.msra.mxu0 0
  %3786 = vmatprep.subr.bf16.mxu0 0
  %3787 = vmatpush1.bf16.msra.mxu0 0
  %3788 = vmatprep.subr.bf16.mxu0 0
  %3789 = vmatpush1.bf16.msra.mxu0 0
  %3790 = vmatprep.subr.bf16.mxu0 0
  %3791 = vmatpush1.bf16.msra.mxu0 0
  %3792 = vmatprep.subr.bf16.mxu0 0
  %3793 = vmatpush1.bf16.msra.mxu0 0
  %3794 = vmatprep.subr.bf16.mxu0 0
  %3795 = vmatpush1.bf16.msra.mxu0 0
  %3796 = vmatprep.subr.bf16.mxu0 0
  %3797 = vmatpush1.bf16.msra.mxu0 0
  %3798 = vmatprep.subr.bf16.mxu0 0
  %3799 = vmatpush1.bf16.msra.mxu0 0
  %3800 = vmatprep.subr.bf16.mxu0 0
  %3801 = vmatpush1.bf16.msra.mxu0 0
  %3802 = vmatprep.subr.bf16.mxu0 0
  %3803 = vmatpush1.bf16.msra.mxu0 0
  %3804 = vmatprep.subr.bf16.mxu0 0
  %3805 = vmatpush1.bf16.msra.mxu0 0
  %3806 = vmatprep.mubr.bf16.mxu0 0
  %3807 = vmatmul.mubr.bf16.gmra.mrb[0].mxu0 %v3772
  %v3808 = vpop.f32.mrb[0].mxu0
  %v3809 = vadd.f32 0.0, %v3808
  %v3810 = vpop.f32.mrb[0].mxu0
  %v3811 = vpop.f32.mrb[0].mxu0
  %v3812 = vadd.f32 0.0, %v3811
  %v3813 = vpop.f32.mrb[0].mxu0
  %3814 = vdwg.mxu0
  %v3815 = vld [vmem:[%s18 + $0x1] sm:$0x1]
  %v3816 = vlaneseq
  %v3817 = vshrl.u32 %v3816, 7
  %v3818 = vsub.s32 0, %v3817
  %v3819 = vrot.slane %v3815, %v3818
  %v3820 = vmul.f32 %v3809, %v3819
  %v3821 = vmul.f32 %v3812, %v3819
  %v3822 = vadd.f32 %v3755, %v3820
  %v3823 = vadd.f32 %v3756, %v3821
  %s3824 = scalar_lea.vmem %s4, 16
  %v3825 = vld [vmem:[%s3824] sm:$0xf]
  %v3826 = vld [vmem:[%s3824 + $0x4] sm:$0xf]
  %v3829 = vunpack.c.l.b16 %v3825
  %v3830 = vunpack.c.l.b16 %v3826
  %v3831 = vpack.c.b16 %v3830, %v3829
  %3832 = vrot.lane.b32.xlu0 %v3689, 7
  %v3833 = vpop.permute.xlu0 %3832
  %3834 = vrot.lane.b32.xlu0 %v3690, 7
  %v3835 = vpop.permute.xlu0 %3834
  %v3836 = vsel %vm3171, %v3833, %v3835
  %v3839 = vsel %vm133, %v3831, 0
  %3841 = vmatprep.subr.bf16.mxu0 0
  %3842 = vmatpush1.bf16.msra.mxu0 %v3836
  %3843 = vmatprep.subr.bf16.mxu0 0
  %3844 = vmatpush1.bf16.msra.mxu0 0
  %3845 = vmatprep.subr.bf16.mxu0 0
  %3846 = vmatpush1.bf16.msra.mxu0 0
  %3847 = vmatprep.subr.bf16.mxu0 0
  %3848 = vmatpush1.bf16.msra.mxu0 0
  %3849 = vmatprep.subr.bf16.mxu0 0
  %3850 = vmatpush1.bf16.msra.mxu0 0
  %3851 = vmatprep.subr.bf16.mxu0 0
  %3852 = vmatpush1.bf16.msra.mxu0 0
  %3853 = vmatprep.subr.bf16.mxu0 0
  %3854 = vmatpush1.bf16.msra.mxu0 0
  %3855 = vmatprep.subr.bf16.mxu0 0
  %3856 = vmatpush1.bf16.msra.mxu0 0
  %3857 = vmatprep.subr.bf16.mxu0 0
  %3858 = vmatpush1.bf16.msra.mxu0 0
  %3859 = vmatprep.subr.bf16.mxu0 0
  %3860 = vmatpush1.bf16.msra.mxu0 0
  %3861 = vmatprep.subr.bf16.mxu0 0
  %3862 = vmatpush1.bf16.msra.mxu0 0
  %3863 = vmatprep.subr.bf16.mxu0 0
  %3864 = vmatpush1.bf16.msra.mxu0 0
  %3865 = vmatprep.subr.bf16.mxu0 0
  %3866 = vmatpush1.bf16.msra.mxu0 0
  %3867 = vmatprep.subr.bf16.mxu0 0
  %3868 = vmatpush1.bf16.msra.mxu0 0
  %3869 = vmatprep.subr.bf16.mxu0 0
  %3870 = vmatpush1.bf16.msra.mxu0 0
  %3871 = vmatprep.subr.bf16.mxu0 0
  %3872 = vmatpush1.bf16.msra.mxu0 0
  %3873 = vmatprep.mubr.bf16.mxu0 0
  %3874 = vmatmul.mubr.bf16.gmra.mrb[0].mxu0 %v3839
  %v3875 = vpop.f32.mrb[0].mxu0
  %v3876 = vadd.f32 0.0, %v3875
  %v3877 = vpop.f32.mrb[0].mxu0
  %v3878 = vpop.f32.mrb[0].mxu0
  %v3879 = vadd.f32 0.0, %v3878
  %v3880 = vpop.f32.mrb[0].mxu0
  %3881 = vdwg.mxu0
  %v3882 = vld [vmem:[%s18 + $0x2] sm:$0x1]
  %v3883 = vlaneseq
  %v3884 = vshrl.u32 %v3883, 7
  %v3885 = vsub.s32 0, %v3884
  %v3886 = vrot.slane %v3882, %v3885
  %v3887 = vmul.f32 %v3876, %v3886
  %v3888 = vmul.f32 %v3879, %v3886
  %v3889 = vadd.f32 %v3822, %v3887
  %v3890 = vadd.f32 %v3823, %v3888
  %s3891 = scalar_lea.vmem %s4, 24
  %v3892 = vld [vmem:[%s3891] sm:$0xf]
  %v3893 = vld [vmem:[%s3891 + $0x4] sm:$0xf]
  %v3896 = vunpack.c.l.b16 %v3892
  %v3897 = vunpack.c.l.b16 %v3893
  %v3898 = vpack.c.b16 %v3897, %v3896
  %3899 = vrot.lane.b32.xlu0 %v3689, 1
  %v3900 = vpop.permute.xlu0 %3899
  %3901 = vrot.lane.b32.xlu0 %v3690, 1
  %v3902 = vpop.permute.xlu0 %3901
  %v3903 = vsel %vm531, %v3900, %v3902
  %v3906 = vsel %vm133, %v3898, 0
  %3908 = vmatprep.subr.bf16.mxu0 0
  %3909 = vmatpush1.bf16.msra.mxu0 %v3903
  %3910 = vmatprep.subr.bf16.mxu0 0
  %3911 = vmatpush1.bf16.msra.mxu0 0
  %3912 = vmatprep.subr.bf16.mxu0 0
  %3913 = vmatpush1.bf16.msra.mxu0 0
  %3914 = vmatprep.subr.bf16.mxu0 0
  %3915 = vmatpush1.bf16.msra.mxu0 0
  %3916 = vmatprep.subr.bf16.mxu0 0
  %3917 = vmatpush1.bf16.msra.mxu0 0
  %3918 = vmatprep.subr.bf16.mxu0 0
  %3919 = vmatpush1.bf16.msra.mxu0 0
  %3920 = vmatprep.subr.bf16.mxu0 0
  %3921 = vmatpush1.bf16.msra.mxu0 0
  %3922 = vmatprep.subr.bf16.mxu0 0
  %3923 = vmatpush1.bf16.msra.mxu0 0
  %3924 = vmatprep.subr.bf16.mxu0 0
  %3925 = vmatpush1.bf16.msra.mxu0 0
  %3926 = vmatprep.subr.bf16.mxu0 0
  %3927 = vmatpush1.bf16.msra.mxu0 0
  %3928 = vmatprep.subr.bf16.mxu0 0
  %3929 = vmatpush1.bf16.msra.mxu0 0
  %3930 = vmatprep.subr.bf16.mxu0 0
  %3931 = vmatpush1.bf16.msra.mxu0 0
  %3932 = vmatprep.subr.bf16.mxu0 0
  %3933 = vmatpush1.bf16.msra.mxu0 0
  %3934 = vmatprep.subr.bf16.mxu0 0
  %3935 = vmatpush1.bf16.msra.mxu0 0
  %3936 = vmatprep.subr.bf16.mxu0 0
  %3937 = vmatpush1.bf16.msra.mxu0 0
  %3938 = vmatprep.subr.bf16.mxu0 0
  %3939 = vmatpush1.bf16.msra.mxu0 0
  %3940 = vmatprep.mubr.bf16.mxu0 0
  %3941 = vmatmul.mubr.bf16.gmra.mrb[0].mxu0 %v3906
  %v3942 = vpop.f32.mrb[0].mxu0
  %v3943 = vadd.f32 0.0, %v3942
  %v3944 = vpop.f32.mrb[0].mxu0
  %v3945 = vpop.f32.mrb[0].mxu0
  %v3946 = vadd.f32 0.0, %v3945
  %v3947 = vpop.f32.mrb[0].mxu0
  %3948 = vdwg.mxu0
  %v3949 = vld [vmem:[%s18 + $0x3] sm:$0x1]
  %v3950 = vlaneseq
  %v3951 = vshrl.u32 %v3950, 7
  %v3952 = vsub.s32 0, %v3951
  %v3953 = vrot.slane %v3949, %v3952
  %v3954 = vmul.f32 %v3943, %v3953
  %v3955 = vmul.f32 %v3946, %v3953
  %v3956 = vadd.f32 %v3889, %v3954
  %v3957 = vadd.f32 %v3890, %v3955
  %s3958 = scalar_lea.vmem %s4, 32
  %v3959 = vld [vmem:[%s3958] sm:$0xf]
  %v3960 = vld [vmem:[%s3958 + $0x4] sm:$0xf]
  %v3963 = vunpack.c.l.b16 %v3959
  %v3964 = vunpack.c.l.b16 %v3960
  %v3965 = vpack.c.b16 %v3964, %v3963
  %v3967 = vsel %vm133, %v3965, 0
  %3969 = vmatprep.subr.bf16.mxu0 0
  %3970 = vmatpush1.bf16.msra.mxu0 %v3690
  %3971 = vmatprep.subr.bf16.mxu0 0
  %3972 = vmatpush1.bf16.msra.mxu0 0
  %3973 = vmatprep.subr.bf16.mxu0 0
  %3974 = vmatpush1.bf16.msra.mxu0 0
  %3975 = vmatprep.subr.bf16.mxu0 0
  %3976 = vmatpush1.bf16.msra.mxu0 0
  %3977 = vmatprep.subr.bf16.mxu0 0
  %3978 = vmatpush1.bf16.msra.mxu0 0
  %3979 = vmatprep.subr.bf16.mxu0 0
  %3980 = vmatpush1.bf16.msra.mxu0 0
  %3981 = vmatprep.subr.bf16.mxu0 0
  %3982 = vmatpush1.bf16.msra.mxu0 0
  %3983 = vmatprep.subr.bf16.mxu0 0
  %3984 = vmatpush1.bf16.msra.mxu0 0
  %3985 = vmatprep.subr.bf16.mxu0 0
  %3986 = vmatpush1.bf16.msra.mxu0 0
  %3987 = vmatprep.subr.bf16.mxu0 0
  %3988 = vmatpush1.bf16.msra.mxu0 0
  %3989 = vmatprep.subr.bf16.mxu0 0
  %3990 = vmatpush1.bf16.msra.mxu0 0
  %3991 = vmatprep.subr.bf16.mxu0 0
  %3992 = vmatpush1.bf16.msra.mxu0 0
  %3993 = vmatprep.subr.bf16.mxu0 0
  %3994 = vmatpush1.bf16.msra.mxu0 0
  %3995 = vmatprep.subr.bf16.mxu0 0
  %3996 = vmatpush1.bf16.msra.mxu0 0
  %3997 = vmatprep.subr.bf16.mxu0 0
  %3998 = vmatpush1.bf16.msra.mxu0 0
  %3999 = vmatprep.subr.bf16.mxu0 0
  %4000 = vmatpush1.bf16.msra.mxu0 0
  %4001 = vmatprep.mubr.bf16.mxu0 0
  %4002 = vmatmul.mubr.bf16.gmra.mrb[0].mxu0 %v3967
  %v4003 = vpop.f32.mrb[0].mxu0
  %v4004 = vadd.f32 0.0, %v4003
  %v4005 = vpop.f32.mrb[0].mxu0
  %v4006 = vpop.f32.mrb[0].mxu0
  %v4007 = vadd.f32 0.0, %v4006
  %v4008 = vpop.f32.mrb[0].mxu0
  %4009 = vdwg.mxu0
  %v4010 = vadd.f32 %v3956, %v4004
  %v4011 = vadd.f32 %v3957, %v4007
  %v4012 = vld [vmem:[#allocation2 + $0x8] sm:$0xff]
  %v4013 = vld [vmem:[#allocation2 + $0x10] sm:$0xff]
  %s4014 = scalar_lea.vmem %s4, 40
  %v4015 = vld [vmem:[%s4014] sm:$0xf]
  %v4016 = vld [vmem:[%s4014 + $0x4] sm:$0xf]
  %v4019 = vunpack.c.l.b16 %v4015
  %v4020 = vunpack.c.l.b16 %v4016
  %v4021 = vpack.c.b16 %v4020, %v4019
  %4024 = vrot.lane.b32.xlu0 %v4012, 127
  %v4025 = vpop.permute.xlu0 %4024
  %4026 = vrot.lane.b32.xlu0 %v4013, 127
  %v4027 = vpop.permute.xlu0 %4026
  %v4028 = vsel %vm769, %v4025, %v4027
  %v4031 = vsel %vm133, %v4021, 0
  %4033 = vmatprep.subr.bf16.mxu0 0
  %4034 = vmatpush1.bf16.msra.mxu0 %v4028
  %4035 = vmatprep.subr.bf16.mxu0 0
  %4036 = vmatpush1.bf16.msra.mxu0 0
  %4037 = vmatprep.subr.bf16.mxu0 0
  %4038 = vmatpush1.bf16.msra.mxu0 0
  %4039 = vmatprep.subr.bf16.mxu0 0
  %4040 = vmatpush1.bf16.msra.mxu0 0
  %4041 = vmatprep.subr.bf16.mxu0 0
  %4042 = vmatpush1.bf16.msra.mxu0 0
  %4043 = vmatprep.subr.bf16.mxu0 0
  %4044 = vmatpush1.bf16.msra.mxu0 0
  %4045 = vmatprep.subr.bf16.mxu0 0
  %4046 = vmatpush1.bf16.msra.mxu0 0
  %4047 = vmatprep.subr.bf16.mxu0 0
  %4048 = vmatpush1.bf16.msra.mxu0 0
  %4049 = vmatprep.subr.bf16.mxu0 0
  %4050 = vmatpush1.bf16.msra.mxu0 0
  %4051 = vmatprep.subr.bf16.mxu0 0
  %4052 = vmatpush1.bf16.msra.mxu0 0
  %4053 = vmatprep.subr.bf16.mxu0 0
  %4054 = vmatpush1.bf16.msra.mxu0 0
  %4055 = vmatprep.subr.bf16.mxu0 0
  %4056 = vmatpush1.bf16.msra.mxu0 0
  %4057 = vmatprep.subr.bf16.mxu0 0
  %4058 = vmatpush1.bf16.msra.mxu0 0
  %4059 = vmatprep.subr.bf16.mxu0 0
  %4060 = vmatpush1.bf16.msra.mxu0 0
  %4061 = vmatprep.subr.bf16.mxu0 0
  %4062 = vmatpush1.bf16.msra.mxu0 0
  %4063 = vmatprep.subr.bf16.mxu0 0
  %4064 = vmatpush1.bf16.msra.mxu0 0
  %4065 = vmatprep.mubr.bf16.mxu0 0
  %4066 = vmatmul.mubr.bf16.gmra.mrb[0].mxu0 %v4031
  %v4067 = vpop.f32.mrb[0].mxu0
  %v4068 = vadd.f32 0.0, %v4067
  %v4069 = vpop.f32.mrb[0].mxu0
  %v4070 = vpop.f32.mrb[0].mxu0
  %v4071 = vadd.f32 0.0, %v4070
  %v4072 = vpop.f32.mrb[0].mxu0
  %4073 = vdwg.mxu0
  %v4074 = vld [vmem:[%s18 + $0x5] sm:$0x1]
  %v4075 = vlaneseq
  %v4076 = vshrl.u32 %v4075, 7
  %v4077 = vsub.s32 0, %v4076
  %v4078 = vrot.slane %v4074, %v4077
  %v4079 = vmul.f32 %v4068, %v4078
  %v4080 = vmul.f32 %v4071, %v4078
  %v4081 = vadd.f32 %v4010, %v4079
  %v4082 = vadd.f32 %v4011, %v4080
  %s4083 = scalar_lea.vmem %s4, 48
  %v4084 = vld [vmem:[%s4083] sm:$0xf]
  %v4085 = vld [vmem:[%s4083 + $0x4] sm:$0xf]
  %v4088 = vunpack.c.l.b16 %v4084
  %v4089 = vunpack.c.l.b16 %v4085
  %v4090 = vpack.c.b16 %v4089, %v4088
  %4091 = vrot.lane.b32.xlu0 %v4012, 121
  %v4092 = vpop.permute.xlu0 %4091
  %4093 = vrot.lane.b32.xlu0 %v4013, 121
  %v4094 = vpop.permute.xlu0 %4093
  %v4095 = vsel %vm3431, %v4092, %v4094
  %v4098 = vsel %vm133, %v4090, 0
  %4100 = vmatprep.subr.bf16.mxu0 0
  %4101 = vmatpush1.bf16.msra.mxu0 %v4095
  %4102 = vmatprep.subr.bf16.mxu0 0
  %4103 = vmatpush1.bf16.msra.mxu0 0
  %4104 = vmatprep.subr.bf16.mxu0 0
  %4105 = vmatpush1.bf16.msra.mxu0 0
  %4106 = vmatprep.subr.bf16.mxu0 0
  %4107 = vmatpush1.bf16.msra.mxu0 0
  %4108 = vmatprep.subr.bf16.mxu0 0
  %4109 = vmatpush1.bf16.msra.mxu0 0
  %4110 = vmatprep.subr.bf16.mxu0 0
  %4111 = vmatpush1.bf16.msra.mxu0 0
  %4112 = vmatprep.subr.bf16.mxu0 0
  %4113 = vmatpush1.bf16.msra.mxu0 0
  %4114 = vmatprep.subr.bf16.mxu0 0
  %4115 = vmatpush1.bf16.msra.mxu0 0
  %4116 = vmatprep.subr.bf16.mxu0 0
  %4117 = vmatpush1.bf16.msra.mxu0 0
  %4118 = vmatprep.subr.bf16.mxu0 0
  %4119 = vmatpush1.bf16.msra.mxu0 0
  %4120 = vmatprep.subr.bf16.mxu0 0
  %4121 = vmatpush1.bf16.msra.mxu0 0
  %4122 = vmatprep.subr.bf16.mxu0 0
  %4123 = vmatpush1.bf16.msra.mxu0 0
  %4124 = vmatprep.subr.bf16.mxu0 0
  %4125 = vmatpush1.bf16.msra.mxu0 0
  %4126 = vmatprep.subr.bf16.mxu0 0
  %4127 = vmatpush1.bf16.msra.mxu0 0
  %4128 = vmatprep.subr.bf16.mxu0 0
  %4129 = vmatpush1.bf16.msra.mxu0 0
  %4130 = vmatprep.subr.bf16.mxu0 0
  %4131 = vmatpush1.bf16.msra.mxu0 0
  %4132 = vmatprep.mubr.bf16.mxu0 0
  %4133 = vmatmul.mubr.bf16.gmra.mrb[0].mxu0 %v4098
  %v4134 = vpop.f32.mrb[0].mxu0
  %v4135 = vadd.f32 0.0, %v4134
  %v4136 = vpop.f32.mrb[0].mxu0
  %v4137 = vpop.f32.mrb[0].mxu0
  %v4138 = vadd.f32 0.0, %v4137
  %v4139 = vpop.f32.mrb[0].mxu0
  %4140 = vdwg.mxu0
  %v4141 = vld [vmem:[%s18 + $0x6] sm:$0x1]
  %v4142 = vlaneseq
  %v4143 = vshrl.u32 %v4142, 7
  %v4144 = vsub.s32 0, %v4143
  %v4145 = vrot.slane %v4141, %v4144
  %v4146 = vmul.f32 %v4135, %v4145
  %v4147 = vmul.f32 %v4138, %v4145
  %v4148 = vadd.f32 %v4081, %v4146
  %v4149 = vadd.f32 %v4082, %v4147
  %s4150 = scalar_lea.vmem %s4, 56
  %v4151 = vld [vmem:[%s4150] sm:$0xf]
  %v4152 = vld [vmem:[%s4150 + $0x4] sm:$0xf]
  %v4155 = vunpack.c.l.b16 %v4151
  %v4156 = vunpack.c.l.b16 %v4152
  %v4157 = vpack.c.b16 %v4156, %v4155
  %4158 = vrot.lane.b32.xlu0 %v4012, 120
  %v4159 = vpop.permute.xlu0 %4158
  %4160 = vrot.lane.b32.xlu0 %v4013, 120
  %v4161 = vpop.permute.xlu0 %4160
  %v4162 = vsel %vm3499, %v4159, %v4161
  %v4165 = vsel %vm133, %v4157, 0
  %4167 = vmatprep.subr.bf16.mxu0 0
  %4168 = vmatpush1.bf16.msra.mxu0 %v4162
  %4169 = vmatprep.subr.bf16.mxu0 0
  %4170 = vmatpush1.bf16.msra.mxu0 0
  %4171 = vmatprep.subr.bf16.mxu0 0
  %4172 = vmatpush1.bf16.msra.mxu0 0
  %4173 = vmatprep.subr.bf16.mxu0 0
  %4174 = vmatpush1.bf16.msra.mxu0 0
  %4175 = vmatprep.subr.bf16.mxu0 0
  %4176 = vmatpush1.bf16.msra.mxu0 0
  %4177 = vmatprep.subr.bf16.mxu0 0
  %4178 = vmatpush1.bf16.msra.mxu0 0
  %4179 = vmatprep.subr.bf16.mxu0 0
  %4180 = vmatpush1.bf16.msra.mxu0 0
  %4181 = vmatprep.subr.bf16.mxu0 0
  %4182 = vmatpush1.bf16.msra.mxu0 0
  %4183 = vmatprep.subr.bf16.mxu0 0
  %4184 = vmatpush1.bf16.msra.mxu0 0
  %4185 = vmatprep.subr.bf16.mxu0 0
  %4186 = vmatpush1.bf16.msra.mxu0 0
  %4187 = vmatprep.subr.bf16.mxu0 0
  %4188 = vmatpush1.bf16.msra.mxu0 0
  %4189 = vmatprep.subr.bf16.mxu0 0
  %4190 = vmatpush1.bf16.msra.mxu0 0
  %4191 = vmatprep.subr.bf16.mxu0 0
  %4192 = vmatpush1.bf16.msra.mxu0 0
  %4193 = vmatprep.subr.bf16.mxu0 0
  %4194 = vmatpush1.bf16.msra.mxu0 0
  %4195 = vmatprep.subr.bf16.mxu0 0
  %4196 = vmatpush1.bf16.msra.mxu0 0
  %4197 = vmatprep.subr.bf16.mxu0 0
  %4198 = vmatpush1.bf16.msra.mxu0 0
  %4199 = vmatprep.mubr.bf16.mxu0 0
  %4200 = vmatmul.mubr.bf16.gmra.mrb[0].mxu0 %v4165
  %v4201 = vpop.f32.mrb[0].mxu0
  %v4202 = vadd.f32 0.0, %v4201
  %v4203 = vpop.f32.mrb[0].mxu0
  %v4204 = vpop.f32.mrb[0].mxu0
  %v4205 = vadd.f32 0.0, %v4204
  %v4206 = vpop.f32.mrb[0].mxu0
  %4207 = vdwg.mxu0
  %v4208 = vld [vmem:[%s18 + $0x7] sm:$0x1]
  %v4209 = vlaneseq
  %v4210 = vshrl.u32 %v4209, 7
  %v4211 = vsub.s32 0, %v4210
  %v4212 = vrot.slane %v4208, %v4211
  %v4213 = vmul.f32 %v4202, %v4212
  %v4214 = vmul.f32 %v4205, %v4212
  %v4215 = vadd.f32 %v4148, %v4213
  %v4216 = vadd.f32 %v4149, %v4214
  %s4217 = scalar_lea.vmem %s4, 64
  %v4218 = vld [vmem:[%s4217] sm:$0xf]
  %v4219 = vld [vmem:[%s4217 + $0x4] sm:$0xf]
  %v4222 = vunpack.c.l.b16 %v4218
  %v4223 = vunpack.c.l.b16 %v4219
  %v4224 = vpack.c.b16 %v4223, %v4222
  %4225 = vrot.lane.b32.xlu0 %v4012, 119
  %v4226 = vpop.permute.xlu0 %4225
  %4227 = vrot.lane.b32.xlu0 %v4013, 119
  %v4228 = vpop.permute.xlu0 %4227
  %v4229 = vsel %vm3567, %v4226, %v4228
  %v4232 = vsel %vm133, %v4224, 0
  %4234 = vmatprep.subr.bf16.mxu0 0
  %4235 = vmatpush1.bf16.msra.mxu0 %v4229
  %4236 = vmatprep.subr.bf16.mxu0 0
  %4237 = vmatpush1.bf16.msra.mxu0 0
  %4238 = vmatprep.subr.bf16.mxu0 0
  %4239 = vmatpush1.bf16.msra.mxu0 0
  %4240 = vmatprep.subr.bf16.mxu0 0
  %4241 = vmatpush1.bf16.msra.mxu0 0
  %4242 = vmatprep.subr.bf16.mxu0 0
  %4243 = vmatpush1.bf16.msra.mxu0 0
  %4244 = vmatprep.subr.bf16.mxu0 0
  %4245 = vmatpush1.bf16.msra.mxu0 0
  %4246 = vmatprep.subr.bf16.mxu0 0
  %4247 = vmatpush1.bf16.msra.mxu0 0
  %4248 = vmatprep.subr.bf16.mxu0 0
  %4249 = vmatpush1.bf16.msra.mxu0 0
  %4250 = vmatprep.subr.bf16.mxu0 0
  %4251 = vmatpush1.bf16.msra.mxu0 0
  %4252 = vmatprep.subr.bf16.mxu0 0
  %4253 = vmatpush1.bf16.msra.mxu0 0
  %4254 = vmatprep.subr.bf16.mxu0 0
  %4255 = vmatpush1.bf16.msra.mxu0 0
  %4256 = vmatprep.subr.bf16.mxu0 0
  %4257 = vmatpush1.bf16.msra.mxu0 0
  %4258 = vmatprep.subr.bf16.mxu0 0
  %4259 = vmatpush1.bf16.msra.mxu0 0
  %4260 = vmatprep.subr.bf16.mxu0 0
  %4261 = vmatpush1.bf16.msra.mxu0 0
  %4262 = vmatprep.subr.bf16.mxu0 0
  %4263 = vmatpush1.bf16.msra.mxu0 0
  %4264 = vmatprep.subr.bf16.mxu0 0
  %4265 = vmatpush1.bf16.msra.mxu0 0
  %4266 = vmatprep.mubr.bf16.mxu0 0
  %4267 = vmatmul.mubr.bf16.gmra.mrb[0].mxu0 %v4232
  %v4268 = vpop.f32.mrb[0].mxu0
  %v4269 = vadd.f32 0.0, %v4268
  %v4270 = vpop.f32.mrb[0].mxu0
  %v4271 = vpop.f32.mrb[0].mxu0
  %v4272 = vadd.f32 0.0, %v4271
  %v4273 = vpop.f32.mrb[0].mxu0
  %4274 = vdwg.mxu0
  %v4275 = vld [vmem:[%s18 + $0x8] sm:$0x1]
  %v4276 = vlaneseq
  %v4277 = vshrl.u32 %v4276, 7
  %v4278 = vsub.s32 0, %v4277
  %v4279 = vrot.slane %v4275, %v4278
  %v4280 = vmul.f32 %v4269, %v4279
  %v4281 = vmul.f32 %v4272, %v4279
  %v4282 = vadd.f32 %v4215, %v4280
  %v4283 = vadd.f32 %v4216, %v4281
  %4284 = vadd.xlane.f32.xlu0 %v4282
  %v4285 = vpop.xlane.xlu0 %4284
  %4286 = vadd.xlane.f32.xlu0 %v4283
  %v4287 = vpop.xlane.xlu0 %4286
  %v4288 = vmul.f32 %v4282, %v4282
  %v4289 = vmul.f32 %v4283, %v4283
  %4290 = vadd.xlane.f32.xlu0 %v4288
  %v4291 = vpop.xlane.xlu0 %4290
  %4292 = vadd.xlane.f32.xlu0 %v4289
  %v4293 = vpop.xlane.xlu0 %4292
  %v4294 = vmul.f32 %v4285, 0.0078125
  %v4295 = vmul.f32 %v4287, 0.0078125
  %v4296 = vmul.f32 %v4291, 0.0078125
  %v4297 = vmul.f32 %v4293, 0.0078125
  %v4298 = vmul.f32 %v4294, %v4294
  %v4299 = vmul.f32 %v4295, %v4295
  %v4300 = vsub.f32 %v4296, %v4298
  %v4301 = vsub.f32 %v4297, %v4299
  %v4302 = vld [vmem:[%s12] sm:$0xff]
  %v4303 = vld [vmem:[%s12 + $0x8] sm:$0xff]
  %v4304 = vadd.f32 %v4300, 1e-05
  %v4305 = vadd.f32 %v4301, 1e-05
  %v4306 = vrsqrt.pop %v4304
  %v4307 = vrsqrt.pop %v4305
  %v4308 = vmul.f32 %v4302, %v4306
  %v4309 = vmul.f32 %v4303, %v4307
  %v4310 = vmul.f32 %v4294, %v4308
  %v4311 = vmul.f32 %v4295, %v4309
  %4314 = vrot.lane.b32.xlu0 %v4310, 1
  %v4315 = vpop.permute.xlu0 %4314
  %4316 = vrot.lane.b32.xlu0 %v4311, 1
  %v4317 = vpop.permute.xlu0 %4316
  %v4320 = vsub.f32 %v4302, %v4315
  %v4321 = vsub.f32 %v4303, %v4317
  %4323 = vset.pattern.permute.xlu0 0
  %4324 = vperm.xlu0 %4323, %v4308
  %v4325 = vpop.permute.xlu0 %4324
  %4328 = vset.pattern.permute.xlu0 0
  %4329 = vperm.xlu0 %4328, %v4309
  %v4330 = vpop.permute.xlu0 %4329
  %v4332 = vmul.f32 %v4282, %v4325
  %v4333 = vmul.f32 %v4283, %v4330
  %4335 = vset.pattern.permute.xlu0 1
  %4336 = vperm.xlu0 %4335, %v4320
  %v4337 = vpop.permute.xlu0 %4336
  %4340 = vset.pattern.permute.xlu0 1
  %4341 = vperm.xlu0 %4340, %v4321
  %v4342 = vpop.permute.xlu0 %4341
  %v4344 = vadd.f32 %v4332, %v4337
  %v4345 = vadd.f32 %v4333, %v4342
  %v4346 = vmax.f32 %v4344, 0.0
  %v4347 = vmax.f32 %v4345, 0.0
  %v4348 = vpack.c.bf16 %v4347, %v4346
  %4349 = vst [vmem:[#allocation2 + $0x8] sm:$0xff] %v4348
  %v4350 = vld [vmem:[#allocation2] sm:$0xff]
  %v4351 = vld [vmem:[#allocation2 + $0x8] sm:$0xff]
  %v4352 = vld [vmem:[%s5] sm:$0xf]
  %v4353 = vld [vmem:[%s5 + $0x4] sm:$0xf]
  %v4356 = vunpack.c.l.b16 %v4352
  %v4357 = vunpack.c.l.b16 %v4353
  %v4358 = vpack.c.b16 %v4357, %v4356
  %4361 = vrot.lane.b32.xlu0 %v4350, 9
  %v4362 = vpop.permute.xlu0 %4361
  %4363 = vrot.lane.b32.xlu0 %v4351, 9
  %v4364 = vpop.permute.xlu0 %4363
  %v4365 = vsel %vm3037, %v4362, %v4364
  %v4368 = vsel %vm133, %v4358, 0
  %4370 = vmatprep.subr.bf16.mxu0 0
  %4371 = vmatpush1.bf16.msra.mxu0 %v4365
  %4372 = vmatprep.subr.bf16.mxu0 0
  %4373 = vmatpush1.bf16.msra.mxu0 0
  %4374 = vmatprep.subr.bf16.mxu0 0
  %4375 = vmatpush1.bf16.msra.mxu0 0
  %4376 = vmatprep.subr.bf16.mxu0 0
  %4377 = vmatpush1.bf16.msra.mxu0 0
  %4378 = vmatprep.subr.bf16.mxu0 0
  %4379 = vmatpush1.bf16.msra.mxu0 0
  %4380 = vmatprep.subr.bf16.mxu0 0
  %4381 = vmatpush1.bf16.msra.mxu0 0
  %4382 = vmatprep.subr.bf16.mxu0 0
  %4383 = vmatpush1.bf16.msra.mxu0 0
  %4384 = vmatprep.subr.bf16.mxu0 0
  %4385 = vmatpush1.bf16.msra.mxu0 0
  %4386 = vmatprep.subr.bf16.mxu0 0
  %4387 = vmatpush1.bf16.msra.mxu0 0
  %4388 = vmatprep.subr.bf16.mxu0 0
  %4389 = vmatpush1.bf16.msra.mxu0 0
  %4390 = vmatprep.subr.bf16.mxu0 0
  %4391 = vmatpush1.bf16.msra.mxu0 0
  %4392 = vmatprep.subr.bf16.mxu0 0
  %4393 = vmatpush1.bf16.msra.mxu0 0
  %4394 = vmatprep.subr.bf16.mxu0 0
  %4395 = vmatpush1.bf16.msra.mxu0 0
  %4396 = vmatprep.subr.bf16.mxu0 0
  %4397 = vmatpush1.bf16.msra.mxu0 0
  %4398 = vmatprep.subr.bf16.mxu0 0
  %4399 = vmatpush1.bf16.msra.mxu0 0
  %4400 = vmatprep.subr.bf16.mxu0 0
  %4401 = vmatpush1.bf16.msra.mxu0 0
  %4402 = vmatprep.mubr.bf16.mxu0 0
  %4403 = vmatmul.mubr.bf16.gmra.mrb[0].mxu0 %v4368
  %v4404 = vpop.f32.mrb[0].mxu0
  %v4405 = vadd.f32 0.0, %v4404
  %v4406 = vpop.f32.mrb[0].mxu0
  %v4407 = vpop.f32.mrb[0].mxu0
  %v4408 = vadd.f32 0.0, %v4407
  %v4409 = vpop.f32.mrb[0].mxu0
  %4410 = vdwg.mxu0
  %v4411 = vld [vmem:[%s18] sm:$0x1]
  %v4412 = vlaneseq
  %v4413 = vshrl.u32 %v4412, 7
  %v4414 = vsub.s32 0, %v4413
  %v4415 = vrot.slane %v4411, %v4414
  %v4416 = vmul.f32 %v4405, %v4415
  %v4417 = vmul.f32 %v4408, %v4415
  %s4418 = scalar_lea.vmem %s5, 8
  %v4419 = vld [vmem:[%s4418] sm:$0xf]
  %v4420 = vld [vmem:[%s4418 + $0x4] sm:$0xf]
  %v4423 = vunpack.c.l.b16 %v4419
  %v4424 = vunpack.c.l.b16 %v4420
  %v4425 = vpack.c.b16 %v4424, %v4423
  %4426 = vrot.lane.b32.xlu0 %v4350, 8
  %v4427 = vpop.permute.xlu0 %4426
  %4428 = vrot.lane.b32.xlu0 %v4351, 8
  %v4429 = vpop.permute.xlu0 %4428
  %v4430 = vsel %vm3103, %v4427, %v4429
  %v4433 = vsel %vm133, %v4425, 0
  %4435 = vmatprep.subr.bf16.mxu0 0
  %4436 = vmatpush1.bf16.msra.mxu0 %v4430
  %4437 = vmatprep.subr.bf16.mxu0 0
  %4438 = vmatpush1.bf16.msra.mxu0 0
  %4439 = vmatprep.subr.bf16.mxu0 0
  %4440 = vmatpush1.bf16.msra.mxu0 0
  %4441 = vmatprep.subr.bf16.mxu0 0
  %4442 = vmatpush1.bf16.msra.mxu0 0
  %4443 = vmatprep.subr.bf16.mxu0 0
  %4444 = vmatpush1.bf16.msra.mxu0 0
  %4445 = vmatprep.subr.bf16.mxu0 0
  %4446 = vmatpush1.bf16.msra.mxu0 0
  %4447 = vmatprep.subr.bf16.mxu0 0
  %4448 = vmatpush1.bf16.msra.mxu0 0
  %4449 = vmatprep.subr.bf16.mxu0 0
  %4450 = vmatpush1.bf16.msra.mxu0 0
  %4451 = vmatprep.subr.bf16.mxu0 0
  %4452 = vmatpush1.bf16.msra.mxu0 0
  %4453 = vmatprep.subr.bf16.mxu0 0
  %4454 = vmatpush1.bf16.msra.mxu0 0
  %4455 = vmatprep.subr.bf16.mxu0 0
  %4456 = vmatpush1.bf16.msra.mxu0 0
  %4457 = vmatprep.subr.bf16.mxu0 0
  %4458 = vmatpush1.bf16.msra.mxu0 0
  %4459 = vmatprep.subr.bf16.mxu0 0
  %4460 = vmatpush1.bf16.msra.mxu0 0
  %4461 = vmatprep.subr.bf16.mxu0 0
  %4462 = vmatpush1.bf16.msra.mxu0 0
  %4463 = vmatprep.subr.bf16.mxu0 0
  %4464 = vmatpush1.bf16.msra.mxu0 0
  %4465 = vmatprep.subr.bf16.mxu0 0
  %4466 = vmatpush1.bf16.msra.mxu0 0
  %4467 = vmatprep.mubr.bf16.mxu0 0
  %4468 = vmatmul.mubr.bf16.gmra.mrb[0].mxu0 %v4433
  %v4469 = vpop.f32.mrb[0].mxu0
  %v4470 = vadd.f32 0.0, %v4469
  %v4471 = vpop.f32.mrb[0].mxu0
  %v4472 = vpop.f32.mrb[0].mxu0
  %v4473 = vadd.f32 0.0, %v4472
  %v4474 = vpop.f32.mrb[0].mxu0
  %4475 = vdwg.mxu0
  %v4476 = vld [vmem:[%s18 + $0x1] sm:$0x1]
  %v4477 = vlaneseq
  %v4478 = vshrl.u32 %v4477, 7
  %v4479 = vsub.s32 0, %v4478
  %v4480 = vrot.slane %v4476, %v4479
  %v4481 = vmul.f32 %v4470, %v4480
  %v4482 = vmul.f32 %v4473, %v4480
  %v4483 = vadd.f32 %v4416, %v4481
  %v4484 = vadd.f32 %v4417, %v4482
  %s4485 = scalar_lea.vmem %s5, 16
  %v4486 = vld [vmem:[%s4485] sm:$0xf]
  %v4487 = vld [vmem:[%s4485 + $0x4] sm:$0xf]
  %v4490 = vunpack.c.l.b16 %v4486
  %v4491 = vunpack.c.l.b16 %v4487
  %v4492 = vpack.c.b16 %v4491, %v4490
  %4493 = vrot.lane.b32.xlu0 %v4350, 7
  %v4494 = vpop.permute.xlu0 %4493
  %4495 = vrot.lane.b32.xlu0 %v4351, 7
  %v4496 = vpop.permute.xlu0 %4495
  %v4497 = vsel %vm3171, %v4494, %v4496
  %v4500 = vsel %vm133, %v4492, 0
  %4502 = vmatprep.subr.bf16.mxu0 0
  %4503 = vmatpush1.bf16.msra.mxu0 %v4497
  %4504 = vmatprep.subr.bf16.mxu0 0
  %4505 = vmatpush1.bf16.msra.mxu0 0
  %4506 = vmatprep.subr.bf16.mxu0 0
  %4507 = vmatpush1.bf16.msra.mxu0 0
  %4508 = vmatprep.subr.bf16.mxu0 0
  %4509 = vmatpush1.bf16.msra.mxu0 0
  %4510 = vmatprep.subr.bf16.mxu0 0
  %4511 = vmatpush1.bf16.msra.mxu0 0
  %4512 = vmatprep.subr.bf16.mxu0 0
  %4513 = vmatpush1.bf16.msra.mxu0 0
  %4514 = vmatprep.subr.bf16.mxu0 0
  %4515 = vmatpush1.bf16.msra.mxu0 0
  %4516 = vmatprep.subr.bf16.mxu0 0
  %4517 = vmatpush1.bf16.msra.mxu0 0
  %4518 = vmatprep.subr.bf16.mxu0 0
  %4519 = vmatpush1.bf16.msra.mxu0 0
  %4520 = vmatprep.subr.bf16.mxu0 0
  %4521 = vmatpush1.bf16.msra.mxu0 0
  %4522 = vmatprep.subr.bf16.mxu0 0
  %4523 = vmatpush1.bf16.msra.mxu0 0
  %4524 = vmatprep.subr.bf16.mxu0 0
  %4525 = vmatpush1.bf16.msra.mxu0 0
  %4526 = vmatprep.subr.bf16.mxu0 0
  %4527 = vmatpush1.bf16.msra.mxu0 0
  %4528 = vmatprep.subr.bf16.mxu0 0
  %4529 = vmatpush1.bf16.msra.mxu0 0
  %4530 = vmatprep.subr.bf16.mxu0 0
  %4531 = vmatpush1.bf16.msra.mxu0 0
  %4532 = vmatprep.subr.bf16.mxu0 0
  %4533 = vmatpush1.bf16.msra.mxu0 0
  %4534 = vmatprep.mubr.bf16.mxu0 0
  %4535 = vmatmul.mubr.bf16.gmra.mrb[0].mxu0 %v4500
  %v4536 = vpop.f32.mrb[0].mxu0
  %v4537 = vadd.f32 0.0, %v4536
  %v4538 = vpop.f32.mrb[0].mxu0
  %v4539 = vpop.f32.mrb[0].mxu0
  %v4540 = vadd.f32 0.0, %v4539
  %v4541 = vpop.f32.mrb[0].mxu0
  %4542 = vdwg.mxu0
  %v4543 = vld [vmem:[%s18 + $0x2] sm:$0x1]
  %v4544 = vlaneseq
  %v4545 = vshrl.u32 %v4544, 7
  %v4546 = vsub.s32 0, %v4545
  %v4547 = vrot.slane %v4543, %v4546
  %v4548 = vmul.f32 %v4537, %v4547
  %v4549 = vmul.f32 %v4540, %v4547
  %v4550 = vadd.f32 %v4483, %v4548
  %v4551 = vadd.f32 %v4484, %v4549
  %s4552 = scalar_lea.vmem %s5, 24
  %v4553 = vld [vmem:[%s4552] sm:$0xf]
  %v4554 = vld [vmem:[%s4552 + $0x4] sm:$0xf]
  %v4557 = vunpack.c.l.b16 %v4553
  %v4558 = vunpack.c.l.b16 %v4554
  %v4559 = vpack.c.b16 %v4558, %v4557
  %4560 = vrot.lane.b32.xlu0 %v4350, 1
  %v4561 = vpop.permute.xlu0 %4560
  %4562 = vrot.lane.b32.xlu0 %v4351, 1
  %v4563 = vpop.permute.xlu0 %4562
  %v4564 = vsel %vm531, %v4561, %v4563
  %v4567 = vsel %vm133, %v4559, 0
  %4569 = vmatprep.subr.bf16.mxu0 0
  %4570 = vmatpush1.bf16.msra.mxu0 %v4564
  %4571 = vmatprep.subr.bf16.mxu0 0
  %4572 = vmatpush1.bf16.msra.mxu0 0
  %4573 = vmatprep.subr.bf16.mxu0 0
  %4574 = vmatpush1.bf16.msra.mxu0 0
  %4575 = vmatprep.subr.bf16.mxu0 0
  %4576 = vmatpush1.bf16.msra.mxu0 0
  %4577 = vmatprep.subr.bf16.mxu0 0
  %4578 = vmatpush1.bf16.msra.mxu0 0
  %4579 = vmatprep.subr.bf16.mxu0 0
  %4580 = vmatpush1.bf16.msra.mxu0 0
  %4581 = vmatprep.subr.bf16.mxu0 0
  %4582 = vmatpush1.bf16.msra.mxu0 0
  %4583 = vmatprep.subr.bf16.mxu0 0
  %4584 = vmatpush1.bf16.msra.mxu0 0
  %4585 = vmatprep.subr.bf16.mxu0 0
  %4586 = vmatpush1.bf16.msra.mxu0 0
  %4587 = vmatprep.subr.bf16.mxu0 0
  %4588 = vmatpush1.bf16.msra.mxu0 0
  %4589 = vmatprep.subr.bf16.mxu0 0
  %4590 = vmatpush1.bf16.msra.mxu0 0
  %4591 = vmatprep.subr.bf16.mxu0 0
  %4592 = vmatpush1.bf16.msra.mxu0 0
  %4593 = vmatprep.subr.bf16.mxu0 0
  %4594 = vmatpush1.bf16.msra.mxu0 0
  %4595 = vmatprep.subr.bf16.mxu0 0
  %4596 = vmatpush1.bf16.msra.mxu0 0
  %4597 = vmatprep.subr.bf16.mxu0 0
  %4598 = vmatpush1.bf16.msra.mxu0 0
  %4599 = vmatprep.subr.bf16.mxu0 0
  %4600 = vmatpush1.bf16.msra.mxu0 0
  %4601 = vmatprep.mubr.bf16.mxu0 0
  %4602 = vmatmul.mubr.bf16.gmra.mrb[0].mxu0 %v4567
  %v4603 = vpop.f32.mrb[0].mxu0
  %v4604 = vadd.f32 0.0, %v4603
  %v4605 = vpop.f32.mrb[0].mxu0
  %v4606 = vpop.f32.mrb[0].mxu0
  %v4607 = vadd.f32 0.0, %v4606
  %v4608 = vpop.f32.mrb[0].mxu0
  %4609 = vdwg.mxu0
  %v4610 = vld [vmem:[%s18 + $0x3] sm:$0x1]
  %v4611 = vlaneseq
  %v4612 = vshrl.u32 %v4611, 7
  %v4613 = vsub.s32 0, %v4612
  %v4614 = vrot.slane %v4610, %v4613
  %v4615 = vmul.f32 %v4604, %v4614
  %v4616 = vmul.f32 %v4607, %v4614
  %v4617 = vadd.f32 %v4550, %v4615
  %v4618 = vadd.f32 %v4551, %v4616
  %s4619 = scalar_lea.vmem %s5, 32
  %v4620 = vld [vmem:[%s4619] sm:$0xf]
  %v4621 = vld [vmem:[%s4619 + $0x4] sm:$0xf]
  %v4624 = vunpack.c.l.b16 %v4620
  %v4625 = vunpack.c.l.b16 %v4621
  %v4626 = vpack.c.b16 %v4625, %v4624
  %v4628 = vsel %vm133, %v4626, 0
  %4630 = vmatprep.subr.bf16.mxu0 0
  %4631 = vmatpush1.bf16.msra.mxu0 %v4351
  %4632 = vmatprep.subr.bf16.mxu0 0
  %4633 = vmatpush1.bf16.msra.mxu0 0
  %4634 = vmatprep.subr.bf16.mxu0 0
  %4635 = vmatpush1.bf16.msra.mxu0 0
  %4636 = vmatprep.subr.bf16.mxu0 0
  %4637 = vmatpush1.bf16.msra.mxu0 0
  %4638 = vmatprep.subr.bf16.mxu0 0
  %4639 = vmatpush1.bf16.msra.mxu0 0
  %4640 = vmatprep.subr.bf16.mxu0 0
  %4641 = vmatpush1.bf16.msra.mxu0 0
  %4642 = vmatprep.subr.bf16.mxu0 0
  %4643 = vmatpush1.bf16.msra.mxu0 0
  %4644 = vmatprep.subr.bf16.mxu0 0
  %4645 = vmatpush1.bf16.msra.mxu0 0
  %4646 = vmatprep.subr.bf16.mxu0 0
  %4647 = vmatpush1.bf16.msra.mxu0 0
  %4648 = vmatprep.subr.bf16.mxu0 0
  %4649 = vmatpush1.bf16.msra.mxu0 0
  %4650 = vmatprep.subr.bf16.mxu0 0
  %4651 = vmatpush1.bf16.msra.mxu0 0
  %4652 = vmatprep.subr.bf16.mxu0 0
  %4653 = vmatpush1.bf16.msra.mxu0 0
  %4654 = vmatprep.subr.bf16.mxu0 0
  %4655 = vmatpush1.bf16.msra.mxu0 0
  %4656 = vmatprep.subr.bf16.mxu0 0
  %4657 = vmatpush1.bf16.msra.mxu0 0
  %4658 = vmatprep.subr.bf16.mxu0 0
  %4659 = vmatpush1.bf16.msra.mxu0 0
  %4660 = vmatprep.subr.bf16.mxu0 0
  %4661 = vmatpush1.bf16.msra.mxu0 0
  %4662 = vmatprep.mubr.bf16.mxu0 0
  %4663 = vmatmul.mubr.bf16.gmra.mrb[0].mxu0 %v4628
  %v4664 = vpop.f32.mrb[0].mxu0
  %v4665 = vadd.f32 0.0, %v4664
  %v4666 = vpop.f32.mrb[0].mxu0
  %v4667 = vpop.f32.mrb[0].mxu0
  %v4668 = vadd.f32 0.0, %v4667
  %v4669 = vpop.f32.mrb[0].mxu0
  %4670 = vdwg.mxu0
  %v4671 = vadd.f32 %v4617, %v4665
  %v4672 = vadd.f32 %v4618, %v4668
  %v4673 = vld [vmem:[#allocation2 + $0x8] sm:$0xff]
  %v4674 = vld [vmem:[#allocation2 + $0x10] sm:$0xff]
  %s4675 = scalar_lea.vmem %s5, 40
  %v4676 = vld [vmem:[%s4675] sm:$0xf]
  %v4677 = vld [vmem:[%s4675 + $0x4] sm:$0xf]
  %v4680 = vunpack.c.l.b16 %v4676
  %v4681 = vunpack.c.l.b16 %v4677
  %v4682 = vpack.c.b16 %v4681, %v4680
  %4685 = vrot.lane.b32.xlu0 %v4673, 127
  %v4686 = vpop.permute.xlu0 %4685
  %4687 = vrot.lane.b32.xlu0 %v4674, 127
  %v4688 = vpop.permute.xlu0 %4687
  %v4689 = vsel %vm769, %v4686, %v4688
  %v4692 = vsel %vm133, %v4682, 0
  %4694 = vmatprep.subr.bf16.mxu0 0
  %4695 = vmatpush1.bf16.msra.mxu0 %v4689
  %4696 = vmatprep.subr.bf16.mxu0 0
  %4697 = vmatpush1.bf16.msra.mxu0 0
  %4698 = vmatprep.subr.bf16.mxu0 0
  %4699 = vmatpush1.bf16.msra.mxu0 0
  %4700 = vmatprep.subr.bf16.mxu0 0
  %4701 = vmatpush1.bf16.msra.mxu0 0
  %4702 = vmatprep.subr.bf16.mxu0 0
  %4703 = vmatpush1.bf16.msra.mxu0 0
  %4704 = vmatprep.subr.bf16.mxu0 0
  %4705 = vmatpush1.bf16.msra.mxu0 0
  %4706 = vmatprep.subr.bf16.mxu0 0
  %4707 = vmatpush1.bf16.msra.mxu0 0
  %4708 = vmatprep.subr.bf16.mxu0 0
  %4709 = vmatpush1.bf16.msra.mxu0 0
  %4710 = vmatprep.subr.bf16.mxu0 0
  %4711 = vmatpush1.bf16.msra.mxu0 0
  %4712 = vmatprep.subr.bf16.mxu0 0
  %4713 = vmatpush1.bf16.msra.mxu0 0
  %4714 = vmatprep.subr.bf16.mxu0 0
  %4715 = vmatpush1.bf16.msra.mxu0 0
  %4716 = vmatprep.subr.bf16.mxu0 0
  %4717 = vmatpush1.bf16.msra.mxu0 0
  %4718 = vmatprep.subr.bf16.mxu0 0
  %4719 = vmatpush1.bf16.msra.mxu0 0
  %4720 = vmatprep.subr.bf16.mxu0 0
  %4721 = vmatpush1.bf16.msra.mxu0 0
  %4722 = vmatprep.subr.bf16.mxu0 0
  %4723 = vmatpush1.bf16.msra.mxu0 0
  %4724 = vmatprep.subr.bf16.mxu0 0
  %4725 = vmatpush1.bf16.msra.mxu0 0
  %4726 = vmatprep.mubr.bf16.mxu0 0
  %4727 = vmatmul.mubr.bf16.gmra.mrb[0].mxu0 %v4692
  %v4728 = vpop.f32.mrb[0].mxu0
  %v4729 = vadd.f32 0.0, %v4728
  %v4730 = vpop.f32.mrb[0].mxu0
  %v4731 = vpop.f32.mrb[0].mxu0
  %v4732 = vadd.f32 0.0, %v4731
  %v4733 = vpop.f32.mrb[0].mxu0
  %4734 = vdwg.mxu0
  %v4735 = vld [vmem:[%s18 + $0x5] sm:$0x1]
  %v4736 = vlaneseq
  %v4737 = vshrl.u32 %v4736, 7
  %v4738 = vsub.s32 0, %v4737
  %v4739 = vrot.slane %v4735, %v4738
  %v4740 = vmul.f32 %v4729, %v4739
  %v4741 = vmul.f32 %v4732, %v4739
  %v4742 = vadd.f32 %v4671, %v4740
  %v4743 = vadd.f32 %v4672, %v4741
  %s4744 = scalar_lea.vmem %s5, 48
  %v4745 = vld [vmem:[%s4744] sm:$0xf]
  %v4746 = vld [vmem:[%s4744 + $0x4] sm:$0xf]
  %v4749 = vunpack.c.l.b16 %v4745
  %v4750 = vunpack.c.l.b16 %v4746
  %v4751 = vpack.c.b16 %v4750, %v4749
  %4752 = vrot.lane.b32.xlu0 %v4673, 121
  %v4753 = vpop.permute.xlu0 %4752
  %4754 = vrot.lane.b32.xlu0 %v4674, 121
  %v4755 = vpop.permute.xlu0 %4754
  %v4756 = vsel %vm3431, %v4753, %v4755
  %v4759 = vsel %vm133, %v4751, 0
  %4761 = vmatprep.subr.bf16.mxu0 0
  %4762 = vmatpush1.bf16.msra.mxu0 %v4756
  %4763 = vmatprep.subr.bf16.mxu0 0
  %4764 = vmatpush1.bf16.msra.mxu0 0
  %4765 = vmatprep.subr.bf16.mxu0 0
  %4766 = vmatpush1.bf16.msra.mxu0 0
  %4767 = vmatprep.subr.bf16.mxu0 0
  %4768 = vmatpush1.bf16.msra.mxu0 0
  %4769 = vmatprep.subr.bf16.mxu0 0
  %4770 = vmatpush1.bf16.msra.mxu0 0
  %4771 = vmatprep.subr.bf16.mxu0 0
  %4772 = vmatpush1.bf16.msra.mxu0 0
  %4773 = vmatprep.subr.bf16.mxu0 0
  %4774 = vmatpush1.bf16.msra.mxu0 0
  %4775 = vmatprep.subr.bf16.mxu0 0
  %4776 = vmatpush1.bf16.msra.mxu0 0
  %4777 = vmatprep.subr.bf16.mxu0 0
  %4778 = vmatpush1.bf16.msra.mxu0 0
  %4779 = vmatprep.subr.bf16.mxu0 0
  %4780 = vmatpush1.bf16.msra.mxu0 0
  %4781 = vmatprep.subr.bf16.mxu0 0
  %4782 = vmatpush1.bf16.msra.mxu0 0
  %4783 = vmatprep.subr.bf16.mxu0 0
  %4784 = vmatpush1.bf16.msra.mxu0 0
  %4785 = vmatprep.subr.bf16.mxu0 0
  %4786 = vmatpush1.bf16.msra.mxu0 0
  %4787 = vmatprep.subr.bf16.mxu0 0
  %4788 = vmatpush1.bf16.msra.mxu0 0
  %4789 = vmatprep.subr.bf16.mxu0 0
  %4790 = vmatpush1.bf16.msra.mxu0 0
  %4791 = vmatprep.subr.bf16.mxu0 0
  %4792 = vmatpush1.bf16.msra.mxu0 0
  %4793 = vmatprep.mubr.bf16.mxu0 0
  %4794 = vmatmul.mubr.bf16.gmra.mrb[0].mxu0 %v4759
  %v4795 = vpop.f32.mrb[0].mxu0
  %v4796 = vadd.f32 0.0, %v4795
  %v4797 = vpop.f32.mrb[0].mxu0
  %v4798 = vpop.f32.mrb[0].mxu0
  %v4799 = vadd.f32 0.0, %v4798
  %v4800 = vpop.f32.mrb[0].mxu0
  %4801 = vdwg.mxu0
  %v4802 = vld [vmem:[%s18 + $0x6] sm:$0x1]
  %v4803 = vlaneseq
  %v4804 = vshrl.u32 %v4803, 7
  %v4805 = vsub.s32 0, %v4804
  %v4806 = vrot.slane %v4802, %v4805
  %v4807 = vmul.f32 %v4796, %v4806
  %v4808 = vmul.f32 %v4799, %v4806
  %v4809 = vadd.f32 %v4742, %v4807
  %v4810 = vadd.f32 %v4743, %v4808
  %s4811 = scalar_lea.vmem %s5, 56
  %v4812 = vld [vmem:[%s4811] sm:$0xf]
  %v4813 = vld [vmem:[%s4811 + $0x4] sm:$0xf]
  %v4816 = vunpack.c.l.b16 %v4812
  %v4817 = vunpack.c.l.b16 %v4813
  %v4818 = vpack.c.b16 %v4817, %v4816
  %4819 = vrot.lane.b32.xlu0 %v4673, 120
  %v4820 = vpop.permute.xlu0 %4819
  %4821 = vrot.lane.b32.xlu0 %v4674, 120
  %v4822 = vpop.permute.xlu0 %4821
  %v4823 = vsel %vm3499, %v4820, %v4822
  %v4826 = vsel %vm133, %v4818, 0
  %4828 = vmatprep.subr.bf16.mxu0 0
  %4829 = vmatpush1.bf16.msra.mxu0 %v4823
  %4830 = vmatprep.subr.bf16.mxu0 0
  %4831 = vmatpush1.bf16.msra.mxu0 0
  %4832 = vmatprep.subr.bf16.mxu0 0
  %4833 = vmatpush1.bf16.msra.mxu0 0
  %4834 = vmatprep.subr.bf16.mxu0 0
  %4835 = vmatpush1.bf16.msra.mxu0 0
  %4836 = vmatprep.subr.bf16.mxu0 0
  %4837 = vmatpush1.bf16.msra.mxu0 0
  %4838 = vmatprep.subr.bf16.mxu0 0
  %4839 = vmatpush1.bf16.msra.mxu0 0
  %4840 = vmatprep.subr.bf16.mxu0 0
  %4841 = vmatpush1.bf16.msra.mxu0 0
  %4842 = vmatprep.subr.bf16.mxu0 0
  %4843 = vmatpush1.bf16.msra.mxu0 0
  %4844 = vmatprep.subr.bf16.mxu0 0
  %4845 = vmatpush1.bf16.msra.mxu0 0
  %4846 = vmatprep.subr.bf16.mxu0 0
  %4847 = vmatpush1.bf16.msra.mxu0 0
  %4848 = vmatprep.subr.bf16.mxu0 0
  %4849 = vmatpush1.bf16.msra.mxu0 0
  %4850 = vmatprep.subr.bf16.mxu0 0
  %4851 = vmatpush1.bf16.msra.mxu0 0
  %4852 = vmatprep.subr.bf16.mxu0 0
  %4853 = vmatpush1.bf16.msra.mxu0 0
  %4854 = vmatprep.subr.bf16.mxu0 0
  %4855 = vmatpush1.bf16.msra.mxu0 0
  %4856 = vmatprep.subr.bf16.mxu0 0
  %4857 = vmatpush1.bf16.msra.mxu0 0
  %4858 = vmatprep.subr.bf16.mxu0 0
  %4859 = vmatpush1.bf16.msra.mxu0 0
  %4860 = vmatprep.mubr.bf16.mxu0 0
  %4861 = vmatmul.mubr.bf16.gmra.mrb[0].mxu0 %v4826
  %v4862 = vpop.f32.mrb[0].mxu0
  %v4863 = vadd.f32 0.0, %v4862
  %v4864 = vpop.f32.mrb[0].mxu0
  %v4865 = vpop.f32.mrb[0].mxu0
  %v4866 = vadd.f32 0.0, %v4865
  %v4867 = vpop.f32.mrb[0].mxu0
  %4868 = vdwg.mxu0
  %v4869 = vld [vmem:[%s18 + $0x7] sm:$0x1]
  %v4870 = vlaneseq
  %v4871 = vshrl.u32 %v4870, 7
  %v4872 = vsub.s32 0, %v4871
  %v4873 = vrot.slane %v4869, %v4872
  %v4874 = vmul.f32 %v4863, %v4873
  %v4875 = vmul.f32 %v4866, %v4873
  %v4876 = vadd.f32 %v4809, %v4874
  %v4877 = vadd.f32 %v4810, %v4875
  %s4878 = scalar_lea.vmem %s5, 64
  %v4879 = vld [vmem:[%s4878] sm:$0xf]
  %v4880 = vld [vmem:[%s4878 + $0x4] sm:$0xf]
  %v4883 = vunpack.c.l.b16 %v4879
  %v4884 = vunpack.c.l.b16 %v4880
  %v4885 = vpack.c.b16 %v4884, %v4883
  %4886 = vrot.lane.b32.xlu0 %v4673, 119
  %v4887 = vpop.permute.xlu0 %4886
  %4888 = vrot.lane.b32.xlu0 %v4674, 119
  %v4889 = vpop.permute.xlu0 %4888
  %v4890 = vsel %vm3567, %v4887, %v4889
  %v4893 = vsel %vm133, %v4885, 0
  %4895 = vmatprep.subr.bf16.mxu0 0
  %4896 = vmatpush1.bf16.msra.mxu0 %v4890
  %4897 = vmatprep.subr.bf16.mxu0 0
  %4898 = vmatpush1.bf16.msra.mxu0 0
  %4899 = vmatprep.subr.bf16.mxu0 0
  %4900 = vmatpush1.bf16.msra.mxu0 0
  %4901 = vmatprep.subr.bf16.mxu0 0
  %4902 = vmatpush1.bf16.msra.mxu0 0
  %4903 = vmatprep.subr.bf16.mxu0 0
  %4904 = vmatpush1.bf16.msra.mxu0 0
  %4905 = vmatprep.subr.bf16.mxu0 0
  %4906 = vmatpush1.bf16.msra.mxu0 0
  %4907 = vmatprep.subr.bf16.mxu0 0
  %4908 = vmatpush1.bf16.msra.mxu0 0
  %4909 = vmatprep.subr.bf16.mxu0 0
  %4910 = vmatpush1.bf16.msra.mxu0 0
  %4911 = vmatprep.subr.bf16.mxu0 0
  %4912 = vmatpush1.bf16.msra.mxu0 0
  %4913 = vmatprep.subr.bf16.mxu0 0
  %4914 = vmatpush1.bf16.msra.mxu0 0
  %4915 = vmatprep.subr.bf16.mxu0 0
  %4916 = vmatpush1.bf16.msra.mxu0 0
  %4917 = vmatprep.subr.bf16.mxu0 0
  %4918 = vmatpush1.bf16.msra.mxu0 0
  %4919 = vmatprep.subr.bf16.mxu0 0
  %4920 = vmatpush1.bf16.msra.mxu0 0
  %4921 = vmatprep.subr.bf16.mxu0 0
  %4922 = vmatpush1.bf16.msra.mxu0 0
  %4923 = vmatprep.subr.bf16.mxu0 0
  %4924 = vmatpush1.bf16.msra.mxu0 0
  %4925 = vmatprep.subr.bf16.mxu0 0
  %4926 = vmatpush1.bf16.msra.mxu0 0
  %4927 = vmatprep.mubr.bf16.mxu0 0
  %4928 = vmatmul.mubr.bf16.gmra.mrb[0].mxu0 %v4893
  %v4929 = vpop.f32.mrb[0].mxu0
  %v4930 = vadd.f32 0.0, %v4929
  %v4931 = vpop.f32.mrb[0].mxu0
  %v4932 = vpop.f32.mrb[0].mxu0
  %v4933 = vadd.f32 0.0, %v4932
  %v4934 = vpop.f32.mrb[0].mxu0
  %4935 = vdwg.mxu0
  %v4936 = vld [vmem:[%s18 + $0x8] sm:$0x1]
  %v4937 = vlaneseq
  %v4938 = vshrl.u32 %v4937, 7
  %v4939 = vsub.s32 0, %v4938
  %v4940 = vrot.slane %v4936, %v4939
  %v4941 = vmul.f32 %v4930, %v4940
  %v4942 = vmul.f32 %v4933, %v4940
  %v4943 = vadd.f32 %v4876, %v4941
  %v4944 = vadd.f32 %v4877, %v4942
  %4945 = vadd.xlane.f32.xlu0 %v4943
  %v4946 = vpop.xlane.xlu0 %4945
  %4947 = vadd.xlane.f32.xlu0 %v4944
  %v4948 = vpop.xlane.xlu0 %4947
  %v4949 = vmul.f32 %v4943, %v4943
  %v4950 = vmul.f32 %v4944, %v4944
  %4951 = vadd.xlane.f32.xlu0 %v4949
  %v4952 = vpop.xlane.xlu0 %4951
  %4953 = vadd.xlane.f32.xlu0 %v4950
  %v4954 = vpop.xlane.xlu0 %4953
  %v4955 = vmul.f32 %v4946, 0.0078125
  %v4956 = vmul.f32 %v4948, 0.0078125
  %v4957 = vmul.f32 %v4952, 0.0078125
  %v4958 = vmul.f32 %v4954, 0.0078125
  %v4959 = vmul.f32 %v4955, %v4955
  %v4960 = vmul.f32 %v4956, %v4956
  %v4961 = vsub.f32 %v4957, %v4959
  %v4962 = vsub.f32 %v4958, %v4960
  %v4963 = vld [vmem:[%s13] sm:$0xff]
  %v4964 = vld [vmem:[%s13 + $0x8] sm:$0xff]
  %v4965 = vadd.f32 %v4961, 1e-05
  %v4966 = vadd.f32 %v4962, 1e-05
  %v4967 = vrsqrt.pop %v4965
  %v4968 = vrsqrt.pop %v4966
  %v4969 = vmul.f32 %v4963, %v4967
  %v4970 = vmul.f32 %v4964, %v4968
  %v4971 = vmul.f32 %v4955, %v4969
  %v4972 = vmul.f32 %v4956, %v4970
  %4975 = vrot.lane.b32.xlu0 %v4971, 1
  %v4976 = vpop.permute.xlu0 %4975
  %4977 = vrot.lane.b32.xlu0 %v4972, 1
  %v4978 = vpop.permute.xlu0 %4977
  %v4981 = vsub.f32 %v4963, %v4976
  %v4982 = vsub.f32 %v4964, %v4978
  %4984 = vset.pattern.permute.xlu0 0
  %4985 = vperm.xlu0 %4984, %v4969
  %v4986 = vpop.permute.xlu0 %4985
  %4989 = vset.pattern.permute.xlu0 0
  %4990 = vperm.xlu0 %4989, %v4970
  %v4991 = vpop.permute.xlu0 %4990
  %v4993 = vmul.f32 %v4943, %v4986
  %v4994 = vmul.f32 %v4944, %v4991
  %4996 = vset.pattern.permute.xlu0 1
  %4997 = vperm.xlu0 %4996, %v4981
  %v4998 = vpop.permute.xlu0 %4997
  %5001 = vset.pattern.permute.xlu0 1
  %5002 = vperm.xlu0 %5001, %v4982
  %v5003 = vpop.permute.xlu0 %5002
  %v5005 = vadd.f32 %v4993, %v4998
  %v5006 = vadd.f32 %v4994, %v5003
  %v5007 = vmax.f32 %v5005, 0.0
  %v5008 = vmax.f32 %v5006, 0.0
  %v5009 = vpack.c.bf16 %v5008, %v5007
  %5010 = vst [vmem:[#allocation2 + $0x8] sm:$0xff] %v5009
  %v5011 = vld [vmem:[#allocation2] sm:$0xff]
  %v5012 = vld [vmem:[#allocation2 + $0x8] sm:$0xff]
  %v5013 = vld [vmem:[%s6] sm:$0xf]
  %v5014 = vld [vmem:[%s6 + $0x4] sm:$0xf]
  %v5017 = vunpack.c.l.b16 %v5013
  %v5018 = vunpack.c.l.b16 %v5014
  %v5019 = vpack.c.b16 %v5018, %v5017
  %5022 = vrot.lane.b32.xlu0 %v5011, 9
  %v5023 = vpop.permute.xlu0 %5022
  %5024 = vrot.lane.b32.xlu0 %v5012, 9
  %v5025 = vpop.permute.xlu0 %5024
  %v5026 = vsel %vm3037, %v5023, %v5025
  %v5029 = vsel %vm133, %v5019, 0
  %5031 = vmatprep.subr.bf16.mxu0 0
  %5032 = vmatpush1.bf16.msra.mxu0 %v5026
  %5033 = vmatprep.subr.bf16.mxu0 0
  %5034 = vmatpush1.bf16.msra.mxu0 0
  %5035 = vmatprep.subr.bf16.mxu0 0
  %5036 = vmatpush1.bf16.msra.mxu0 0
  %5037 = vmatprep.subr.bf16.mxu0 0
  %5038 = vmatpush1.bf16.msra.mxu0 0
  %5039 = vmatprep.subr.bf16.mxu0 0
  %5040 = vmatpush1.bf16.msra.mxu0 0
  %5041 = vmatprep.subr.bf16.mxu0 0
  %5042 = vmatpush1.bf16.msra.mxu0 0
  %5043 = vmatprep.subr.bf16.mxu0 0
  %5044 = vmatpush1.bf16.msra.mxu0 0
  %5045 = vmatprep.subr.bf16.mxu0 0
  %5046 = vmatpush1.bf16.msra.mxu0 0
  %5047 = vmatprep.subr.bf16.mxu0 0
  %5048 = vmatpush1.bf16.msra.mxu0 0
  %5049 = vmatprep.subr.bf16.mxu0 0
  %5050 = vmatpush1.bf16.msra.mxu0 0
  %5051 = vmatprep.subr.bf16.mxu0 0
  %5052 = vmatpush1.bf16.msra.mxu0 0
  %5053 = vmatprep.subr.bf16.mxu0 0
  %5054 = vmatpush1.bf16.msra.mxu0 0
  %5055 = vmatprep.subr.bf16.mxu0 0
  %5056 = vmatpush1.bf16.msra.mxu0 0
  %5057 = vmatprep.subr.bf16.mxu0 0
  %5058 = vmatpush1.bf16.msra.mxu0 0
  %5059 = vmatprep.subr.bf16.mxu0 0
  %5060 = vmatpush1.bf16.msra.mxu0 0
  %5061 = vmatprep.subr.bf16.mxu0 0
  %5062 = vmatpush1.bf16.msra.mxu0 0
  %5063 = vmatprep.mubr.bf16.mxu0 0
  %5064 = vmatmul.mubr.bf16.gmra.mrb[0].mxu0 %v5029
  %v5065 = vpop.f32.mrb[0].mxu0
  %v5066 = vadd.f32 0.0, %v5065
  %v5067 = vpop.f32.mrb[0].mxu0
  %v5068 = vpop.f32.mrb[0].mxu0
  %v5069 = vadd.f32 0.0, %v5068
  %v5070 = vpop.f32.mrb[0].mxu0
  %5071 = vdwg.mxu0
  %v5072 = vld [vmem:[%s18] sm:$0x1]
  %v5073 = vlaneseq
  %v5074 = vshrl.u32 %v5073, 7
  %v5075 = vsub.s32 0, %v5074
  %v5076 = vrot.slane %v5072, %v5075
  %v5077 = vmul.f32 %v5066, %v5076
  %v5078 = vmul.f32 %v5069, %v5076
  %s5079 = scalar_lea.vmem %s6, 8
  %v5080 = vld [vmem:[%s5079] sm:$0xf]
  %v5081 = vld [vmem:[%s5079 + $0x4] sm:$0xf]
  %v5084 = vunpack.c.l.b16 %v5080
  %v5085 = vunpack.c.l.b16 %v5081
  %v5086 = vpack.c.b16 %v5085, %v5084
  %5087 = vrot.lane.b32.xlu0 %v5011, 8
  %v5088 = vpop.permute.xlu0 %5087
  %5089 = vrot.lane.b32.xlu0 %v5012, 8
  %v5090 = vpop.permute.xlu0 %5089
  %v5091 = vsel %vm3103, %v5088, %v5090
  %v5094 = vsel %vm133, %v5086, 0
  %5096 = vmatprep.subr.bf16.mxu0 0
  %5097 = vmatpush1.bf16.msra.mxu0 %v5091
  %5098 = vmatprep.subr.bf16.mxu0 0
  %5099 = vmatpush1.bf16.msra.mxu0 0
  %5100 = vmatprep.subr.bf16.mxu0 0
  %5101 = vmatpush1.bf16.msra.mxu0 0
  %5102 = vmatprep.subr.bf16.mxu0 0
  %5103 = vmatpush1.bf16.msra.mxu0 0
  %5104 = vmatprep.subr.bf16.mxu0 0
  %5105 = vmatpush1.bf16.msra.mxu0 0
  %5106 = vmatprep.subr.bf16.mxu0 0
  %5107 = vmatpush1.bf16.msra.mxu0 0
  %5108 = vmatprep.subr.bf16.mxu0 0
  %5109 = vmatpush1.bf16.msra.mxu0 0
  %5110 = vmatprep.subr.bf16.mxu0 0
  %5111 = vmatpush1.bf16.msra.mxu0 0
  %5112 = vmatprep.subr.bf16.mxu0 0
  %5113 = vmatpush1.bf16.msra.mxu0 0
  %5114 = vmatprep.subr.bf16.mxu0 0
  %5115 = vmatpush1.bf16.msra.mxu0 0
  %5116 = vmatprep.subr.bf16.mxu0 0
  %5117 = vmatpush1.bf16.msra.mxu0 0
  %5118 = vmatprep.subr.bf16.mxu0 0
  %5119 = vmatpush1.bf16.msra.mxu0 0
  %5120 = vmatprep.subr.bf16.mxu0 0
  %5121 = vmatpush1.bf16.msra.mxu0 0
  %5122 = vmatprep.subr.bf16.mxu0 0
  %5123 = vmatpush1.bf16.msra.mxu0 0
  %5124 = vmatprep.subr.bf16.mxu0 0
  %5125 = vmatpush1.bf16.msra.mxu0 0
  %5126 = vmatprep.subr.bf16.mxu0 0
  %5127 = vmatpush1.bf16.msra.mxu0 0
  %5128 = vmatprep.mubr.bf16.mxu0 0
  %5129 = vmatmul.mubr.bf16.gmra.mrb[0].mxu0 %v5094
  %v5130 = vpop.f32.mrb[0].mxu0
  %v5131 = vadd.f32 0.0, %v5130
  %v5132 = vpop.f32.mrb[0].mxu0
  %v5133 = vpop.f32.mrb[0].mxu0
  %v5134 = vadd.f32 0.0, %v5133
  %v5135 = vpop.f32.mrb[0].mxu0
  %5136 = vdwg.mxu0
  %v5137 = vld [vmem:[%s18 + $0x1] sm:$0x1]
  %v5138 = vlaneseq
  %v5139 = vshrl.u32 %v5138, 7
  %v5140 = vsub.s32 0, %v5139
  %v5141 = vrot.slane %v5137, %v5140
  %v5142 = vmul.f32 %v5131, %v5141
  %v5143 = vmul.f32 %v5134, %v5141
  %v5144 = vadd.f32 %v5077, %v5142
  %v5145 = vadd.f32 %v5078, %v5143
  %s5146 = scalar_lea.vmem %s6, 16
  %v5147 = vld [vmem:[%s5146] sm:$0xf]
  %v5148 = vld [vmem:[%s5146 + $0x4] sm:$0xf]
  %v5151 = vunpack.c.l.b16 %v5147
  %v5152 = vunpack.c.l.b16 %v5148
  %v5153 = vpack.c.b16 %v5152, %v5151
  %5154 = vrot.lane.b32.xlu0 %v5011, 7
  %v5155 = vpop.permute.xlu0 %5154
  %5156 = vrot.lane.b32.xlu0 %v5012, 7
  %v5157 = vpop.permute.xlu0 %5156
  %v5158 = vsel %vm3171, %v5155, %v5157
  %v5161 = vsel %vm133, %v5153, 0
  %5163 = vmatprep.subr.bf16.mxu0 0
  %5164 = vmatpush1.bf16.msra.mxu0 %v5158
  %5165 = vmatprep.subr.bf16.mxu0 0
  %5166 = vmatpush1.bf16.msra.mxu0 0
  %5167 = vmatprep.subr.bf16.mxu0 0
  %5168 = vmatpush1.bf16.msra.mxu0 0
  %5169 = vmatprep.subr.bf16.mxu0 0
  %5170 = vmatpush1.bf16.msra.mxu0 0
  %5171 = vmatprep.subr.bf16.mxu0 0
  %5172 = vmatpush1.bf16.msra.mxu0 0
  %5173 = vmatprep.subr.bf16.mxu0 0
  %5174 = vmatpush1.bf16.msra.mxu0 0
  %5175 = vmatprep.subr.bf16.mxu0 0
  %5176 = vmatpush1.bf16.msra.mxu0 0
  %5177 = vmatprep.subr.bf16.mxu0 0
  %5178 = vmatpush1.bf16.msra.mxu0 0
  %5179 = vmatprep.subr.bf16.mxu0 0
  %5180 = vmatpush1.bf16.msra.mxu0 0
  %5181 = vmatprep.subr.bf16.mxu0 0
  %5182 = vmatpush1.bf16.msra.mxu0 0
  %5183 = vmatprep.subr.bf16.mxu0 0
  %5184 = vmatpush1.bf16.msra.mxu0 0
  %5185 = vmatprep.subr.bf16.mxu0 0
  %5186 = vmatpush1.bf16.msra.mxu0 0
  %5187 = vmatprep.subr.bf16.mxu0 0
  %5188 = vmatpush1.bf16.msra.mxu0 0
  %5189 = vmatprep.subr.bf16.mxu0 0
  %5190 = vmatpush1.bf16.msra.mxu0 0
  %5191 = vmatprep.subr.bf16.mxu0 0
  %5192 = vmatpush1.bf16.msra.mxu0 0
  %5193 = vmatprep.subr.bf16.mxu0 0
  %5194 = vmatpush1.bf16.msra.mxu0 0
  %5195 = vmatprep.mubr.bf16.mxu0 0
  %5196 = vmatmul.mubr.bf16.gmra.mrb[0].mxu0 %v5161
  %v5197 = vpop.f32.mrb[0].mxu0
  %v5198 = vadd.f32 0.0, %v5197
  %v5199 = vpop.f32.mrb[0].mxu0
  %v5200 = vpop.f32.mrb[0].mxu0
  %v5201 = vadd.f32 0.0, %v5200
  %v5202 = vpop.f32.mrb[0].mxu0
  %5203 = vdwg.mxu0
  %v5204 = vld [vmem:[%s18 + $0x2] sm:$0x1]
  %v5205 = vlaneseq
  %v5206 = vshrl.u32 %v5205, 7
  %v5207 = vsub.s32 0, %v5206
  %v5208 = vrot.slane %v5204, %v5207
  %v5209 = vmul.f32 %v5198, %v5208
  %v5210 = vmul.f32 %v5201, %v5208
  %v5211 = vadd.f32 %v5144, %v5209
  %v5212 = vadd.f32 %v5145, %v5210
  %s5213 = scalar_lea.vmem %s6, 24
  %v5214 = vld [vmem:[%s5213] sm:$0xf]
  %v5215 = vld [vmem:[%s5213 + $0x4] sm:$0xf]
  %v5218 = vunpack.c.l.b16 %v5214
  %v5219 = vunpack.c.l.b16 %v5215
  %v5220 = vpack.c.b16 %v5219, %v5218
  %5221 = vrot.lane.b32.xlu0 %v5011, 1
  %v5222 = vpop.permute.xlu0 %5221
  %5223 = vrot.lane.b32.xlu0 %v5012, 1
  %v5224 = vpop.permute.xlu0 %5223
  %v5225 = vsel %vm531, %v5222, %v5224
  %v5228 = vsel %vm133, %v5220, 0
  %5230 = vmatprep.subr.bf16.mxu0 0
  %5231 = vmatpush1.bf16.msra.mxu0 %v5225
  %5232 = vmatprep.subr.bf16.mxu0 0
  %5233 = vmatpush1.bf16.msra.mxu0 0
  %5234 = vmatprep.subr.bf16.mxu0 0
  %5235 = vmatpush1.bf16.msra.mxu0 0
  %5236 = vmatprep.subr.bf16.mxu0 0
  %5237 = vmatpush1.bf16.msra.mxu0 0
  %5238 = vmatprep.subr.bf16.mxu0 0
  %5239 = vmatpush1.bf16.msra.mxu0 0
  %5240 = vmatprep.subr.bf16.mxu0 0
  %5241 = vmatpush1.bf16.msra.mxu0 0
  %5242 = vmatprep.subr.bf16.mxu0 0
  %5243 = vmatpush1.bf16.msra.mxu0 0
  %5244 = vmatprep.subr.bf16.mxu0 0
  %5245 = vmatpush1.bf16.msra.mxu0 0
  %5246 = vmatprep.subr.bf16.mxu0 0
  %5247 = vmatpush1.bf16.msra.mxu0 0
  %5248 = vmatprep.subr.bf16.mxu0 0
  %5249 = vmatpush1.bf16.msra.mxu0 0
  %5250 = vmatprep.subr.bf16.mxu0 0
  %5251 = vmatpush1.bf16.msra.mxu0 0
  %5252 = vmatprep.subr.bf16.mxu0 0
  %5253 = vmatpush1.bf16.msra.mxu0 0
  %5254 = vmatprep.subr.bf16.mxu0 0
  %5255 = vmatpush1.bf16.msra.mxu0 0
  %5256 = vmatprep.subr.bf16.mxu0 0
  %5257 = vmatpush1.bf16.msra.mxu0 0
  %5258 = vmatprep.subr.bf16.mxu0 0
  %5259 = vmatpush1.bf16.msra.mxu0 0
  %5260 = vmatprep.subr.bf16.mxu0 0
  %5261 = vmatpush1.bf16.msra.mxu0 0
  %5262 = vmatprep.mubr.bf16.mxu0 0
  %5263 = vmatmul.mubr.bf16.gmra.mrb[0].mxu0 %v5228
  %v5264 = vpop.f32.mrb[0].mxu0
  %v5265 = vadd.f32 0.0, %v5264
  %v5266 = vpop.f32.mrb[0].mxu0
  %v5267 = vpop.f32.mrb[0].mxu0
  %v5268 = vadd.f32 0.0, %v5267
  %v5269 = vpop.f32.mrb[0].mxu0
  %5270 = vdwg.mxu0
  %v5271 = vld [vmem:[%s18 + $0x3] sm:$0x1]
  %v5272 = vlaneseq
  %v5273 = vshrl.u32 %v5272, 7
  %v5274 = vsub.s32 0, %v5273
  %v5275 = vrot.slane %v5271, %v5274
  %v5276 = vmul.f32 %v5265, %v5275
  %v5277 = vmul.f32 %v5268, %v5275
  %v5278 = vadd.f32 %v5211, %v5276
  %v5279 = vadd.f32 %v5212, %v5277
  %s5280 = scalar_lea.vmem %s6, 32
  %v5281 = vld [vmem:[%s5280] sm:$0xf]
  %v5282 = vld [vmem:[%s5280 + $0x4] sm:$0xf]
  %v5285 = vunpack.c.l.b16 %v5281
  %v5286 = vunpack.c.l.b16 %v5282
  %v5287 = vpack.c.b16 %v5286, %v5285
  %v5289 = vsel %vm133, %v5287, 0
  %5291 = vmatprep.subr.bf16.mxu0 0
  %5292 = vmatpush1.bf16.msra.mxu0 %v5012
  %5293 = vmatprep.subr.bf16.mxu0 0
  %5294 = vmatpush1.bf16.msra.mxu0 0
  %5295 = vmatprep.subr.bf16.mxu0 0
  %5296 = vmatpush1.bf16.msra.mxu0 0
  %5297 = vmatprep.subr.bf16.mxu0 0
  %5298 = vmatpush1.bf16.msra.mxu0 0
  %5299 = vmatprep.subr.bf16.mxu0 0
  %5300 = vmatpush1.bf16.msra.mxu0 0
  %5301 = vmatprep.subr.bf16.mxu0 0
  %5302 = vmatpush1.bf16.msra.mxu0 0
  %5303 = vmatprep.subr.bf16.mxu0 0
  %5304 = vmatpush1.bf16.msra.mxu0 0
  %5305 = vmatprep.subr.bf16.mxu0 0
  %5306 = vmatpush1.bf16.msra.mxu0 0
  %5307 = vmatprep.subr.bf16.mxu0 0
  %5308 = vmatpush1.bf16.msra.mxu0 0
  %5309 = vmatprep.subr.bf16.mxu0 0
  %5310 = vmatpush1.bf16.msra.mxu0 0
  %5311 = vmatprep.subr.bf16.mxu0 0
  %5312 = vmatpush1.bf16.msra.mxu0 0
  %5313 = vmatprep.subr.bf16.mxu0 0
  %5314 = vmatpush1.bf16.msra.mxu0 0
  %5315 = vmatprep.subr.bf16.mxu0 0
  %5316 = vmatpush1.bf16.msra.mxu0 0
  %5317 = vmatprep.subr.bf16.mxu0 0
  %5318 = vmatpush1.bf16.msra.mxu0 0
  %5319 = vmatprep.subr.bf16.mxu0 0
  %5320 = vmatpush1.bf16.msra.mxu0 0
  %5321 = vmatprep.subr.bf16.mxu0 0
  %5322 = vmatpush1.bf16.msra.mxu0 0
  %5323 = vmatprep.mubr.bf16.mxu0 0
  %5324 = vmatmul.mubr.bf16.gmra.mrb[0].mxu0 %v5289
  %v5325 = vpop.f32.mrb[0].mxu0
  %v5326 = vadd.f32 0.0, %v5325
  %v5327 = vpop.f32.mrb[0].mxu0
  %v5328 = vpop.f32.mrb[0].mxu0
  %v5329 = vadd.f32 0.0, %v5328
  %v5330 = vpop.f32.mrb[0].mxu0
  %5331 = vdwg.mxu0
  %v5332 = vadd.f32 %v5278, %v5326
  %v5333 = vadd.f32 %v5279, %v5329
  %v5334 = vld [vmem:[#allocation2 + $0x8] sm:$0xff]
  %v5335 = vld [vmem:[#allocation2 + $0x10] sm:$0xff]
  %s5336 = scalar_lea.vmem %s6, 40
  %v5337 = vld [vmem:[%s5336] sm:$0xf]
  %v5338 = vld [vmem:[%s5336 + $0x4] sm:$0xf]
  %v5341 = vunpack.c.l.b16 %v5337
  %v5342 = vunpack.c.l.b16 %v5338
  %v5343 = vpack.c.b16 %v5342, %v5341
  %5346 = vrot.lane.b32.xlu0 %v5334, 127
  %v5347 = vpop.permute.xlu0 %5346
  %5348 = vrot.lane.b32.xlu0 %v5335, 127
  %v5349 = vpop.permute.xlu0 %5348
  %v5350 = vsel %vm769, %v5347, %v5349
  %v5353 = vsel %vm133, %v5343, 0
  %5355 = vmatprep.subr.bf16.mxu0 0
  %5356 = vmatpush1.bf16.msra.mxu0 %v5350
  %5357 = vmatprep.subr.bf16.mxu0 0
  %5358 = vmatpush1.bf16.msra.mxu0 0
  %5359 = vmatprep.subr.bf16.mxu0 0
  %5360 = vmatpush1.bf16.msra.mxu0 0
  %5361 = vmatprep.subr.bf16.mxu0 0
  %5362 = vmatpush1.bf16.msra.mxu0 0
  %5363 = vmatprep.subr.bf16.mxu0 0
  %5364 = vmatpush1.bf16.msra.mxu0 0
  %5365 = vmatprep.subr.bf16.mxu0 0
  %5366 = vmatpush1.bf16.msra.mxu0 0
  %5367 = vmatprep.subr.bf16.mxu0 0
  %5368 = vmatpush1.bf16.msra.mxu0 0
  %5369 = vmatprep.subr.bf16.mxu0 0
  %5370 = vmatpush1.bf16.msra.mxu0 0
  %5371 = vmatprep.subr.bf16.mxu0 0
  %5372 = vmatpush1.bf16.msra.mxu0 0
  %5373 = vmatprep.subr.bf16.mxu0 0
  %5374 = vmatpush1.bf16.msra.mxu0 0
  %5375 = vmatprep.subr.bf16.mxu0 0
  %5376 = vmatpush1.bf16.msra.mxu0 0
  %5377 = vmatprep.subr.bf16.mxu0 0
  %5378 = vmatpush1.bf16.msra.mxu0 0
  %5379 = vmatprep.subr.bf16.mxu0 0
  %5380 = vmatpush1.bf16.msra.mxu0 0
  %5381 = vmatprep.subr.bf16.mxu0 0
  %5382 = vmatpush1.bf16.msra.mxu0 0
  %5383 = vmatprep.subr.bf16.mxu0 0
  %5384 = vmatpush1.bf16.msra.mxu0 0
  %5385 = vmatprep.subr.bf16.mxu0 0
  %5386 = vmatpush1.bf16.msra.mxu0 0
  %5387 = vmatprep.mubr.bf16.mxu0 0
  %5388 = vmatmul.mubr.bf16.gmra.mrb[0].mxu0 %v5353
  %v5389 = vpop.f32.mrb[0].mxu0
  %v5390 = vadd.f32 0.0, %v5389
  %v5391 = vpop.f32.mrb[0].mxu0
  %v5392 = vpop.f32.mrb[0].mxu0
  %v5393 = vadd.f32 0.0, %v5392
  %v5394 = vpop.f32.mrb[0].mxu0
  %5395 = vdwg.mxu0
  %v5396 = vld [vmem:[%s18 + $0x5] sm:$0x1]
  %v5397 = vlaneseq
  %v5398 = vshrl.u32 %v5397, 7
  %v5399 = vsub.s32 0, %v5398
  %v5400 = vrot.slane %v5396, %v5399
  %v5401 = vmul.f32 %v5390, %v5400
  %v5402 = vmul.f32 %v5393, %v5400
  %v5403 = vadd.f32 %v5332, %v5401
  %v5404 = vadd.f32 %v5333, %v5402
  %s5405 = scalar_lea.vmem %s6, 48
  %v5406 = vld [vmem:[%s5405] sm:$0xf]
  %v5407 = vld [vmem:[%s5405 + $0x4] sm:$0xf]
  %v5410 = vunpack.c.l.b16 %v5406
  %v5411 = vunpack.c.l.b16 %v5407
  %v5412 = vpack.c.b16 %v5411, %v5410
  %5413 = vrot.lane.b32.xlu0 %v5334, 121
  %v5414 = vpop.permute.xlu0 %5413
  %5415 = vrot.lane.b32.xlu0 %v5335, 121
  %v5416 = vpop.permute.xlu0 %5415
  %v5417 = vsel %vm3431, %v5414, %v5416
  %v5420 = vsel %vm133, %v5412, 0
  %5422 = vmatprep.subr.bf16.mxu0 0
  %5423 = vmatpush1.bf16.msra.mxu0 %v5417
  %5424 = vmatprep.subr.bf16.mxu0 0
  %5425 = vmatpush1.bf16.msra.mxu0 0
  %5426 = vmatprep.subr.bf16.mxu0 0
  %5427 = vmatpush1.bf16.msra.mxu0 0
  %5428 = vmatprep.subr.bf16.mxu0 0
  %5429 = vmatpush1.bf16.msra.mxu0 0
  %5430 = vmatprep.subr.bf16.mxu0 0
  %5431 = vmatpush1.bf16.msra.mxu0 0
  %5432 = vmatprep.subr.bf16.mxu0 0
  %5433 = vmatpush1.bf16.msra.mxu0 0
  %5434 = vmatprep.subr.bf16.mxu0 0
  %5435 = vmatpush1.bf16.msra.mxu0 0
  %5436 = vmatprep.subr.bf16.mxu0 0
  %5437 = vmatpush1.bf16.msra.mxu0 0
  %5438 = vmatprep.subr.bf16.mxu0 0
  %5439 = vmatpush1.bf16.msra.mxu0 0
  %5440 = vmatprep.subr.bf16.mxu0 0
  %5441 = vmatpush1.bf16.msra.mxu0 0
  %5442 = vmatprep.subr.bf16.mxu0 0
  %5443 = vmatpush1.bf16.msra.mxu0 0
  %5444 = vmatprep.subr.bf16.mxu0 0
  %5445 = vmatpush1.bf16.msra.mxu0 0
  %5446 = vmatprep.subr.bf16.mxu0 0
  %5447 = vmatpush1.bf16.msra.mxu0 0
  %5448 = vmatprep.subr.bf16.mxu0 0
  %5449 = vmatpush1.bf16.msra.mxu0 0
  %5450 = vmatprep.subr.bf16.mxu0 0
  %5451 = vmatpush1.bf16.msra.mxu0 0
  %5452 = vmatprep.subr.bf16.mxu0 0
  %5453 = vmatpush1.bf16.msra.mxu0 0
  %5454 = vmatprep.mubr.bf16.mxu0 0
  %5455 = vmatmul.mubr.bf16.gmra.mrb[0].mxu0 %v5420
  %v5456 = vpop.f32.mrb[0].mxu0
  %v5457 = vadd.f32 0.0, %v5456
  %v5458 = vpop.f32.mrb[0].mxu0
  %v5459 = vpop.f32.mrb[0].mxu0
  %v5460 = vadd.f32 0.0, %v5459
  %v5461 = vpop.f32.mrb[0].mxu0
  %5462 = vdwg.mxu0
  %v5463 = vld [vmem:[%s18 + $0x6] sm:$0x1]
  %v5464 = vlaneseq
  %v5465 = vshrl.u32 %v5464, 7
  %v5466 = vsub.s32 0, %v5465
  %v5467 = vrot.slane %v5463, %v5466
  %v5468 = vmul.f32 %v5457, %v5467
  %v5469 = vmul.f32 %v5460, %v5467
  %v5470 = vadd.f32 %v5403, %v5468
  %v5471 = vadd.f32 %v5404, %v5469
  %s5472 = scalar_lea.vmem %s6, 56
  %v5473 = vld [vmem:[%s5472] sm:$0xf]
  %v5474 = vld [vmem:[%s5472 + $0x4] sm:$0xf]
  %v5477 = vunpack.c.l.b16 %v5473
  %v5478 = vunpack.c.l.b16 %v5474
  %v5479 = vpack.c.b16 %v5478, %v5477
  %5480 = vrot.lane.b32.xlu0 %v5334, 120
  %v5481 = vpop.permute.xlu0 %5480
  %5482 = vrot.lane.b32.xlu0 %v5335, 120
  %v5483 = vpop.permute.xlu0 %5482
  %v5484 = vsel %vm3499, %v5481, %v5483
  %v5487 = vsel %vm133, %v5479, 0
  %5489 = vmatprep.subr.bf16.mxu0 0
  %5490 = vmatpush1.bf16.msra.mxu0 %v5484
  %5491 = vmatprep.subr.bf16.mxu0 0
  %5492 = vmatpush1.bf16.msra.mxu0 0
  %5493 = vmatprep.subr.bf16.mxu0 0
  %5494 = vmatpush1.bf16.msra.mxu0 0
  %5495 = vmatprep.subr.bf16.mxu0 0
  %5496 = vmatpush1.bf16.msra.mxu0 0
  %5497 = vmatprep.subr.bf16.mxu0 0
  %5498 = vmatpush1.bf16.msra.mxu0 0
  %5499 = vmatprep.subr.bf16.mxu0 0
  %5500 = vmatpush1.bf16.msra.mxu0 0
  %5501 = vmatprep.subr.bf16.mxu0 0
  %5502 = vmatpush1.bf16.msra.mxu0 0
  %5503 = vmatprep.subr.bf16.mxu0 0
  %5504 = vmatpush1.bf16.msra.mxu0 0
  %5505 = vmatprep.subr.bf16.mxu0 0
  %5506 = vmatpush1.bf16.msra.mxu0 0
  %5507 = vmatprep.subr.bf16.mxu0 0
  %5508 = vmatpush1.bf16.msra.mxu0 0
  %5509 = vmatprep.subr.bf16.mxu0 0
  %5510 = vmatpush1.bf16.msra.mxu0 0
  %5511 = vmatprep.subr.bf16.mxu0 0
  %5512 = vmatpush1.bf16.msra.mxu0 0
  %5513 = vmatprep.subr.bf16.mxu0 0
  %5514 = vmatpush1.bf16.msra.mxu0 0
  %5515 = vmatprep.subr.bf16.mxu0 0
  %5516 = vmatpush1.bf16.msra.mxu0 0
  %5517 = vmatprep.subr.bf16.mxu0 0
  %5518 = vmatpush1.bf16.msra.mxu0 0
  %5519 = vmatprep.subr.bf16.mxu0 0
  %5520 = vmatpush1.bf16.msra.mxu0 0
  %5521 = vmatprep.mubr.bf16.mxu0 0
  %5522 = vmatmul.mubr.bf16.gmra.mrb[0].mxu0 %v5487
  %v5523 = vpop.f32.mrb[0].mxu0
  %v5524 = vadd.f32 0.0, %v5523
  %v5525 = vpop.f32.mrb[0].mxu0
  %v5526 = vpop.f32.mrb[0].mxu0
  %v5527 = vadd.f32 0.0, %v5526
  %v5528 = vpop.f32.mrb[0].mxu0
  %5529 = vdwg.mxu0
  %v5530 = vld [vmem:[%s18 + $0x7] sm:$0x1]
  %v5531 = vlaneseq
  %v5532 = vshrl.u32 %v5531, 7
  %v5533 = vsub.s32 0, %v5532
  %v5534 = vrot.slane %v5530, %v5533
  %v5535 = vmul.f32 %v5524, %v5534
  %v5536 = vmul.f32 %v5527, %v5534
  %v5537 = vadd.f32 %v5470, %v5535
  %v5538 = vadd.f32 %v5471, %v5536
  %s5539 = scalar_lea.vmem %s6, 64
  %v5540 = vld [vmem:[%s5539] sm:$0xf]
  %v5541 = vld [vmem:[%s5539 + $0x4] sm:$0xf]
  %v5544 = vunpack.c.l.b16 %v5540
  %v5545 = vunpack.c.l.b16 %v5541
  %v5546 = vpack.c.b16 %v5545, %v5544
  %5547 = vrot.lane.b32.xlu0 %v5334, 119
  %v5548 = vpop.permute.xlu0 %5547
  %5549 = vrot.lane.b32.xlu0 %v5335, 119
  %v5550 = vpop.permute.xlu0 %5549
  %v5551 = vsel %vm3567, %v5548, %v5550
  %v5554 = vsel %vm133, %v5546, 0
  %5556 = vmatprep.subr.bf16.mxu0 0
  %5557 = vmatpush1.bf16.msra.mxu0 %v5551
  %5558 = vmatprep.subr.bf16.mxu0 0
  %5559 = vmatpush1.bf16.msra.mxu0 0
  %5560 = vmatprep.subr.bf16.mxu0 0
  %5561 = vmatpush1.bf16.msra.mxu0 0
  %5562 = vmatprep.subr.bf16.mxu0 0
  %5563 = vmatpush1.bf16.msra.mxu0 0
  %5564 = vmatprep.subr.bf16.mxu0 0
  %5565 = vmatpush1.bf16.msra.mxu0 0
  %5566 = vmatprep.subr.bf16.mxu0 0
  %5567 = vmatpush1.bf16.msra.mxu0 0
  %5568 = vmatprep.subr.bf16.mxu0 0
  %5569 = vmatpush1.bf16.msra.mxu0 0
  %5570 = vmatprep.subr.bf16.mxu0 0
  %5571 = vmatpush1.bf16.msra.mxu0 0
  %5572 = vmatprep.subr.bf16.mxu0 0
  %5573 = vmatpush1.bf16.msra.mxu0 0
  %5574 = vmatprep.subr.bf16.mxu0 0
  %5575 = vmatpush1.bf16.msra.mxu0 0
  %5576 = vmatprep.subr.bf16.mxu0 0
  %5577 = vmatpush1.bf16.msra.mxu0 0
  %5578 = vmatprep.subr.bf16.mxu0 0
  %5579 = vmatpush1.bf16.msra.mxu0 0
  %5580 = vmatprep.subr.bf16.mxu0 0
  %5581 = vmatpush1.bf16.msra.mxu0 0
  %5582 = vmatprep.subr.bf16.mxu0 0
  %5583 = vmatpush1.bf16.msra.mxu0 0
  %5584 = vmatprep.subr.bf16.mxu0 0
  %5585 = vmatpush1.bf16.msra.mxu0 0
  %5586 = vmatprep.subr.bf16.mxu0 0
  %5587 = vmatpush1.bf16.msra.mxu0 0
  %5588 = vmatprep.mubr.bf16.mxu0 0
  %5589 = vmatmul.mubr.bf16.gmra.mrb[0].mxu0 %v5554
  %v5590 = vpop.f32.mrb[0].mxu0
  %v5591 = vadd.f32 0.0, %v5590
  %v5592 = vpop.f32.mrb[0].mxu0
  %v5593 = vpop.f32.mrb[0].mxu0
  %v5594 = vadd.f32 0.0, %v5593
  %v5595 = vpop.f32.mrb[0].mxu0
  %5596 = vdwg.mxu0
  %v5597 = vld [vmem:[%s18 + $0x8] sm:$0x1]
  %v5598 = vlaneseq
  %v5599 = vshrl.u32 %v5598, 7
  %v5600 = vsub.s32 0, %v5599
  %v5601 = vrot.slane %v5597, %v5600
  %v5602 = vmul.f32 %v5591, %v5601
  %v5603 = vmul.f32 %v5594, %v5601
  %v5604 = vadd.f32 %v5537, %v5602
  %v5605 = vadd.f32 %v5538, %v5603
  %5606 = vadd.xlane.f32.xlu0 %v5604
  %v5607 = vpop.xlane.xlu0 %5606
  %5608 = vadd.xlane.f32.xlu0 %v5605
  %v5609 = vpop.xlane.xlu0 %5608
  %v5610 = vmul.f32 %v5604, %v5604
  %v5611 = vmul.f32 %v5605, %v5605
  %5612 = vadd.xlane.f32.xlu0 %v5610
  %v5613 = vpop.xlane.xlu0 %5612
  %5614 = vadd.xlane.f32.xlu0 %v5611
  %v5615 = vpop.xlane.xlu0 %5614
  %v5616 = vmul.f32 %v5607, 0.0078125
  %v5617 = vmul.f32 %v5609, 0.0078125
  %v5618 = vmul.f32 %v5613, 0.0078125
  %v5619 = vmul.f32 %v5615, 0.0078125
  %v5620 = vmul.f32 %v5616, %v5616
  %v5621 = vmul.f32 %v5617, %v5617
  %v5622 = vsub.f32 %v5618, %v5620
  %v5623 = vsub.f32 %v5619, %v5621
  %v5624 = vld [vmem:[%s14] sm:$0xff]
  %v5625 = vld [vmem:[%s14 + $0x8] sm:$0xff]
  %v5626 = vadd.f32 %v5622, 1e-05
  %v5627 = vadd.f32 %v5623, 1e-05
  %v5628 = vrsqrt.pop %v5626
  %v5629 = vrsqrt.pop %v5627
  %v5630 = vmul.f32 %v5624, %v5628
  %v5631 = vmul.f32 %v5625, %v5629
  %v5632 = vmul.f32 %v5616, %v5630
  %v5633 = vmul.f32 %v5617, %v5631
  %5636 = vrot.lane.b32.xlu0 %v5632, 1
  %v5637 = vpop.permute.xlu0 %5636
  %5638 = vrot.lane.b32.xlu0 %v5633, 1
  %v5639 = vpop.permute.xlu0 %5638
  %v5642 = vsub.f32 %v5624, %v5637
  %v5643 = vsub.f32 %v5625, %v5639
  %5645 = vset.pattern.permute.xlu0 0
  %5646 = vperm.xlu0 %5645, %v5630
  %v5647 = vpop.permute.xlu0 %5646
  %5650 = vset.pattern.permute.xlu0 0
  %5651 = vperm.xlu0 %5650, %v5631
  %v5652 = vpop.permute.xlu0 %5651
  %v5654 = vmul.f32 %v5604, %v5647
  %v5655 = vmul.f32 %v5605, %v5652
  %5657 = vset.pattern.permute.xlu0 1
  %5658 = vperm.xlu0 %5657, %v5642
  %v5659 = vpop.permute.xlu0 %5658
  %5662 = vset.pattern.permute.xlu0 1
  %5663 = vperm.xlu0 %5662, %v5643
  %v5664 = vpop.permute.xlu0 %5663
  %v5666 = vadd.f32 %v5654, %v5659
  %v5667 = vadd.f32 %v5655, %v5664
  %v5668 = vmax.f32 %v5666, 0.0
  %v5669 = vmax.f32 %v5667, 0.0
  %v5670 = vpack.c.bf16 %v5669, %v5668
  %5671 = vst [vmem:[#allocation2 + $0x8] sm:$0xff] %v5670
  %v5672 = vld [vmem:[#allocation2] sm:$0xff]
  %v5673 = vld [vmem:[#allocation2 + $0x8] sm:$0xff]
  %v5674 = vld [vmem:[%s7] sm:$0xf]
  %v5675 = vld [vmem:[%s7 + $0x4] sm:$0xf]
  %v5678 = vunpack.c.l.b16 %v5674
  %v5679 = vunpack.c.l.b16 %v5675
  %v5680 = vpack.c.b16 %v5679, %v5678
  %5683 = vrot.lane.b32.xlu0 %v5672, 9
  %v5684 = vpop.permute.xlu0 %5683
  %5685 = vrot.lane.b32.xlu0 %v5673, 9
  %v5686 = vpop.permute.xlu0 %5685
  %v5687 = vsel %vm3037, %v5684, %v5686
  %v5690 = vsel %vm133, %v5680, 0
  %5692 = vmatprep.subr.bf16.mxu0 0
  %5693 = vmatpush1.bf16.msra.mxu0 %v5687
  %5694 = vmatprep.subr.bf16.mxu0 0
  %5695 = vmatpush1.bf16.msra.mxu0 0
  %5696 = vmatprep.subr.bf16.mxu0 0
  %5697 = vmatpush1.bf16.msra.mxu0 0
  %5698 = vmatprep.subr.bf16.mxu0 0
  %5699 = vmatpush1.bf16.msra.mxu0 0
  %5700 = vmatprep.subr.bf16.mxu0 0
  %5701 = vmatpush1.bf16.msra.mxu0 0
  %5702 = vmatprep.subr.bf16.mxu0 0
  %5703 = vmatpush1.bf16.msra.mxu0 0
  %5704 = vmatprep.subr.bf16.mxu0 0
  %5705 = vmatpush1.bf16.msra.mxu0 0
  %5706 = vmatprep.subr.bf16.mxu0 0
  %5707 = vmatpush1.bf16.msra.mxu0 0
  %5708 = vmatprep.subr.bf16.mxu0 0
  %5709 = vmatpush1.bf16.msra.mxu0 0
  %5710 = vmatprep.subr.bf16.mxu0 0
  %5711 = vmatpush1.bf16.msra.mxu0 0
  %5712 = vmatprep.subr.bf16.mxu0 0
  %5713 = vmatpush1.bf16.msra.mxu0 0
  %5714 = vmatprep.subr.bf16.mxu0 0
  %5715 = vmatpush1.bf16.msra.mxu0 0
  %5716 = vmatprep.subr.bf16.mxu0 0
  %5717 = vmatpush1.bf16.msra.mxu0 0
  %5718 = vmatprep.subr.bf16.mxu0 0
  %5719 = vmatpush1.bf16.msra.mxu0 0
  %5720 = vmatprep.subr.bf16.mxu0 0
  %5721 = vmatpush1.bf16.msra.mxu0 0
  %5722 = vmatprep.subr.bf16.mxu0 0
  %5723 = vmatpush1.bf16.msra.mxu0 0
  %5724 = vmatprep.mubr.bf16.mxu0 0
  %5725 = vmatmul.mubr.bf16.gmra.mrb[0].mxu0 %v5690
  %v5726 = vpop.f32.mrb[0].mxu0
  %v5727 = vadd.f32 0.0, %v5726
  %v5728 = vpop.f32.mrb[0].mxu0
  %v5729 = vpop.f32.mrb[0].mxu0
  %v5730 = vadd.f32 0.0, %v5729
  %v5731 = vpop.f32.mrb[0].mxu0
  %5732 = vdwg.mxu0
  %v5733 = vld [vmem:[%s18] sm:$0x1]
  %v5734 = vlaneseq
  %v5735 = vshrl.u32 %v5734, 7
  %v5736 = vsub.s32 0, %v5735
  %v5737 = vrot.slane %v5733, %v5736
  %v5738 = vmul.f32 %v5727, %v5737
  %v5739 = vmul.f32 %v5730, %v5737
  %s5740 = scalar_lea.vmem %s7, 8
  %v5741 = vld [vmem:[%s5740] sm:$0xf]
  %v5742 = vld [vmem:[%s5740 + $0x4] sm:$0xf]
  %v5745 = vunpack.c.l.b16 %v5741
  %v5746 = vunpack.c.l.b16 %v5742
  %v5747 = vpack.c.b16 %v5746, %v5745
  %5748 = vrot.lane.b32.xlu0 %v5672, 8
  %v5749 = vpop.permute.xlu0 %5748
  %5750 = vrot.lane.b32.xlu0 %v5673, 8
  %v5751 = vpop.permute.xlu0 %5750
  %v5752 = vsel %vm3103, %v5749, %v5751
  %v5755 = vsel %vm133, %v5747, 0
  %5757 = vmatprep.subr.bf16.mxu0 0
  %5758 = vmatpush1.bf16.msra.mxu0 %v5752
  %5759 = vmatprep.subr.bf16.mxu0 0
  %5760 = vmatpush1.bf16.msra.mxu0 0
  %5761 = vmatprep.subr.bf16.mxu0 0
  %5762 = vmatpush1.bf16.msra.mxu0 0
  %5763 = vmatprep.subr.bf16.mxu0 0
  %5764 = vmatpush1.bf16.msra.mxu0 0
  %5765 = vmatprep.subr.bf16.mxu0 0
  %5766 = vmatpush1.bf16.msra.mxu0 0
  %5767 = vmatprep.subr.bf16.mxu0 0
  %5768 = vmatpush1.bf16.msra.mxu0 0
  %5769 = vmatprep.subr.bf16.mxu0 0
  %5770 = vmatpush1.bf16.msra.mxu0 0
  %5771 = vmatprep.subr.bf16.mxu0 0
  %5772 = vmatpush1.bf16.msra.mxu0 0
  %5773 = vmatprep.subr.bf16.mxu0 0
  %5774 = vmatpush1.bf16.msra.mxu0 0
  %5775 = vmatprep.subr.bf16.mxu0 0
  %5776 = vmatpush1.bf16.msra.mxu0 0
  %5777 = vmatprep.subr.bf16.mxu0 0
  %5778 = vmatpush1.bf16.msra.mxu0 0
  %5779 = vmatprep.subr.bf16.mxu0 0
  %5780 = vmatpush1.bf16.msra.mxu0 0
  %5781 = vmatprep.subr.bf16.mxu0 0
  %5782 = vmatpush1.bf16.msra.mxu0 0
  %5783 = vmatprep.subr.bf16.mxu0 0
  %5784 = vmatpush1.bf16.msra.mxu0 0
  %5785 = vmatprep.subr.bf16.mxu0 0
  %5786 = vmatpush1.bf16.msra.mxu0 0
  %5787 = vmatprep.subr.bf16.mxu0 0
  %5788 = vmatpush1.bf16.msra.mxu0 0
  %5789 = vmatprep.mubr.bf16.mxu0 0
  %5790 = vmatmul.mubr.bf16.gmra.mrb[0].mxu0 %v5755
  %v5791 = vpop.f32.mrb[0].mxu0
  %v5792 = vadd.f32 0.0, %v5791
  %v5793 = vpop.f32.mrb[0].mxu0
  %v5794 = vpop.f32.mrb[0].mxu0
  %v5795 = vadd.f32 0.0, %v5794
  %v5796 = vpop.f32.mrb[0].mxu0
  %5797 = vdwg.mxu0
  %v5798 = vld [vmem:[%s18 + $0x1] sm:$0x1]
  %v5799 = vlaneseq
  %v5800 = vshrl.u32 %v5799, 7
  %v5801 = vsub.s32 0, %v5800
  %v5802 = vrot.slane %v5798, %v5801
  %v5803 = vmul.f32 %v5792, %v5802
  %v5804 = vmul.f32 %v5795, %v5802
  %v5805 = vadd.f32 %v5738, %v5803
  %v5806 = vadd.f32 %v5739, %v5804
  %s5807 = scalar_lea.vmem %s7, 16
  %v5808 = vld [vmem:[%s5807] sm:$0xf]
  %v5809 = vld [vmem:[%s5807 + $0x4] sm:$0xf]
  %v5812 = vunpack.c.l.b16 %v5808
  %v5813 = vunpack.c.l.b16 %v5809
  %v5814 = vpack.c.b16 %v5813, %v5812
  %5815 = vrot.lane.b32.xlu0 %v5672, 7
  %v5816 = vpop.permute.xlu0 %5815
  %5817 = vrot.lane.b32.xlu0 %v5673, 7
  %v5818 = vpop.permute.xlu0 %5817
  %v5819 = vsel %vm3171, %v5816, %v5818
  %v5822 = vsel %vm133, %v5814, 0
  %5824 = vmatprep.subr.bf16.mxu0 0
  %5825 = vmatpush1.bf16.msra.mxu0 %v5819
  %5826 = vmatprep.subr.bf16.mxu0 0
  %5827 = vmatpush1.bf16.msra.mxu0 0
  %5828 = vmatprep.subr.bf16.mxu0 0
  %5829 = vmatpush1.bf16.msra.mxu0 0
  %5830 = vmatprep.subr.bf16.mxu0 0
  %5831 = vmatpush1.bf16.msra.mxu0 0
  %5832 = vmatprep.subr.bf16.mxu0 0
  %5833 = vmatpush1.bf16.msra.mxu0 0
  %5834 = vmatprep.subr.bf16.mxu0 0
  %5835 = vmatpush1.bf16.msra.mxu0 0
  %5836 = vmatprep.subr.bf16.mxu0 0
  %5837 = vmatpush1.bf16.msra.mxu0 0
  %5838 = vmatprep.subr.bf16.mxu0 0
  %5839 = vmatpush1.bf16.msra.mxu0 0
  %5840 = vmatprep.subr.bf16.mxu0 0
  %5841 = vmatpush1.bf16.msra.mxu0 0
  %5842 = vmatprep.subr.bf16.mxu0 0
  %5843 = vmatpush1.bf16.msra.mxu0 0
  %5844 = vmatprep.subr.bf16.mxu0 0
  %5845 = vmatpush1.bf16.msra.mxu0 0
  %5846 = vmatprep.subr.bf16.mxu0 0
  %5847 = vmatpush1.bf16.msra.mxu0 0
  %5848 = vmatprep.subr.bf16.mxu0 0
  %5849 = vmatpush1.bf16.msra.mxu0 0
  %5850 = vmatprep.subr.bf16.mxu0 0
  %5851 = vmatpush1.bf16.msra.mxu0 0
  %5852 = vmatprep.subr.bf16.mxu0 0
  %5853 = vmatpush1.bf16.msra.mxu0 0
  %5854 = vmatprep.subr.bf16.mxu0 0
  %5855 = vmatpush1.bf16.msra.mxu0 0
  %5856 = vmatprep.mubr.bf16.mxu0 0
  %5857 = vmatmul.mubr.bf16.gmra.mrb[0].mxu0 %v5822
  %v5858 = vpop.f32.mrb[0].mxu0
  %v5859 = vadd.f32 0.0, %v5858
  %v5860 = vpop.f32.mrb[0].mxu0
  %v5861 = vpop.f32.mrb[0].mxu0
  %v5862 = vadd.f32 0.0, %v5861
  %v5863 = vpop.f32.mrb[0].mxu0
  %5864 = vdwg.mxu0
  %v5865 = vld [vmem:[%s18 + $0x2] sm:$0x1]
  %v5866 = vlaneseq
  %v5867 = vshrl.u32 %v5866, 7
  %v5868 = vsub.s32 0, %v5867
  %v5869 = vrot.slane %v5865, %v5868
  %v5870 = vmul.f32 %v5859, %v5869
  %v5871 = vmul.f32 %v5862, %v5869
  %v5872 = vadd.f32 %v5805, %v5870
  %v5873 = vadd.f32 %v5806, %v5871
  %s5874 = scalar_lea.vmem %s7, 24
  %v5875 = vld [vmem:[%s5874] sm:$0xf]
  %v5876 = vld [vmem:[%s5874 + $0x4] sm:$0xf]
  %v5879 = vunpack.c.l.b16 %v5875
  %v5880 = vunpack.c.l.b16 %v5876
  %v5881 = vpack.c.b16 %v5880, %v5879
  %5882 = vrot.lane.b32.xlu0 %v5672, 1
  %v5883 = vpop.permute.xlu0 %5882
  %5884 = vrot.lane.b32.xlu0 %v5673, 1
  %v5885 = vpop.permute.xlu0 %5884
  %v5886 = vsel %vm531, %v5883, %v5885
  %v5889 = vsel %vm133, %v5881, 0
  %5891 = vmatprep.subr.bf16.mxu0 0
  %5892 = vmatpush1.bf16.msra.mxu0 %v5886
  %5893 = vmatprep.subr.bf16.mxu0 0
  %5894 = vmatpush1.bf16.msra.mxu0 0
  %5895 = vmatprep.subr.bf16.mxu0 0
  %5896 = vmatpush1.bf16.msra.mxu0 0
  %5897 = vmatprep.subr.bf16.mxu0 0
  %5898 = vmatpush1.bf16.msra.mxu0 0
  %5899 = vmatprep.subr.bf16.mxu0 0
  %5900 = vmatpush1.bf16.msra.mxu0 0
  %5901 = vmatprep.subr.bf16.mxu0 0
  %5902 = vmatpush1.bf16.msra.mxu0 0
  %5903 = vmatprep.subr.bf16.mxu0 0
  %5904 = vmatpush1.bf16.msra.mxu0 0
  %5905 = vmatprep.subr.bf16.mxu0 0
  %5906 = vmatpush1.bf16.msra.mxu0 0
  %5907 = vmatprep.subr.bf16.mxu0 0
  %5908 = vmatpush1.bf16.msra.mxu0 0
  %5909 = vmatprep.subr.bf16.mxu0 0
  %5910 = vmatpush1.bf16.msra.mxu0 0
  %5911 = vmatprep.subr.bf16.mxu0 0
  %5912 = vmatpush1.bf16.msra.mxu0 0
  %5913 = vmatprep.subr.bf16.mxu0 0
  %5914 = vmatpush1.bf16.msra.mxu0 0
  %5915 = vmatprep.subr.bf16.mxu0 0
  %5916 = vmatpush1.bf16.msra.mxu0 0
  %5917 = vmatprep.subr.bf16.mxu0 0
  %5918 = vmatpush1.bf16.msra.mxu0 0
  %5919 = vmatprep.subr.bf16.mxu0 0
  %5920 = vmatpush1.bf16.msra.mxu0 0
  %5921 = vmatprep.subr.bf16.mxu0 0
  %5922 = vmatpush1.bf16.msra.mxu0 0
  %5923 = vmatprep.mubr.bf16.mxu0 0
  %5924 = vmatmul.mubr.bf16.gmra.mrb[0].mxu0 %v5889
  %v5925 = vpop.f32.mrb[0].mxu0
  %v5926 = vadd.f32 0.0, %v5925
  %v5927 = vpop.f32.mrb[0].mxu0
  %v5928 = vpop.f32.mrb[0].mxu0
  %v5929 = vadd.f32 0.0, %v5928
  %v5930 = vpop.f32.mrb[0].mxu0
  %5931 = vdwg.mxu0
  %v5932 = vld [vmem:[%s18 + $0x3] sm:$0x1]
  %v5933 = vlaneseq
  %v5934 = vshrl.u32 %v5933, 7
  %v5935 = vsub.s32 0, %v5934
  %v5936 = vrot.slane %v5932, %v5935
  %v5937 = vmul.f32 %v5926, %v5936
  %v5938 = vmul.f32 %v5929, %v5936
  %v5939 = vadd.f32 %v5872, %v5937
  %v5940 = vadd.f32 %v5873, %v5938
  %s5941 = scalar_lea.vmem %s7, 32
  %v5942 = vld [vmem:[%s5941] sm:$0xf]
  %v5943 = vld [vmem:[%s5941 + $0x4] sm:$0xf]
  %v5946 = vunpack.c.l.b16 %v5942
  %v5947 = vunpack.c.l.b16 %v5943
  %v5948 = vpack.c.b16 %v5947, %v5946
  %v5950 = vsel %vm133, %v5948, 0
  %5952 = vmatprep.subr.bf16.mxu0 0
  %5953 = vmatpush1.bf16.msra.mxu0 %v5673
  %5954 = vmatprep.subr.bf16.mxu0 0
  %5955 = vmatpush1.bf16.msra.mxu0 0
  %5956 = vmatprep.subr.bf16.mxu0 0
  %5957 = vmatpush1.bf16.msra.mxu0 0
  %5958 = vmatprep.subr.bf16.mxu0 0
  %5959 = vmatpush1.bf16.msra.mxu0 0
  %5960 = vmatprep.subr.bf16.mxu0 0
  %5961 = vmatpush1.bf16.msra.mxu0 0
  %5962 = vmatprep.subr.bf16.mxu0 0
  %5963 = vmatpush1.bf16.msra.mxu0 0
  %5964 = vmatprep.subr.bf16.mxu0 0
  %5965 = vmatpush1.bf16.msra.mxu0 0
  %5966 = vmatprep.subr.bf16.mxu0 0
  %5967 = vmatpush1.bf16.msra.mxu0 0
  %5968 = vmatprep.subr.bf16.mxu0 0
  %5969 = vmatpush1.bf16.msra.mxu0 0
  %5970 = vmatprep.subr.bf16.mxu0 0
  %5971 = vmatpush1.bf16.msra.mxu0 0
  %5972 = vmatprep.subr.bf16.mxu0 0
  %5973 = vmatpush1.bf16.msra.mxu0 0
  %5974 = vmatprep.subr.bf16.mxu0 0
  %5975 = vmatpush1.bf16.msra.mxu0 0
  %5976 = vmatprep.subr.bf16.mxu0 0
  %5977 = vmatpush1.bf16.msra.mxu0 0
  %5978 = vmatprep.subr.bf16.mxu0 0
  %5979 = vmatpush1.bf16.msra.mxu0 0
  %5980 = vmatprep.subr.bf16.mxu0 0
  %5981 = vmatpush1.bf16.msra.mxu0 0
  %5982 = vmatprep.subr.bf16.mxu0 0
  %5983 = vmatpush1.bf16.msra.mxu0 0
  %5984 = vmatprep.mubr.bf16.mxu0 0
  %5985 = vmatmul.mubr.bf16.gmra.mrb[0].mxu0 %v5950
  %v5986 = vpop.f32.mrb[0].mxu0
  %v5987 = vadd.f32 0.0, %v5986
  %v5988 = vpop.f32.mrb[0].mxu0
  %v5989 = vpop.f32.mrb[0].mxu0
  %v5990 = vadd.f32 0.0, %v5989
  %v5991 = vpop.f32.mrb[0].mxu0
  %5992 = vdwg.mxu0
  %v5993 = vadd.f32 %v5939, %v5987
  %v5994 = vadd.f32 %v5940, %v5990
  %v5995 = vld [vmem:[#allocation2 + $0x8] sm:$0xff]
  %v5996 = vld [vmem:[#allocation2 + $0x10] sm:$0xff]
  %s5997 = scalar_lea.vmem %s7, 40
  %v5998 = vld [vmem:[%s5997] sm:$0xf]
  %v5999 = vld [vmem:[%s5997 + $0x4] sm:$0xf]
  %v6002 = vunpack.c.l.b16 %v5998
  %v6003 = vunpack.c.l.b16 %v5999
  %v6004 = vpack.c.b16 %v6003, %v6002
  %6007 = vrot.lane.b32.xlu0 %v5995, 127
  %v6008 = vpop.permute.xlu0 %6007
  %6009 = vrot.lane.b32.xlu0 %v5996, 127
  %v6010 = vpop.permute.xlu0 %6009
  %v6011 = vsel %vm769, %v6008, %v6010
  %v6014 = vsel %vm133, %v6004, 0
  %6016 = vmatprep.subr.bf16.mxu0 0
  %6017 = vmatpush1.bf16.msra.mxu0 %v6011
  %6018 = vmatprep.subr.bf16.mxu0 0
  %6019 = vmatpush1.bf16.msra.mxu0 0
  %6020 = vmatprep.subr.bf16.mxu0 0
  %6021 = vmatpush1.bf16.msra.mxu0 0
  %6022 = vmatprep.subr.bf16.mxu0 0
  %6023 = vmatpush1.bf16.msra.mxu0 0
  %6024 = vmatprep.subr.bf16.mxu0 0
  %6025 = vmatpush1.bf16.msra.mxu0 0
  %6026 = vmatprep.subr.bf16.mxu0 0
  %6027 = vmatpush1.bf16.msra.mxu0 0
  %6028 = vmatprep.subr.bf16.mxu0 0
  %6029 = vmatpush1.bf16.msra.mxu0 0
  %6030 = vmatprep.subr.bf16.mxu0 0
  %6031 = vmatpush1.bf16.msra.mxu0 0
  %6032 = vmatprep.subr.bf16.mxu0 0
  %6033 = vmatpush1.bf16.msra.mxu0 0
  %6034 = vmatprep.subr.bf16.mxu0 0
  %6035 = vmatpush1.bf16.msra.mxu0 0
  %6036 = vmatprep.subr.bf16.mxu0 0
  %6037 = vmatpush1.bf16.msra.mxu0 0
  %6038 = vmatprep.subr.bf16.mxu0 0
  %6039 = vmatpush1.bf16.msra.mxu0 0
  %6040 = vmatprep.subr.bf16.mxu0 0
  %6041 = vmatpush1.bf16.msra.mxu0 0
  %6042 = vmatprep.subr.bf16.mxu0 0
  %6043 = vmatpush1.bf16.msra.mxu0 0
  %6044 = vmatprep.subr.bf16.mxu0 0
  %6045 = vmatpush1.bf16.msra.mxu0 0
  %6046 = vmatprep.subr.bf16.mxu0 0
  %6047 = vmatpush1.bf16.msra.mxu0 0
  %6048 = vmatprep.mubr.bf16.mxu0 0
  %6049 = vmatmul.mubr.bf16.gmra.mrb[0].mxu0 %v6014
  %v6050 = vpop.f32.mrb[0].mxu0
  %v6051 = vadd.f32 0.0, %v6050
  %v6052 = vpop.f32.mrb[0].mxu0
  %v6053 = vpop.f32.mrb[0].mxu0
  %v6054 = vadd.f32 0.0, %v6053
  %v6055 = vpop.f32.mrb[0].mxu0
  %6056 = vdwg.mxu0
  %v6057 = vld [vmem:[%s18 + $0x5] sm:$0x1]
  %v6058 = vlaneseq
  %v6059 = vshrl.u32 %v6058, 7
  %v6060 = vsub.s32 0, %v6059
  %v6061 = vrot.slane %v6057, %v6060
  %v6062 = vmul.f32 %v6051, %v6061
  %v6063 = vmul.f32 %v6054, %v6061
  %v6064 = vadd.f32 %v5993, %v6062
  %v6065 = vadd.f32 %v5994, %v6063
  %s6066 = scalar_lea.vmem %s7, 48
  %v6067 = vld [vmem:[%s6066] sm:$0xf]
  %v6068 = vld [vmem:[%s6066 + $0x4] sm:$0xf]
  %v6071 = vunpack.c.l.b16 %v6067
  %v6072 = vunpack.c.l.b16 %v6068
  %v6073 = vpack.c.b16 %v6072, %v6071
  %6074 = vrot.lane.b32.xlu0 %v5995, 121
  %v6075 = vpop.permute.xlu0 %6074
  %6076 = vrot.lane.b32.xlu0 %v5996, 121
  %v6077 = vpop.permute.xlu0 %6076
  %v6078 = vsel %vm3431, %v6075, %v6077
  %v6081 = vsel %vm133, %v6073, 0
  %6083 = vmatprep.subr.bf16.mxu0 0
  %6084 = vmatpush1.bf16.msra.mxu0 %v6078
  %6085 = vmatprep.subr.bf16.mxu0 0
  %6086 = vmatpush1.bf16.msra.mxu0 0
  %6087 = vmatprep.subr.bf16.mxu0 0
  %6088 = vmatpush1.bf16.msra.mxu0 0
  %6089 = vmatprep.subr.bf16.mxu0 0
  %6090 = vmatpush1.bf16.msra.mxu0 0
  %6091 = vmatprep.subr.bf16.mxu0 0
  %6092 = vmatpush1.bf16.msra.mxu0 0
  %6093 = vmatprep.subr.bf16.mxu0 0
  %6094 = vmatpush1.bf16.msra.mxu0 0
  %6095 = vmatprep.subr.bf16.mxu0 0
  %6096 = vmatpush1.bf16.msra.mxu0 0
  %6097 = vmatprep.subr.bf16.mxu0 0
  %6098 = vmatpush1.bf16.msra.mxu0 0
  %6099 = vmatprep.subr.bf16.mxu0 0
  %6100 = vmatpush1.bf16.msra.mxu0 0
  %6101 = vmatprep.subr.bf16.mxu0 0
  %6102 = vmatpush1.bf16.msra.mxu0 0
  %6103 = vmatprep.subr.bf16.mxu0 0
  %6104 = vmatpush1.bf16.msra.mxu0 0
  %6105 = vmatprep.subr.bf16.mxu0 0
  %6106 = vmatpush1.bf16.msra.mxu0 0
  %6107 = vmatprep.subr.bf16.mxu0 0
  %6108 = vmatpush1.bf16.msra.mxu0 0
  %6109 = vmatprep.subr.bf16.mxu0 0
  %6110 = vmatpush1.bf16.msra.mxu0 0
  %6111 = vmatprep.subr.bf16.mxu0 0
  %6112 = vmatpush1.bf16.msra.mxu0 0
  %6113 = vmatprep.subr.bf16.mxu0 0
  %6114 = vmatpush1.bf16.msra.mxu0 0
  %6115 = vmatprep.mubr.bf16.mxu0 0
  %6116 = vmatmul.mubr.bf16.gmra.mrb[0].mxu0 %v6081
  %v6117 = vpop.f32.mrb[0].mxu0
  %v6118 = vadd.f32 0.0, %v6117
  %v6119 = vpop.f32.mrb[0].mxu0
  %v6120 = vpop.f32.mrb[0].mxu0
  %v6121 = vadd.f32 0.0, %v6120
  %v6122 = vpop.f32.mrb[0].mxu0
  %6123 = vdwg.mxu0
  %v6124 = vld [vmem:[%s18 + $0x6] sm:$0x1]
  %v6125 = vlaneseq
  %v6126 = vshrl.u32 %v6125, 7
  %v6127 = vsub.s32 0, %v6126
  %v6128 = vrot.slane %v6124, %v6127
  %v6129 = vmul.f32 %v6118, %v6128
  %v6130 = vmul.f32 %v6121, %v6128
  %v6131 = vadd.f32 %v6064, %v6129
  %v6132 = vadd.f32 %v6065, %v6130
  %s6133 = scalar_lea.vmem %s7, 56
  %v6134 = vld [vmem:[%s6133] sm:$0xf]
  %v6135 = vld [vmem:[%s6133 + $0x4] sm:$0xf]
  %v6138 = vunpack.c.l.b16 %v6134
  %v6139 = vunpack.c.l.b16 %v6135
  %v6140 = vpack.c.b16 %v6139, %v6138
  %6141 = vrot.lane.b32.xlu0 %v5995, 120
  %v6142 = vpop.permute.xlu0 %6141
  %6143 = vrot.lane.b32.xlu0 %v5996, 120
  %v6144 = vpop.permute.xlu0 %6143
  %v6145 = vsel %vm3499, %v6142, %v6144
  %v6148 = vsel %vm133, %v6140, 0
  %6150 = vmatprep.subr.bf16.mxu0 0
  %6151 = vmatpush1.bf16.msra.mxu0 %v6145
  %6152 = vmatprep.subr.bf16.mxu0 0
  %6153 = vmatpush1.bf16.msra.mxu0 0
  %6154 = vmatprep.subr.bf16.mxu0 0
  %6155 = vmatpush1.bf16.msra.mxu0 0
  %6156 = vmatprep.subr.bf16.mxu0 0
  %6157 = vmatpush1.bf16.msra.mxu0 0
  %6158 = vmatprep.subr.bf16.mxu0 0
  %6159 = vmatpush1.bf16.msra.mxu0 0
  %6160 = vmatprep.subr.bf16.mxu0 0
  %6161 = vmatpush1.bf16.msra.mxu0 0
  %6162 = vmatprep.subr.bf16.mxu0 0
  %6163 = vmatpush1.bf16.msra.mxu0 0
  %6164 = vmatprep.subr.bf16.mxu0 0
  %6165 = vmatpush1.bf16.msra.mxu0 0
  %6166 = vmatprep.subr.bf16.mxu0 0
  %6167 = vmatpush1.bf16.msra.mxu0 0
  %6168 = vmatprep.subr.bf16.mxu0 0
  %6169 = vmatpush1.bf16.msra.mxu0 0
  %6170 = vmatprep.subr.bf16.mxu0 0
  %6171 = vmatpush1.bf16.msra.mxu0 0
  %6172 = vmatprep.subr.bf16.mxu0 0
  %6173 = vmatpush1.bf16.msra.mxu0 0
  %6174 = vmatprep.subr.bf16.mxu0 0
  %6175 = vmatpush1.bf16.msra.mxu0 0
  %6176 = vmatprep.subr.bf16.mxu0 0
  %6177 = vmatpush1.bf16.msra.mxu0 0
  %6178 = vmatprep.subr.bf16.mxu0 0
  %6179 = vmatpush1.bf16.msra.mxu0 0
  %6180 = vmatprep.subr.bf16.mxu0 0
  %6181 = vmatpush1.bf16.msra.mxu0 0
  %6182 = vmatprep.mubr.bf16.mxu0 0
  %6183 = vmatmul.mubr.bf16.gmra.mrb[0].mxu0 %v6148
  %v6184 = vpop.f32.mrb[0].mxu0
  %v6185 = vadd.f32 0.0, %v6184
  %v6186 = vpop.f32.mrb[0].mxu0
  %v6187 = vpop.f32.mrb[0].mxu0
  %v6188 = vadd.f32 0.0, %v6187
  %v6189 = vpop.f32.mrb[0].mxu0
  %6190 = vdwg.mxu0
  %v6191 = vld [vmem:[%s18 + $0x7] sm:$0x1]
  %v6192 = vlaneseq
  %v6193 = vshrl.u32 %v6192, 7
  %v6194 = vsub.s32 0, %v6193
  %v6195 = vrot.slane %v6191, %v6194
  %v6196 = vmul.f32 %v6185, %v6195
  %v6197 = vmul.f32 %v6188, %v6195
  %v6198 = vadd.f32 %v6131, %v6196
  %v6199 = vadd.f32 %v6132, %v6197
  %s6200 = scalar_lea.vmem %s7, 64
  %v6201 = vld [vmem:[%s6200] sm:$0xf]
  %v6202 = vld [vmem:[%s6200 + $0x4] sm:$0xf]
  %v6205 = vunpack.c.l.b16 %v6201
  %v6206 = vunpack.c.l.b16 %v6202
  %v6207 = vpack.c.b16 %v6206, %v6205
  %6208 = vrot.lane.b32.xlu0 %v5995, 119
  %v6209 = vpop.permute.xlu0 %6208
  %6210 = vrot.lane.b32.xlu0 %v5996, 119
  %v6211 = vpop.permute.xlu0 %6210
  %v6212 = vsel %vm3567, %v6209, %v6211
  %v6215 = vsel %vm133, %v6207, 0
  %6217 = vmatprep.subr.bf16.mxu0 0
  %6218 = vmatpush1.bf16.msra.mxu0 %v6212
  %6219 = vmatprep.subr.bf16.mxu0 0
  %6220 = vmatpush1.bf16.msra.mxu0 0
  %6221 = vmatprep.subr.bf16.mxu0 0
  %6222 = vmatpush1.bf16.msra.mxu0 0
  %6223 = vmatprep.subr.bf16.mxu0 0
  %6224 = vmatpush1.bf16.msra.mxu0 0
  %6225 = vmatprep.subr.bf16.mxu0 0
  %6226 = vmatpush1.bf16.msra.mxu0 0
  %6227 = vmatprep.subr.bf16.mxu0 0
  %6228 = vmatpush1.bf16.msra.mxu0 0
  %6229 = vmatprep.subr.bf16.mxu0 0
  %6230 = vmatpush1.bf16.msra.mxu0 0
  %6231 = vmatprep.subr.bf16.mxu0 0
  %6232 = vmatpush1.bf16.msra.mxu0 0
  %6233 = vmatprep.subr.bf16.mxu0 0
  %6234 = vmatpush1.bf16.msra.mxu0 0
  %6235 = vmatprep.subr.bf16.mxu0 0
  %6236 = vmatpush1.bf16.msra.mxu0 0
  %6237 = vmatprep.subr.bf16.mxu0 0
  %6238 = vmatpush1.bf16.msra.mxu0 0
  %6239 = vmatprep.subr.bf16.mxu0 0
  %6240 = vmatpush1.bf16.msra.mxu0 0
  %6241 = vmatprep.subr.bf16.mxu0 0
  %6242 = vmatpush1.bf16.msra.mxu0 0
  %6243 = vmatprep.subr.bf16.mxu0 0
  %6244 = vmatpush1.bf16.msra.mxu0 0
  %6245 = vmatprep.subr.bf16.mxu0 0
  %6246 = vmatpush1.bf16.msra.mxu0 0
  %6247 = vmatprep.subr.bf16.mxu0 0
  %6248 = vmatpush1.bf16.msra.mxu0 0
  %6249 = vmatprep.mubr.bf16.mxu0 0
  %6250 = vmatmul.mubr.bf16.gmra.mrb[0].mxu0 %v6215
  %v6251 = vpop.f32.mrb[0].mxu0
  %v6252 = vadd.f32 0.0, %v6251
  %v6253 = vpop.f32.mrb[0].mxu0
  %v6254 = vpop.f32.mrb[0].mxu0
  %v6255 = vadd.f32 0.0, %v6254
  %v6256 = vpop.f32.mrb[0].mxu0
  %6257 = vdwg.mxu0
  %v6258 = vld [vmem:[%s18 + $0x8] sm:$0x1]
  %v6259 = vlaneseq
  %v6260 = vshrl.u32 %v6259, 7
  %v6261 = vsub.s32 0, %v6260
  %v6262 = vrot.slane %v6258, %v6261
  %v6263 = vmul.f32 %v6252, %v6262
  %v6264 = vmul.f32 %v6255, %v6262
  %v6265 = vadd.f32 %v6198, %v6263
  %v6266 = vadd.f32 %v6199, %v6264
  %6267 = vadd.xlane.f32.xlu0 %v6265
  %v6268 = vpop.xlane.xlu0 %6267
  %6269 = vadd.xlane.f32.xlu0 %v6266
  %v6270 = vpop.xlane.xlu0 %6269
  %v6271 = vmul.f32 %v6265, %v6265
  %v6272 = vmul.f32 %v6266, %v6266
  %6273 = vadd.xlane.f32.xlu0 %v6271
  %v6274 = vpop.xlane.xlu0 %6273
  %6275 = vadd.xlane.f32.xlu0 %v6272
  %v6276 = vpop.xlane.xlu0 %6275
  %v6277 = vmul.f32 %v6268, 0.0078125
  %v6278 = vmul.f32 %v6270, 0.0078125
  %v6279 = vmul.f32 %v6274, 0.0078125
  %v6280 = vmul.f32 %v6276, 0.0078125
  %v6281 = vmul.f32 %v6277, %v6277
  %v6282 = vmul.f32 %v6278, %v6278
  %v6283 = vsub.f32 %v6279, %v6281
  %v6284 = vsub.f32 %v6280, %v6282
  %v6285 = vld [vmem:[%s15] sm:$0xff]
  %v6286 = vld [vmem:[%s15 + $0x8] sm:$0xff]
  %v6287 = vadd.f32 %v6283, 1e-05
  %v6288 = vadd.f32 %v6284, 1e-05
  %v6289 = vrsqrt.pop %v6287
  %v6290 = vrsqrt.pop %v6288
  %v6291 = vmul.f32 %v6285, %v6289
  %v6292 = vmul.f32 %v6286, %v6290
  %v6293 = vmul.f32 %v6277, %v6291
  %v6294 = vmul.f32 %v6278, %v6292
  %6297 = vrot.lane.b32.xlu0 %v6293, 1
  %v6298 = vpop.permute.xlu0 %6297
  %6299 = vrot.lane.b32.xlu0 %v6294, 1
  %v6300 = vpop.permute.xlu0 %6299
  %v6303 = vsub.f32 %v6285, %v6298
  %v6304 = vsub.f32 %v6286, %v6300
  %6306 = vset.pattern.permute.xlu0 0
  %6307 = vperm.xlu0 %6306, %v6291
  %v6308 = vpop.permute.xlu0 %6307
  %6311 = vset.pattern.permute.xlu0 0
  %6312 = vperm.xlu0 %6311, %v6292
  %v6313 = vpop.permute.xlu0 %6312
  %v6315 = vmul.f32 %v6265, %v6308
  %v6316 = vmul.f32 %v6266, %v6313
  %6318 = vset.pattern.permute.xlu0 1
  %6319 = vperm.xlu0 %6318, %v6303
  %v6320 = vpop.permute.xlu0 %6319
  %6323 = vset.pattern.permute.xlu0 1
  %6324 = vperm.xlu0 %6323, %v6304
  %v6325 = vpop.permute.xlu0 %6324
  %v6327 = vadd.f32 %v6315, %v6320
  %v6328 = vadd.f32 %v6316, %v6325
  %v6329 = vmax.f32 %v6327, 0.0
  %v6330 = vmax.f32 %v6328, 0.0
  %v6331 = vpack.c.bf16 %v6330, %v6329
  %6332 = vst [vmem:[#allocation2 + $0x8] sm:$0xff] %v6331
  %v6333 = vld [vmem:[#allocation2] sm:$0xff]
  %v6334 = vld [vmem:[#allocation2 + $0x8] sm:$0xff]
  %v6335 = vld [vmem:[%s8] sm:$0xf]
  %v6336 = vld [vmem:[%s8 + $0x4] sm:$0xf]
  %v6339 = vunpack.c.l.b16 %v6335
  %v6340 = vunpack.c.l.b16 %v6336
  %v6341 = vpack.c.b16 %v6340, %v6339
  %6344 = vrot.lane.b32.xlu0 %v6333, 9
  %v6345 = vpop.permute.xlu0 %6344
  %6346 = vrot.lane.b32.xlu0 %v6334, 9
  %v6347 = vpop.permute.xlu0 %6346
  %v6348 = vsel %vm3037, %v6345, %v6347
  %v6351 = vsel %vm133, %v6341, 0
  %6353 = vmatprep.subr.bf16.mxu0 0
  %6354 = vmatpush1.bf16.msra.mxu0 %v6348
  %6355 = vmatprep.subr.bf16.mxu0 0
  %6356 = vmatpush1.bf16.msra.mxu0 0
  %6357 = vmatprep.subr.bf16.mxu0 0
  %6358 = vmatpush1.bf16.msra.mxu0 0
  %6359 = vmatprep.subr.bf16.mxu0 0
  %6360 = vmatpush1.bf16.msra.mxu0 0
  %6361 = vmatprep.subr.bf16.mxu0 0
  %6362 = vmatpush1.bf16.msra.mxu0 0
  %6363 = vmatprep.subr.bf16.mxu0 0
  %6364 = vmatpush1.bf16.msra.mxu0 0
  %6365 = vmatprep.subr.bf16.mxu0 0
  %6366 = vmatpush1.bf16.msra.mxu0 0
  %6367 = vmatprep.subr.bf16.mxu0 0
  %6368 = vmatpush1.bf16.msra.mxu0 0
  %6369 = vmatprep.subr.bf16.mxu0 0
  %6370 = vmatpush1.bf16.msra.mxu0 0
  %6371 = vmatprep.subr.bf16.mxu0 0
  %6372 = vmatpush1.bf16.msra.mxu0 0
  %6373 = vmatprep.subr.bf16.mxu0 0
  %6374 = vmatpush1.bf16.msra.mxu0 0
  %6375 = vmatprep.subr.bf16.mxu0 0
  %6376 = vmatpush1.bf16.msra.mxu0 0
  %6377 = vmatprep.subr.bf16.mxu0 0
  %6378 = vmatpush1.bf16.msra.mxu0 0
  %6379 = vmatprep.subr.bf16.mxu0 0
  %6380 = vmatpush1.bf16.msra.mxu0 0
  %6381 = vmatprep.subr.bf16.mxu0 0
  %6382 = vmatpush1.bf16.msra.mxu0 0
  %6383 = vmatprep.subr.bf16.mxu0 0
  %6384 = vmatpush1.bf16.msra.mxu0 0
  %6385 = vmatprep.mubr.bf16.mxu0 0
  %6386 = vmatmul.mubr.bf16.gmra.mrb[0].mxu0 %v6351
  %v6387 = vpop.f32.mrb[0].mxu0
  %v6388 = vadd.f32 0.0, %v6387
  %v6389 = vpop.f32.mrb[0].mxu0
  %v6390 = vpop.f32.mrb[0].mxu0
  %v6391 = vadd.f32 0.0, %v6390
  %v6392 = vpop.f32.mrb[0].mxu0
  %6393 = vdwg.mxu0
  %v6394 = vld [vmem:[%s18] sm:$0x1]
  %v6395 = vlaneseq
  %v6396 = vshrl.u32 %v6395, 7
  %v6397 = vsub.s32 0, %v6396
  %v6398 = vrot.slane %v6394, %v6397
  %v6399 = vmul.f32 %v6388, %v6398
  %v6400 = vmul.f32 %v6391, %v6398
  %s6401 = scalar_lea.vmem %s8, 8
  %v6402 = vld [vmem:[%s6401] sm:$0xf]
  %v6403 = vld [vmem:[%s6401 + $0x4] sm:$0xf]
  %v6406 = vunpack.c.l.b16 %v6402
  %v6407 = vunpack.c.l.b16 %v6403
  %v6408 = vpack.c.b16 %v6407, %v6406
  %6409 = vrot.lane.b32.xlu0 %v6333, 8
  %v6410 = vpop.permute.xlu0 %6409
  %6411 = vrot.lane.b32.xlu0 %v6334, 8
  %v6412 = vpop.permute.xlu0 %6411
  %v6413 = vsel %vm3103, %v6410, %v6412
  %v6416 = vsel %vm133, %v6408, 0
  %6418 = vmatprep.subr.bf16.mxu0 0
  %6419 = vmatpush1.bf16.msra.mxu0 %v6413
  %6420 = vmatprep.subr.bf16.mxu0 0
  %6421 = vmatpush1.bf16.msra.mxu0 0
  %6422 = vmatprep.subr.bf16.mxu0 0
  %6423 = vmatpush1.bf16.msra.mxu0 0
  %6424 = vmatprep.subr.bf16.mxu0 0
  %6425 = vmatpush1.bf16.msra.mxu0 0
  %6426 = vmatprep.subr.bf16.mxu0 0
  %6427 = vmatpush1.bf16.msra.mxu0 0
  %6428 = vmatprep.subr.bf16.mxu0 0
  %6429 = vmatpush1.bf16.msra.mxu0 0
  %6430 = vmatprep.subr.bf16.mxu0 0
  %6431 = vmatpush1.bf16.msra.mxu0 0
  %6432 = vmatprep.subr.bf16.mxu0 0
  %6433 = vmatpush1.bf16.msra.mxu0 0
  %6434 = vmatprep.subr.bf16.mxu0 0
  %6435 = vmatpush1.bf16.msra.mxu0 0
  %6436 = vmatprep.subr.bf16.mxu0 0
  %6437 = vmatpush1.bf16.msra.mxu0 0
  %6438 = vmatprep.subr.bf16.mxu0 0
  %6439 = vmatpush1.bf16.msra.mxu0 0
  %6440 = vmatprep.subr.bf16.mxu0 0
  %6441 = vmatpush1.bf16.msra.mxu0 0
  %6442 = vmatprep.subr.bf16.mxu0 0
  %6443 = vmatpush1.bf16.msra.mxu0 0
  %6444 = vmatprep.subr.bf16.mxu0 0
  %6445 = vmatpush1.bf16.msra.mxu0 0
  %6446 = vmatprep.subr.bf16.mxu0 0
  %6447 = vmatpush1.bf16.msra.mxu0 0
  %6448 = vmatprep.subr.bf16.mxu0 0
  %6449 = vmatpush1.bf16.msra.mxu0 0
  %6450 = vmatprep.mubr.bf16.mxu0 0
  %6451 = vmatmul.mubr.bf16.gmra.mrb[0].mxu0 %v6416
  %v6452 = vpop.f32.mrb[0].mxu0
  %v6453 = vadd.f32 0.0, %v6452
  %v6454 = vpop.f32.mrb[0].mxu0
  %v6455 = vpop.f32.mrb[0].mxu0
  %v6456 = vadd.f32 0.0, %v6455
  %v6457 = vpop.f32.mrb[0].mxu0
  %6458 = vdwg.mxu0
  %v6459 = vld [vmem:[%s18 + $0x1] sm:$0x1]
  %v6460 = vlaneseq
  %v6461 = vshrl.u32 %v6460, 7
  %v6462 = vsub.s32 0, %v6461
  %v6463 = vrot.slane %v6459, %v6462
  %v6464 = vmul.f32 %v6453, %v6463
  %v6465 = vmul.f32 %v6456, %v6463
  %v6466 = vadd.f32 %v6399, %v6464
  %v6467 = vadd.f32 %v6400, %v6465
  %s6468 = scalar_lea.vmem %s8, 16
  %v6469 = vld [vmem:[%s6468] sm:$0xf]
  %v6470 = vld [vmem:[%s6468 + $0x4] sm:$0xf]
  %v6473 = vunpack.c.l.b16 %v6469
  %v6474 = vunpack.c.l.b16 %v6470
  %v6475 = vpack.c.b16 %v6474, %v6473
  %6476 = vrot.lane.b32.xlu0 %v6333, 7
  %v6477 = vpop.permute.xlu0 %6476
  %6478 = vrot.lane.b32.xlu0 %v6334, 7
  %v6479 = vpop.permute.xlu0 %6478
  %v6480 = vsel %vm3171, %v6477, %v6479
  %v6483 = vsel %vm133, %v6475, 0
  %6485 = vmatprep.subr.bf16.mxu0 0
  %6486 = vmatpush1.bf16.msra.mxu0 %v6480
  %6487 = vmatprep.subr.bf16.mxu0 0
  %6488 = vmatpush1.bf16.msra.mxu0 0
  %6489 = vmatprep.subr.bf16.mxu0 0
  %6490 = vmatpush1.bf16.msra.mxu0 0
  %6491 = vmatprep.subr.bf16.mxu0 0
  %6492 = vmatpush1.bf16.msra.mxu0 0
  %6493 = vmatprep.subr.bf16.mxu0 0
  %6494 = vmatpush1.bf16.msra.mxu0 0
  %6495 = vmatprep.subr.bf16.mxu0 0
  %6496 = vmatpush1.bf16.msra.mxu0 0
  %6497 = vmatprep.subr.bf16.mxu0 0
  %6498 = vmatpush1.bf16.msra.mxu0 0
  %6499 = vmatprep.subr.bf16.mxu0 0
  %6500 = vmatpush1.bf16.msra.mxu0 0
  %6501 = vmatprep.subr.bf16.mxu0 0
  %6502 = vmatpush1.bf16.msra.mxu0 0
  %6503 = vmatprep.subr.bf16.mxu0 0
  %6504 = vmatpush1.bf16.msra.mxu0 0
  %6505 = vmatprep.subr.bf16.mxu0 0
  %6506 = vmatpush1.bf16.msra.mxu0 0
  %6507 = vmatprep.subr.bf16.mxu0 0
  %6508 = vmatpush1.bf16.msra.mxu0 0
  %6509 = vmatprep.subr.bf16.mxu0 0
  %6510 = vmatpush1.bf16.msra.mxu0 0
  %6511 = vmatprep.subr.bf16.mxu0 0
  %6512 = vmatpush1.bf16.msra.mxu0 0
  %6513 = vmatprep.subr.bf16.mxu0 0
  %6514 = vmatpush1.bf16.msra.mxu0 0
  %6515 = vmatprep.subr.bf16.mxu0 0
  %6516 = vmatpush1.bf16.msra.mxu0 0
  %6517 = vmatprep.mubr.bf16.mxu0 0
  %6518 = vmatmul.mubr.bf16.gmra.mrb[0].mxu0 %v6483
  %v6519 = vpop.f32.mrb[0].mxu0
  %v6520 = vadd.f32 0.0, %v6519
  %v6521 = vpop.f32.mrb[0].mxu0
  %v6522 = vpop.f32.mrb[0].mxu0
  %v6523 = vadd.f32 0.0, %v6522
  %v6524 = vpop.f32.mrb[0].mxu0
  %6525 = vdwg.mxu0
  %v6526 = vld [vmem:[%s18 + $0x2] sm:$0x1]
  %v6527 = vlaneseq
  %v6528 = vshrl.u32 %v6527, 7
  %v6529 = vsub.s32 0, %v6528
  %v6530 = vrot.slane %v6526, %v6529
  %v6531 = vmul.f32 %v6520, %v6530
  %v6532 = vmul.f32 %v6523, %v6530
  %v6533 = vadd.f32 %v6466, %v6531
  %v6534 = vadd.f32 %v6467, %v6532
  %s6535 = scalar_lea.vmem %s8, 24
  %v6536 = vld [vmem:[%s6535] sm:$0xf]
  %v6537 = vld [vmem:[%s6535 + $0x4] sm:$0xf]
  %v6540 = vunpack.c.l.b16 %v6536
  %v6541 = vunpack.c.l.b16 %v6537
  %v6542 = vpack.c.b16 %v6541, %v6540
  %6543 = vrot.lane.b32.xlu0 %v6333, 1
  %v6544 = vpop.permute.xlu0 %6543
  %6545 = vrot.lane.b32.xlu0 %v6334, 1
  %v6546 = vpop.permute.xlu0 %6545
  %v6547 = vsel %vm531, %v6544, %v6546
  %v6550 = vsel %vm133, %v6542, 0
  %6552 = vmatprep.subr.bf16.mxu0 0
  %6553 = vmatpush1.bf16.msra.mxu0 %v6547
  %6554 = vmatprep.subr.bf16.mxu0 0
  %6555 = vmatpush1.bf16.msra.mxu0 0
  %6556 = vmatprep.subr.bf16.mxu0 0
  %6557 = vmatpush1.bf16.msra.mxu0 0
  %6558 = vmatprep.subr.bf16.mxu0 0
  %6559 = vmatpush1.bf16.msra.mxu0 0
  %6560 = vmatprep.subr.bf16.mxu0 0
  %6561 = vmatpush1.bf16.msra.mxu0 0
  %6562 = vmatprep.subr.bf16.mxu0 0
  %6563 = vmatpush1.bf16.msra.mxu0 0
  %6564 = vmatprep.subr.bf16.mxu0 0
  %6565 = vmatpush1.bf16.msra.mxu0 0
  %6566 = vmatprep.subr.bf16.mxu0 0
  %6567 = vmatpush1.bf16.msra.mxu0 0
  %6568 = vmatprep.subr.bf16.mxu0 0
  %6569 = vmatpush1.bf16.msra.mxu0 0
  %6570 = vmatprep.subr.bf16.mxu0 0
  %6571 = vmatpush1.bf16.msra.mxu0 0
  %6572 = vmatprep.subr.bf16.mxu0 0
  %6573 = vmatpush1.bf16.msra.mxu0 0
  %6574 = vmatprep.subr.bf16.mxu0 0
  %6575 = vmatpush1.bf16.msra.mxu0 0
  %6576 = vmatprep.subr.bf16.mxu0 0
  %6577 = vmatpush1.bf16.msra.mxu0 0
  %6578 = vmatprep.subr.bf16.mxu0 0
  %6579 = vmatpush1.bf16.msra.mxu0 0
  %6580 = vmatprep.subr.bf16.mxu0 0
  %6581 = vmatpush1.bf16.msra.mxu0 0
  %6582 = vmatprep.subr.bf16.mxu0 0
  %6583 = vmatpush1.bf16.msra.mxu0 0
  %6584 = vmatprep.mubr.bf16.mxu0 0
  %6585 = vmatmul.mubr.bf16.gmra.mrb[0].mxu0 %v6550
  %v6586 = vpop.f32.mrb[0].mxu0
  %v6587 = vadd.f32 0.0, %v6586
  %v6588 = vpop.f32.mrb[0].mxu0
  %v6589 = vpop.f32.mrb[0].mxu0
  %v6590 = vadd.f32 0.0, %v6589
  %v6591 = vpop.f32.mrb[0].mxu0
  %6592 = vdwg.mxu0
  %v6593 = vld [vmem:[%s18 + $0x3] sm:$0x1]
  %v6594 = vlaneseq
  %v6595 = vshrl.u32 %v6594, 7
  %v6596 = vsub.s32 0, %v6595
  %v6597 = vrot.slane %v6593, %v6596
  %v6598 = vmul.f32 %v6587, %v6597
  %v6599 = vmul.f32 %v6590, %v6597
  %v6600 = vadd.f32 %v6533, %v6598
  %v6601 = vadd.f32 %v6534, %v6599
  %s6602 = scalar_lea.vmem %s8, 32
  %v6603 = vld [vmem:[%s6602] sm:$0xf]
  %v6604 = vld [vmem:[%s6602 + $0x4] sm:$0xf]
  %v6607 = vunpack.c.l.b16 %v6603
  %v6608 = vunpack.c.l.b16 %v6604
  %v6609 = vpack.c.b16 %v6608, %v6607
  %v6611 = vsel %vm133, %v6609, 0
  %6613 = vmatprep.subr.bf16.mxu0 0
  %6614 = vmatpush1.bf16.msra.mxu0 %v6334
  %6615 = vmatprep.subr.bf16.mxu0 0
  %6616 = vmatpush1.bf16.msra.mxu0 0
  %6617 = vmatprep.subr.bf16.mxu0 0
  %6618 = vmatpush1.bf16.msra.mxu0 0
  %6619 = vmatprep.subr.bf16.mxu0 0
  %6620 = vmatpush1.bf16.msra.mxu0 0
  %6621 = vmatprep.subr.bf16.mxu0 0
  %6622 = vmatpush1.bf16.msra.mxu0 0
  %6623 = vmatprep.subr.bf16.mxu0 0
  %6624 = vmatpush1.bf16.msra.mxu0 0
  %6625 = vmatprep.subr.bf16.mxu0 0
  %6626 = vmatpush1.bf16.msra.mxu0 0
  %6627 = vmatprep.subr.bf16.mxu0 0
  %6628 = vmatpush1.bf16.msra.mxu0 0
  %6629 = vmatprep.subr.bf16.mxu0 0
  %6630 = vmatpush1.bf16.msra.mxu0 0
  %6631 = vmatprep.subr.bf16.mxu0 0
  %6632 = vmatpush1.bf16.msra.mxu0 0
  %6633 = vmatprep.subr.bf16.mxu0 0
  %6634 = vmatpush1.bf16.msra.mxu0 0
  %6635 = vmatprep.subr.bf16.mxu0 0
  %6636 = vmatpush1.bf16.msra.mxu0 0
  %6637 = vmatprep.subr.bf16.mxu0 0
  %6638 = vmatpush1.bf16.msra.mxu0 0
  %6639 = vmatprep.subr.bf16.mxu0 0
  %6640 = vmatpush1.bf16.msra.mxu0 0
  %6641 = vmatprep.subr.bf16.mxu0 0
  %6642 = vmatpush1.bf16.msra.mxu0 0
  %6643 = vmatprep.subr.bf16.mxu0 0
  %6644 = vmatpush1.bf16.msra.mxu0 0
  %6645 = vmatprep.mubr.bf16.mxu0 0
  %6646 = vmatmul.mubr.bf16.gmra.mrb[0].mxu0 %v6611
  %v6647 = vpop.f32.mrb[0].mxu0
  %v6648 = vadd.f32 0.0, %v6647
  %v6649 = vpop.f32.mrb[0].mxu0
  %v6650 = vpop.f32.mrb[0].mxu0
  %v6651 = vadd.f32 0.0, %v6650
  %v6652 = vpop.f32.mrb[0].mxu0
  %6653 = vdwg.mxu0
  %v6654 = vadd.f32 %v6600, %v6648
  %v6655 = vadd.f32 %v6601, %v6651
  %v6656 = vld [vmem:[#allocation2 + $0x8] sm:$0xff]
  %v6657 = vld [vmem:[#allocation2 + $0x10] sm:$0xff]
  %s6658 = scalar_lea.vmem %s8, 40
  %v6659 = vld [vmem:[%s6658] sm:$0xf]
  %v6660 = vld [vmem:[%s6658 + $0x4] sm:$0xf]
  %v6663 = vunpack.c.l.b16 %v6659
  %v6664 = vunpack.c.l.b16 %v6660
  %v6665 = vpack.c.b16 %v6664, %v6663
  %6668 = vrot.lane.b32.xlu0 %v6656, 127
  %v6669 = vpop.permute.xlu0 %6668
  %6670 = vrot.lane.b32.xlu0 %v6657, 127
  %v6671 = vpop.permute.xlu0 %6670
  %v6672 = vsel %vm769, %v6669, %v6671
  %v6675 = vsel %vm133, %v6665, 0
  %6677 = vmatprep.subr.bf16.mxu0 0
  %6678 = vmatpush1.bf16.msra.mxu0 %v6672
  %6679 = vmatprep.subr.bf16.mxu0 0
  %6680 = vmatpush1.bf16.msra.mxu0 0
  %6681 = vmatprep.subr.bf16.mxu0 0
  %6682 = vmatpush1.bf16.msra.mxu0 0
  %6683 = vmatprep.subr.bf16.mxu0 0
  %6684 = vmatpush1.bf16.msra.mxu0 0
  %6685 = vmatprep.subr.bf16.mxu0 0
  %6686 = vmatpush1.bf16.msra.mxu0 0
  %6687 = vmatprep.subr.bf16.mxu0 0
  %6688 = vmatpush1.bf16.msra.mxu0 0
  %6689 = vmatprep.subr.bf16.mxu0 0
  %6690 = vmatpush1.bf16.msra.mxu0 0
  %6691 = vmatprep.subr.bf16.mxu0 0
  %6692 = vmatpush1.bf16.msra.mxu0 0
  %6693 = vmatprep.subr.bf16.mxu0 0
  %6694 = vmatpush1.bf16.msra.mxu0 0
  %6695 = vmatprep.subr.bf16.mxu0 0
  %6696 = vmatpush1.bf16.msra.mxu0 0
  %6697 = vmatprep.subr.bf16.mxu0 0
  %6698 = vmatpush1.bf16.msra.mxu0 0
  %6699 = vmatprep.subr.bf16.mxu0 0
  %6700 = vmatpush1.bf16.msra.mxu0 0
  %6701 = vmatprep.subr.bf16.mxu0 0
  %6702 = vmatpush1.bf16.msra.mxu0 0
  %6703 = vmatprep.subr.bf16.mxu0 0
  %6704 = vmatpush1.bf16.msra.mxu0 0
  %6705 = vmatprep.subr.bf16.mxu0 0
  %6706 = vmatpush1.bf16.msra.mxu0 0
  %6707 = vmatprep.subr.bf16.mxu0 0
  %6708 = vmatpush1.bf16.msra.mxu0 0
  %6709 = vmatprep.mubr.bf16.mxu0 0
  %6710 = vmatmul.mubr.bf16.gmra.mrb[0].mxu0 %v6675
  %v6711 = vpop.f32.mrb[0].mxu0
  %v6712 = vadd.f32 0.0, %v6711
  %v6713 = vpop.f32.mrb[0].mxu0
  %v6714 = vpop.f32.mrb[0].mxu0
  %v6715 = vadd.f32 0.0, %v6714
  %v6716 = vpop.f32.mrb[0].mxu0
  %6717 = vdwg.mxu0
  %v6718 = vld [vmem:[%s18 + $0x5] sm:$0x1]
  %v6719 = vlaneseq
  %v6720 = vshrl.u32 %v6719, 7
  %v6721 = vsub.s32 0, %v6720
  %v6722 = vrot.slane %v6718, %v6721
  %v6723 = vmul.f32 %v6712, %v6722
  %v6724 = vmul.f32 %v6715, %v6722
  %v6725 = vadd.f32 %v6654, %v6723
  %v6726 = vadd.f32 %v6655, %v6724
  %s6727 = scalar_lea.vmem %s8, 48
  %v6728 = vld [vmem:[%s6727] sm:$0xf]
  %v6729 = vld [vmem:[%s6727 + $0x4] sm:$0xf]
  %v6732 = vunpack.c.l.b16 %v6728
  %v6733 = vunpack.c.l.b16 %v6729
  %v6734 = vpack.c.b16 %v6733, %v6732
  %6735 = vrot.lane.b32.xlu0 %v6656, 121
  %v6736 = vpop.permute.xlu0 %6735
  %6737 = vrot.lane.b32.xlu0 %v6657, 121
  %v6738 = vpop.permute.xlu0 %6737
  %v6739 = vsel %vm3431, %v6736, %v6738
  %v6742 = vsel %vm133, %v6734, 0
  %6744 = vmatprep.subr.bf16.mxu0 0
  %6745 = vmatpush1.bf16.msra.mxu0 %v6739
  %6746 = vmatprep.subr.bf16.mxu0 0
  %6747 = vmatpush1.bf16.msra.mxu0 0
  %6748 = vmatprep.subr.bf16.mxu0 0
  %6749 = vmatpush1.bf16.msra.mxu0 0
  %6750 = vmatprep.subr.bf16.mxu0 0
  %6751 = vmatpush1.bf16.msra.mxu0 0
  %6752 = vmatprep.subr.bf16.mxu0 0
  %6753 = vmatpush1.bf16.msra.mxu0 0
  %6754 = vmatprep.subr.bf16.mxu0 0
  %6755 = vmatpush1.bf16.msra.mxu0 0
  %6756 = vmatprep.subr.bf16.mxu0 0
  %6757 = vmatpush1.bf16.msra.mxu0 0
  %6758 = vmatprep.subr.bf16.mxu0 0
  %6759 = vmatpush1.bf16.msra.mxu0 0
  %6760 = vmatprep.subr.bf16.mxu0 0
  %6761 = vmatpush1.bf16.msra.mxu0 0
  %6762 = vmatprep.subr.bf16.mxu0 0
  %6763 = vmatpush1.bf16.msra.mxu0 0
  %6764 = vmatprep.subr.bf16.mxu0 0
  %6765 = vmatpush1.bf16.msra.mxu0 0
  %6766 = vmatprep.subr.bf16.mxu0 0
  %6767 = vmatpush1.bf16.msra.mxu0 0
  %6768 = vmatprep.subr.bf16.mxu0 0
  %6769 = vmatpush1.bf16.msra.mxu0 0
  %6770 = vmatprep.subr.bf16.mxu0 0
  %6771 = vmatpush1.bf16.msra.mxu0 0
  %6772 = vmatprep.subr.bf16.mxu0 0
  %6773 = vmatpush1.bf16.msra.mxu0 0
  %6774 = vmatprep.subr.bf16.mxu0 0
  %6775 = vmatpush1.bf16.msra.mxu0 0
  %6776 = vmatprep.mubr.bf16.mxu0 0
  %6777 = vmatmul.mubr.bf16.gmra.mrb[0].mxu0 %v6742
  %v6778 = vpop.f32.mrb[0].mxu0
  %v6779 = vadd.f32 0.0, %v6778
  %v6780 = vpop.f32.mrb[0].mxu0
  %v6781 = vpop.f32.mrb[0].mxu0
  %v6782 = vadd.f32 0.0, %v6781
  %v6783 = vpop.f32.mrb[0].mxu0
  %6784 = vdwg.mxu0
  %v6785 = vld [vmem:[%s18 + $0x6] sm:$0x1]
  %v6786 = vlaneseq
  %v6787 = vshrl.u32 %v6786, 7
  %v6788 = vsub.s32 0, %v6787
  %v6789 = vrot.slane %v6785, %v6788
  %v6790 = vmul.f32 %v6779, %v6789
  %v6791 = vmul.f32 %v6782, %v6789
  %v6792 = vadd.f32 %v6725, %v6790
  %v6793 = vadd.f32 %v6726, %v6791
  %s6794 = scalar_lea.vmem %s8, 56
  %v6795 = vld [vmem:[%s6794] sm:$0xf]
  %v6796 = vld [vmem:[%s6794 + $0x4] sm:$0xf]
  %v6799 = vunpack.c.l.b16 %v6795
  %v6800 = vunpack.c.l.b16 %v6796
  %v6801 = vpack.c.b16 %v6800, %v6799
  %6802 = vrot.lane.b32.xlu0 %v6656, 120
  %v6803 = vpop.permute.xlu0 %6802
  %6804 = vrot.lane.b32.xlu0 %v6657, 120
  %v6805 = vpop.permute.xlu0 %6804
  %v6806 = vsel %vm3499, %v6803, %v6805
  %v6809 = vsel %vm133, %v6801, 0
  %6811 = vmatprep.subr.bf16.mxu0 0
  %6812 = vmatpush1.bf16.msra.mxu0 %v6806
  %6813 = vmatprep.subr.bf16.mxu0 0
  %6814 = vmatpush1.bf16.msra.mxu0 0
  %6815 = vmatprep.subr.bf16.mxu0 0
  %6816 = vmatpush1.bf16.msra.mxu0 0
  %6817 = vmatprep.subr.bf16.mxu0 0
  %6818 = vmatpush1.bf16.msra.mxu0 0
  %6819 = vmatprep.subr.bf16.mxu0 0
  %6820 = vmatpush1.bf16.msra.mxu0 0
  %6821 = vmatprep.subr.bf16.mxu0 0
  %6822 = vmatpush1.bf16.msra.mxu0 0
  %6823 = vmatprep.subr.bf16.mxu0 0
  %6824 = vmatpush1.bf16.msra.mxu0 0
  %6825 = vmatprep.subr.bf16.mxu0 0
  %6826 = vmatpush1.bf16.msra.mxu0 0
  %6827 = vmatprep.subr.bf16.mxu0 0
  %6828 = vmatpush1.bf16.msra.mxu0 0
  %6829 = vmatprep.subr.bf16.mxu0 0
  %6830 = vmatpush1.bf16.msra.mxu0 0
  %6831 = vmatprep.subr.bf16.mxu0 0
  %6832 = vmatpush1.bf16.msra.mxu0 0
  %6833 = vmatprep.subr.bf16.mxu0 0
  %6834 = vmatpush1.bf16.msra.mxu0 0
  %6835 = vmatprep.subr.bf16.mxu0 0
  %6836 = vmatpush1.bf16.msra.mxu0 0
  %6837 = vmatprep.subr.bf16.mxu0 0
  %6838 = vmatpush1.bf16.msra.mxu0 0
  %6839 = vmatprep.subr.bf16.mxu0 0
  %6840 = vmatpush1.bf16.msra.mxu0 0
  %6841 = vmatprep.subr.bf16.mxu0 0
  %6842 = vmatpush1.bf16.msra.mxu0 0
  %6843 = vmatprep.mubr.bf16.mxu0 0
  %6844 = vmatmul.mubr.bf16.gmra.mrb[0].mxu0 %v6809
  %v6845 = vpop.f32.mrb[0].mxu0
  %v6846 = vadd.f32 0.0, %v6845
  %v6847 = vpop.f32.mrb[0].mxu0
  %v6848 = vpop.f32.mrb[0].mxu0
  %v6849 = vadd.f32 0.0, %v6848
  %v6850 = vpop.f32.mrb[0].mxu0
  %6851 = vdwg.mxu0
  %v6852 = vld [vmem:[%s18 + $0x7] sm:$0x1]
  %v6853 = vlaneseq
  %v6854 = vshrl.u32 %v6853, 7
  %v6855 = vsub.s32 0, %v6854
  %v6856 = vrot.slane %v6852, %v6855
  %v6857 = vmul.f32 %v6846, %v6856
  %v6858 = vmul.f32 %v6849, %v6856
  %v6859 = vadd.f32 %v6792, %v6857
  %v6860 = vadd.f32 %v6793, %v6858
  %s6861 = scalar_lea.vmem %s8, 64
  %v6862 = vld [vmem:[%s6861] sm:$0xf]
  %v6863 = vld [vmem:[%s6861 + $0x4] sm:$0xf]
  %v6866 = vunpack.c.l.b16 %v6862
  %v6867 = vunpack.c.l.b16 %v6863
  %v6868 = vpack.c.b16 %v6867, %v6866
  %6869 = vrot.lane.b32.xlu0 %v6656, 119
  %v6870 = vpop.permute.xlu0 %6869
  %6871 = vrot.lane.b32.xlu0 %v6657, 119
  %v6872 = vpop.permute.xlu0 %6871
  %v6873 = vsel %vm3567, %v6870, %v6872
  %v6876 = vsel %vm133, %v6868, 0
  %6878 = vmatprep.subr.bf16.mxu0 0
  %6879 = vmatpush1.bf16.msra.mxu0 %v6873
  %6880 = vmatprep.subr.bf16.mxu0 0
  %6881 = vmatpush1.bf16.msra.mxu0 0
  %6882 = vmatprep.subr.bf16.mxu0 0
  %6883 = vmatpush1.bf16.msra.mxu0 0
  %6884 = vmatprep.subr.bf16.mxu0 0
  %6885 = vmatpush1.bf16.msra.mxu0 0
  %6886 = vmatprep.subr.bf16.mxu0 0
  %6887 = vmatpush1.bf16.msra.mxu0 0
  %6888 = vmatprep.subr.bf16.mxu0 0
  %6889 = vmatpush1.bf16.msra.mxu0 0
  %6890 = vmatprep.subr.bf16.mxu0 0
  %6891 = vmatpush1.bf16.msra.mxu0 0
  %6892 = vmatprep.subr.bf16.mxu0 0
  %6893 = vmatpush1.bf16.msra.mxu0 0
  %6894 = vmatprep.subr.bf16.mxu0 0
  %6895 = vmatpush1.bf16.msra.mxu0 0
  %6896 = vmatprep.subr.bf16.mxu0 0
  %6897 = vmatpush1.bf16.msra.mxu0 0
  %6898 = vmatprep.subr.bf16.mxu0 0
  %6899 = vmatpush1.bf16.msra.mxu0 0
  %6900 = vmatprep.subr.bf16.mxu0 0
  %6901 = vmatpush1.bf16.msra.mxu0 0
  %6902 = vmatprep.subr.bf16.mxu0 0
  %6903 = vmatpush1.bf16.msra.mxu0 0
  %6904 = vmatprep.subr.bf16.mxu0 0
  %6905 = vmatpush1.bf16.msra.mxu0 0
  %6906 = vmatprep.subr.bf16.mxu0 0
  %6907 = vmatpush1.bf16.msra.mxu0 0
  %6908 = vmatprep.subr.bf16.mxu0 0
  %6909 = vmatpush1.bf16.msra.mxu0 0
  %6910 = vmatprep.mubr.bf16.mxu0 0
  %6911 = vmatmul.mubr.bf16.gmra.mrb[0].mxu0 %v6876
  %v6912 = vpop.f32.mrb[0].mxu0
  %v6913 = vadd.f32 0.0, %v6912
  %v6914 = vpop.f32.mrb[0].mxu0
  %v6915 = vpop.f32.mrb[0].mxu0
  %v6916 = vadd.f32 0.0, %v6915
  %v6917 = vpop.f32.mrb[0].mxu0
  %6918 = vdwg.mxu0
  %v6919 = vld [vmem:[%s18 + $0x8] sm:$0x1]
  %v6920 = vlaneseq
  %v6921 = vshrl.u32 %v6920, 7
  %v6922 = vsub.s32 0, %v6921
  %v6923 = vrot.slane %v6919, %v6922
  %v6924 = vmul.f32 %v6913, %v6923
  %v6925 = vmul.f32 %v6916, %v6923
  %v6926 = vadd.f32 %v6859, %v6924
  %v6927 = vadd.f32 %v6860, %v6925
  %6928 = vadd.xlane.f32.xlu0 %v6926
  %v6929 = vpop.xlane.xlu0 %6928
  %6930 = vadd.xlane.f32.xlu0 %v6927
  %v6931 = vpop.xlane.xlu0 %6930
  %v6932 = vmul.f32 %v6926, %v6926
  %v6933 = vmul.f32 %v6927, %v6927
  %6934 = vadd.xlane.f32.xlu0 %v6932
  %v6935 = vpop.xlane.xlu0 %6934
  %6936 = vadd.xlane.f32.xlu0 %v6933
  %v6937 = vpop.xlane.xlu0 %6936
  %v6938 = vmul.f32 %v6929, 0.0078125
  %v6939 = vmul.f32 %v6931, 0.0078125
  %v6940 = vmul.f32 %v6935, 0.0078125
  %v6941 = vmul.f32 %v6937, 0.0078125
  %v6942 = vmul.f32 %v6938, %v6938
  %v6943 = vmul.f32 %v6939, %v6939
  %v6944 = vsub.f32 %v6940, %v6942
  %v6945 = vsub.f32 %v6941, %v6943
  %v6946 = vld [vmem:[%s16] sm:$0xff]
  %v6947 = vld [vmem:[%s16 + $0x8] sm:$0xff]
  %v6948 = vadd.f32 %v6944, 1e-05
  %v6949 = vadd.f32 %v6945, 1e-05
  %v6950 = vrsqrt.pop %v6948
  %v6951 = vrsqrt.pop %v6949
  %v6952 = vmul.f32 %v6946, %v6950
  %v6953 = vmul.f32 %v6947, %v6951
  %v6954 = vmul.f32 %v6938, %v6952
  %v6955 = vmul.f32 %v6939, %v6953
  %6958 = vrot.lane.b32.xlu0 %v6954, 1
  %v6959 = vpop.permute.xlu0 %6958
  %6960 = vrot.lane.b32.xlu0 %v6955, 1
  %v6961 = vpop.permute.xlu0 %6960
  %v6964 = vsub.f32 %v6946, %v6959
  %v6965 = vsub.f32 %v6947, %v6961
  %6967 = vset.pattern.permute.xlu0 0
  %6968 = vperm.xlu0 %6967, %v6952
  %v6969 = vpop.permute.xlu0 %6968
  %6972 = vset.pattern.permute.xlu0 0
  %6973 = vperm.xlu0 %6972, %v6953
  %v6974 = vpop.permute.xlu0 %6973
  %v6976 = vmul.f32 %v6926, %v6969
  %v6977 = vmul.f32 %v6927, %v6974
  %6979 = vset.pattern.permute.xlu0 1
  %6980 = vperm.xlu0 %6979, %v6964
  %v6981 = vpop.permute.xlu0 %6980
  %6984 = vset.pattern.permute.xlu0 1
  %6985 = vperm.xlu0 %6984, %v6965
  %v6986 = vpop.permute.xlu0 %6985
  %v6988 = vadd.f32 %v6976, %v6981
  %v6989 = vadd.f32 %v6977, %v6986
  %v6990 = vmax.f32 %v6988, 0.0
  %v6991 = vmax.f32 %v6989, 0.0
  %6992 = vst [vmem:[%s20] sm:$0xff] %v6990
  %6993 = vst [vmem:[%s20 + $0x8] sm:$0xff] %v6991
  // Predicated region
  $region82: #{edge_feature_extractor.1} parent=0 // pred_check
    _
  $region83: #{edge_feature_extractor.1} parent=0 // pred_check_branch
    %6995 = sbr.rel (0) target = $region85
  $region84: #{edge_feature_extractor.1} parent=0 // pred_region
    _
  $region85: #{edge_feature_extractor.1} parent=0 // pred_fallthru
    _
  // Predicated region
  $region86: #{edge_feature_extractor.1} parent=0 // pred_check
    _
  $region87: #{edge_feature_extractor.1} parent=0 // pred_check_branch
    %6997 = sbr.rel (0) target = $region89
  $region88: #{edge_feature_extractor.1} parent=0 // pred_region
    _
  $region89: #{edge_feature_extractor.1} parent=0 // pred_fallthru
    _

</llo_original>
